<compile_context>
chip_gen: v7x
topology: tpu7x:2x2x1
jax: 0.10.0
libtpu: 0.0.40
codegen_flags: <defaults>
</compile_context>

<pallas_src>
import jax
import jax.numpy as jnp
from jax.experimental import pallas as pl
from jax.experimental.pallas import tpu as pltpu


# --------------------------- fused Pallas kernel ----------------------------

def _lenet_kernel(x_ref, t1_ref, b1_ref, s1_ref, rs1_ref, cs1_ref,
                  t2_ref, b2_ref, s2_ref, rs2_ref, cs2_ref,
                  g_ref, w1s_ref, fb1_ref, w2_ref, fb2_ref, w3_ref, fb3_ref,
                  o_ref):
    f32 = jnp.float32

    def mm(a, b):
        return jnp.dot(a, b, preferred_element_type=f32)

    def conv_relu(xin, t_ref, s_ref, bias):
        # xin: (Cin*Hin, B*Win); s_ref[kj]: (B*Win, B*OW) block-diag shift;
        # t_ref[kj]: (Cout*OH, Cin*Hin) banded weights.
        k = t_ref.shape[0]
        acc = None
        for kj in range(k):
            part = mm(t_ref[kj], mm(xin, s_ref[kj]))        # (Cout*OH, B*OW)
            acc = part if acc is None else acc + part
        return jnp.maximum(acc + bias, 0.0)                  # bias: (Cout*OH, 1)

    def pool2x2(y, rs_ref, cs_ref):
        # y: (C*H, B*W) -> (C*H/2, B*W/2); max over 4 stride-2 selector products.
        out = None
        for dj in range(2):
            cols = mm(y, cs_ref[dj])                         # block-diag col pick
            for di in range(2):
                cand = mm(rs_ref[di], cols)                  # row pick (batch-free)
                out = cand if out is None else jnp.maximum(out, cand)
        return out

    x = x_ref[...]                                           # (28, B*28), Cin = 1
    y1 = conv_relu(x, t1_ref, s1_ref, b1_ref[...])           # (6*24, B*24)
    p1 = pool2x2(y1, rs1_ref, cs1_ref)                       # (6*12, B*12)
    y2 = conv_relu(p1, t2_ref, s2_ref, b2_ref[...])          # (16*8, B*8)
    p2 = pool2x2(y2, rs2_ref, cs2_ref)                       # (16*4, B*4)

    # fc1: torch flatten index is c*16 + h*4 + w == row(p2)*4 + w, so fold the
    # flatten into 4 column-sliced weight matmuls with batched gather selectors.
    acc = None
    for w in range(4):
        col = mm(p2, g_ref[w])                               # (64, B) = p2[:, b*4+w]
        part = mm(w1s_ref[w], col)                           # (120, B)
        acc = part if acc is None else acc + part
    h1 = jnp.maximum(acc + fb1_ref[...], 0.0)                # (120, B)
    h2 = jnp.maximum(mm(w2_ref[...], h1) + fb2_ref[...], 0.0)  # (84, B)
    o_ref[...] = mm(w3_ref[...], h2) + fb3_ref[...]          # single (10, B) store


# ------------------------ one-time weight preparation -----------------------

def _conv_row_matrices(w, hin):
    """w: (Cout, Cin, k, k) -> T: (k, Cout*OH, Cin*Hin).

    T[kj, co*OH+oh, ci*Hin+h] = w[co, ci, h-oh, kj] if 0 <= h-oh < k else 0,
    so conv(x)[co, oh, ow] = sum_kj (T[kj] @ shift_kj(x2d))[co*OH+oh, ow]
    with x2d rows = ci*Hin + h and cols = w.
    """
    cout, cin, k, _ = w.shape
    oh = hin - k + 1
    d = jnp.arange(hin)[None, :] - jnp.arange(oh)[:, None]          # (oh, hin)
    valid = ((d >= 0) & (d < k)).astype(w.dtype)
    dc = jnp.clip(d, 0, k - 1)
    wt = jnp.transpose(w, (2, 3, 0, 1))                             # (ki, kj, co, ci)
    band = wt[dc] * valid[:, :, None, None, None]                   # (oh, hin, kj, co, ci)
    band = jnp.transpose(band, (2, 3, 0, 4, 1))                     # (kj, co, oh, ci, hin)
    return band.reshape(k, cout * oh, cin * hin)


def _shift_selectors(win, ow, k, dtype=jnp.float32):
    w = jnp.arange(win)[:, None]
    o = jnp.arange(ow)[None, :]
    return jnp.stack([(w == o + kj).astype(dtype) for kj in range(k)])   # (k, win, ow)


def _pool_selectors(rows, cols, dtype=jnp.float32):
    ri = jnp.arange(rows // 2)[:, None]
    rj = jnp.arange(rows)[None, :]
    rs = jnp.stack([(rj == 2 * ri + d).astype(dtype) for d in (0, 1)])   # (2, rows/2, rows)
    wi = jnp.arange(cols)[:, None]
    wp = jnp.arange(cols // 2)[None, :]
    cs = jnp.stack([(wi == 2 * wp + d).astype(dtype) for d in (0, 1)])   # (2, cols, cols/2)
    return rs, cs


def prepare_params(params, batch):
    """Pre-transform torch-layout LeNet params into batched kernel operands."""
    f32 = jnp.float32
    eye_b = jnp.eye(batch, dtype=f32)

    def block_diag(sel):  # (k, n, m) -> (k, B*n, B*m): kron(I_B, sel[k]) per slice
        return jnp.stack([jnp.kron(eye_b, sel[i]) for i in range(sel.shape[0])])

    rs1, cs1 = _pool_selectors(6 * 24, 24)
    rs2, cs2 = _pool_selectors(16 * 8, 8)
    e4 = jnp.eye(4, dtype=f32)[:, :, None]                               # (4, 4, 1)
    fc1_w = params["fc1_w"].astype(f32)                                  # (120, 256)

    return {
        "t1":  _conv_row_matrices(params["w1"].astype(f32), 28),         # (5, 144, 28)
        "b1":  jnp.repeat(params["b1"].astype(f32), 24)[:, None],        # (144, 1)
        "s1":  block_diag(_shift_selectors(28, 24, 5)),                  # (5, 28B, 24B)
        "rs1": rs1,                                                      # (2, 72, 144)
        "cs1": block_diag(cs1),                                          # (2, 24B, 12B)
        "t2":  _conv_row_matrices(params["w2"].astype(f32), 12),         # (5, 128, 72)
        "b2":  jnp.repeat(params["b2"].astype(f32), 8)[:, None],         # (128, 1)
        "s2":  block_diag(_shift_selectors(12, 8, 5)),                   # (5, 12B, 8B)
        "rs2": rs2,                                                      # (2, 64, 128)
        "cs2": block_diag(cs2),                                          # (2, 8B, 4B)
        "g":   block_diag(e4),                                           # (4, 4B, B)
        "w1s": jnp.stack([fc1_w[:, c::4] for c in range(4)]),            # (4, 120, 64)
        "fb1": params["fc1_b"].astype(f32)[:, None],                     # (120, 1)
        "w2":  params["fc2_w"].astype(f32),                              # (84, 120)
        "fb2": params["fc2_b"].astype(f32)[:, None],                     # (84, 1)
        "w3":  params["fc3_w"].astype(f32),                              # (10, 84)
        "fb3": params["fc3_b"].astype(f32)[:, None],                     # (10, 1)
    }


# ------------------------------ forward pass --------------------------------

def lenet_forward(prep, x):
    """x: (B, 1, 28, 28) float32 -> logits (B, num_classes)."""
    assert x.shape[1:] == (1, 28, 28)
    B = x.shape[0]
    assert prep["s1"].shape[1] == B * 28, "prepare_params() built for another batch"
    num_classes = prep["fb3"].shape[0]

    # Batch-in-lanes layout: x2d[h, b*28 + w] = x[b, 0, h, w].
    x2d = jnp.transpose(x.reshape(B, 28, 28).astype(jnp.float32),
                        (1, 0, 2)).reshape(28, B * 28)

    names = ["t1", "b1", "s1", "rs1", "cs1", "t2", "b2", "s2", "rs2", "cs2",
             "g", "w1s", "fb1", "w2", "fb2", "w3", "fb3"]
    operands = [x2d] + [prep[n] for n in names]

    def full_spec(a):
        nd = a.ndim
        return pl.BlockSpec(a.shape, lambda i, nd=nd: (0,) * nd)

    out = pl.pallas_call(
        _lenet_kernel,
        out_shape=jax.ShapeDtypeStruct((num_classes, B), jnp.float32),
        grid=(1,),
        in_specs=[full_spec(a) for a in operands],
        out_specs=pl.BlockSpec((num_classes, B), lambda i: (0, 0)),
        compiler_params=pltpu.CompilerParams(
            dimension_semantics=("arbitrary",)),
    )(*operands)
    return out.T                                             # (B, num_classes)


# ------------------------------- parameters ---------------------------------

def init_params(key, num_classes=10):
    """Torch-layout params with PyTorch-default uniform(+-1/sqrt(fan_in)) init."""
    def uinit(k, shape, fan_in):
        bound = 1.0 / jnp.sqrt(jnp.float32(fan_in))
        return jax.random.uniform(k, shape, jnp.float32, -bound, bound)

    ks = jax.random.split(key, 10)
    return {
        "w1": uinit(ks[0], (6, 1, 5, 5), 1 * 5 * 5),
        "b1": uinit(ks[1], (6,), 1 * 5 * 5),
        "w2": uinit(ks[2], (16, 6, 5, 5), 6 * 5 * 5),
        "b2": uinit(ks[3], (16,), 6 * 5 * 5),
        "fc1_w": uinit(ks[4], (120, 16 * 4 * 4), 16 * 4 * 4),
        "fc1_b": uinit(ks[5], (120,), 16 * 4 * 4),
        "fc2_w": uinit(ks[6], (84, 120), 120),
        "fc2_b": uinit(ks[7], (84,), 120),
        "fc3_w": uinit(ks[8], (num_classes, 84), 84),
        "fc3_b": uinit(ks[9], (num_classes,), 84),
    }


def _lenet_reference(params, x):
    """Pure-JAX (XLA) reference matching the PyTorch module, for validation."""
    f32 = jnp.float32
    x = x.astype(f32)

    def conv_relu(x, w, b):
        y = jax.lax.conv_general_dilated(
            x, w.astype(f32), (1, 1), "VALID",
            dimension_numbers=("NCHW", "OIHW", "NCHW"))
        return jnp.maximum(y + b.astype(f32)[None, :, None, None], 0.0)

    def pool(x):
        n, c, h, w = x.shape
        return x.reshape(n, c, h // 2, 2, w // 2, 2).max(axis=(3, 5))

    y = pool(conv_relu(x, params["w1"], params["b1"]))
    y = pool(conv_relu(y, params["w2"], params["b2"]))
    y = y.reshape(x.shape[0], -1)
    y = jnp.maximum(y @ params["fc1_w"].T + params["fc1_b"], 0.0)
    y = jnp.maximum(y @ params["fc2_w"].T + params["fc2_b"], 0.0)
    return y @ params["fc3_w"].T + params["fc3_b"]


if __name__ == "__main__":
    key = jax.random.PRNGKey(0)
    pkey, xkey = jax.random.split(key)
    params = init_params(pkey, num_classes=10)
    # LeNet's fc1 (16*4*4 inputs) implies 28x28 spatial input; small batch.
    x = jax.random.normal(xkey, (2, 1, 28, 28), dtype=jnp.float32)

    prep = prepare_params(params, batch=x.shape[0])   # one-time weight re-layout
    fwd = jax.jit(lenet_forward)
    out = jax.block_until_ready(fwd(prep, x))
    assert out.shape == (2, 10) and out.dtype == jnp.float32

    ref = _lenet_reference(params, x)
    assert jnp.allclose(out, ref, atol=1e-3, rtol=1e-3), (
        "max abs err = %e" % float(jnp.max(jnp.abs(out - ref))))
    print("KERNEL_OK")
</pallas_src>

<mosaic_0001>
module attributes {stable_mosaic.version = 11 : i64} {
  func.func @_lenet_kernel(%arg0: i32, %arg1: memref<28x56xf32, #tpu.memory_space<vmem>>, %arg2: memref<5x144x28xf32, #tpu.memory_space<vmem>>, %arg3: memref<144x1xf32, #tpu.memory_space<vmem>>, %arg4: memref<5x56x48xf32, #tpu.memory_space<vmem>>, %arg5: memref<2x72x144xf32, #tpu.memory_space<vmem>>, %arg6: memref<2x48x24xf32, #tpu.memory_space<vmem>>, %arg7: memref<5x128x72xf32, #tpu.memory_space<vmem>>, %arg8: memref<128x1xf32, #tpu.memory_space<vmem>>, %arg9: memref<5x24x16xf32, #tpu.memory_space<vmem>>, %arg10: memref<2x64x128xf32, #tpu.memory_space<vmem>>, %arg11: memref<2x16x8xf32, #tpu.memory_space<vmem>>, %arg12: memref<4x8x2xf32, #tpu.memory_space<vmem>>, %arg13: memref<4x120x64xf32, #tpu.memory_space<vmem>>, %arg14: memref<120x1xf32, #tpu.memory_space<vmem>>, %arg15: memref<84x120xf32, #tpu.memory_space<vmem>>, %arg16: memref<84x1xf32, #tpu.memory_space<vmem>>, %arg17: memref<10x84xf32, #tpu.memory_space<vmem>>, %arg18: memref<10x1xf32, #tpu.memory_space<vmem>>, %arg19: memref<10x2xf32, #tpu.memory_space<vmem>>) attributes {dimension_semantics = [#tpu.dimension_semantics<arbitrary>], iteration_bounds = array<i64: 1>, scalar_prefetch = 0 : i64, scratch_operands = 0 : i64, tpu.core_type = #tpu.core_type<tc>, window_params = [{pipeline_mode = #tpu.pipeline_mode<synchronous>, transform_indices = @transform_0, window_bounds = array<i64: 28, 56>}, {pipeline_mode = #tpu.pipeline_mode<synchronous>, transform_indices = @transform_1, window_bounds = array<i64: 5, 144, 28>}, {pipeline_mode = #tpu.pipeline_mode<synchronous>, transform_indices = @transform_2, window_bounds = array<i64: 144, 1>}, {pipeline_mode = #tpu.pipeline_mode<synchronous>, transform_indices = @transform_3, window_bounds = array<i64: 5, 56, 48>}, {pipeline_mode = #tpu.pipeline_mode<synchronous>, transform_indices = @transform_4, window_bounds = array<i64: 2, 72, 144>}, {pipeline_mode = #tpu.pipeline_mode<synchronous>, transform_indices = @transform_5, window_bounds = array<i64: 2, 48, 24>}, {pipeline_mode = #tpu.pipeline_mode<synchronous>, transform_indices = @transform_6, window_bounds = array<i64: 5, 128, 72>}, {pipeline_mode = #tpu.pipeline_mode<synchronous>, transform_indices = @transform_7, window_bounds = array<i64: 128, 1>}, {pipeline_mode = #tpu.pipeline_mode<synchronous>, transform_indices = @transform_8, window_bounds = array<i64: 5, 24, 16>}, {pipeline_mode = #tpu.pipeline_mode<synchronous>, transform_indices = @transform_9, window_bounds = array<i64: 2, 64, 128>}, {pipeline_mode = #tpu.pipeline_mode<synchronous>, transform_indices = @transform_10, window_bounds = array<i64: 2, 16, 8>}, {pipeline_mode = #tpu.pipeline_mode<synchronous>, transform_indices = @transform_11, window_bounds = array<i64: 4, 8, 2>}, {pipeline_mode = #tpu.pipeline_mode<synchronous>, transform_indices = @transform_12, window_bounds = array<i64: 4, 120, 64>}, {pipeline_mode = #tpu.pipeline_mode<synchronous>, transform_indices = @transform_13, window_bounds = array<i64: 120, 1>}, {pipeline_mode = #tpu.pipeline_mode<synchronous>, transform_indices = @transform_14, window_bounds = array<i64: 84, 120>}, {pipeline_mode = #tpu.pipeline_mode<synchronous>, transform_indices = @transform_15, window_bounds = array<i64: 84, 1>}, {pipeline_mode = #tpu.pipeline_mode<synchronous>, transform_indices = @transform_16, window_bounds = array<i64: 10, 84>}, {pipeline_mode = #tpu.pipeline_mode<synchronous>, transform_indices = @transform_17, window_bounds = array<i64: 10, 1>}, {pipeline_mode = #tpu.pipeline_mode<synchronous>, transform_indices = @transform_18, window_bounds = array<i64: 10, 2>}]} {
    %c0 = arith.constant 0 : index
    %c0_0 = arith.constant 0 : index
    %0 = vector.load %arg1[%c0, %c0_0] : memref<28x56xf32, #tpu.memory_space<vmem>>, vector<28x56xf32>
    %c0_1 = arith.constant 0 : index
    %c0_2 = arith.constant 0 : index
    %1 = vector.load %arg3[%c0_1, %c0_2] : memref<144x1xf32, #tpu.memory_space<vmem>>, vector<144x1xf32>
    %c0_3 = arith.constant 0 : index
    %c0_4 = arith.constant 0 : index
    %c0_5 = arith.constant 0 : index
    %2 = vector.load %arg2[%c0_3, %c0_4, %c0_5] : memref<5x144x28xf32, #tpu.memory_space<vmem>>, vector<1x144x28xf32>
    %3 = vector.shape_cast %2 : vector<1x144x28xf32> to vector<144x28xf32>
    %c0_6 = arith.constant 0 : index
    %c0_7 = arith.constant 0 : index
    %c0_8 = arith.constant 0 : index
    %4 = vector.load %arg4[%c0_6, %c0_7, %c0_8] : memref<5x56x48xf32, #tpu.memory_space<vmem>>, vector<1x56x48xf32>
    %5 = vector.shape_cast %4 : vector<1x56x48xf32> to vector<56x48xf32>
    %cst = arith.constant dense<0.000000e+00> : vector<28x48xf32>
    %6 = tpu.matmul %0, %5, %cst {dimension_numbers = #tpu.dot_dimension_numbers<[1], [0], [0], [1], [0, 0, 1, 1], [], []>} : vector<28x56xf32>, vector<56x48xf32>, vector<28x48xf32> -> vector<28x48xf32>
    %cst_9 = arith.constant dense<0.000000e+00> : vector<144x48xf32>
    %7 = tpu.matmul %3, %6, %cst_9 {dimension_numbers = #tpu.dot_dimension_numbers<[1], [0], [0], [1], [0, 0, 1, 1], [], []>} : vector<144x28xf32>, vector<28x48xf32>, vector<144x48xf32> -> vector<144x48xf32>
    %c1 = arith.constant 1 : index
    %c0_10 = arith.constant 0 : index
    %c0_11 = arith.constant 0 : index
    %8 = vector.load %arg2[%c1, %c0_10, %c0_11] : memref<5x144x28xf32, #tpu.memory_space<vmem>>, vector<1x144x28xf32>
    %9 = vector.shape_cast %8 : vector<1x144x28xf32> to vector<144x28xf32>
    %c1_12 = arith.constant 1 : index
    %c0_13 = arith.constant 0 : index
    %c0_14 = arith.constant 0 : index
    %10 = vector.load %arg4[%c1_12, %c0_13, %c0_14] : memref<5x56x48xf32, #tpu.memory_space<vmem>>, vector<1x56x48xf32>
    %11 = vector.shape_cast %10 : vector<1x56x48xf32> to vector<56x48xf32>
    %cst_15 = arith.constant dense<0.000000e+00> : vector<28x48xf32>
    %12 = tpu.matmul %0, %11, %cst_15 {dimension_numbers = #tpu.dot_dimension_numbers<[1], [0], [0], [1], [0, 0, 1, 1], [], []>} : vector<28x56xf32>, vector<56x48xf32>, vector<28x48xf32> -> vector<28x48xf32>
    %cst_16 = arith.constant dense<0.000000e+00> : vector<144x48xf32>
    %13 = tpu.matmul %9, %12, %cst_16 {dimension_numbers = #tpu.dot_dimension_numbers<[1], [0], [0], [1], [0, 0, 1, 1], [], []>} : vector<144x28xf32>, vector<28x48xf32>, vector<144x48xf32> -> vector<144x48xf32>
    %14 = arith.addf %7, %13 : vector<144x48xf32>
    %c2 = arith.constant 2 : index
    %c0_17 = arith.constant 0 : index
    %c0_18 = arith.constant 0 : index
    %15 = vector.load %arg2[%c2, %c0_17, %c0_18] : memref<5x144x28xf32, #tpu.memory_space<vmem>>, vector<1x144x28xf32>
    %16 = vector.shape_cast %15 : vector<1x144x28xf32> to vector<144x28xf32>
    %c2_19 = arith.constant 2 : index
    %c0_20 = arith.constant 0 : index
    %c0_21 = arith.constant 0 : index
    %17 = vector.load %arg4[%c2_19, %c0_20, %c0_21] : memref<5x56x48xf32, #tpu.memory_space<vmem>>, vector<1x56x48xf32>
    %18 = vector.shape_cast %17 : vector<1x56x48xf32> to vector<56x48xf32>
    %cst_22 = arith.constant dense<0.000000e+00> : vector<28x48xf32>
    %19 = tpu.matmul %0, %18, %cst_22 {dimension_numbers = #tpu.dot_dimension_numbers<[1], [0], [0], [1], [0, 0, 1, 1], [], []>} : vector<28x56xf32>, vector<56x48xf32>, vector<28x48xf32> -> vector<28x48xf32>
    %cst_23 = arith.constant dense<0.000000e+00> : vector<144x48xf32>
    %20 = tpu.matmul %16, %19, %cst_23 {dimension_numbers = #tpu.dot_dimension_numbers<[1], [0], [0], [1], [0, 0, 1, 1], [], []>} : vector<144x28xf32>, vector<28x48xf32>, vector<144x48xf32> -> vector<144x48xf32>
    %21 = arith.addf %14, %20 : vector<144x48xf32>
    %c3 = arith.constant 3 : index
    %c0_24 = arith.constant 0 : index
    %c0_25 = arith.constant 0 : index
    %22 = vector.load %arg2[%c3, %c0_24, %c0_25] : memref<5x144x28xf32, #tpu.memory_space<vmem>>, vector<1x144x28xf32>
    %23 = vector.shape_cast %22 : vector<1x144x28xf32> to vector<144x28xf32>
    %c3_26 = arith.constant 3 : index
    %c0_27 = arith.constant 0 : index
    %c0_28 = arith.constant 0 : index
    %24 = vector.load %arg4[%c3_26, %c0_27, %c0_28] : memref<5x56x48xf32, #tpu.memory_space<vmem>>, vector<1x56x48xf32>
    %25 = vector.shape_cast %24 : vector<1x56x48xf32> to vector<56x48xf32>
    %cst_29 = arith.constant dense<0.000000e+00> : vector<28x48xf32>
    %26 = tpu.matmul %0, %25, %cst_29 {dimension_numbers = #tpu.dot_dimension_numbers<[1], [0], [0], [1], [0, 0, 1, 1], [], []>} : vector<28x56xf32>, vector<56x48xf32>, vector<28x48xf32> -> vector<28x48xf32>
    %cst_30 = arith.constant dense<0.000000e+00> : vector<144x48xf32>
    %27 = tpu.matmul %23, %26, %cst_30 {dimension_numbers = #tpu.dot_dimension_numbers<[1], [0], [0], [1], [0, 0, 1, 1], [], []>} : vector<144x28xf32>, vector<28x48xf32>, vector<144x48xf32> -> vector<144x48xf32>
    %28 = arith.addf %21, %27 : vector<144x48xf32>
    %c4 = arith.constant 4 : index
    %c0_31 = arith.constant 0 : index
    %c0_32 = arith.constant 0 : index
    %29 = vector.load %arg2[%c4, %c0_31, %c0_32] : memref<5x144x28xf32, #tpu.memory_space<vmem>>, vector<1x144x28xf32>
    %30 = vector.shape_cast %29 : vector<1x144x28xf32> to vector<144x28xf32>
    %c4_33 = arith.constant 4 : index
    %c0_34 = arith.constant 0 : index
    %c0_35 = arith.constant 0 : index
    %31 = vector.load %arg4[%c4_33, %c0_34, %c0_35] : memref<5x56x48xf32, #tpu.memory_space<vmem>>, vector<1x56x48xf32>
    %32 = vector.shape_cast %31 : vector<1x56x48xf32> to vector<56x48xf32>
    %cst_36 = arith.constant dense<0.000000e+00> : vector<28x48xf32>
    %33 = tpu.matmul %0, %32, %cst_36 {dimension_numbers = #tpu.dot_dimension_numbers<[1], [0], [0], [1], [0, 0, 1, 1], [], []>} : vector<28x56xf32>, vector<56x48xf32>, vector<28x48xf32> -> vector<28x48xf32>
    %cst_37 = arith.constant dense<0.000000e+00> : vector<144x48xf32>
    %34 = tpu.matmul %30, %33, %cst_37 {dimension_numbers = #tpu.dot_dimension_numbers<[1], [0], [0], [1], [0, 0, 1, 1], [], []>} : vector<144x28xf32>, vector<28x48xf32>, vector<144x48xf32> -> vector<144x48xf32>
    %35 = arith.addf %28, %34 : vector<144x48xf32>
    %36 = vector.broadcast %1 : vector<144x1xf32> to vector<144x48xf32>
    %37 = arith.addf %35, %36 : vector<144x48xf32>
    %cst_38 = arith.constant 0.000000e+00 : f32
    %38 = vector.broadcast %cst_38 : f32 to vector<144x48xf32>
    %39 = arith.maximumf %37, %38 : vector<144x48xf32>
    %c0_39 = arith.constant 0 : index
    %c0_40 = arith.constant 0 : index
    %c0_41 = arith.constant 0 : index
    %40 = vector.load %arg6[%c0_39, %c0_40, %c0_41] : memref<2x48x24xf32, #tpu.memory_space<vmem>>, vector<1x48x24xf32>
    %41 = vector.shape_cast %40 : vector<1x48x24xf32> to vector<48x24xf32>
    %cst_42 = arith.constant dense<0.000000e+00> : vector<144x24xf32>
    %42 = tpu.matmul %39, %41, %cst_42 {dimension_numbers = #tpu.dot_dimension_numbers<[1], [0], [0], [1], [0, 0, 1, 1], [], []>} : vector<144x48xf32>, vector<48x24xf32>, vector<144x24xf32> -> vector<144x24xf32>
    %c0_43 = arith.constant 0 : index
    %c0_44 = arith.constant 0 : index
    %c0_45 = arith.constant 0 : index
    %43 = vector.load %arg5[%c0_43, %c0_44, %c0_45] : memref<2x72x144xf32, #tpu.memory_space<vmem>>, vector<1x72x144xf32>
    %44 = vector.shape_cast %43 : vector<1x72x144xf32> to vector<72x144xf32>
    %cst_46 = arith.constant dense<0.000000e+00> : vector<72x24xf32>
    %45 = tpu.matmul %44, %42, %cst_46 {dimension_numbers = #tpu.dot_dimension_numbers<[1], [0], [0], [1], [0, 0, 1, 1], [], []>} : vector<72x144xf32>, vector<144x24xf32>, vector<72x24xf32> -> vector<72x24xf32>
    %c1_47 = arith.constant 1 : index
    %c0_48 = arith.constant 0 : index
    %c0_49 = arith.constant 0 : index
    %46 = vector.load %arg5[%c1_47, %c0_48, %c0_49] : memref<2x72x144xf32, #tpu.memory_space<vmem>>, vector<1x72x144xf32>
    %47 = vector.shape_cast %46 : vector<1x72x144xf32> to vector<72x144xf32>
    %cst_50 = arith.constant dense<0.000000e+00> : vector<72x24xf32>
    %48 = tpu.matmul %47, %42, %cst_50 {dimension_numbers = #tpu.dot_dimension_numbers<[1], [0], [0], [1], [0, 0, 1, 1], [], []>} : vector<72x144xf32>, vector<144x24xf32>, vector<72x24xf32> -> vector<72x24xf32>
    %49 = arith.maximumf %45, %48 : vector<72x24xf32>
    %c1_51 = arith.constant 1 : index
    %c0_52 = arith.constant 0 : index
    %c0_53 = arith.constant 0 : index
    %50 = vector.load %arg6[%c1_51, %c0_52, %c0_53] : memref<2x48x24xf32, #tpu.memory_space<vmem>>, vector<1x48x24xf32>
    %51 = vector.shape_cast %50 : vector<1x48x24xf32> to vector<48x24xf32>
    %cst_54 = arith.constant dense<0.000000e+00> : vector<144x24xf32>
    %52 = tpu.matmul %39, %51, %cst_54 {dimension_numbers = #tpu.dot_dimension_numbers<[1], [0], [0], [1], [0, 0, 1, 1], [], []>} : vector<144x48xf32>, vector<48x24xf32>, vector<144x24xf32> -> vector<144x24xf32>
    %c0_55 = arith.constant 0 : index
    %c0_56 = arith.constant 0 : index
    %c0_57 = arith.constant 0 : index
    %53 = vector.load %arg5[%c0_55, %c0_56, %c0_57] : memref<2x72x144xf32, #tpu.memory_space<vmem>>, vector<1x72x144xf32>
    %54 = vector.shape_cast %53 : vector<1x72x144xf32> to vector<72x144xf32>
    %cst_58 = arith.constant dense<0.000000e+00> : vector<72x24xf32>
    %55 = tpu.matmul %54, %52, %cst_58 {dimension_numbers = #tpu.dot_dimension_numbers<[1], [0], [0], [1], [0, 0, 1, 1], [], []>} : vector<72x144xf32>, vector<144x24xf32>, vector<72x24xf32> -> vector<72x24xf32>
    %56 = arith.maximumf %49, %55 : vector<72x24xf32>
    %c1_59 = arith.constant 1 : index
    %c0_60 = arith.constant 0 : index
    %c0_61 = arith.constant 0 : index
    %57 = vector.load %arg5[%c1_59, %c0_60, %c0_61] : memref<2x72x144xf32, #tpu.memory_space<vmem>>, vector<1x72x144xf32>
    %58 = vector.shape_cast %57 : vector<1x72x144xf32> to vector<72x144xf32>
    %cst_62 = arith.constant dense<0.000000e+00> : vector<72x24xf32>
    %59 = tpu.matmul %58, %52, %cst_62 {dimension_numbers = #tpu.dot_dimension_numbers<[1], [0], [0], [1], [0, 0, 1, 1], [], []>} : vector<72x144xf32>, vector<144x24xf32>, vector<72x24xf32> -> vector<72x24xf32>
    %60 = arith.maximumf %56, %59 : vector<72x24xf32>
    %c0_63 = arith.constant 0 : index
    %c0_64 = arith.constant 0 : index
    %61 = vector.load %arg8[%c0_63, %c0_64] : memref<128x1xf32, #tpu.memory_space<vmem>>, vector<128x1xf32>
    %c0_65 = arith.constant 0 : index
    %c0_66 = arith.constant 0 : index
    %c0_67 = arith.constant 0 : index
    %62 = vector.load %arg7[%c0_65, %c0_66, %c0_67] : memref<5x128x72xf32, #tpu.memory_space<vmem>>, vector<1x128x72xf32>
    %63 = vector.shape_cast %62 : vector<1x128x72xf32> to vector<128x72xf32>
    %c0_68 = arith.constant 0 : index
    %c0_69 = arith.constant 0 : index
    %c0_70 = arith.constant 0 : index
    %64 = vector.load %arg9[%c0_68, %c0_69, %c0_70] : memref<5x24x16xf32, #tpu.memory_space<vmem>>, vector<1x24x16xf32>
    %65 = vector.shape_cast %64 : vector<1x24x16xf32> to vector<24x16xf32>
    %cst_71 = arith.constant dense<0.000000e+00> : vector<72x16xf32>
    %66 = tpu.matmul %60, %65, %cst_71 {dimension_numbers = #tpu.dot_dimension_numbers<[1], [0], [0], [1], [0, 0, 1, 1], [], []>} : vector<72x24xf32>, vector<24x16xf32>, vector<72x16xf32> -> vector<72x16xf32>
    %cst_72 = arith.constant dense<0.000000e+00> : vector<128x16xf32>
    %67 = tpu.matmul %63, %66, %cst_72 {dimension_numbers = #tpu.dot_dimension_numbers<[1], [0], [0], [1], [0, 0, 1, 1], [], []>} : vector<128x72xf32>, vector<72x16xf32>, vector<128x16xf32> -> vector<128x16xf32>
    %c1_73 = arith.constant 1 : index
    %c0_74 = arith.constant 0 : index
    %c0_75 = arith.constant 0 : index
    %68 = vector.load %arg7[%c1_73, %c0_74, %c0_75] : memref<5x128x72xf32, #tpu.memory_space<vmem>>, vector<1x128x72xf32>
    %69 = vector.shape_cast %68 : vector<1x128x72xf32> to vector<128x72xf32>
    %c1_76 = arith.constant 1 : index
    %c0_77 = arith.constant 0 : index
    %c0_78 = arith.constant 0 : index
    %70 = vector.load %arg9[%c1_76, %c0_77, %c0_78] : memref<5x24x16xf32, #tpu.memory_space<vmem>>, vector<1x24x16xf32>
    %71 = vector.shape_cast %70 : vector<1x24x16xf32> to vector<24x16xf32>
    %cst_79 = arith.constant dense<0.000000e+00> : vector<72x16xf32>
    %72 = tpu.matmul %60, %71, %cst_79 {dimension_numbers = #tpu.dot_dimension_numbers<[1], [0], [0], [1], [0, 0, 1, 1], [], []>} : vector<72x24xf32>, vector<24x16xf32>, vector<72x16xf32> -> vector<72x16xf32>
    %cst_80 = arith.constant dense<0.000000e+00> : vector<128x16xf32>
    %73 = tpu.matmul %69, %72, %cst_80 {dimension_numbers = #tpu.dot_dimension_numbers<[1], [0], [0], [1], [0, 0, 1, 1], [], []>} : vector<128x72xf32>, vector<72x16xf32>, vector<128x16xf32> -> vector<128x16xf32>
    %74 = arith.addf %67, %73 : vector<128x16xf32>
    %c2_81 = arith.constant 2 : index
    %c0_82 = arith.constant 0 : index
    %c0_83 = arith.constant 0 : index
    %75 = vector.load %arg7[%c2_81, %c0_82, %c0_83] : memref<5x128x72xf32, #tpu.memory_space<vmem>>, vector<1x128x72xf32>
    %76 = vector.shape_cast %75 : vector<1x128x72xf32> to vector<128x72xf32>
    %c2_84 = arith.constant 2 : index
    %c0_85 = arith.constant 0 : index
    %c0_86 = arith.constant 0 : index
    %77 = vector.load %arg9[%c2_84, %c0_85, %c0_86] : memref<5x24x16xf32, #tpu.memory_space<vmem>>, vector<1x24x16xf32>
    %78 = vector.shape_cast %77 : vector<1x24x16xf32> to vector<24x16xf32>
    %cst_87 = arith.constant dense<0.000000e+00> : vector<72x16xf32>
    %79 = tpu.matmul %60, %78, %cst_87 {dimension_numbers = #tpu.dot_dimension_numbers<[1], [0], [0], [1], [0, 0, 1, 1], [], []>} : vector<72x24xf32>, vector<24x16xf32>, vector<72x16xf32> -> vector<72x16xf32>
    %cst_88 = arith.constant dense<0.000000e+00> : vector<128x16xf32>
    %80 = tpu.matmul %76, %79, %cst_88 {dimension_numbers = #tpu.dot_dimension_numbers<[1], [0], [0], [1], [0, 0, 1, 1], [], []>} : vector<128x72xf32>, vector<72x16xf32>, vector<128x16xf32> -> vector<128x16xf32>
    %81 = arith.addf %74, %80 : vector<128x16xf32>
    %c3_89 = arith.constant 3 : index
    %c0_90 = arith.constant 0 : index
    %c0_91 = arith.constant 0 : index
    %82 = vector.load %arg7[%c3_89, %c0_90, %c0_91] : memref<5x128x72xf32, #tpu.memory_space<vmem>>, vector<1x128x72xf32>
    %83 = vector.shape_cast %82 : vector<1x128x72xf32> to vector<128x72xf32>
    %c3_92 = arith.constant 3 : index
    %c0_93 = arith.constant 0 : index
    %c0_94 = arith.constant 0 : index
    %84 = vector.load %arg9[%c3_92, %c0_93, %c0_94] : memref<5x24x16xf32, #tpu.memory_space<vmem>>, vector<1x24x16xf32>
    %85 = vector.shape_cast %84 : vector<1x24x16xf32> to vector<24x16xf32>
    %cst_95 = arith.constant dense<0.000000e+00> : vector<72x16xf32>
    %86 = tpu.matmul %60, %85, %cst_95 {dimension_numbers = #tpu.dot_dimension_numbers<[1], [0], [0], [1], [0, 0, 1, 1], [], []>} : vector<72x24xf32>, vector<24x16xf32>, vector<72x16xf32> -> vector<72x16xf32>
    %cst_96 = arith.constant dense<0.000000e+00> : vector<128x16xf32>
    %87 = tpu.matmul %83, %86, %cst_96 {dimension_numbers = #tpu.dot_dimension_numbers<[1], [0], [0], [1], [0, 0, 1, 1], [], []>} : vector<128x72xf32>, vector<72x16xf32>, vector<128x16xf32> -> vector<128x16xf32>
    %88 = arith.addf %81, %87 : vector<128x16xf32>
    %c4_97 = arith.constant 4 : index
    %c0_98 = arith.constant 0 : index
    %c0_99 = arith.constant 0 : index
    %89 = vector.load %arg7[%c4_97, %c0_98, %c0_99] : memref<5x128x72xf32, #tpu.memory_space<vmem>>, vector<1x128x72xf32>
    %90 = vector.shape_cast %89 : vector<1x128x72xf32> to vector<128x72xf32>
    %c4_100 = arith.constant 4 : index
    %c0_101 = arith.constant 0 : index
    %c0_102 = arith.constant 0 : index
    %91 = vector.load %arg9[%c4_100, %c0_101, %c0_102] : memref<5x24x16xf32, #tpu.memory_space<vmem>>, vector<1x24x16xf32>
    %92 = vector.shape_cast %91 : vector<1x24x16xf32> to vector<24x16xf32>
    %cst_103 = arith.constant dense<0.000000e+00> : vector<72x16xf32>
    %93 = tpu.matmul %60, %92, %cst_103 {dimension_numbers = #tpu.dot_dimension_numbers<[1], [0], [0], [1], [0, 0, 1, 1], [], []>} : vector<72x24xf32>, vector<24x16xf32>, vector<72x16xf32> -> vector<72x16xf32>
    %cst_104 = arith.constant dense<0.000000e+00> : vector<128x16xf32>
    %94 = tpu.matmul %90, %93, %cst_104 {dimension_numbers = #tpu.dot_dimension_numbers<[1], [0], [0], [1], [0, 0, 1, 1], [], []>} : vector<128x72xf32>, vector<72x16xf32>, vector<128x16xf32> -> vector<128x16xf32>
    %95 = arith.addf %88, %94 : vector<128x16xf32>
    %96 = vector.broadcast %61 : vector<128x1xf32> to vector<128x16xf32>
    %97 = arith.addf %95, %96 : vector<128x16xf32>
    %cst_105 = arith.constant 0.000000e+00 : f32
    %98 = vector.broadcast %cst_105 : f32 to vector<128x16xf32>
    %99 = arith.maximumf %97, %98 : vector<128x16xf32>
    %c0_106 = arith.constant 0 : index
    %c0_107 = arith.constant 0 : index
    %c0_108 = arith.constant 0 : index
    %100 = vector.load %arg11[%c0_106, %c0_107, %c0_108] : memref<2x16x8xf32, #tpu.memory_space<vmem>>, vector<1x16x8xf32>
    %101 = vector.shape_cast %100 : vector<1x16x8xf32> to vector<16x8xf32>
    %cst_109 = arith.constant dense<0.000000e+00> : vector<128x8xf32>
    %102 = tpu.matmul %99, %101, %cst_109 {dimension_numbers = #tpu.dot_dimension_numbers<[1], [0], [0], [1], [0, 0, 1, 1], [], []>} : vector<128x16xf32>, vector<16x8xf32>, vector<128x8xf32> -> vector<128x8xf32>
    %c0_110 = arith.constant 0 : index
    %c0_111 = arith.constant 0 : index
    %c0_112 = arith.constant 0 : index
    %103 = vector.load %arg10[%c0_110, %c0_111, %c0_112] : memref<2x64x128xf32, #tpu.memory_space<vmem>>, vector<1x64x128xf32>
    %104 = vector.shape_cast %103 : vector<1x64x128xf32> to vector<64x128xf32>
    %cst_113 = arith.constant dense<0.000000e+00> : vector<64x8xf32>
    %105 = tpu.matmul %104, %102, %cst_113 {dimension_numbers = #tpu.dot_dimension_numbers<[1], [0], [0], [1], [0, 0, 1, 1], [], []>} : vector<64x128xf32>, vector<128x8xf32>, vector<64x8xf32> -> vector<64x8xf32>
    %c1_114 = arith.constant 1 : index
    %c0_115 = arith.constant 0 : index
    %c0_116 = arith.constant 0 : index
    %106 = vector.load %arg10[%c1_114, %c0_115, %c0_116] : memref<2x64x128xf32, #tpu.memory_space<vmem>>, vector<1x64x128xf32>
    %107 = vector.shape_cast %106 : vector<1x64x128xf32> to vector<64x128xf32>
    %cst_117 = arith.constant dense<0.000000e+00> : vector<64x8xf32>
    %108 = tpu.matmul %107, %102, %cst_117 {dimension_numbers = #tpu.dot_dimension_numbers<[1], [0], [0], [1], [0, 0, 1, 1], [], []>} : vector<64x128xf32>, vector<128x8xf32>, vector<64x8xf32> -> vector<64x8xf32>
    %109 = arith.maximumf %105, %108 : vector<64x8xf32>
    %c1_118 = arith.constant 1 : index
    %c0_119 = arith.constant 0 : index
    %c0_120 = arith.constant 0 : index
    %110 = vector.load %arg11[%c1_118, %c0_119, %c0_120] : memref<2x16x8xf32, #tpu.memory_space<vmem>>, vector<1x16x8xf32>
    %111 = vector.shape_cast %110 : vector<1x16x8xf32> to vector<16x8xf32>
    %cst_121 = arith.constant dense<0.000000e+00> : vector<128x8xf32>
    %112 = tpu.matmul %99, %111, %cst_121 {dimension_numbers = #tpu.dot_dimension_numbers<[1], [0], [0], [1], [0, 0, 1, 1], [], []>} : vector<128x16xf32>, vector<16x8xf32>, vector<128x8xf32> -> vector<128x8xf32>
    %c0_122 = arith.constant 0 : index
    %c0_123 = arith.constant 0 : index
    %c0_124 = arith.constant 0 : index
    %113 = vector.load %arg10[%c0_122, %c0_123, %c0_124] : memref<2x64x128xf32, #tpu.memory_space<vmem>>, vector<1x64x128xf32>
    %114 = vector.shape_cast %113 : vector<1x64x128xf32> to vector<64x128xf32>
    %cst_125 = arith.constant dense<0.000000e+00> : vector<64x8xf32>
    %115 = tpu.matmul %114, %112, %cst_125 {dimension_numbers = #tpu.dot_dimension_numbers<[1], [0], [0], [1], [0, 0, 1, 1], [], []>} : vector<64x128xf32>, vector<128x8xf32>, vector<64x8xf32> -> vector<64x8xf32>
    %116 = arith.maximumf %109, %115 : vector<64x8xf32>
    %c1_126 = arith.constant 1 : index
    %c0_127 = arith.constant 0 : index
    %c0_128 = arith.constant 0 : index
    %117 = vector.load %arg10[%c1_126, %c0_127, %c0_128] : memref<2x64x128xf32, #tpu.memory_space<vmem>>, vector<1x64x128xf32>
    %118 = vector.shape_cast %117 : vector<1x64x128xf32> to vector<64x128xf32>
    %cst_129 = arith.constant dense<0.000000e+00> : vector<64x8xf32>
    %119 = tpu.matmul %118, %112, %cst_129 {dimension_numbers = #tpu.dot_dimension_numbers<[1], [0], [0], [1], [0, 0, 1, 1], [], []>} : vector<64x128xf32>, vector<128x8xf32>, vector<64x8xf32> -> vector<64x8xf32>
    %120 = arith.maximumf %116, %119 : vector<64x8xf32>
    %c0_130 = arith.constant 0 : index
    %c0_131 = arith.constant 0 : index
    %c0_132 = arith.constant 0 : index
    %121 = vector.load %arg12[%c0_130, %c0_131, %c0_132] : memref<4x8x2xf32, #tpu.memory_space<vmem>>, vector<1x8x2xf32>
    %122 = vector.shape_cast %121 : vector<1x8x2xf32> to vector<8x2xf32>
    %cst_133 = arith.constant dense<0.000000e+00> : vector<64x2xf32>
    %123 = tpu.matmul %120, %122, %cst_133 {dimension_numbers = #tpu.dot_dimension_numbers<[1], [0], [0], [1], [0, 0, 1, 1], [], []>} : vector<64x8xf32>, vector<8x2xf32>, vector<64x2xf32> -> vector<64x2xf32>
    %c0_134 = arith.constant 0 : index
    %c0_135 = arith.constant 0 : index
    %c0_136 = arith.constant 0 : index
    %124 = vector.load %arg13[%c0_134, %c0_135, %c0_136] : memref<4x120x64xf32, #tpu.memory_space<vmem>>, vector<1x120x64xf32>
    %125 = vector.shape_cast %124 : vector<1x120x64xf32> to vector<120x64xf32>
    %cst_137 = arith.constant dense<0.000000e+00> : vector<120x2xf32>
    %126 = tpu.matmul %125, %123, %cst_137 {dimension_numbers = #tpu.dot_dimension_numbers<[1], [0], [0], [1], [0, 0, 1, 1], [], []>} : vector<120x64xf32>, vector<64x2xf32>, vector<120x2xf32> -> vector<120x2xf32>
    %c1_138 = arith.constant 1 : index
    %c0_139 = arith.constant 0 : index
    %c0_140 = arith.constant 0 : index
    %127 = vector.load %arg12[%c1_138, %c0_139, %c0_140] : memref<4x8x2xf32, #tpu.memory_space<vmem>>, vector<1x8x2xf32>
    %128 = vector.shape_cast %127 : vector<1x8x2xf32> to vector<8x2xf32>
    %cst_141 = arith.constant dense<0.000000e+00> : vector<64x2xf32>
    %129 = tpu.matmul %120, %128, %cst_141 {dimension_numbers = #tpu.dot_dimension_numbers<[1], [0], [0], [1], [0, 0, 1, 1], [], []>} : vector<64x8xf32>, vector<8x2xf32>, vector<64x2xf32> -> vector<64x2xf32>
    %c1_142 = arith.constant 1 : index
    %c0_143 = arith.constant 0 : index
    %c0_144 = arith.constant 0 : index
    %130 = vector.load %arg13[%c1_142, %c0_143, %c0_144] : memref<4x120x64xf32, #tpu.memory_space<vmem>>, vector<1x120x64xf32>
    %131 = vector.shape_cast %130 : vector<1x120x64xf32> to vector<120x64xf32>
    %cst_145 = arith.constant dense<0.000000e+00> : vector<120x2xf32>
    %132 = tpu.matmul %131, %129, %cst_145 {dimension_numbers = #tpu.dot_dimension_numbers<[1], [0], [0], [1], [0, 0, 1, 1], [], []>} : vector<120x64xf32>, vector<64x2xf32>, vector<120x2xf32> -> vector<120x2xf32>
    %133 = arith.addf %126, %132 : vector<120x2xf32>
    %c2_146 = arith.constant 2 : index
    %c0_147 = arith.constant 0 : index
    %c0_148 = arith.constant 0 : index
    %134 = vector.load %arg12[%c2_146, %c0_147, %c0_148] : memref<4x8x2xf32, #tpu.memory_space<vmem>>, vector<1x8x2xf32>
    %135 = vector.shape_cast %134 : vector<1x8x2xf32> to vector<8x2xf32>
    %cst_149 = arith.constant dense<0.000000e+00> : vector<64x2xf32>
    %136 = tpu.matmul %120, %135, %cst_149 {dimension_numbers = #tpu.dot_dimension_numbers<[1], [0], [0], [1], [0, 0, 1, 1], [], []>} : vector<64x8xf32>, vector<8x2xf32>, vector<64x2xf32> -> vector<64x2xf32>
    %c2_150 = arith.constant 2 : index
    %c0_151 = arith.constant 0 : index
    %c0_152 = arith.constant 0 : index
    %137 = vector.load %arg13[%c2_150, %c0_151, %c0_152] : memref<4x120x64xf32, #tpu.memory_space<vmem>>, vector<1x120x64xf32>
    %138 = vector.shape_cast %137 : vector<1x120x64xf32> to vector<120x64xf32>
    %cst_153 = arith.constant dense<0.000000e+00> : vector<120x2xf32>
    %139 = tpu.matmul %138, %136, %cst_153 {dimension_numbers = #tpu.dot_dimension_numbers<[1], [0], [0], [1], [0, 0, 1, 1], [], []>} : vector<120x64xf32>, vector<64x2xf32>, vector<120x2xf32> -> vector<120x2xf32>
    %140 = arith.addf %133, %139 : vector<120x2xf32>
    %c3_154 = arith.constant 3 : index
    %c0_155 = arith.constant 0 : index
    %c0_156 = arith.constant 0 : index
    %141 = vector.load %arg12[%c3_154, %c0_155, %c0_156] : memref<4x8x2xf32, #tpu.memory_space<vmem>>, vector<1x8x2xf32>
    %142 = vector.shape_cast %141 : vector<1x8x2xf32> to vector<8x2xf32>
    %cst_157 = arith.constant dense<0.000000e+00> : vector<64x2xf32>
    %143 = tpu.matmul %120, %142, %cst_157 {dimension_numbers = #tpu.dot_dimension_numbers<[1], [0], [0], [1], [0, 0, 1, 1], [], []>} : vector<64x8xf32>, vector<8x2xf32>, vector<64x2xf32> -> vector<64x2xf32>
    %c3_158 = arith.constant 3 : index
    %c0_159 = arith.constant 0 : index
    %c0_160 = arith.constant 0 : index
    %144 = vector.load %arg13[%c3_158, %c0_159, %c0_160] : memref<4x120x64xf32, #tpu.memory_space<vmem>>, vector<1x120x64xf32>
    %145 = vector.shape_cast %144 : vector<1x120x64xf32> to vector<120x64xf32>
    %cst_161 = arith.constant dense<0.000000e+00> : vector<120x2xf32>
    %146 = tpu.matmul %145, %143, %cst_161 {dimension_numbers = #tpu.dot_dimension_numbers<[1], [0], [0], [1], [0, 0, 1, 1], [], []>} : vector<120x64xf32>, vector<64x2xf32>, vector<120x2xf32> -> vector<120x2xf32>
    %147 = arith.addf %140, %146 : vector<120x2xf32>
    %c0_162 = arith.constant 0 : index
    %c0_163 = arith.constant 0 : index
    %148 = vector.load %arg14[%c0_162, %c0_163] : memref<120x1xf32, #tpu.memory_space<vmem>>, vector<120x1xf32>
    %149 = vector.broadcast %148 : vector<120x1xf32> to vector<120x2xf32>
    %150 = arith.addf %147, %149 : vector<120x2xf32>
    %cst_164 = arith.constant 0.000000e+00 : f32
    %151 = vector.broadcast %cst_164 : f32 to vector<120x2xf32>
    %152 = arith.maximumf %150, %151 : vector<120x2xf32>
    %c0_165 = arith.constant 0 : index
    %c0_166 = arith.constant 0 : index
    %153 = vector.load %arg15[%c0_165, %c0_166] : memref<84x120xf32, #tpu.memory_space<vmem>>, vector<84x120xf32>
    %cst_167 = arith.constant dense<0.000000e+00> : vector<84x2xf32>
    %154 = tpu.matmul %153, %152, %cst_167 {dimension_numbers = #tpu.dot_dimension_numbers<[1], [0], [0], [1], [0, 0, 1, 1], [], []>} : vector<84x120xf32>, vector<120x2xf32>, vector<84x2xf32> -> vector<84x2xf32>
    %c0_168 = arith.constant 0 : index
    %c0_169 = arith.constant 0 : index
    %155 = vector.load %arg16[%c0_168, %c0_169] : memref<84x1xf32, #tpu.memory_space<vmem>>, vector<84x1xf32>
    %156 = vector.broadcast %155 : vector<84x1xf32> to vector<84x2xf32>
    %157 = arith.addf %154, %156 : vector<84x2xf32>
    %cst_170 = arith.constant 0.000000e+00 : f32
    %158 = vector.broadcast %cst_170 : f32 to vector<84x2xf32>
    %159 = arith.maximumf %157, %158 : vector<84x2xf32>
    %c0_171 = arith.constant 0 : index
    %c0_172 = arith.constant 0 : index
    %160 = vector.load %arg17[%c0_171, %c0_172] : memref<10x84xf32, #tpu.memory_space<vmem>>, vector<10x84xf32>
    %cst_173 = arith.constant dense<0.000000e+00> : vector<10x2xf32>
    %161 = tpu.matmul %160, %159, %cst_173 {dimension_numbers = #tpu.dot_dimension_numbers<[1], [0], [0], [1], [0, 0, 1, 1], [], []>} : vector<10x84xf32>, vector<84x2xf32>, vector<10x2xf32> -> vector<10x2xf32>
    %c0_174 = arith.constant 0 : index
    %c0_175 = arith.constant 0 : index
    %162 = vector.load %arg18[%c0_174, %c0_175] : memref<10x1xf32, #tpu.memory_space<vmem>>, vector<10x1xf32>
    %163 = vector.broadcast %162 : vector<10x1xf32> to vector<10x2xf32>
    %164 = arith.addf %161, %163 : vector<10x2xf32>
    %c0_176 = arith.constant 0 : index
    %c0_177 = arith.constant 0 : index
    %165 = vector.load %arg19[%c0_176, %c0_177] : memref<10x2xf32, #tpu.memory_space<vmem>>, vector<10x2xf32>
    tpu.vector_store %arg19[%c0_176, %c0_177], %164 {strides = array<i32>} : memref<10x2xf32, #tpu.memory_space<vmem>>, vector<10x2xf32>,
    return
  }
  func.func @transform_0(%arg0: i32) -> (i32, i32) {
    %c0_i32 = arith.constant 0 : i32
    %c0_i32_0 = arith.constant 0 : i32
    %c0_i32_1 = arith.constant 0 : i32
    return %c0_i32, %c0_i32_0 : i32, i32
  }
  func.func @transform_1(%arg0: i32) -> (i32, i32, i32) {
    %c0_i32 = arith.constant 0 : i32
    %c0_i32_0 = arith.constant 0 : i32
    %c0_i32_1 = arith.constant 0 : i32
    %c0_i32_2 = arith.constant 0 : i32
    return %c0_i32, %c0_i32_0, %c0_i32_1 : i32, i32, i32
  }
  func.func @transform_2(%arg0: i32) -> (i32, i32) {
    %c0_i32 = arith.constant 0 : i32
    %c0_i32_0 = arith.constant 0 : i32
    %c0_i32_1 = arith.constant 0 : i32
    return %c0_i32, %c0_i32_0 : i32, i32
  }
  func.func @transform_3(%arg0: i32) -> (i32, i32, i32) {
    %c0_i32 = arith.constant 0 : i32
    %c0_i32_0 = arith.constant 0 : i32
    %c0_i32_1 = arith.constant 0 : i32
    %c0_i32_2 = arith.constant 0 : i32
    return %c0_i32, %c0_i32_0, %c0_i32_1 : i32, i32, i32
  }
  func.func @transform_4(%arg0: i32) -> (i32, i32, i32) {
    %c0_i32 = arith.constant 0 : i32
    %c0_i32_0 = arith.constant 0 : i32
    %c0_i32_1 = arith.constant 0 : i32
    %c0_i32_2 = arith.constant 0 : i32
    return %c0_i32, %c0_i32_0, %c0_i32_1 : i32, i32, i32
  }
  func.func @transform_5(%arg0: i32) -> (i32, i32, i32) {
    %c0_i32 = arith.constant 0 : i32
    %c0_i32_0 = arith.constant 0 : i32
    %c0_i32_1 = arith.constant 0 : i32
    %c0_i32_2 = arith.constant 0 : i32
    return %c0_i32, %c0_i32_0, %c0_i32_1 : i32, i32, i32
  }
  func.func @transform_6(%arg0: i32) -> (i32, i32, i32) {
    %c0_i32 = arith.constant 0 : i32
    %c0_i32_0 = arith.constant 0 : i32
    %c0_i32_1 = arith.constant 0 : i32
    %c0_i32_2 = arith.constant 0 : i32
    return %c0_i32, %c0_i32_0, %c0_i32_1 : i32, i32, i32
  }
  func.func @transform_7(%arg0: i32) -> (i32, i32) {
    %c0_i32 = arith.constant 0 : i32
    %c0_i32_0 = arith.constant 0 : i32
    %c0_i32_1 = arith.constant 0 : i32
    return %c0_i32, %c0_i32_0 : i32, i32
  }
  func.func @transform_8(%arg0: i32) -> (i32, i32, i32) {
    %c0_i32 = arith.constant 0 : i32
    %c0_i32_0 = arith.constant 0 : i32
    %c0_i32_1 = arith.constant 0 : i32
    %c0_i32_2 = arith.constant 0 : i32
    return %c0_i32, %c0_i32_0, %c0_i32_1 : i32, i32, i32
  }
  func.func @transform_9(%arg0: i32) -> (i32, i32, i32) {
    %c0_i32 = arith.constant 0 : i32
    %c0_i32_0 = arith.constant 0 : i32
    %c0_i32_1 = arith.constant 0 : i32
    %c0_i32_2 = arith.constant 0 : i32
    return %c0_i32, %c0_i32_0, %c0_i32_1 : i32, i32, i32
  }
  func.func @transform_10(%arg0: i32) -> (i32, i32, i32) {
    %c0_i32 = arith.constant 0 : i32
    %c0_i32_0 = arith.constant 0 : i32
    %c0_i32_1 = arith.constant 0 : i32
    %c0_i32_2 = arith.constant 0 : i32
    return %c0_i32, %c0_i32_0, %c0_i32_1 : i32, i32, i32
  }
  func.func @transform_11(%arg0: i32) -> (i32, i32, i32) {
    %c0_i32 = arith.constant 0 : i32
    %c0_i32_0 = arith.constant 0 : i32
    %c0_i32_1 = arith.constant 0 : i32
    %c0_i32_2 = arith.constant 0 : i32
    return %c0_i32, %c0_i32_0, %c0_i32_1 : i32, i32, i32
  }
  func.func @transform_12(%arg0: i32) -> (i32, i32, i32) {
    %c0_i32 = arith.constant 0 : i32
    %c0_i32_0 = arith.constant 0 : i32
    %c0_i32_1 = arith.constant 0 : i32
    %c0_i32_2 = arith.constant 0 : i32
    return %c0_i32, %c0_i32_0, %c0_i32_1 : i32, i32, i32
  }
  func.func @transform_13(%arg0: i32) -> (i32, i32) {
    %c0_i32 = arith.constant 0 : i32
    %c0_i32_0 = arith.constant 0 : i32
    %c0_i32_1 = arith.constant 0 : i32
    return %c0_i32, %c0_i32_0 : i32, i32
  }
  func.func @transform_14(%arg0: i32) -> (i32, i32) {
    %c0_i32 = arith.constant 0 : i32
    %c0_i32_0 = arith.constant 0 : i32
    %c0_i32_1 = arith.constant 0 : i32
    return %c0_i32, %c0_i32_0 : i32, i32
  }
  func.func @transform_15(%arg0: i32) -> (i32, i32) {
    %c0_i32 = arith.constant 0 : i32
    %c0_i32_0 = arith.constant 0 : i32
    %c0_i32_1 = arith.constant 0 : i32
    return %c0_i32, %c0_i32_0 : i32, i32
  }
  func.func @transform_16(%arg0: i32) -> (i32, i32) {
    %c0_i32 = arith.constant 0 : i32
    %c0_i32_0 = arith.constant 0 : i32
    %c0_i32_1 = arith.constant 0 : i32
    return %c0_i32, %c0_i32_0 : i32, i32
  }
  func.func @transform_17(%arg0: i32) -> (i32, i32) {
    %c0_i32 = arith.constant 0 : i32
    %c0_i32_0 = arith.constant 0 : i32
    %c0_i32_1 = arith.constant 0 : i32
    return %c0_i32, %c0_i32_0 : i32, i32
  }
  func.func @transform_18(%arg0: i32) -> (i32, i32) {
    %c0_i32 = arith.constant 0 : i32
    %c0_i32_0 = arith.constant 0 : i32
    %c0_i32_1 = arith.constant 0 : i32
    return %c0_i32, %c0_i32_0 : i32, i32
  }
}

</mosaic_0001>

<llo_original>
// kernel: lenet_forward.1
$region0: #{lenet_forward.1}
  #allocation0 [shape = 'u32[]', space=smem, size = 0x4, offset = 0x4, fixed_abs, tag = 'smem constant byte address 0x4 - core index']
  #allocation1 [shape = 'u32[144,128]{1,0:T(1,128)}', space=vmem, size = 0x12000, scoped, tag = 'internal scratch']
  %s0 = inlined_call_operand.vmem [shape: f32[28,56], index: 0, kind: input, shape index: {}]
  %s1 = inlined_call_operand.vmem [shape: f32[5,144,28], index: 1, kind: input, shape index: {}]
  %s2 = inlined_call_operand.vmem [shape: f32[144,1], index: 2, kind: input, shape index: {}]
  %s3 = inlined_call_operand.vmem [shape: f32[5,56,48], index: 3, kind: input, shape index: {}]
  %s4 = inlined_call_operand.vmem [shape: f32[2,72,144], index: 4, kind: input, shape index: {}]
  %s5 = inlined_call_operand.vmem [shape: f32[2,48,24], index: 5, kind: input, shape index: {}]
  %s6 = inlined_call_operand.vmem [shape: f32[5,128,72], index: 6, kind: input, shape index: {}]
  %s7 = inlined_call_operand.vmem [shape: f32[128,1], index: 7, kind: input, shape index: {}]
  %s8 = inlined_call_operand.vmem [shape: f32[5,24,16], index: 8, kind: input, shape index: {}]
  %s9 = inlined_call_operand.vmem [shape: f32[2,64,128], index: 9, kind: input, shape index: {}]
  %s10 = inlined_call_operand.vmem [shape: f32[2,16,8], index: 10, kind: input, shape index: {}]
  %s11 = inlined_call_operand.vmem [shape: f32[4,8,2], index: 11, kind: input, shape index: {}]
  %s12 = inlined_call_operand.vmem [shape: f32[4,120,64], index: 12, kind: input, shape index: {}]
  %s13 = inlined_call_operand.vmem [shape: f32[120,1], index: 13, kind: input, shape index: {}]
  %s14 = inlined_call_operand.vmem [shape: f32[84,120], index: 14, kind: input, shape index: {}]
  %s15 = inlined_call_operand.vmem [shape: f32[84,1], index: 15, kind: input, shape index: {}]
  %s16 = inlined_call_operand.vmem [shape: f32[10,84], index: 16, kind: input, shape index: {}]
  %s17 = inlined_call_operand.vmem [shape: f32[10,1], index: 17, kind: input, shape index: {}]
  %s18 = inlined_call_operand.vmem [shape: f32[10,2], index: 18, kind: output, shape index: {}]
  %s19 = sld [smem:[#allocation0]]
  $region82: #{lenet_forward.1} parent=0
    _
  %s21 = ssub.s32 1, %s19
  %s22 = scalar_select 0, %s21, %s19
  // Predicated region
  $region2: #{lenet_forward.1} parent=0 // pred_check
    _
  $region3: #{lenet_forward.1} parent=0 // pred_check_branch
    %24 = sbr.rel (0) target = $region5
  $region4: #{lenet_forward.1} parent=0 // pred_region
    _
  $region5: #{lenet_forward.1} parent=0 // pred_fallthru
    _
  // Predicated region
  $region6: #{lenet_forward.1} parent=0 // pred_check
    _
  $region7: #{lenet_forward.1} parent=0 // pred_check_branch
    %26 = sbr.rel (0) target = $region9
  $region8: #{lenet_forward.1} parent=0 // pred_region
    _
  $region9: #{lenet_forward.1} parent=0 // pred_fallthru
    _
  // Predicated region
  $region10: #{lenet_forward.1} parent=0 // pred_check
    _
  $region11: #{lenet_forward.1} parent=0 // pred_check_branch
    %28 = sbr.rel (0) target = $region13
  $region12: #{lenet_forward.1} parent=0 // pred_region
    _
  $region13: #{lenet_forward.1} parent=0 // pred_fallthru
    _
  // Predicated region
  $region14: #{lenet_forward.1} parent=0 // pred_check
    _
  $region15: #{lenet_forward.1} parent=0 // pred_check_branch
    %30 = sbr.rel (0) target = $region17
  $region16: #{lenet_forward.1} parent=0 // pred_region
    _
  $region17: #{lenet_forward.1} parent=0 // pred_fallthru
    _
  // Predicated region
  $region18: #{lenet_forward.1} parent=0 // pred_check
    _
  $region19: #{lenet_forward.1} parent=0 // pred_check_branch
    %32 = sbr.rel (0) target = $region21
  $region20: #{lenet_forward.1} parent=0 // pred_region
    _
  $region21: #{lenet_forward.1} parent=0 // pred_fallthru
    _
  // Predicated region
  $region22: #{lenet_forward.1} parent=0 // pred_check
    _
  $region23: #{lenet_forward.1} parent=0 // pred_check_branch
    %34 = sbr.rel (0) target = $region25
  $region24: #{lenet_forward.1} parent=0 // pred_region
    _
  $region25: #{lenet_forward.1} parent=0 // pred_fallthru
    _
  // Predicated region
  $region26: #{lenet_forward.1} parent=0 // pred_check
    _
  $region27: #{lenet_forward.1} parent=0 // pred_check_branch
    %36 = sbr.rel (0) target = $region29
  $region28: #{lenet_forward.1} parent=0 // pred_region
    _
  $region29: #{lenet_forward.1} parent=0 // pred_fallthru
    _
  // Predicated region
  $region30: #{lenet_forward.1} parent=0 // pred_check
    _
  $region31: #{lenet_forward.1} parent=0 // pred_check_branch
    %38 = sbr.rel (0) target = $region33
  $region32: #{lenet_forward.1} parent=0 // pred_region
    _
  $region33: #{lenet_forward.1} parent=0 // pred_fallthru
    _
  // Predicated region
  $region34: #{lenet_forward.1} parent=0 // pred_check
    _
  $region35: #{lenet_forward.1} parent=0 // pred_check_branch
    %40 = sbr.rel (0) target = $region37
  $region36: #{lenet_forward.1} parent=0 // pred_region
    _
  $region37: #{lenet_forward.1} parent=0 // pred_fallthru
    _
  // Predicated region
  $region38: #{lenet_forward.1} parent=0 // pred_check
    _
  $region39: #{lenet_forward.1} parent=0 // pred_check_branch
    %42 = sbr.rel (0) target = $region41
  $region40: #{lenet_forward.1} parent=0 // pred_region
    _
  $region41: #{lenet_forward.1} parent=0 // pred_fallthru
    _
  // Predicated region
  $region42: #{lenet_forward.1} parent=0 // pred_check
    _
  $region43: #{lenet_forward.1} parent=0 // pred_check_branch
    %44 = sbr.rel (0) target = $region45
  $region44: #{lenet_forward.1} parent=0 // pred_region
    _
  $region45: #{lenet_forward.1} parent=0 // pred_fallthru
    _
  // Predicated region
  $region46: #{lenet_forward.1} parent=0 // pred_check
    _
  $region47: #{lenet_forward.1} parent=0 // pred_check_branch
    %46 = sbr.rel (0) target = $region49
  $region48: #{lenet_forward.1} parent=0 // pred_region
    _
  $region49: #{lenet_forward.1} parent=0 // pred_fallthru
    _
  // Predicated region
  $region50: #{lenet_forward.1} parent=0 // pred_check
    _
  $region51: #{lenet_forward.1} parent=0 // pred_check_branch
    %48 = sbr.rel (0) target = $region53
  $region52: #{lenet_forward.1} parent=0 // pred_region
    _
  $region53: #{lenet_forward.1} parent=0 // pred_fallthru
    _
  // Predicated region
  $region54: #{lenet_forward.1} parent=0 // pred_check
    _
  $region55: #{lenet_forward.1} parent=0 // pred_check_branch
    %50 = sbr.rel (0) target = $region57
  $region56: #{lenet_forward.1} parent=0 // pred_region
    _
  $region57: #{lenet_forward.1} parent=0 // pred_fallthru
    _
  // Predicated region
  $region58: #{lenet_forward.1} parent=0 // pred_check
    _
  $region59: #{lenet_forward.1} parent=0 // pred_check_branch
    %52 = sbr.rel (0) target = $region61
  $region60: #{lenet_forward.1} parent=0 // pred_region
    _
  $region61: #{lenet_forward.1} parent=0 // pred_fallthru
    _
  // Predicated region
  $region62: #{lenet_forward.1} parent=0 // pred_check
    _
  $region63: #{lenet_forward.1} parent=0 // pred_check_branch
    %54 = sbr.rel (0) target = $region65
  $region64: #{lenet_forward.1} parent=0 // pred_region
    _
  $region65: #{lenet_forward.1} parent=0 // pred_fallthru
    _
  // Predicated region
  $region66: #{lenet_forward.1} parent=0 // pred_check
    _
  $region67: #{lenet_forward.1} parent=0 // pred_check_branch
    %56 = sbr.rel (0) target = $region69
  $region68: #{lenet_forward.1} parent=0 // pred_region
    _
  $region69: #{lenet_forward.1} parent=0 // pred_fallthru
    _
  // Predicated region
  $region70: #{lenet_forward.1} parent=0 // pred_check
    _
  $region71: #{lenet_forward.1} parent=0 // pred_check_branch
    %58 = sbr.rel (0) target = $region73
  $region72: #{lenet_forward.1} parent=0 // pred_region
    _
  $region73: #{lenet_forward.1} parent=0 // pred_fallthru
    _
  %v59 = vld [vmem:[%s0] sm:$0xff]
  %v60 = vld [vmem:[%s0 + $0x8] sm:$0xff]
  %v61 = vld [vmem:[%s0 + $0x10] sm:$0xff]
  %v62 = vld [vmem:[%s0 + $0x18] sm:$0xf]
  %v63 = vld [vmem:[%s2] sm:$0xff]
  %v64 = vld [vmem:[%s2 + $0x8] sm:$0xff]
  %v65 = vld [vmem:[%s2 + $0x10] sm:$0xff]
  %v66 = vld [vmem:[%s2 + $0x18] sm:$0xff]
  %v67 = vld [vmem:[%s2 + $0x20] sm:$0xff]
  %v68 = vld [vmem:[%s2 + $0x28] sm:$0xff]
  %v69 = vld [vmem:[%s2 + $0x30] sm:$0xff]
  %v70 = vld [vmem:[%s2 + $0x38] sm:$0xff]
  %v71 = vld [vmem:[%s2 + $0x40] sm:$0xff]
  %v72 = vld [vmem:[%s2 + $0x48] sm:$0xff]
  %v73 = vld [vmem:[%s2 + $0x50] sm:$0xff]
  %v74 = vld [vmem:[%s2 + $0x58] sm:$0xff]
  %v75 = vld [vmem:[%s2 + $0x60] sm:$0xff]
  %v76 = vld [vmem:[%s2 + $0x68] sm:$0xff]
  %v77 = vld [vmem:[%s2 + $0x70] sm:$0xff]
  %v78 = vld [vmem:[%s2 + $0x78] sm:$0xff]
  %v79 = vld [vmem:[%s2 + $0x80] sm:$0xff]
  %v80 = vld [vmem:[%s2 + $0x88] sm:$0xff]
  %v81 = vld [vmem:[%s1] sm:$0xff]
  %v82 = vld [vmem:[%s1 + $0x8] sm:$0xff]
  %v83 = vld [vmem:[%s1 + $0x10] sm:$0xff]
  %v84 = vld [vmem:[%s1 + $0x18] sm:$0xff]
  %v85 = vld [vmem:[%s1 + $0x20] sm:$0xff]
  %v86 = vld [vmem:[%s1 + $0x28] sm:$0xff]
  %v87 = vld [vmem:[%s1 + $0x30] sm:$0xff]
  %v88 = vld [vmem:[%s1 + $0x38] sm:$0xff]
  %v89 = vld [vmem:[%s1 + $0x40] sm:$0xff]
  %v90 = vld [vmem:[%s1 + $0x48] sm:$0xff]
  %v91 = vld [vmem:[%s1 + $0x50] sm:$0xff]
  %v92 = vld [vmem:[%s1 + $0x58] sm:$0xff]
  %v93 = vld [vmem:[%s1 + $0x60] sm:$0xff]
  %v94 = vld [vmem:[%s1 + $0x68] sm:$0xff]
  %v95 = vld [vmem:[%s1 + $0x70] sm:$0xff]
  %v96 = vld [vmem:[%s1 + $0x78] sm:$0xff]
  %v97 = vld [vmem:[%s1 + $0x80] sm:$0xff]
  %v98 = vld [vmem:[%s1 + $0x88] sm:$0xff]
  %v99 = vld [vmem:[%s3] sm:$0xff]
  %v100 = vld [vmem:[%s3 + $0x8] sm:$0xff]
  %v101 = vld [vmem:[%s3 + $0x10] sm:$0xff]
  %v102 = vld [vmem:[%s3 + $0x18] sm:$0xff]
  %v103 = vld [vmem:[%s3 + $0x20] sm:$0xff]
  %v104 = vld [vmem:[%s3 + $0x28] sm:$0xff]
  %v105 = vld [vmem:[%s3 + $0x30] sm:$0xff]
  %vm106 = vcmask 457728
  %v108 = vsel %vm106, %v59, 0
  %v111 = vsel %vm106, %v60, 0
  %v114 = vsel %vm106, %v61, 0
  %v117 = vsel %vm106, %v62, 0
  %119 = vmatprep.subr.mxu0 0.0
  %120 = vmatpush1.msra.mxu0 %v99
  %121 = vmatprep.subr.mxu0 0.0
  %122 = vmatpush1.msra.mxu0 %v100
  %123 = vmatprep.subr.mxu0 0.0
  %124 = vmatpush1.msra.mxu0 %v101
  %125 = vmatprep.subr.mxu0 0.0
  %126 = vmatpush1.msra.mxu0 %v102
  %127 = vmatprep.subr.mxu0 0.0
  %128 = vmatpush1.msra.mxu0 %v103
  %129 = vmatprep.subr.mxu0 0.0
  %130 = vmatpush1.msra.mxu0 %v104
  %131 = vmatprep.subr.mxu0 0.0
  %132 = vmatpush1.msra.mxu0 %v105
  %133 = vmatprep.subr.mxu0 0.0
  %134 = vmatpush1.msra.mxu0 0.0
  %135 = vmatprep.subr.mxu0 0.0
  %136 = vmatpush1.msra.mxu0 0.0
  %137 = vmatprep.subr.mxu0 0.0
  %138 = vmatpush1.msra.mxu0 0.0
  %139 = vmatprep.subr.mxu0 0.0
  %140 = vmatpush1.msra.mxu0 0.0
  %141 = vmatprep.subr.mxu0 0.0
  %142 = vmatpush1.msra.mxu0 0.0
  %143 = vmatprep.subr.mxu0 0.0
  %144 = vmatpush1.msra.mxu0 0.0
  %145 = vmatprep.subr.mxu0 0.0
  %146 = vmatpush1.msra.mxu0 0.0
  %147 = vmatprep.subr.mxu0 0.0
  %148 = vmatpush1.msra.mxu0 0.0
  %149 = vmatprep.subr.mxu0 0.0
  %150 = vmatpush1.msra.mxu0 0.0
  %151 = vmatprep.subr.mxu0 0.0
  %152 = vmatpush1.msra.mxu0 0.0
  %153 = vmatprep.subr.mxu0 0.0
  %154 = vmatpush1.msra.mxu0 0.0
  %155 = vmatprep.subr.mxu0 0.0
  %156 = vmatpush1.msra.mxu0 0.0
  %157 = vmatprep.subr.mxu0 0.0
  %158 = vmatpush1.msra.mxu0 0.0
  %159 = vmatprep.subr.mxu0 0.0
  %160 = vmatpush1.msra.mxu0 0.0
  %161 = vmatprep.subr.mxu0 0.0
  %162 = vmatpush1.msra.mxu0 0.0
  %163 = vmatprep.subr.mxu0 0.0
  %164 = vmatpush1.msra.mxu0 0.0
  %165 = vmatprep.subr.mxu0 0.0
  %166 = vmatpush1.msra.mxu0 0.0
  %167 = vmatprep.subr.mxu0 0.0
  %168 = vmatpush1.msra.mxu0 0.0
  %169 = vmatprep.subr.mxu0 0.0
  %170 = vmatpush1.msra.mxu0 0.0
  %171 = vmatprep.subr.mxu0 0.0
  %172 = vmatpush1.msra.mxu0 0.0
  %173 = vmatprep.subr.mxu0 0.0
  %174 = vmatpush1.msra.mxu0 0.0
  %175 = vmatprep.subr.mxu0 0.0
  %176 = vmatpush1.msra.mxu0 0.0
  %177 = vmatprep.subr.mxu0 0.0
  %178 = vmatpush1.msra.mxu0 0.0
  %179 = vmatprep.subr.mxu0 0.0
  %180 = vmatpush1.msra.mxu0 0.0
  %181 = vmatprep.subr.mxu0 0.0
  %182 = vmatpush1.msra.mxu0 0.0
  %183 = vmatprep.mubr.f32.mxu0 0.0
  %184 = vmatmul.mubr.f32.gmra.mrb[0].mxu0 %v108
  %v185 = vpop.f32.mrb[0].mxu0
  %v186 = vadd.f32 0.0, %v185
  %v187 = vpop.f32.mrb[0].mxu0
  %188 = vmatprep.mubr.f32.mxu0 0.0
  %189 = vmatmul.mubr.f32.gmra.mrb[0].mxu0 %v111
  %v190 = vpop.f32.mrb[0].mxu0
  %v191 = vadd.f32 0.0, %v190
  %v192 = vpop.f32.mrb[0].mxu0
  %193 = vmatprep.mubr.f32.mxu0 0.0
  %194 = vmatmul.mubr.f32.gmra.mrb[0].mxu0 %v114
  %v195 = vpop.f32.mrb[0].mxu0
  %v196 = vadd.f32 0.0, %v195
  %v197 = vpop.f32.mrb[0].mxu0
  %198 = vmatprep.mubr.f32.mxu0 0.0
  %199 = vmatmul.mubr.f32.gmra.mrb[0].mxu0 %v117
  %v200 = vpop.f32.mrb[0].mxu0
  %v201 = vadd.f32 0.0, %v200
  %v202 = vpop.f32.mrb[0].mxu0
  %203 = vdwg.mxu0
  %s204 = scalar_lea.vmem %s1, 144
  %v205 = vld [vmem:[%s204] sm:$0xff]
  %v206 = vld [vmem:[%s204 + $0x8] sm:$0xff]
  %v207 = vld [vmem:[%s204 + $0x10] sm:$0xff]
  %v208 = vld [vmem:[%s204 + $0x18] sm:$0xff]
  %v209 = vld [vmem:[%s204 + $0x20] sm:$0xff]
  %v210 = vld [vmem:[%s204 + $0x28] sm:$0xff]
  %v211 = vld [vmem:[%s204 + $0x30] sm:$0xff]
  %v212 = vld [vmem:[%s204 + $0x38] sm:$0xff]
  %v213 = vld [vmem:[%s204 + $0x40] sm:$0xff]
  %v214 = vld [vmem:[%s204 + $0x48] sm:$0xff]
  %v215 = vld [vmem:[%s204 + $0x50] sm:$0xff]
  %v216 = vld [vmem:[%s204 + $0x58] sm:$0xff]
  %v217 = vld [vmem:[%s204 + $0x60] sm:$0xff]
  %v218 = vld [vmem:[%s204 + $0x68] sm:$0xff]
  %v219 = vld [vmem:[%s204 + $0x70] sm:$0xff]
  %v220 = vld [vmem:[%s204 + $0x78] sm:$0xff]
  %v221 = vld [vmem:[%s204 + $0x80] sm:$0xff]
  %v222 = vld [vmem:[%s204 + $0x88] sm:$0xff]
  %s223 = scalar_lea.vmem %s3, 56
  %v224 = vld [vmem:[%s223] sm:$0xff]
  %v225 = vld [vmem:[%s223 + $0x8] sm:$0xff]
  %v226 = vld [vmem:[%s223 + $0x10] sm:$0xff]
  %v227 = vld [vmem:[%s223 + $0x18] sm:$0xff]
  %v228 = vld [vmem:[%s223 + $0x20] sm:$0xff]
  %v229 = vld [vmem:[%s223 + $0x28] sm:$0xff]
  %v230 = vld [vmem:[%s223 + $0x30] sm:$0xff]
  %231 = vmatprep.subr.mxu0 0.0
  %232 = vmatpush1.msra.mxu0 %v224
  %233 = vmatprep.subr.mxu0 0.0
  %234 = vmatpush1.msra.mxu0 %v225
  %235 = vmatprep.subr.mxu0 0.0
  %236 = vmatpush1.msra.mxu0 %v226
  %237 = vmatprep.subr.mxu0 0.0
  %238 = vmatpush1.msra.mxu0 %v227
  %239 = vmatprep.subr.mxu0 0.0
  %240 = vmatpush1.msra.mxu0 %v228
  %241 = vmatprep.subr.mxu0 0.0
  %242 = vmatpush1.msra.mxu0 %v229
  %243 = vmatprep.subr.mxu0 0.0
  %244 = vmatpush1.msra.mxu0 %v230
  %245 = vmatprep.subr.mxu0 0.0
  %246 = vmatpush1.msra.mxu0 0.0
  %247 = vmatprep.subr.mxu0 0.0
  %248 = vmatpush1.msra.mxu0 0.0
  %249 = vmatprep.subr.mxu0 0.0
  %250 = vmatpush1.msra.mxu0 0.0
  %251 = vmatprep.subr.mxu0 0.0
  %252 = vmatpush1.msra.mxu0 0.0
  %253 = vmatprep.subr.mxu0 0.0
  %254 = vmatpush1.msra.mxu0 0.0
  %255 = vmatprep.subr.mxu0 0.0
  %256 = vmatpush1.msra.mxu0 0.0
  %257 = vmatprep.subr.mxu0 0.0
  %258 = vmatpush1.msra.mxu0 0.0
  %259 = vmatprep.subr.mxu0 0.0
  %260 = vmatpush1.msra.mxu0 0.0
  %261 = vmatprep.subr.mxu0 0.0
  %262 = vmatpush1.msra.mxu0 0.0
  %263 = vmatprep.subr.mxu0 0.0
  %264 = vmatpush1.msra.mxu0 0.0
  %265 = vmatprep.subr.mxu0 0.0
  %266 = vmatpush1.msra.mxu0 0.0
  %267 = vmatprep.subr.mxu0 0.0
  %268 = vmatpush1.msra.mxu0 0.0
  %269 = vmatprep.subr.mxu0 0.0
  %270 = vmatpush1.msra.mxu0 0.0
  %271 = vmatprep.subr.mxu0 0.0
  %272 = vmatpush1.msra.mxu0 0.0
  %273 = vmatprep.subr.mxu0 0.0
  %274 = vmatpush1.msra.mxu0 0.0
  %275 = vmatprep.subr.mxu0 0.0
  %276 = vmatpush1.msra.mxu0 0.0
  %277 = vmatprep.subr.mxu0 0.0
  %278 = vmatpush1.msra.mxu0 0.0
  %279 = vmatprep.subr.mxu0 0.0
  %280 = vmatpush1.msra.mxu0 0.0
  %281 = vmatprep.subr.mxu0 0.0
  %282 = vmatpush1.msra.mxu0 0.0
  %283 = vmatprep.subr.mxu0 0.0
  %284 = vmatpush1.msra.mxu0 0.0
  %285 = vmatprep.subr.mxu0 0.0
  %286 = vmatpush1.msra.mxu0 0.0
  %287 = vmatprep.subr.mxu0 0.0
  %288 = vmatpush1.msra.mxu0 0.0
  %289 = vmatprep.subr.mxu0 0.0
  %290 = vmatpush1.msra.mxu0 0.0
  %291 = vmatprep.subr.mxu0 0.0
  %292 = vmatpush1.msra.mxu0 0.0
  %293 = vmatprep.subr.mxu0 0.0
  %294 = vmatpush1.msra.mxu0 0.0
  %295 = vmatprep.mubr.f32.mxu0 0.0
  %296 = vmatmul.mubr.f32.gmra.mrb[0].mxu0 %v108
  %v297 = vpop.f32.mrb[0].mxu0
  %v298 = vadd.f32 0.0, %v297
  %v299 = vpop.f32.mrb[0].mxu0
  %300 = vmatprep.mubr.f32.mxu0 0.0
  %301 = vmatmul.mubr.f32.gmra.mrb[0].mxu0 %v111
  %v302 = vpop.f32.mrb[0].mxu0
  %v303 = vadd.f32 0.0, %v302
  %v304 = vpop.f32.mrb[0].mxu0
  %305 = vmatprep.mubr.f32.mxu0 0.0
  %306 = vmatmul.mubr.f32.gmra.mrb[0].mxu0 %v114
  %v307 = vpop.f32.mrb[0].mxu0
  %v308 = vadd.f32 0.0, %v307
  %v309 = vpop.f32.mrb[0].mxu0
  %310 = vmatprep.mubr.f32.mxu0 0.0
  %311 = vmatmul.mubr.f32.gmra.mrb[0].mxu0 %v117
  %v312 = vpop.f32.mrb[0].mxu0
  %v313 = vadd.f32 0.0, %v312
  %v314 = vpop.f32.mrb[0].mxu0
  %315 = vdwg.mxu0
  %vm316 = vcmask 228352
  %v318 = vsel %vm316, %v205, 0
  %v321 = vsel %vm316, %v206, 0
  %v324 = vsel %vm316, %v207, 0
  %v327 = vsel %vm316, %v208, 0
  %v330 = vsel %vm316, %v209, 0
  %v333 = vsel %vm316, %v210, 0
  %v336 = vsel %vm316, %v211, 0
  %v339 = vsel %vm316, %v212, 0
  %v342 = vsel %vm316, %v213, 0
  %v345 = vsel %vm316, %v214, 0
  %v348 = vsel %vm316, %v215, 0
  %v351 = vsel %vm316, %v216, 0
  %v354 = vsel %vm316, %v217, 0
  %v357 = vsel %vm316, %v218, 0
  %v360 = vsel %vm316, %v219, 0
  %v363 = vsel %vm316, %v220, 0
  %v366 = vsel %vm316, %v221, 0
  %v369 = vsel %vm316, %v222, 0
  %vm371 = vcmask 1043456
  %v373 = vsel %vm371, %v313, 0
  %375 = vmatprep.subr.mxu0 0.0
  %376 = vmatpush1.msra.mxu0 %v298
  %377 = vmatprep.subr.mxu0 0.0
  %378 = vmatpush1.msra.mxu0 %v303
  %379 = vmatprep.subr.mxu0 0.0
  %380 = vmatpush1.msra.mxu0 %v308
  %381 = vmatprep.subr.mxu0 0.0
  %382 = vmatpush1.msra.mxu0 %v373
  %383 = vmatprep.subr.mxu0 0.0
  %384 = vmatpush1.msra.mxu0 0.0
  %385 = vmatprep.subr.mxu0 0.0
  %386 = vmatpush1.msra.mxu0 0.0
  %387 = vmatprep.subr.mxu0 0.0
  %388 = vmatpush1.msra.mxu0 0.0
  %389 = vmatprep.subr.mxu0 0.0
  %390 = vmatpush1.msra.mxu0 0.0
  %391 = vmatprep.subr.mxu0 0.0
  %392 = vmatpush1.msra.mxu0 0.0
  %393 = vmatprep.subr.mxu0 0.0
  %394 = vmatpush1.msra.mxu0 0.0
  %395 = vmatprep.subr.mxu0 0.0
  %396 = vmatpush1.msra.mxu0 0.0
  %397 = vmatprep.subr.mxu0 0.0
  %398 = vmatpush1.msra.mxu0 0.0
  %399 = vmatprep.subr.mxu0 0.0
  %400 = vmatpush1.msra.mxu0 0.0
  %401 = vmatprep.subr.mxu0 0.0
  %402 = vmatpush1.msra.mxu0 0.0
  %403 = vmatprep.subr.mxu0 0.0
  %404 = vmatpush1.msra.mxu0 0.0
  %405 = vmatprep.subr.mxu0 0.0
  %406 = vmatpush1.msra.mxu0 0.0
  %407 = vmatprep.subr.mxu0 0.0
  %408 = vmatpush1.msra.mxu0 0.0
  %409 = vmatprep.subr.mxu0 0.0
  %410 = vmatpush1.msra.mxu0 0.0
  %411 = vmatprep.subr.mxu0 0.0
  %412 = vmatpush1.msra.mxu0 0.0
  %413 = vmatprep.subr.mxu0 0.0
  %414 = vmatpush1.msra.mxu0 0.0
  %415 = vmatprep.subr.mxu0 0.0
  %416 = vmatpush1.msra.mxu0 0.0
  %417 = vmatprep.subr.mxu0 0.0
  %418 = vmatpush1.msra.mxu0 0.0
  %419 = vmatprep.subr.mxu0 0.0
  %420 = vmatpush1.msra.mxu0 0.0
  %421 = vmatprep.subr.mxu0 0.0
  %422 = vmatpush1.msra.mxu0 0.0
  %423 = vmatprep.subr.mxu0 0.0
  %424 = vmatpush1.msra.mxu0 0.0
  %425 = vmatprep.subr.mxu0 0.0
  %426 = vmatpush1.msra.mxu0 0.0
  %427 = vmatprep.subr.mxu0 0.0
  %428 = vmatpush1.msra.mxu0 0.0
  %429 = vmatprep.subr.mxu0 0.0
  %430 = vmatpush1.msra.mxu0 0.0
  %431 = vmatprep.subr.mxu0 0.0
  %432 = vmatpush1.msra.mxu0 0.0
  %433 = vmatprep.subr.mxu0 0.0
  %434 = vmatpush1.msra.mxu0 0.0
  %435 = vmatprep.subr.mxu0 0.0
  %436 = vmatpush1.msra.mxu0 0.0
  %437 = vmatprep.subr.mxu0 0.0
  %438 = vmatpush1.msra.mxu0 0.0
  %439 = vmatprep.mubr.f32.mxu0 0.0
  %440 = vmatmul.mubr.f32.gmra.mrb[0].mxu0 %v318
  %v441 = vpop.f32.mrb[0].mxu0
  %v442 = vadd.f32 0.0, %v441
  %v443 = vpop.f32.mrb[0].mxu0
  %444 = vmatprep.mubr.f32.mxu0 0.0
  %445 = vmatmul.mubr.f32.gmra.mrb[0].mxu0 %v321
  %v446 = vpop.f32.mrb[0].mxu0
  %v447 = vadd.f32 0.0, %v446
  %v448 = vpop.f32.mrb[0].mxu0
  %449 = vmatprep.mubr.f32.mxu0 0.0
  %450 = vmatmul.mubr.f32.gmra.mrb[0].mxu0 %v324
  %v451 = vpop.f32.mrb[0].mxu0
  %v452 = vadd.f32 0.0, %v451
  %v453 = vpop.f32.mrb[0].mxu0
  %454 = vmatprep.mubr.f32.mxu0 0.0
  %455 = vmatmul.mubr.f32.gmra.mrb[0].mxu0 %v327
  %v456 = vpop.f32.mrb[0].mxu0
  %v457 = vadd.f32 0.0, %v456
  %v458 = vpop.f32.mrb[0].mxu0
  %459 = vmatprep.mubr.f32.mxu0 0.0
  %460 = vmatmul.mubr.f32.gmra.mrb[0].mxu0 %v330
  %v461 = vpop.f32.mrb[0].mxu0
  %v462 = vadd.f32 0.0, %v461
  %v463 = vpop.f32.mrb[0].mxu0
  %464 = vmatprep.mubr.f32.mxu0 0.0
  %465 = vmatmul.mubr.f32.gmra.mrb[0].mxu0 %v333
  %v466 = vpop.f32.mrb[0].mxu0
  %v467 = vadd.f32 0.0, %v466
  %v468 = vpop.f32.mrb[0].mxu0
  %469 = vmatprep.mubr.f32.mxu0 0.0
  %470 = vmatmul.mubr.f32.gmra.mrb[0].mxu0 %v336
  %v471 = vpop.f32.mrb[0].mxu0
  %v472 = vadd.f32 0.0, %v471
  %v473 = vpop.f32.mrb[0].mxu0
  %474 = vmatprep.mubr.f32.mxu0 0.0
  %475 = vmatmul.mubr.f32.gmra.mrb[0].mxu0 %v339
  %v476 = vpop.f32.mrb[0].mxu0
  %v477 = vadd.f32 0.0, %v476
  %v478 = vpop.f32.mrb[0].mxu0
  %479 = vmatprep.mubr.f32.mxu0 0.0
  %480 = vmatmul.mubr.f32.gmra.mrb[0].mxu0 %v342
  %v481 = vpop.f32.mrb[0].mxu0
  %v482 = vadd.f32 0.0, %v481
  %v483 = vpop.f32.mrb[0].mxu0
  %484 = vmatprep.mubr.f32.mxu0 0.0
  %485 = vmatmul.mubr.f32.gmra.mrb[0].mxu0 %v345
  %v486 = vpop.f32.mrb[0].mxu0
  %v487 = vadd.f32 0.0, %v486
  %v488 = vpop.f32.mrb[0].mxu0
  %489 = vmatprep.mubr.f32.mxu0 0.0
  %490 = vmatmul.mubr.f32.gmra.mrb[0].mxu0 %v348
  %v491 = vpop.f32.mrb[0].mxu0
  %v492 = vadd.f32 0.0, %v491
  %v493 = vpop.f32.mrb[0].mxu0
  %494 = vmatprep.mubr.f32.mxu0 0.0
  %495 = vmatmul.mubr.f32.gmra.mrb[0].mxu0 %v351
  %v496 = vpop.f32.mrb[0].mxu0
  %v497 = vadd.f32 0.0, %v496
  %v498 = vpop.f32.mrb[0].mxu0
  %499 = vmatprep.mubr.f32.mxu0 0.0
  %500 = vmatmul.mubr.f32.gmra.mrb[0].mxu0 %v354
  %v501 = vpop.f32.mrb[0].mxu0
  %v502 = vadd.f32 0.0, %v501
  %v503 = vpop.f32.mrb[0].mxu0
  %504 = vmatprep.mubr.f32.mxu0 0.0
  %505 = vmatmul.mubr.f32.gmra.mrb[0].mxu0 %v357
  %v506 = vpop.f32.mrb[0].mxu0
  %v507 = vadd.f32 0.0, %v506
  %v508 = vpop.f32.mrb[0].mxu0
  %509 = vmatprep.mubr.f32.mxu0 0.0
  %510 = vmatmul.mubr.f32.gmra.mrb[0].mxu0 %v360
  %v511 = vpop.f32.mrb[0].mxu0
  %v512 = vadd.f32 0.0, %v511
  %v513 = vpop.f32.mrb[0].mxu0
  %514 = vmatprep.mubr.f32.mxu0 0.0
  %515 = vmatmul.mubr.f32.gmra.mrb[0].mxu0 %v363
  %v516 = vpop.f32.mrb[0].mxu0
  %v517 = vadd.f32 0.0, %v516
  %v518 = vpop.f32.mrb[0].mxu0
  %519 = vmatprep.mubr.f32.mxu0 0.0
  %520 = vmatmul.mubr.f32.gmra.mrb[0].mxu0 %v366
  %v521 = vpop.f32.mrb[0].mxu0
  %v522 = vadd.f32 0.0, %v521
  %v523 = vpop.f32.mrb[0].mxu0
  %524 = vmatprep.mubr.f32.mxu0 0.0
  %525 = vmatmul.mubr.f32.gmra.mrb[0].mxu0 %v369
  %v526 = vpop.f32.mrb[0].mxu0
  %v527 = vadd.f32 0.0, %v526
  %v528 = vpop.f32.mrb[0].mxu0
  %529 = vdwg.mxu0
  %v531 = vsel %vm316, %v81, 0
  %v534 = vsel %vm316, %v82, 0
  %v537 = vsel %vm316, %v83, 0
  %v540 = vsel %vm316, %v84, 0
  %v543 = vsel %vm316, %v85, 0
  %v546 = vsel %vm316, %v86, 0
  %v549 = vsel %vm316, %v87, 0
  %v552 = vsel %vm316, %v88, 0
  %v555 = vsel %vm316, %v89, 0
  %v558 = vsel %vm316, %v90, 0
  %v561 = vsel %vm316, %v91, 0
  %v564 = vsel %vm316, %v92, 0
  %v567 = vsel %vm316, %v93, 0
  %v570 = vsel %vm316, %v94, 0
  %v573 = vsel %vm316, %v95, 0
  %v576 = vsel %vm316, %v96, 0
  %v579 = vsel %vm316, %v97, 0
  %v582 = vsel %vm316, %v98, 0
  %v585 = vsel %vm371, %v201, 0
  %587 = vmatprep.subr.mxu0 0.0
  %588 = vmatpush1.msra.mxu0 %v186
  %589 = vmatprep.subr.mxu0 0.0
  %590 = vmatpush1.msra.mxu0 %v191
  %591 = vmatprep.subr.mxu0 0.0
  %592 = vmatpush1.msra.mxu0 %v196
  %593 = vmatprep.subr.mxu0 0.0
  %594 = vmatpush1.msra.mxu0 %v585
  %595 = vmatprep.subr.mxu0 0.0
  %596 = vmatpush1.msra.mxu0 0.0
  %597 = vmatprep.subr.mxu0 0.0
  %598 = vmatpush1.msra.mxu0 0.0
  %599 = vmatprep.subr.mxu0 0.0
  %600 = vmatpush1.msra.mxu0 0.0
  %601 = vmatprep.subr.mxu0 0.0
  %602 = vmatpush1.msra.mxu0 0.0
  %603 = vmatprep.subr.mxu0 0.0
  %604 = vmatpush1.msra.mxu0 0.0
  %605 = vmatprep.subr.mxu0 0.0
  %606 = vmatpush1.msra.mxu0 0.0
  %607 = vmatprep.subr.mxu0 0.0
  %608 = vmatpush1.msra.mxu0 0.0
  %609 = vmatprep.subr.mxu0 0.0
  %610 = vmatpush1.msra.mxu0 0.0
  %611 = vmatprep.subr.mxu0 0.0
  %612 = vmatpush1.msra.mxu0 0.0
  %613 = vmatprep.subr.mxu0 0.0
  %614 = vmatpush1.msra.mxu0 0.0
  %615 = vmatprep.subr.mxu0 0.0
  %616 = vmatpush1.msra.mxu0 0.0
  %617 = vmatprep.subr.mxu0 0.0
  %618 = vmatpush1.msra.mxu0 0.0
  %619 = vmatprep.subr.mxu0 0.0
  %620 = vmatpush1.msra.mxu0 0.0
  %621 = vmatprep.subr.mxu0 0.0
  %622 = vmatpush1.msra.mxu0 0.0
  %623 = vmatprep.subr.mxu0 0.0
  %624 = vmatpush1.msra.mxu0 0.0
  %625 = vmatprep.subr.mxu0 0.0
  %626 = vmatpush1.msra.mxu0 0.0
  %627 = vmatprep.subr.mxu0 0.0
  %628 = vmatpush1.msra.mxu0 0.0
  %629 = vmatprep.subr.mxu0 0.0
  %630 = vmatpush1.msra.mxu0 0.0
  %631 = vmatprep.subr.mxu0 0.0
  %632 = vmatpush1.msra.mxu0 0.0
  %633 = vmatprep.subr.mxu0 0.0
  %634 = vmatpush1.msra.mxu0 0.0
  %635 = vmatprep.subr.mxu0 0.0
  %636 = vmatpush1.msra.mxu0 0.0
  %637 = vmatprep.subr.mxu0 0.0
  %638 = vmatpush1.msra.mxu0 0.0
  %639 = vmatprep.subr.mxu0 0.0
  %640 = vmatpush1.msra.mxu0 0.0
  %641 = vmatprep.subr.mxu0 0.0
  %642 = vmatpush1.msra.mxu0 0.0
  %643 = vmatprep.subr.mxu0 0.0
  %644 = vmatpush1.msra.mxu0 0.0
  %645 = vmatprep.subr.mxu0 0.0
  %646 = vmatpush1.msra.mxu0 0.0
  %647 = vmatprep.subr.mxu0 0.0
  %648 = vmatpush1.msra.mxu0 0.0
  %649 = vmatprep.subr.mxu0 0.0
  %650 = vmatpush1.msra.mxu0 0.0
  %651 = vmatprep.mubr.f32.mxu0 0.0
  %652 = vmatmul.mubr.f32.gmra.mrb[0].mxu0 %v531
  %v653 = vpop.f32.mrb[0].mxu0
  %v654 = vadd.f32 %v442, %v653
  %v655 = vpop.f32.mrb[0].mxu0
  %656 = vmatprep.mubr.f32.mxu0 0.0
  %657 = vmatmul.mubr.f32.gmra.mrb[0].mxu0 %v534
  %v658 = vpop.f32.mrb[0].mxu0
  %v659 = vadd.f32 %v447, %v658
  %v660 = vpop.f32.mrb[0].mxu0
  %661 = vmatprep.mubr.f32.mxu0 0.0
  %662 = vmatmul.mubr.f32.gmra.mrb[0].mxu0 %v537
  %v663 = vpop.f32.mrb[0].mxu0
  %v664 = vadd.f32 %v452, %v663
  %v665 = vpop.f32.mrb[0].mxu0
  %666 = vmatprep.mubr.f32.mxu0 0.0
  %667 = vmatmul.mubr.f32.gmra.mrb[0].mxu0 %v540
  %v668 = vpop.f32.mrb[0].mxu0
  %v669 = vadd.f32 %v457, %v668
  %v670 = vpop.f32.mrb[0].mxu0
  %671 = vmatprep.mubr.f32.mxu0 0.0
  %672 = vmatmul.mubr.f32.gmra.mrb[0].mxu0 %v543
  %v673 = vpop.f32.mrb[0].mxu0
  %v674 = vadd.f32 %v462, %v673
  %v675 = vpop.f32.mrb[0].mxu0
  %676 = vmatprep.mubr.f32.mxu0 0.0
  %677 = vmatmul.mubr.f32.gmra.mrb[0].mxu0 %v546
  %v678 = vpop.f32.mrb[0].mxu0
  %v679 = vadd.f32 %v467, %v678
  %v680 = vpop.f32.mrb[0].mxu0
  %681 = vmatprep.mubr.f32.mxu0 0.0
  %682 = vmatmul.mubr.f32.gmra.mrb[0].mxu0 %v549
  %v683 = vpop.f32.mrb[0].mxu0
  %v684 = vadd.f32 %v472, %v683
  %v685 = vpop.f32.mrb[0].mxu0
  %686 = vmatprep.mubr.f32.mxu0 0.0
  %687 = vmatmul.mubr.f32.gmra.mrb[0].mxu0 %v552
  %v688 = vpop.f32.mrb[0].mxu0
  %v689 = vadd.f32 %v477, %v688
  %v690 = vpop.f32.mrb[0].mxu0
  %691 = vmatprep.mubr.f32.mxu0 0.0
  %692 = vmatmul.mubr.f32.gmra.mrb[0].mxu0 %v555
  %v693 = vpop.f32.mrb[0].mxu0
  %v694 = vadd.f32 %v482, %v693
  %v695 = vpop.f32.mrb[0].mxu0
  %696 = vmatprep.mubr.f32.mxu0 0.0
  %697 = vmatmul.mubr.f32.gmra.mrb[0].mxu0 %v558
  %v698 = vpop.f32.mrb[0].mxu0
  %v699 = vadd.f32 %v487, %v698
  %v700 = vpop.f32.mrb[0].mxu0
  %701 = vmatprep.mubr.f32.mxu0 0.0
  %702 = vmatmul.mubr.f32.gmra.mrb[0].mxu0 %v561
  %v703 = vpop.f32.mrb[0].mxu0
  %v704 = vadd.f32 %v492, %v703
  %v705 = vpop.f32.mrb[0].mxu0
  %706 = vmatprep.mubr.f32.mxu0 0.0
  %707 = vmatmul.mubr.f32.gmra.mrb[0].mxu0 %v564
  %v708 = vpop.f32.mrb[0].mxu0
  %v709 = vadd.f32 %v497, %v708
  %v710 = vpop.f32.mrb[0].mxu0
  %711 = vmatprep.mubr.f32.mxu0 0.0
  %712 = vmatmul.mubr.f32.gmra.mrb[0].mxu0 %v567
  %v713 = vpop.f32.mrb[0].mxu0
  %v714 = vadd.f32 %v502, %v713
  %v715 = vpop.f32.mrb[0].mxu0
  %716 = vmatprep.mubr.f32.mxu0 0.0
  %717 = vmatmul.mubr.f32.gmra.mrb[0].mxu0 %v570
  %v718 = vpop.f32.mrb[0].mxu0
  %v719 = vadd.f32 %v507, %v718
  %v720 = vpop.f32.mrb[0].mxu0
  %721 = vmatprep.mubr.f32.mxu0 0.0
  %722 = vmatmul.mubr.f32.gmra.mrb[0].mxu0 %v573
  %v723 = vpop.f32.mrb[0].mxu0
  %v724 = vadd.f32 %v512, %v723
  %v725 = vpop.f32.mrb[0].mxu0
  %726 = vmatprep.mubr.f32.mxu0 0.0
  %727 = vmatmul.mubr.f32.gmra.mrb[0].mxu0 %v576
  %v728 = vpop.f32.mrb[0].mxu0
  %v729 = vadd.f32 %v517, %v728
  %v730 = vpop.f32.mrb[0].mxu0
  %731 = vmatprep.mubr.f32.mxu0 0.0
  %732 = vmatmul.mubr.f32.gmra.mrb[0].mxu0 %v579
  %v733 = vpop.f32.mrb[0].mxu0
  %v734 = vadd.f32 %v522, %v733
  %v735 = vpop.f32.mrb[0].mxu0
  %736 = vmatprep.mubr.f32.mxu0 0.0
  %737 = vmatmul.mubr.f32.gmra.mrb[0].mxu0 %v582
  %v738 = vpop.f32.mrb[0].mxu0
  %v739 = vadd.f32 %v527, %v738
  %v740 = vpop.f32.mrb[0].mxu0
  %741 = vdwg.mxu0
  %s742 = scalar_lea.vmem %s1, 288
  %v743 = vld [vmem:[%s742] sm:$0xff]
  %v744 = vld [vmem:[%s742 + $0x8] sm:$0xff]
  %v745 = vld [vmem:[%s742 + $0x10] sm:$0xff]
  %v746 = vld [vmem:[%s742 + $0x18] sm:$0xff]
  %v747 = vld [vmem:[%s742 + $0x20] sm:$0xff]
  %v748 = vld [vmem:[%s742 + $0x28] sm:$0xff]
  %v749 = vld [vmem:[%s742 + $0x30] sm:$0xff]
  %v750 = vld [vmem:[%s742 + $0x38] sm:$0xff]
  %v751 = vld [vmem:[%s742 + $0x40] sm:$0xff]
  %v752 = vld [vmem:[%s742 + $0x48] sm:$0xff]
  %v753 = vld [vmem:[%s742 + $0x50] sm:$0xff]
  %v754 = vld [vmem:[%s742 + $0x58] sm:$0xff]
  %v755 = vld [vmem:[%s742 + $0x60] sm:$0xff]
  %v756 = vld [vmem:[%s742 + $0x68] sm:$0xff]
  %v757 = vld [vmem:[%s742 + $0x70] sm:$0xff]
  %v758 = vld [vmem:[%s742 + $0x78] sm:$0xff]
  %v759 = vld [vmem:[%s742 + $0x80] sm:$0xff]
  %v760 = vld [vmem:[%s742 + $0x88] sm:$0xff]
  %s761 = scalar_lea.vmem %s3, 112
  %v762 = vld [vmem:[%s761] sm:$0xff]
  %v763 = vld [vmem:[%s761 + $0x8] sm:$0xff]
  %v764 = vld [vmem:[%s761 + $0x10] sm:$0xff]
  %v765 = vld [vmem:[%s761 + $0x18] sm:$0xff]
  %v766 = vld [vmem:[%s761 + $0x20] sm:$0xff]
  %v767 = vld [vmem:[%s761 + $0x28] sm:$0xff]
  %v768 = vld [vmem:[%s761 + $0x30] sm:$0xff]
  %769 = vmatprep.subr.mxu0 0.0
  %770 = vmatpush1.msra.mxu0 %v762
  %771 = vmatprep.subr.mxu0 0.0
  %772 = vmatpush1.msra.mxu0 %v763
  %773 = vmatprep.subr.mxu0 0.0
  %774 = vmatpush1.msra.mxu0 %v764
  %775 = vmatprep.subr.mxu0 0.0
  %776 = vmatpush1.msra.mxu0 %v765
  %777 = vmatprep.subr.mxu0 0.0
  %778 = vmatpush1.msra.mxu0 %v766
  %779 = vmatprep.subr.mxu0 0.0
  %780 = vmatpush1.msra.mxu0 %v767
  %781 = vmatprep.subr.mxu0 0.0
  %782 = vmatpush1.msra.mxu0 %v768
  %783 = vmatprep.subr.mxu0 0.0
  %784 = vmatpush1.msra.mxu0 0.0
  %785 = vmatprep.subr.mxu0 0.0
  %786 = vmatpush1.msra.mxu0 0.0
  %787 = vmatprep.subr.mxu0 0.0
  %788 = vmatpush1.msra.mxu0 0.0
  %789 = vmatprep.subr.mxu0 0.0
  %790 = vmatpush1.msra.mxu0 0.0
  %791 = vmatprep.subr.mxu0 0.0
  %792 = vmatpush1.msra.mxu0 0.0
  %793 = vmatprep.subr.mxu0 0.0
  %794 = vmatpush1.msra.mxu0 0.0
  %795 = vmatprep.subr.mxu0 0.0
  %796 = vmatpush1.msra.mxu0 0.0
  %797 = vmatprep.subr.mxu0 0.0
  %798 = vmatpush1.msra.mxu0 0.0
  %799 = vmatprep.subr.mxu0 0.0
  %800 = vmatpush1.msra.mxu0 0.0
  %801 = vmatprep.subr.mxu0 0.0
  %802 = vmatpush1.msra.mxu0 0.0
  %803 = vmatprep.subr.mxu0 0.0
  %804 = vmatpush1.msra.mxu0 0.0
  %805 = vmatprep.subr.mxu0 0.0
  %806 = vmatpush1.msra.mxu0 0.0
  %807 = vmatprep.subr.mxu0 0.0
  %808 = vmatpush1.msra.mxu0 0.0
  %809 = vmatprep.subr.mxu0 0.0
  %810 = vmatpush1.msra.mxu0 0.0
  %811 = vmatprep.subr.mxu0 0.0
  %812 = vmatpush1.msra.mxu0 0.0
  %813 = vmatprep.subr.mxu0 0.0
  %814 = vmatpush1.msra.mxu0 0.0
  %815 = vmatprep.subr.mxu0 0.0
  %816 = vmatpush1.msra.mxu0 0.0
  %817 = vmatprep.subr.mxu0 0.0
  %818 = vmatpush1.msra.mxu0 0.0
  %819 = vmatprep.subr.mxu0 0.0
  %820 = vmatpush1.msra.mxu0 0.0
  %821 = vmatprep.subr.mxu0 0.0
  %822 = vmatpush1.msra.mxu0 0.0
  %823 = vmatprep.subr.mxu0 0.0
  %824 = vmatpush1.msra.mxu0 0.0
  %825 = vmatprep.subr.mxu0 0.0
  %826 = vmatpush1.msra.mxu0 0.0
  %827 = vmatprep.subr.mxu0 0.0
  %828 = vmatpush1.msra.mxu0 0.0
  %829 = vmatprep.subr.mxu0 0.0
  %830 = vmatpush1.msra.mxu0 0.0
  %831 = vmatprep.subr.mxu0 0.0
  %832 = vmatpush1.msra.mxu0 0.0
  %833 = vmatprep.mubr.f32.mxu0 0.0
  %834 = vmatmul.mubr.f32.gmra.mrb[0].mxu0 %v108
  %v835 = vpop.f32.mrb[0].mxu0
  %v836 = vadd.f32 0.0, %v835
  %v837 = vpop.f32.mrb[0].mxu0
  %838 = vmatprep.mubr.f32.mxu0 0.0
  %839 = vmatmul.mubr.f32.gmra.mrb[0].mxu0 %v111
  %v840 = vpop.f32.mrb[0].mxu0
  %v841 = vadd.f32 0.0, %v840
  %v842 = vpop.f32.mrb[0].mxu0
  %843 = vmatprep.mubr.f32.mxu0 0.0
  %844 = vmatmul.mubr.f32.gmra.mrb[0].mxu0 %v114
  %v845 = vpop.f32.mrb[0].mxu0
  %v846 = vadd.f32 0.0, %v845
  %v847 = vpop.f32.mrb[0].mxu0
  %848 = vmatprep.mubr.f32.mxu0 0.0
  %849 = vmatmul.mubr.f32.gmra.mrb[0].mxu0 %v117
  %v850 = vpop.f32.mrb[0].mxu0
  %v851 = vadd.f32 0.0, %v850
  %v852 = vpop.f32.mrb[0].mxu0
  %853 = vdwg.mxu0
  %v855 = vsel %vm316, %v743, 0
  %v858 = vsel %vm316, %v744, 0
  %v861 = vsel %vm316, %v745, 0
  %v864 = vsel %vm316, %v746, 0
  %v867 = vsel %vm316, %v747, 0
  %v870 = vsel %vm316, %v748, 0
  %v873 = vsel %vm316, %v749, 0
  %v876 = vsel %vm316, %v750, 0
  %v879 = vsel %vm316, %v751, 0
  %v882 = vsel %vm316, %v752, 0
  %v885 = vsel %vm316, %v753, 0
  %v888 = vsel %vm316, %v754, 0
  %v891 = vsel %vm316, %v755, 0
  %v894 = vsel %vm316, %v756, 0
  %v897 = vsel %vm316, %v757, 0
  %v900 = vsel %vm316, %v758, 0
  %v903 = vsel %vm316, %v759, 0
  %v906 = vsel %vm316, %v760, 0
  %v909 = vsel %vm371, %v851, 0
  %911 = vmatprep.subr.mxu0 0.0
  %912 = vmatpush1.msra.mxu0 %v836
  %913 = vmatprep.subr.mxu0 0.0
  %914 = vmatpush1.msra.mxu0 %v841
  %915 = vmatprep.subr.mxu0 0.0
  %916 = vmatpush1.msra.mxu0 %v846
  %917 = vmatprep.subr.mxu0 0.0
  %918 = vmatpush1.msra.mxu0 %v909
  %919 = vmatprep.subr.mxu0 0.0
  %920 = vmatpush1.msra.mxu0 0.0
  %921 = vmatprep.subr.mxu0 0.0
  %922 = vmatpush1.msra.mxu0 0.0
  %923 = vmatprep.subr.mxu0 0.0
  %924 = vmatpush1.msra.mxu0 0.0
  %925 = vmatprep.subr.mxu0 0.0
  %926 = vmatpush1.msra.mxu0 0.0
  %927 = vmatprep.subr.mxu0 0.0
  %928 = vmatpush1.msra.mxu0 0.0
  %929 = vmatprep.subr.mxu0 0.0
  %930 = vmatpush1.msra.mxu0 0.0
  %931 = vmatprep.subr.mxu0 0.0
  %932 = vmatpush1.msra.mxu0 0.0
  %933 = vmatprep.subr.mxu0 0.0
  %934 = vmatpush1.msra.mxu0 0.0
  %935 = vmatprep.subr.mxu0 0.0
  %936 = vmatpush1.msra.mxu0 0.0
  %937 = vmatprep.subr.mxu0 0.0
  %938 = vmatpush1.msra.mxu0 0.0
  %939 = vmatprep.subr.mxu0 0.0
  %940 = vmatpush1.msra.mxu0 0.0
  %941 = vmatprep.subr.mxu0 0.0
  %942 = vmatpush1.msra.mxu0 0.0
  %943 = vmatprep.subr.mxu0 0.0
  %944 = vmatpush1.msra.mxu0 0.0
  %945 = vmatprep.subr.mxu0 0.0
  %946 = vmatpush1.msra.mxu0 0.0
  %947 = vmatprep.subr.mxu0 0.0
  %948 = vmatpush1.msra.mxu0 0.0
  %949 = vmatprep.subr.mxu0 0.0
  %950 = vmatpush1.msra.mxu0 0.0
  %951 = vmatprep.subr.mxu0 0.0
  %952 = vmatpush1.msra.mxu0 0.0
  %953 = vmatprep.subr.mxu0 0.0
  %954 = vmatpush1.msra.mxu0 0.0
  %955 = vmatprep.subr.mxu0 0.0
  %956 = vmatpush1.msra.mxu0 0.0
  %957 = vmatprep.subr.mxu0 0.0
  %958 = vmatpush1.msra.mxu0 0.0
  %959 = vmatprep.subr.mxu0 0.0
  %960 = vmatpush1.msra.mxu0 0.0
  %961 = vmatprep.subr.mxu0 0.0
  %962 = vmatpush1.msra.mxu0 0.0
  %963 = vmatprep.subr.mxu0 0.0
  %964 = vmatpush1.msra.mxu0 0.0
  %965 = vmatprep.subr.mxu0 0.0
  %966 = vmatpush1.msra.mxu0 0.0
  %967 = vmatprep.subr.mxu0 0.0
  %968 = vmatpush1.msra.mxu0 0.0
  %969 = vmatprep.subr.mxu0 0.0
  %970 = vmatpush1.msra.mxu0 0.0
  %971 = vmatprep.subr.mxu0 0.0
  %972 = vmatpush1.msra.mxu0 0.0
  %973 = vmatprep.subr.mxu0 0.0
  %974 = vmatpush1.msra.mxu0 0.0
  %975 = vmatprep.mubr.f32.mxu0 0.0
  %976 = vmatmul.mubr.f32.gmra.mrb[0].mxu0 %v855
  %v977 = vpop.f32.mrb[0].mxu0
  %v978 = vadd.f32 0.0, %v977
  %v979 = vpop.f32.mrb[0].mxu0
  %980 = vmatprep.mubr.f32.mxu0 0.0
  %981 = vmatmul.mubr.f32.gmra.mrb[0].mxu0 %v858
  %v982 = vpop.f32.mrb[0].mxu0
  %v983 = vadd.f32 0.0, %v982
  %v984 = vpop.f32.mrb[0].mxu0
  %985 = vmatprep.mubr.f32.mxu0 0.0
  %986 = vmatmul.mubr.f32.gmra.mrb[0].mxu0 %v861
  %v987 = vpop.f32.mrb[0].mxu0
  %v988 = vadd.f32 0.0, %v987
  %v989 = vpop.f32.mrb[0].mxu0
  %990 = vmatprep.mubr.f32.mxu0 0.0
  %991 = vmatmul.mubr.f32.gmra.mrb[0].mxu0 %v864
  %v992 = vpop.f32.mrb[0].mxu0
  %v993 = vadd.f32 0.0, %v992
  %v994 = vpop.f32.mrb[0].mxu0
  %995 = vmatprep.mubr.f32.mxu0 0.0
  %996 = vmatmul.mubr.f32.gmra.mrb[0].mxu0 %v867
  %v997 = vpop.f32.mrb[0].mxu0
  %v998 = vadd.f32 0.0, %v997
  %v999 = vpop.f32.mrb[0].mxu0
  %1000 = vmatprep.mubr.f32.mxu0 0.0
  %1001 = vmatmul.mubr.f32.gmra.mrb[0].mxu0 %v870
  %v1002 = vpop.f32.mrb[0].mxu0
  %v1003 = vadd.f32 0.0, %v1002
  %v1004 = vpop.f32.mrb[0].mxu0
  %1005 = vmatprep.mubr.f32.mxu0 0.0
  %1006 = vmatmul.mubr.f32.gmra.mrb[0].mxu0 %v873
  %v1007 = vpop.f32.mrb[0].mxu0
  %v1008 = vadd.f32 0.0, %v1007
  %v1009 = vpop.f32.mrb[0].mxu0
  %1010 = vmatprep.mubr.f32.mxu0 0.0
  %1011 = vmatmul.mubr.f32.gmra.mrb[0].mxu0 %v876
  %v1012 = vpop.f32.mrb[0].mxu0
  %v1013 = vadd.f32 0.0, %v1012
  %v1014 = vpop.f32.mrb[0].mxu0
  %1015 = vmatprep.mubr.f32.mxu0 0.0
  %1016 = vmatmul.mubr.f32.gmra.mrb[0].mxu0 %v879
  %v1017 = vpop.f32.mrb[0].mxu0
  %v1018 = vadd.f32 0.0, %v1017
  %v1019 = vpop.f32.mrb[0].mxu0
  %1020 = vmatprep.mubr.f32.mxu0 0.0
  %1021 = vmatmul.mubr.f32.gmra.mrb[0].mxu0 %v882
  %v1022 = vpop.f32.mrb[0].mxu0
  %v1023 = vadd.f32 0.0, %v1022
  %v1024 = vpop.f32.mrb[0].mxu0
  %1025 = vmatprep.mubr.f32.mxu0 0.0
  %1026 = vmatmul.mubr.f32.gmra.mrb[0].mxu0 %v885
  %v1027 = vpop.f32.mrb[0].mxu0
  %v1028 = vadd.f32 0.0, %v1027
  %v1029 = vpop.f32.mrb[0].mxu0
  %1030 = vmatprep.mubr.f32.mxu0 0.0
  %1031 = vmatmul.mubr.f32.gmra.mrb[0].mxu0 %v888
  %v1032 = vpop.f32.mrb[0].mxu0
  %v1033 = vadd.f32 0.0, %v1032
  %v1034 = vpop.f32.mrb[0].mxu0
  %1035 = vmatprep.mubr.f32.mxu0 0.0
  %1036 = vmatmul.mubr.f32.gmra.mrb[0].mxu0 %v891
  %v1037 = vpop.f32.mrb[0].mxu0
  %v1038 = vadd.f32 0.0, %v1037
  %v1039 = vpop.f32.mrb[0].mxu0
  %1040 = vmatprep.mubr.f32.mxu0 0.0
  %1041 = vmatmul.mubr.f32.gmra.mrb[0].mxu0 %v894
  %v1042 = vpop.f32.mrb[0].mxu0
  %v1043 = vadd.f32 0.0, %v1042
  %v1044 = vpop.f32.mrb[0].mxu0
  %1045 = vmatprep.mubr.f32.mxu0 0.0
  %1046 = vmatmul.mubr.f32.gmra.mrb[0].mxu0 %v897
  %v1047 = vpop.f32.mrb[0].mxu0
  %v1048 = vadd.f32 0.0, %v1047
  %v1049 = vpop.f32.mrb[0].mxu0
  %1050 = vmatprep.mubr.f32.mxu0 0.0
  %1051 = vmatmul.mubr.f32.gmra.mrb[0].mxu0 %v900
  %v1052 = vpop.f32.mrb[0].mxu0
  %v1053 = vadd.f32 0.0, %v1052
  %v1054 = vpop.f32.mrb[0].mxu0
  %1055 = vmatprep.mubr.f32.mxu0 0.0
  %1056 = vmatmul.mubr.f32.gmra.mrb[0].mxu0 %v903
  %v1057 = vpop.f32.mrb[0].mxu0
  %v1058 = vadd.f32 0.0, %v1057
  %v1059 = vpop.f32.mrb[0].mxu0
  %1060 = vmatprep.mubr.f32.mxu0 0.0
  %1061 = vmatmul.mubr.f32.gmra.mrb[0].mxu0 %v906
  %v1062 = vpop.f32.mrb[0].mxu0
  %v1063 = vadd.f32 0.0, %v1062
  %v1064 = vpop.f32.mrb[0].mxu0
  %1065 = vdwg.mxu0
  %v1066 = vadd.f32 %v654, %v978
  %v1067 = vadd.f32 %v659, %v983
  %v1068 = vadd.f32 %v664, %v988
  %v1069 = vadd.f32 %v669, %v993
  %v1070 = vadd.f32 %v674, %v998
  %v1071 = vadd.f32 %v679, %v1003
  %v1072 = vadd.f32 %v684, %v1008
  %v1073 = vadd.f32 %v689, %v1013
  %v1074 = vadd.f32 %v694, %v1018
  %v1075 = vadd.f32 %v699, %v1023
  %v1076 = vadd.f32 %v704, %v1028
  %v1077 = vadd.f32 %v709, %v1033
  %v1078 = vadd.f32 %v714, %v1038
  %v1079 = vadd.f32 %v719, %v1043
  %v1080 = vadd.f32 %v724, %v1048
  %v1081 = vadd.f32 %v729, %v1053
  %v1082 = vadd.f32 %v734, %v1058
  %v1083 = vadd.f32 %v739, %v1063
  %s1084 = scalar_lea.vmem %s1, 432
  %v1085 = vld [vmem:[%s1084] sm:$0xff]
  %v1086 = vld [vmem:[%s1084 + $0x8] sm:$0xff]
  %v1087 = vld [vmem:[%s1084 + $0x10] sm:$0xff]
  %v1088 = vld [vmem:[%s1084 + $0x18] sm:$0xff]
  %v1089 = vld [vmem:[%s1084 + $0x20] sm:$0xff]
  %v1090 = vld [vmem:[%s1084 + $0x28] sm:$0xff]
  %v1091 = vld [vmem:[%s1084 + $0x30] sm:$0xff]
  %v1092 = vld [vmem:[%s1084 + $0x38] sm:$0xff]
  %v1093 = vld [vmem:[%s1084 + $0x40] sm:$0xff]
  %v1094 = vld [vmem:[%s1084 + $0x48] sm:$0xff]
  %v1095 = vld [vmem:[%s1084 + $0x50] sm:$0xff]
  %v1096 = vld [vmem:[%s1084 + $0x58] sm:$0xff]
  %v1097 = vld [vmem:[%s1084 + $0x60] sm:$0xff]
  %v1098 = vld [vmem:[%s1084 + $0x68] sm:$0xff]
  %v1099 = vld [vmem:[%s1084 + $0x70] sm:$0xff]
  %v1100 = vld [vmem:[%s1084 + $0x78] sm:$0xff]
  %v1101 = vld [vmem:[%s1084 + $0x80] sm:$0xff]
  %v1102 = vld [vmem:[%s1084 + $0x88] sm:$0xff]
  %s1103 = scalar_lea.vmem %s3, 168
  %v1104 = vld [vmem:[%s1103] sm:$0xff]
  %v1105 = vld [vmem:[%s1103 + $0x8] sm:$0xff]
  %v1106 = vld [vmem:[%s1103 + $0x10] sm:$0xff]
  %v1107 = vld [vmem:[%s1103 + $0x18] sm:$0xff]
  %v1108 = vld [vmem:[%s1103 + $0x20] sm:$0xff]
  %v1109 = vld [vmem:[%s1103 + $0x28] sm:$0xff]
  %v1110 = vld [vmem:[%s1103 + $0x30] sm:$0xff]
  %1111 = vmatprep.subr.mxu0 0.0
  %1112 = vmatpush1.msra.mxu0 %v1104
  %1113 = vmatprep.subr.mxu0 0.0
  %1114 = vmatpush1.msra.mxu0 %v1105
  %1115 = vmatprep.subr.mxu0 0.0
  %1116 = vmatpush1.msra.mxu0 %v1106
  %1117 = vmatprep.subr.mxu0 0.0
  %1118 = vmatpush1.msra.mxu0 %v1107
  %1119 = vmatprep.subr.mxu0 0.0
  %1120 = vmatpush1.msra.mxu0 %v1108
  %1121 = vmatprep.subr.mxu0 0.0
  %1122 = vmatpush1.msra.mxu0 %v1109
  %1123 = vmatprep.subr.mxu0 0.0
  %1124 = vmatpush1.msra.mxu0 %v1110
  %1125 = vmatprep.subr.mxu0 0.0
  %1126 = vmatpush1.msra.mxu0 0.0
  %1127 = vmatprep.subr.mxu0 0.0
  %1128 = vmatpush1.msra.mxu0 0.0
  %1129 = vmatprep.subr.mxu0 0.0
  %1130 = vmatpush1.msra.mxu0 0.0
  %1131 = vmatprep.subr.mxu0 0.0
  %1132 = vmatpush1.msra.mxu0 0.0
  %1133 = vmatprep.subr.mxu0 0.0
  %1134 = vmatpush1.msra.mxu0 0.0
  %1135 = vmatprep.subr.mxu0 0.0
  %1136 = vmatpush1.msra.mxu0 0.0
  %1137 = vmatprep.subr.mxu0 0.0
  %1138 = vmatpush1.msra.mxu0 0.0
  %1139 = vmatprep.subr.mxu0 0.0
  %1140 = vmatpush1.msra.mxu0 0.0
  %1141 = vmatprep.subr.mxu0 0.0
  %1142 = vmatpush1.msra.mxu0 0.0
  %1143 = vmatprep.subr.mxu0 0.0
  %1144 = vmatpush1.msra.mxu0 0.0
  %1145 = vmatprep.subr.mxu0 0.0
  %1146 = vmatpush1.msra.mxu0 0.0
  %1147 = vmatprep.subr.mxu0 0.0
  %1148 = vmatpush1.msra.mxu0 0.0
  %1149 = vmatprep.subr.mxu0 0.0
  %1150 = vmatpush1.msra.mxu0 0.0
  %1151 = vmatprep.subr.mxu0 0.0
  %1152 = vmatpush1.msra.mxu0 0.0
  %1153 = vmatprep.subr.mxu0 0.0
  %1154 = vmatpush1.msra.mxu0 0.0
  %1155 = vmatprep.subr.mxu0 0.0
  %1156 = vmatpush1.msra.mxu0 0.0
  %1157 = vmatprep.subr.mxu0 0.0
  %1158 = vmatpush1.msra.mxu0 0.0
  %1159 = vmatprep.subr.mxu0 0.0
  %1160 = vmatpush1.msra.mxu0 0.0
  %1161 = vmatprep.subr.mxu0 0.0
  %1162 = vmatpush1.msra.mxu0 0.0
  %1163 = vmatprep.subr.mxu0 0.0
  %1164 = vmatpush1.msra.mxu0 0.0
  %1165 = vmatprep.subr.mxu0 0.0
  %1166 = vmatpush1.msra.mxu0 0.0
  %1167 = vmatprep.subr.mxu0 0.0
  %1168 = vmatpush1.msra.mxu0 0.0
  %1169 = vmatprep.subr.mxu0 0.0
  %1170 = vmatpush1.msra.mxu0 0.0
  %1171 = vmatprep.subr.mxu0 0.0
  %1172 = vmatpush1.msra.mxu0 0.0
  %1173 = vmatprep.subr.mxu0 0.0
  %1174 = vmatpush1.msra.mxu0 0.0
  %1175 = vmatprep.mubr.f32.mxu0 0.0
  %1176 = vmatmul.mubr.f32.gmra.mrb[0].mxu0 %v108
  %v1177 = vpop.f32.mrb[0].mxu0
  %v1178 = vadd.f32 0.0, %v1177
  %v1179 = vpop.f32.mrb[0].mxu0
  %1180 = vmatprep.mubr.f32.mxu0 0.0
  %1181 = vmatmul.mubr.f32.gmra.mrb[0].mxu0 %v111
  %v1182 = vpop.f32.mrb[0].mxu0
  %v1183 = vadd.f32 0.0, %v1182
  %v1184 = vpop.f32.mrb[0].mxu0
  %1185 = vmatprep.mubr.f32.mxu0 0.0
  %1186 = vmatmul.mubr.f32.gmra.mrb[0].mxu0 %v114
  %v1187 = vpop.f32.mrb[0].mxu0
  %v1188 = vadd.f32 0.0, %v1187
  %v1189 = vpop.f32.mrb[0].mxu0
  %1190 = vmatprep.mubr.f32.mxu0 0.0
  %1191 = vmatmul.mubr.f32.gmra.mrb[0].mxu0 %v117
  %v1192 = vpop.f32.mrb[0].mxu0
  %v1193 = vadd.f32 0.0, %v1192
  %v1194 = vpop.f32.mrb[0].mxu0
  %1195 = vdwg.mxu0
  %v1197 = vsel %vm316, %v1085, 0
  %v1200 = vsel %vm316, %v1086, 0
  %v1203 = vsel %vm316, %v1087, 0
  %v1206 = vsel %vm316, %v1088, 0
  %v1209 = vsel %vm316, %v1089, 0
  %v1212 = vsel %vm316, %v1090, 0
  %v1215 = vsel %vm316, %v1091, 0
  %v1218 = vsel %vm316, %v1092, 0
  %v1221 = vsel %vm316, %v1093, 0
  %v1224 = vsel %vm316, %v1094, 0
  %v1227 = vsel %vm316, %v1095, 0
  %v1230 = vsel %vm316, %v1096, 0
  %v1233 = vsel %vm316, %v1097, 0
  %v1236 = vsel %vm316, %v1098, 0
  %v1239 = vsel %vm316, %v1099, 0
  %v1242 = vsel %vm316, %v1100, 0
  %v1245 = vsel %vm316, %v1101, 0
  %v1248 = vsel %vm316, %v1102, 0
  %v1251 = vsel %vm371, %v1193, 0
  %1253 = vmatprep.subr.mxu0 0.0
  %1254 = vmatpush1.msra.mxu0 %v1178
  %1255 = vmatprep.subr.mxu0 0.0
  %1256 = vmatpush1.msra.mxu0 %v1183
  %1257 = vmatprep.subr.mxu0 0.0
  %1258 = vmatpush1.msra.mxu0 %v1188
  %1259 = vmatprep.subr.mxu0 0.0
  %1260 = vmatpush1.msra.mxu0 %v1251
  %1261 = vmatprep.subr.mxu0 0.0
  %1262 = vmatpush1.msra.mxu0 0.0
  %1263 = vmatprep.subr.mxu0 0.0
  %1264 = vmatpush1.msra.mxu0 0.0
  %1265 = vmatprep.subr.mxu0 0.0
  %1266 = vmatpush1.msra.mxu0 0.0
  %1267 = vmatprep.subr.mxu0 0.0
  %1268 = vmatpush1.msra.mxu0 0.0
  %1269 = vmatprep.subr.mxu0 0.0
  %1270 = vmatpush1.msra.mxu0 0.0
  %1271 = vmatprep.subr.mxu0 0.0
  %1272 = vmatpush1.msra.mxu0 0.0
  %1273 = vmatprep.subr.mxu0 0.0
  %1274 = vmatpush1.msra.mxu0 0.0
  %1275 = vmatprep.subr.mxu0 0.0
  %1276 = vmatpush1.msra.mxu0 0.0
  %1277 = vmatprep.subr.mxu0 0.0
  %1278 = vmatpush1.msra.mxu0 0.0
  %1279 = vmatprep.subr.mxu0 0.0
  %1280 = vmatpush1.msra.mxu0 0.0
  %1281 = vmatprep.subr.mxu0 0.0
  %1282 = vmatpush1.msra.mxu0 0.0
  %1283 = vmatprep.subr.mxu0 0.0
  %1284 = vmatpush1.msra.mxu0 0.0
  %1285 = vmatprep.subr.mxu0 0.0
  %1286 = vmatpush1.msra.mxu0 0.0
  %1287 = vmatprep.subr.mxu0 0.0
  %1288 = vmatpush1.msra.mxu0 0.0
  %1289 = vmatprep.subr.mxu0 0.0
  %1290 = vmatpush1.msra.mxu0 0.0
  %1291 = vmatprep.subr.mxu0 0.0
  %1292 = vmatpush1.msra.mxu0 0.0
  %1293 = vmatprep.subr.mxu0 0.0
  %1294 = vmatpush1.msra.mxu0 0.0
  %1295 = vmatprep.subr.mxu0 0.0
  %1296 = vmatpush1.msra.mxu0 0.0
  %1297 = vmatprep.subr.mxu0 0.0
  %1298 = vmatpush1.msra.mxu0 0.0
  %1299 = vmatprep.subr.mxu0 0.0
  %1300 = vmatpush1.msra.mxu0 0.0
  %1301 = vmatprep.subr.mxu0 0.0
  %1302 = vmatpush1.msra.mxu0 0.0
  %1303 = vmatprep.subr.mxu0 0.0
  %1304 = vmatpush1.msra.mxu0 0.0
  %1305 = vmatprep.subr.mxu0 0.0
  %1306 = vmatpush1.msra.mxu0 0.0
  %1307 = vmatprep.subr.mxu0 0.0
  %1308 = vmatpush1.msra.mxu0 0.0
  %1309 = vmatprep.subr.mxu0 0.0
  %1310 = vmatpush1.msra.mxu0 0.0
  %1311 = vmatprep.subr.mxu0 0.0
  %1312 = vmatpush1.msra.mxu0 0.0
  %1313 = vmatprep.subr.mxu0 0.0
  %1314 = vmatpush1.msra.mxu0 0.0
  %1315 = vmatprep.subr.mxu0 0.0
  %1316 = vmatpush1.msra.mxu0 0.0
  %1317 = vmatprep.mubr.f32.mxu0 0.0
  %1318 = vmatmul.mubr.f32.gmra.mrb[0].mxu0 %v1197
  %v1319 = vpop.f32.mrb[0].mxu0
  %v1320 = vadd.f32 0.0, %v1319
  %v1321 = vpop.f32.mrb[0].mxu0
  %1322 = vmatprep.mubr.f32.mxu0 0.0
  %1323 = vmatmul.mubr.f32.gmra.mrb[0].mxu0 %v1200
  %v1324 = vpop.f32.mrb[0].mxu0
  %v1325 = vadd.f32 0.0, %v1324
  %v1326 = vpop.f32.mrb[0].mxu0
  %1327 = vmatprep.mubr.f32.mxu0 0.0
  %1328 = vmatmul.mubr.f32.gmra.mrb[0].mxu0 %v1203
  %v1329 = vpop.f32.mrb[0].mxu0
  %v1330 = vadd.f32 0.0, %v1329
  %v1331 = vpop.f32.mrb[0].mxu0
  %1332 = vmatprep.mubr.f32.mxu0 0.0
  %1333 = vmatmul.mubr.f32.gmra.mrb[0].mxu0 %v1206
  %v1334 = vpop.f32.mrb[0].mxu0
  %v1335 = vadd.f32 0.0, %v1334
  %v1336 = vpop.f32.mrb[0].mxu0
  %1337 = vmatprep.mubr.f32.mxu0 0.0
  %1338 = vmatmul.mubr.f32.gmra.mrb[0].mxu0 %v1209
  %v1339 = vpop.f32.mrb[0].mxu0
  %v1340 = vadd.f32 0.0, %v1339
  %v1341 = vpop.f32.mrb[0].mxu0
  %1342 = vmatprep.mubr.f32.mxu0 0.0
  %1343 = vmatmul.mubr.f32.gmra.mrb[0].mxu0 %v1212
  %v1344 = vpop.f32.mrb[0].mxu0
  %v1345 = vadd.f32 0.0, %v1344
  %v1346 = vpop.f32.mrb[0].mxu0
  %1347 = vmatprep.mubr.f32.mxu0 0.0
  %1348 = vmatmul.mubr.f32.gmra.mrb[0].mxu0 %v1215
  %v1349 = vpop.f32.mrb[0].mxu0
  %v1350 = vadd.f32 0.0, %v1349
  %v1351 = vpop.f32.mrb[0].mxu0
  %1352 = vmatprep.mubr.f32.mxu0 0.0
  %1353 = vmatmul.mubr.f32.gmra.mrb[0].mxu0 %v1218
  %v1354 = vpop.f32.mrb[0].mxu0
  %v1355 = vadd.f32 0.0, %v1354
  %v1356 = vpop.f32.mrb[0].mxu0
  %1357 = vmatprep.mubr.f32.mxu0 0.0
  %1358 = vmatmul.mubr.f32.gmra.mrb[0].mxu0 %v1221
  %v1359 = vpop.f32.mrb[0].mxu0
  %v1360 = vadd.f32 0.0, %v1359
  %v1361 = vpop.f32.mrb[0].mxu0
  %1362 = vmatprep.mubr.f32.mxu0 0.0
  %1363 = vmatmul.mubr.f32.gmra.mrb[0].mxu0 %v1224
  %v1364 = vpop.f32.mrb[0].mxu0
  %v1365 = vadd.f32 0.0, %v1364
  %v1366 = vpop.f32.mrb[0].mxu0
  %1367 = vmatprep.mubr.f32.mxu0 0.0
  %1368 = vmatmul.mubr.f32.gmra.mrb[0].mxu0 %v1227
  %v1369 = vpop.f32.mrb[0].mxu0
  %v1370 = vadd.f32 0.0, %v1369
  %v1371 = vpop.f32.mrb[0].mxu0
  %1372 = vmatprep.mubr.f32.mxu0 0.0
  %1373 = vmatmul.mubr.f32.gmra.mrb[0].mxu0 %v1230
  %v1374 = vpop.f32.mrb[0].mxu0
  %v1375 = vadd.f32 0.0, %v1374
  %v1376 = vpop.f32.mrb[0].mxu0
  %1377 = vmatprep.mubr.f32.mxu0 0.0
  %1378 = vmatmul.mubr.f32.gmra.mrb[0].mxu0 %v1233
  %v1379 = vpop.f32.mrb[0].mxu0
  %v1380 = vadd.f32 0.0, %v1379
  %v1381 = vpop.f32.mrb[0].mxu0
  %1382 = vmatprep.mubr.f32.mxu0 0.0
  %1383 = vmatmul.mubr.f32.gmra.mrb[0].mxu0 %v1236
  %v1384 = vpop.f32.mrb[0].mxu0
  %v1385 = vadd.f32 0.0, %v1384
  %v1386 = vpop.f32.mrb[0].mxu0
  %1387 = vmatprep.mubr.f32.mxu0 0.0
  %1388 = vmatmul.mubr.f32.gmra.mrb[0].mxu0 %v1239
  %v1389 = vpop.f32.mrb[0].mxu0
  %v1390 = vadd.f32 0.0, %v1389
  %v1391 = vpop.f32.mrb[0].mxu0
  %1392 = vmatprep.mubr.f32.mxu0 0.0
  %1393 = vmatmul.mubr.f32.gmra.mrb[0].mxu0 %v1242
  %v1394 = vpop.f32.mrb[0].mxu0
  %v1395 = vadd.f32 0.0, %v1394
  %v1396 = vpop.f32.mrb[0].mxu0
  %1397 = vmatprep.mubr.f32.mxu0 0.0
  %1398 = vmatmul.mubr.f32.gmra.mrb[0].mxu0 %v1245
  %v1399 = vpop.f32.mrb[0].mxu0
  %v1400 = vadd.f32 0.0, %v1399
  %v1401 = vpop.f32.mrb[0].mxu0
  %1402 = vmatprep.mubr.f32.mxu0 0.0
  %1403 = vmatmul.mubr.f32.gmra.mrb[0].mxu0 %v1248
  %v1404 = vpop.f32.mrb[0].mxu0
  %v1405 = vadd.f32 0.0, %v1404
  %v1406 = vpop.f32.mrb[0].mxu0
  %1407 = vdwg.mxu0
  %v1408 = vadd.f32 %v1066, %v1320
  %v1409 = vadd.f32 %v1067, %v1325
  %v1410 = vadd.f32 %v1068, %v1330
  %v1411 = vadd.f32 %v1069, %v1335
  %v1412 = vadd.f32 %v1070, %v1340
  %v1413 = vadd.f32 %v1071, %v1345
  %v1414 = vadd.f32 %v1072, %v1350
  %v1415 = vadd.f32 %v1073, %v1355
  %v1416 = vadd.f32 %v1074, %v1360
  %v1417 = vadd.f32 %v1075, %v1365
  %v1418 = vadd.f32 %v1076, %v1370
  %v1419 = vadd.f32 %v1077, %v1375
  %v1420 = vadd.f32 %v1078, %v1380
  %v1421 = vadd.f32 %v1079, %v1385
  %v1422 = vadd.f32 %v1080, %v1390
  %v1423 = vadd.f32 %v1081, %v1395
  %v1424 = vadd.f32 %v1082, %v1400
  %v1425 = vadd.f32 %v1083, %v1405
  %s1426 = scalar_lea.vmem %s1, 576
  %v1427 = vld [vmem:[%s1426] sm:$0xff]
  %v1428 = vld [vmem:[%s1426 + $0x8] sm:$0xff]
  %v1429 = vld [vmem:[%s1426 + $0x10] sm:$0xff]
  %v1430 = vld [vmem:[%s1426 + $0x18] sm:$0xff]
  %v1431 = vld [vmem:[%s1426 + $0x20] sm:$0xff]
  %v1432 = vld [vmem:[%s1426 + $0x28] sm:$0xff]
  %v1433 = vld [vmem:[%s1426 + $0x30] sm:$0xff]
  %v1434 = vld [vmem:[%s1426 + $0x38] sm:$0xff]
  %v1435 = vld [vmem:[%s1426 + $0x40] sm:$0xff]
  %v1436 = vld [vmem:[%s1426 + $0x48] sm:$0xff]
  %v1437 = vld [vmem:[%s1426 + $0x50] sm:$0xff]
  %v1438 = vld [vmem:[%s1426 + $0x58] sm:$0xff]
  %v1439 = vld [vmem:[%s1426 + $0x60] sm:$0xff]
  %v1440 = vld [vmem:[%s1426 + $0x68] sm:$0xff]
  %v1441 = vld [vmem:[%s1426 + $0x70] sm:$0xff]
  %v1442 = vld [vmem:[%s1426 + $0x78] sm:$0xff]
  %v1443 = vld [vmem:[%s1426 + $0x80] sm:$0xff]
  %v1444 = vld [vmem:[%s1426 + $0x88] sm:$0xff]
  %s1445 = scalar_lea.vmem %s3, 224
  %v1446 = vld [vmem:[%s1445] sm:$0xff]
  %v1447 = vld [vmem:[%s1445 + $0x8] sm:$0xff]
  %v1448 = vld [vmem:[%s1445 + $0x10] sm:$0xff]
  %v1449 = vld [vmem:[%s1445 + $0x18] sm:$0xff]
  %v1450 = vld [vmem:[%s1445 + $0x20] sm:$0xff]
  %v1451 = vld [vmem:[%s1445 + $0x28] sm:$0xff]
  %v1452 = vld [vmem:[%s1445 + $0x30] sm:$0xff]
  %1453 = vmatprep.subr.mxu0 0.0
  %1454 = vmatpush1.msra.mxu0 %v1446
  %1455 = vmatprep.subr.mxu0 0.0
  %1456 = vmatpush1.msra.mxu0 %v1447
  %1457 = vmatprep.subr.mxu0 0.0
  %1458 = vmatpush1.msra.mxu0 %v1448
  %1459 = vmatprep.subr.mxu0 0.0
  %1460 = vmatpush1.msra.mxu0 %v1449
  %1461 = vmatprep.subr.mxu0 0.0
  %1462 = vmatpush1.msra.mxu0 %v1450
  %1463 = vmatprep.subr.mxu0 0.0
  %1464 = vmatpush1.msra.mxu0 %v1451
  %1465 = vmatprep.subr.mxu0 0.0
  %1466 = vmatpush1.msra.mxu0 %v1452
  %1467 = vmatprep.subr.mxu0 0.0
  %1468 = vmatpush1.msra.mxu0 0.0
  %1469 = vmatprep.subr.mxu0 0.0
  %1470 = vmatpush1.msra.mxu0 0.0
  %1471 = vmatprep.subr.mxu0 0.0
  %1472 = vmatpush1.msra.mxu0 0.0
  %1473 = vmatprep.subr.mxu0 0.0
  %1474 = vmatpush1.msra.mxu0 0.0
  %1475 = vmatprep.subr.mxu0 0.0
  %1476 = vmatpush1.msra.mxu0 0.0
  %1477 = vmatprep.subr.mxu0 0.0
  %1478 = vmatpush1.msra.mxu0 0.0
  %1479 = vmatprep.subr.mxu0 0.0
  %1480 = vmatpush1.msra.mxu0 0.0
  %1481 = vmatprep.subr.mxu0 0.0
  %1482 = vmatpush1.msra.mxu0 0.0
  %1483 = vmatprep.subr.mxu0 0.0
  %1484 = vmatpush1.msra.mxu0 0.0
  %1485 = vmatprep.subr.mxu0 0.0
  %1486 = vmatpush1.msra.mxu0 0.0
  %1487 = vmatprep.subr.mxu0 0.0
  %1488 = vmatpush1.msra.mxu0 0.0
  %1489 = vmatprep.subr.mxu0 0.0
  %1490 = vmatpush1.msra.mxu0 0.0
  %1491 = vmatprep.subr.mxu0 0.0
  %1492 = vmatpush1.msra.mxu0 0.0
  %1493 = vmatprep.subr.mxu0 0.0
  %1494 = vmatpush1.msra.mxu0 0.0
  %1495 = vmatprep.subr.mxu0 0.0
  %1496 = vmatpush1.msra.mxu0 0.0
  %1497 = vmatprep.subr.mxu0 0.0
  %1498 = vmatpush1.msra.mxu0 0.0
  %1499 = vmatprep.subr.mxu0 0.0
  %1500 = vmatpush1.msra.mxu0 0.0
  %1501 = vmatprep.subr.mxu0 0.0
  %1502 = vmatpush1.msra.mxu0 0.0
  %1503 = vmatprep.subr.mxu0 0.0
  %1504 = vmatpush1.msra.mxu0 0.0
  %1505 = vmatprep.subr.mxu0 0.0
  %1506 = vmatpush1.msra.mxu0 0.0
  %1507 = vmatprep.subr.mxu0 0.0
  %1508 = vmatpush1.msra.mxu0 0.0
  %1509 = vmatprep.subr.mxu0 0.0
  %1510 = vmatpush1.msra.mxu0 0.0
  %1511 = vmatprep.subr.mxu0 0.0
  %1512 = vmatpush1.msra.mxu0 0.0
  %1513 = vmatprep.subr.mxu0 0.0
  %1514 = vmatpush1.msra.mxu0 0.0
  %1515 = vmatprep.subr.mxu0 0.0
  %1516 = vmatpush1.msra.mxu0 0.0
  %1517 = vmatprep.mubr.f32.mxu0 0.0
  %1518 = vmatmul.mubr.f32.gmra.mrb[0].mxu0 %v108
  %v1519 = vpop.f32.mrb[0].mxu0
  %v1520 = vadd.f32 0.0, %v1519
  %v1521 = vpop.f32.mrb[0].mxu0
  %1522 = vmatprep.mubr.f32.mxu0 0.0
  %1523 = vmatmul.mubr.f32.gmra.mrb[0].mxu0 %v111
  %v1524 = vpop.f32.mrb[0].mxu0
  %v1525 = vadd.f32 0.0, %v1524
  %v1526 = vpop.f32.mrb[0].mxu0
  %1527 = vmatprep.mubr.f32.mxu0 0.0
  %1528 = vmatmul.mubr.f32.gmra.mrb[0].mxu0 %v114
  %v1529 = vpop.f32.mrb[0].mxu0
  %v1530 = vadd.f32 0.0, %v1529
  %v1531 = vpop.f32.mrb[0].mxu0
  %1532 = vmatprep.mubr.f32.mxu0 0.0
  %1533 = vmatmul.mubr.f32.gmra.mrb[0].mxu0 %v117
  %v1534 = vpop.f32.mrb[0].mxu0
  %v1535 = vadd.f32 0.0, %v1534
  %v1536 = vpop.f32.mrb[0].mxu0
  %1537 = vdwg.mxu0
  %v1539 = vsel %vm316, %v1427, 0
  %v1542 = vsel %vm316, %v1428, 0
  %v1545 = vsel %vm316, %v1429, 0
  %v1548 = vsel %vm316, %v1430, 0
  %v1551 = vsel %vm316, %v1431, 0
  %v1554 = vsel %vm316, %v1432, 0
  %v1557 = vsel %vm316, %v1433, 0
  %v1560 = vsel %vm316, %v1434, 0
  %v1563 = vsel %vm316, %v1435, 0
  %v1566 = vsel %vm316, %v1436, 0
  %v1569 = vsel %vm316, %v1437, 0
  %v1572 = vsel %vm316, %v1438, 0
  %v1575 = vsel %vm316, %v1439, 0
  %v1578 = vsel %vm316, %v1440, 0
  %v1581 = vsel %vm316, %v1441, 0
  %v1584 = vsel %vm316, %v1442, 0
  %v1587 = vsel %vm316, %v1443, 0
  %v1590 = vsel %vm316, %v1444, 0
  %v1593 = vsel %vm371, %v1535, 0
  %1595 = vmatprep.subr.mxu0 0.0
  %1596 = vmatpush1.msra.mxu0 %v1520
  %1597 = vmatprep.subr.mxu0 0.0
  %1598 = vmatpush1.msra.mxu0 %v1525
  %1599 = vmatprep.subr.mxu0 0.0
  %1600 = vmatpush1.msra.mxu0 %v1530
  %1601 = vmatprep.subr.mxu0 0.0
  %1602 = vmatpush1.msra.mxu0 %v1593
  %1603 = vmatprep.subr.mxu0 0.0
  %1604 = vmatpush1.msra.mxu0 0.0
  %1605 = vmatprep.subr.mxu0 0.0
  %1606 = vmatpush1.msra.mxu0 0.0
  %1607 = vmatprep.subr.mxu0 0.0
  %1608 = vmatpush1.msra.mxu0 0.0
  %1609 = vmatprep.subr.mxu0 0.0
  %1610 = vmatpush1.msra.mxu0 0.0
  %1611 = vmatprep.subr.mxu0 0.0
  %1612 = vmatpush1.msra.mxu0 0.0
  %1613 = vmatprep.subr.mxu0 0.0
  %1614 = vmatpush1.msra.mxu0 0.0
  %1615 = vmatprep.subr.mxu0 0.0
  %1616 = vmatpush1.msra.mxu0 0.0
  %1617 = vmatprep.subr.mxu0 0.0
  %1618 = vmatpush1.msra.mxu0 0.0
  %1619 = vmatprep.subr.mxu0 0.0
  %1620 = vmatpush1.msra.mxu0 0.0
  %1621 = vmatprep.subr.mxu0 0.0
  %1622 = vmatpush1.msra.mxu0 0.0
  %1623 = vmatprep.subr.mxu0 0.0
  %1624 = vmatpush1.msra.mxu0 0.0
  %1625 = vmatprep.subr.mxu0 0.0
  %1626 = vmatpush1.msra.mxu0 0.0
  %1627 = vmatprep.subr.mxu0 0.0
  %1628 = vmatpush1.msra.mxu0 0.0
  %1629 = vmatprep.subr.mxu0 0.0
  %1630 = vmatpush1.msra.mxu0 0.0
  %1631 = vmatprep.subr.mxu0 0.0
  %1632 = vmatpush1.msra.mxu0 0.0
  %1633 = vmatprep.subr.mxu0 0.0
  %1634 = vmatpush1.msra.mxu0 0.0
  %1635 = vmatprep.subr.mxu0 0.0
  %1636 = vmatpush1.msra.mxu0 0.0
  %1637 = vmatprep.subr.mxu0 0.0
  %1638 = vmatpush1.msra.mxu0 0.0
  %1639 = vmatprep.subr.mxu0 0.0
  %1640 = vmatpush1.msra.mxu0 0.0
  %1641 = vmatprep.subr.mxu0 0.0
  %1642 = vmatpush1.msra.mxu0 0.0
  %1643 = vmatprep.subr.mxu0 0.0
  %1644 = vmatpush1.msra.mxu0 0.0
  %1645 = vmatprep.subr.mxu0 0.0
  %1646 = vmatpush1.msra.mxu0 0.0
  %1647 = vmatprep.subr.mxu0 0.0
  %1648 = vmatpush1.msra.mxu0 0.0
  %1649 = vmatprep.subr.mxu0 0.0
  %1650 = vmatpush1.msra.mxu0 0.0
  %1651 = vmatprep.subr.mxu0 0.0
  %1652 = vmatpush1.msra.mxu0 0.0
  %1653 = vmatprep.subr.mxu0 0.0
  %1654 = vmatpush1.msra.mxu0 0.0
  %1655 = vmatprep.subr.mxu0 0.0
  %1656 = vmatpush1.msra.mxu0 0.0
  %1657 = vmatprep.subr.mxu0 0.0
  %1658 = vmatpush1.msra.mxu0 0.0
  %1659 = vmatprep.mubr.f32.mxu0 0.0
  %1660 = vmatmul.mubr.f32.gmra.mrb[0].mxu0 %v1539
  %v1661 = vpop.f32.mrb[0].mxu0
  %v1662 = vadd.f32 0.0, %v1661
  %v1663 = vpop.f32.mrb[0].mxu0
  %1664 = vmatprep.mubr.f32.mxu0 0.0
  %1665 = vmatmul.mubr.f32.gmra.mrb[0].mxu0 %v1542
  %v1666 = vpop.f32.mrb[0].mxu0
  %v1667 = vadd.f32 0.0, %v1666
  %v1668 = vpop.f32.mrb[0].mxu0
  %1669 = vmatprep.mubr.f32.mxu0 0.0
  %1670 = vmatmul.mubr.f32.gmra.mrb[0].mxu0 %v1545
  %v1671 = vpop.f32.mrb[0].mxu0
  %v1672 = vadd.f32 0.0, %v1671
  %v1673 = vpop.f32.mrb[0].mxu0
  %1674 = vmatprep.mubr.f32.mxu0 0.0
  %1675 = vmatmul.mubr.f32.gmra.mrb[0].mxu0 %v1548
  %v1676 = vpop.f32.mrb[0].mxu0
  %v1677 = vadd.f32 0.0, %v1676
  %v1678 = vpop.f32.mrb[0].mxu0
  %1679 = vmatprep.mubr.f32.mxu0 0.0
  %1680 = vmatmul.mubr.f32.gmra.mrb[0].mxu0 %v1551
  %v1681 = vpop.f32.mrb[0].mxu0
  %v1682 = vadd.f32 0.0, %v1681
  %v1683 = vpop.f32.mrb[0].mxu0
  %1684 = vmatprep.mubr.f32.mxu0 0.0
  %1685 = vmatmul.mubr.f32.gmra.mrb[0].mxu0 %v1554
  %v1686 = vpop.f32.mrb[0].mxu0
  %v1687 = vadd.f32 0.0, %v1686
  %v1688 = vpop.f32.mrb[0].mxu0
  %1689 = vmatprep.mubr.f32.mxu0 0.0
  %1690 = vmatmul.mubr.f32.gmra.mrb[0].mxu0 %v1557
  %v1691 = vpop.f32.mrb[0].mxu0
  %v1692 = vadd.f32 0.0, %v1691
  %v1693 = vpop.f32.mrb[0].mxu0
  %1694 = vmatprep.mubr.f32.mxu0 0.0
  %1695 = vmatmul.mubr.f32.gmra.mrb[0].mxu0 %v1560
  %v1696 = vpop.f32.mrb[0].mxu0
  %v1697 = vadd.f32 0.0, %v1696
  %v1698 = vpop.f32.mrb[0].mxu0
  %1699 = vmatprep.mubr.f32.mxu0 0.0
  %1700 = vmatmul.mubr.f32.gmra.mrb[0].mxu0 %v1563
  %v1701 = vpop.f32.mrb[0].mxu0
  %v1702 = vadd.f32 0.0, %v1701
  %v1703 = vpop.f32.mrb[0].mxu0
  %1704 = vmatprep.mubr.f32.mxu0 0.0
  %1705 = vmatmul.mubr.f32.gmra.mrb[0].mxu0 %v1566
  %v1706 = vpop.f32.mrb[0].mxu0
  %v1707 = vadd.f32 0.0, %v1706
  %v1708 = vpop.f32.mrb[0].mxu0
  %1709 = vmatprep.mubr.f32.mxu0 0.0
  %1710 = vmatmul.mubr.f32.gmra.mrb[0].mxu0 %v1569
  %v1711 = vpop.f32.mrb[0].mxu0
  %v1712 = vadd.f32 0.0, %v1711
  %v1713 = vpop.f32.mrb[0].mxu0
  %1714 = vmatprep.mubr.f32.mxu0 0.0
  %1715 = vmatmul.mubr.f32.gmra.mrb[0].mxu0 %v1572
  %v1716 = vpop.f32.mrb[0].mxu0
  %v1717 = vadd.f32 0.0, %v1716
  %v1718 = vpop.f32.mrb[0].mxu0
  %1719 = vmatprep.mubr.f32.mxu0 0.0
  %1720 = vmatmul.mubr.f32.gmra.mrb[0].mxu0 %v1575
  %v1721 = vpop.f32.mrb[0].mxu0
  %v1722 = vadd.f32 0.0, %v1721
  %v1723 = vpop.f32.mrb[0].mxu0
  %1724 = vmatprep.mubr.f32.mxu0 0.0
  %1725 = vmatmul.mubr.f32.gmra.mrb[0].mxu0 %v1578
  %v1726 = vpop.f32.mrb[0].mxu0
  %v1727 = vadd.f32 0.0, %v1726
  %v1728 = vpop.f32.mrb[0].mxu0
  %1729 = vmatprep.mubr.f32.mxu0 0.0
  %1730 = vmatmul.mubr.f32.gmra.mrb[0].mxu0 %v1581
  %v1731 = vpop.f32.mrb[0].mxu0
  %v1732 = vadd.f32 0.0, %v1731
  %v1733 = vpop.f32.mrb[0].mxu0
  %1734 = vmatprep.mubr.f32.mxu0 0.0
  %1735 = vmatmul.mubr.f32.gmra.mrb[0].mxu0 %v1584
  %v1736 = vpop.f32.mrb[0].mxu0
  %v1737 = vadd.f32 0.0, %v1736
  %v1738 = vpop.f32.mrb[0].mxu0
  %1739 = vmatprep.mubr.f32.mxu0 0.0
  %1740 = vmatmul.mubr.f32.gmra.mrb[0].mxu0 %v1587
  %v1741 = vpop.f32.mrb[0].mxu0
  %v1742 = vadd.f32 0.0, %v1741
  %v1743 = vpop.f32.mrb[0].mxu0
  %1744 = vmatprep.mubr.f32.mxu0 0.0
  %1745 = vmatmul.mubr.f32.gmra.mrb[0].mxu0 %v1590
  %v1746 = vpop.f32.mrb[0].mxu0
  %v1747 = vadd.f32 0.0, %v1746
  %v1748 = vpop.f32.mrb[0].mxu0
  %1749 = vdwg.mxu0
  %v1750 = vadd.f32 %v1408, %v1662
  %v1751 = vadd.f32 %v1409, %v1667
  %v1752 = vadd.f32 %v1410, %v1672
  %v1753 = vadd.f32 %v1411, %v1677
  %v1754 = vadd.f32 %v1412, %v1682
  %v1755 = vadd.f32 %v1413, %v1687
  %v1756 = vadd.f32 %v1414, %v1692
  %v1757 = vadd.f32 %v1415, %v1697
  %v1758 = vadd.f32 %v1416, %v1702
  %v1759 = vadd.f32 %v1417, %v1707
  %v1760 = vadd.f32 %v1418, %v1712
  %v1761 = vadd.f32 %v1419, %v1717
  %v1762 = vadd.f32 %v1420, %v1722
  %v1763 = vadd.f32 %v1421, %v1727
  %v1764 = vadd.f32 %v1422, %v1732
  %v1765 = vadd.f32 %v1423, %v1737
  %v1766 = vadd.f32 %v1424, %v1742
  %v1767 = vadd.f32 %v1425, %v1747
  %1769 = vset.pattern.permute.xlu0 0
  %1770 = vperm.xlu0 %1769, %v63
  %v1771 = vpop.permute.xlu0 %1770
  %1774 = vset.pattern.permute.xlu0 0
  %1775 = vperm.xlu0 %1774, %v64
  %v1776 = vpop.permute.xlu0 %1775
  %1779 = vset.pattern.permute.xlu0 0
  %1780 = vperm.xlu0 %1779, %v65
  %v1781 = vpop.permute.xlu0 %1780
  %1784 = vset.pattern.permute.xlu0 0
  %1785 = vperm.xlu0 %1784, %v66
  %v1786 = vpop.permute.xlu0 %1785
  %1789 = vset.pattern.permute.xlu0 0
  %1790 = vperm.xlu0 %1789, %v67
  %v1791 = vpop.permute.xlu0 %1790
  %1794 = vset.pattern.permute.xlu0 0
  %1795 = vperm.xlu0 %1794, %v68
  %v1796 = vpop.permute.xlu0 %1795
  %1799 = vset.pattern.permute.xlu0 0
  %1800 = vperm.xlu0 %1799, %v69
  %v1801 = vpop.permute.xlu0 %1800
  %1804 = vset.pattern.permute.xlu0 0
  %1805 = vperm.xlu0 %1804, %v70
  %v1806 = vpop.permute.xlu0 %1805
  %1809 = vset.pattern.permute.xlu0 0
  %1810 = vperm.xlu0 %1809, %v71
  %v1811 = vpop.permute.xlu0 %1810
  %1814 = vset.pattern.permute.xlu0 0
  %1815 = vperm.xlu0 %1814, %v72
  %v1816 = vpop.permute.xlu0 %1815
  %1819 = vset.pattern.permute.xlu0 0
  %1820 = vperm.xlu0 %1819, %v73
  %v1821 = vpop.permute.xlu0 %1820
  %1824 = vset.pattern.permute.xlu0 0
  %1825 = vperm.xlu0 %1824, %v74
  %v1826 = vpop.permute.xlu0 %1825
  %1829 = vset.pattern.permute.xlu0 0
  %1830 = vperm.xlu0 %1829, %v75
  %v1831 = vpop.permute.xlu0 %1830
  %1834 = vset.pattern.permute.xlu0 0
  %1835 = vperm.xlu0 %1834, %v76
  %v1836 = vpop.permute.xlu0 %1835
  %1839 = vset.pattern.permute.xlu0 0
  %1840 = vperm.xlu0 %1839, %v77
  %v1841 = vpop.permute.xlu0 %1840
  %1844 = vset.pattern.permute.xlu0 0
  %1845 = vperm.xlu0 %1844, %v78
  %v1846 = vpop.permute.xlu0 %1845
  %1849 = vset.pattern.permute.xlu0 0
  %1850 = vperm.xlu0 %1849, %v79
  %v1851 = vpop.permute.xlu0 %1850
  %1854 = vset.pattern.permute.xlu0 0
  %1855 = vperm.xlu0 %1854, %v80
  %v1856 = vpop.permute.xlu0 %1855
  %v1858 = vadd.f32 %v1750, %v1771
  %v1859 = vadd.f32 %v1751, %v1776
  %v1860 = vadd.f32 %v1752, %v1781
  %v1861 = vadd.f32 %v1753, %v1786
  %v1862 = vadd.f32 %v1754, %v1791
  %v1863 = vadd.f32 %v1755, %v1796
  %v1864 = vadd.f32 %v1756, %v1801
  %v1865 = vadd.f32 %v1757, %v1806
  %v1866 = vadd.f32 %v1758, %v1811
  %v1867 = vadd.f32 %v1759, %v1816
  %v1868 = vadd.f32 %v1760, %v1821
  %v1869 = vadd.f32 %v1761, %v1826
  %v1870 = vadd.f32 %v1762, %v1831
  %v1871 = vadd.f32 %v1763, %v1836
  %v1872 = vadd.f32 %v1764, %v1841
  %v1873 = vadd.f32 %v1765, %v1846
  %v1874 = vadd.f32 %v1766, %v1851
  %v1875 = vadd.f32 %v1767, %v1856
  %v1876 = vmax.f32 %v1858, 0.0
  %v1877 = vmax.f32 %v1859, 0.0
  %v1878 = vmax.f32 %v1860, 0.0
  %v1879 = vmax.f32 %v1861, 0.0
  %v1880 = vmax.f32 %v1862, 0.0
  %v1881 = vmax.f32 %v1863, 0.0
  %v1882 = vmax.f32 %v1864, 0.0
  %v1883 = vmax.f32 %v1865, 0.0
  %v1884 = vmax.f32 %v1866, 0.0
  %v1885 = vmax.f32 %v1867, 0.0
  %v1886 = vmax.f32 %v1868, 0.0
  %v1887 = vmax.f32 %v1869, 0.0
  %v1888 = vmax.f32 %v1870, 0.0
  %v1889 = vmax.f32 %v1871, 0.0
  %v1890 = vmax.f32 %v1872, 0.0
  %v1891 = vmax.f32 %v1873, 0.0
  %v1892 = vmax.f32 %v1874, 0.0
  %v1893 = vmax.f32 %v1875, 0.0
  %v1894 = vld [vmem:[%s5] sm:$0xff]
  %v1895 = vld [vmem:[%s5 + $0x8] sm:$0xff]
  %v1896 = vld [vmem:[%s5 + $0x10] sm:$0xff]
  %v1897 = vld [vmem:[%s5 + $0x18] sm:$0xff]
  %v1898 = vld [vmem:[%s5 + $0x20] sm:$0xff]
  %v1899 = vld [vmem:[%s5 + $0x28] sm:$0xff]
  %vm1900 = vcmask 392192
  %v1902 = vsel %vm1900, %v1876, 0
  %v1905 = vsel %vm1900, %v1877, 0
  %v1908 = vsel %vm1900, %v1878, 0
  %v1911 = vsel %vm1900, %v1879, 0
  %v1914 = vsel %vm1900, %v1880, 0
  %v1917 = vsel %vm1900, %v1881, 0
  %v1920 = vsel %vm1900, %v1882, 0
  %v1923 = vsel %vm1900, %v1883, 0
  %v1926 = vsel %vm1900, %v1884, 0
  %v1929 = vsel %vm1900, %v1885, 0
  %v1932 = vsel %vm1900, %v1886, 0
  %v1935 = vsel %vm1900, %v1887, 0
  %v1938 = vsel %vm1900, %v1888, 0
  %v1941 = vsel %vm1900, %v1889, 0
  %v1944 = vsel %vm1900, %v1890, 0
  %v1947 = vsel %vm1900, %v1891, 0
  %v1950 = vsel %vm1900, %v1892, 0
  %v1953 = vsel %vm1900, %v1893, 0
  %1955 = vmatprep.subr.mxu0 0.0
  %1956 = vmatpush1.msra.mxu0 %v1894
  %1957 = vmatprep.subr.mxu0 0.0
  %1958 = vmatpush1.msra.mxu0 %v1895
  %1959 = vmatprep.subr.mxu0 0.0
  %1960 = vmatpush1.msra.mxu0 %v1896
  %1961 = vmatprep.subr.mxu0 0.0
  %1962 = vmatpush1.msra.mxu0 %v1897
  %1963 = vmatprep.subr.mxu0 0.0
  %1964 = vmatpush1.msra.mxu0 %v1898
  %1965 = vmatprep.subr.mxu0 0.0
  %1966 = vmatpush1.msra.mxu0 %v1899
  %1967 = vmatprep.subr.mxu0 0.0
  %1968 = vmatpush1.msra.mxu0 0.0
  %1969 = vmatprep.subr.mxu0 0.0
  %1970 = vmatpush1.msra.mxu0 0.0
  %1971 = vmatprep.subr.mxu0 0.0
  %1972 = vmatpush1.msra.mxu0 0.0
  %1973 = vmatprep.subr.mxu0 0.0
  %1974 = vmatpush1.msra.mxu0 0.0
  %1975 = vmatprep.subr.mxu0 0.0
  %1976 = vmatpush1.msra.mxu0 0.0
  %1977 = vmatprep.subr.mxu0 0.0
  %1978 = vmatpush1.msra.mxu0 0.0
  %1979 = vmatprep.subr.mxu0 0.0
  %1980 = vmatpush1.msra.mxu0 0.0
  %1981 = vmatprep.subr.mxu0 0.0
  %1982 = vmatpush1.msra.mxu0 0.0
  %1983 = vmatprep.subr.mxu0 0.0
  %1984 = vmatpush1.msra.mxu0 0.0
  %1985 = vmatprep.subr.mxu0 0.0
  %1986 = vmatpush1.msra.mxu0 0.0
  %1987 = vmatprep.subr.mxu0 0.0
  %1988 = vmatpush1.msra.mxu0 0.0
  %1989 = vmatprep.subr.mxu0 0.0
  %1990 = vmatpush1.msra.mxu0 0.0
  %1991 = vmatprep.subr.mxu0 0.0
  %1992 = vmatpush1.msra.mxu0 0.0
  %1993 = vmatprep.subr.mxu0 0.0
  %1994 = vmatpush1.msra.mxu0 0.0
  %1995 = vmatprep.subr.mxu0 0.0
  %1996 = vmatpush1.msra.mxu0 0.0
  %1997 = vmatprep.subr.mxu0 0.0
  %1998 = vmatpush1.msra.mxu0 0.0
  %1999 = vmatprep.subr.mxu0 0.0
  %2000 = vmatpush1.msra.mxu0 0.0
  %2001 = vmatprep.subr.mxu0 0.0
  %2002 = vmatpush1.msra.mxu0 0.0
  %2003 = vmatprep.subr.mxu0 0.0
  %2004 = vmatpush1.msra.mxu0 0.0
  %2005 = vmatprep.subr.mxu0 0.0
  %2006 = vmatpush1.msra.mxu0 0.0
  %2007 = vmatprep.subr.mxu0 0.0
  %2008 = vmatpush1.msra.mxu0 0.0
  %2009 = vmatprep.subr.mxu0 0.0
  %2010 = vmatpush1.msra.mxu0 0.0
  %2011 = vmatprep.subr.mxu0 0.0
  %2012 = vmatpush1.msra.mxu0 0.0
  %2013 = vmatprep.subr.mxu0 0.0
  %2014 = vmatpush1.msra.mxu0 0.0
  %2015 = vmatprep.subr.mxu0 0.0
  %2016 = vmatpush1.msra.mxu0 0.0
  %2017 = vmatprep.subr.mxu0 0.0
  %2018 = vmatpush1.msra.mxu0 0.0
  %2019 = vmatprep.mubr.f32.mxu0 0.0
  %2020 = vmatmul.mubr.f32.gmra.mrb[0].mxu0 %v1902
  %v2021 = vpop.f32.mrb[0].mxu0
  %v2022 = vadd.f32 0.0, %v2021
  %v2023 = vpop.f32.mrb[0].mxu0
  %2024 = vmatprep.mubr.f32.mxu0 0.0
  %2025 = vmatmul.mubr.f32.gmra.mrb[0].mxu0 %v1905
  %v2026 = vpop.f32.mrb[0].mxu0
  %v2027 = vadd.f32 0.0, %v2026
  %v2028 = vpop.f32.mrb[0].mxu0
  %2029 = vmatprep.mubr.f32.mxu0 0.0
  %2030 = vmatmul.mubr.f32.gmra.mrb[0].mxu0 %v1908
  %v2031 = vpop.f32.mrb[0].mxu0
  %v2032 = vadd.f32 0.0, %v2031
  %v2033 = vpop.f32.mrb[0].mxu0
  %2034 = vmatprep.mubr.f32.mxu0 0.0
  %2035 = vmatmul.mubr.f32.gmra.mrb[0].mxu0 %v1911
  %v2036 = vpop.f32.mrb[0].mxu0
  %v2037 = vadd.f32 0.0, %v2036
  %v2038 = vpop.f32.mrb[0].mxu0
  %2039 = vmatprep.mubr.f32.mxu0 0.0
  %2040 = vmatmul.mubr.f32.gmra.mrb[0].mxu0 %v1914
  %v2041 = vpop.f32.mrb[0].mxu0
  %v2042 = vadd.f32 0.0, %v2041
  %v2043 = vpop.f32.mrb[0].mxu0
  %2044 = vmatprep.mubr.f32.mxu0 0.0
  %2045 = vmatmul.mubr.f32.gmra.mrb[0].mxu0 %v1917
  %v2046 = vpop.f32.mrb[0].mxu0
  %v2047 = vadd.f32 0.0, %v2046
  %v2048 = vpop.f32.mrb[0].mxu0
  %2049 = vmatprep.mubr.f32.mxu0 0.0
  %2050 = vmatmul.mubr.f32.gmra.mrb[0].mxu0 %v1920
  %v2051 = vpop.f32.mrb[0].mxu0
  %v2052 = vadd.f32 0.0, %v2051
  %v2053 = vpop.f32.mrb[0].mxu0
  %2054 = vmatprep.mubr.f32.mxu0 0.0
  %2055 = vmatmul.mubr.f32.gmra.mrb[0].mxu0 %v1923
  %v2056 = vpop.f32.mrb[0].mxu0
  %v2057 = vadd.f32 0.0, %v2056
  %v2058 = vpop.f32.mrb[0].mxu0
  %2059 = vmatprep.mubr.f32.mxu0 0.0
  %2060 = vmatmul.mubr.f32.gmra.mrb[0].mxu0 %v1926
  %v2061 = vpop.f32.mrb[0].mxu0
  %v2062 = vadd.f32 0.0, %v2061
  %v2063 = vpop.f32.mrb[0].mxu0
  %2064 = vmatprep.mubr.f32.mxu0 0.0
  %2065 = vmatmul.mubr.f32.gmra.mrb[0].mxu0 %v1929
  %v2066 = vpop.f32.mrb[0].mxu0
  %v2067 = vadd.f32 0.0, %v2066
  %v2068 = vpop.f32.mrb[0].mxu0
  %2069 = vmatprep.mubr.f32.mxu0 0.0
  %2070 = vmatmul.mubr.f32.gmra.mrb[0].mxu0 %v1932
  %v2071 = vpop.f32.mrb[0].mxu0
  %v2072 = vadd.f32 0.0, %v2071
  %v2073 = vpop.f32.mrb[0].mxu0
  %2074 = vmatprep.mubr.f32.mxu0 0.0
  %2075 = vmatmul.mubr.f32.gmra.mrb[0].mxu0 %v1935
  %v2076 = vpop.f32.mrb[0].mxu0
  %v2077 = vadd.f32 0.0, %v2076
  %v2078 = vpop.f32.mrb[0].mxu0
  %2079 = vmatprep.mubr.f32.mxu0 0.0
  %2080 = vmatmul.mubr.f32.gmra.mrb[0].mxu0 %v1938
  %v2081 = vpop.f32.mrb[0].mxu0
  %v2082 = vadd.f32 0.0, %v2081
  %v2083 = vpop.f32.mrb[0].mxu0
  %2084 = vmatprep.mubr.f32.mxu0 0.0
  %2085 = vmatmul.mubr.f32.gmra.mrb[0].mxu0 %v1941
  %v2086 = vpop.f32.mrb[0].mxu0
  %v2087 = vadd.f32 0.0, %v2086
  %v2088 = vpop.f32.mrb[0].mxu0
  %2089 = vmatprep.mubr.f32.mxu0 0.0
  %2090 = vmatmul.mubr.f32.gmra.mrb[0].mxu0 %v1944
  %v2091 = vpop.f32.mrb[0].mxu0
  %v2092 = vadd.f32 0.0, %v2091
  %v2093 = vpop.f32.mrb[0].mxu0
  %2094 = vmatprep.mubr.f32.mxu0 0.0
  %2095 = vmatmul.mubr.f32.gmra.mrb[0].mxu0 %v1947
  %v2096 = vpop.f32.mrb[0].mxu0
  %v2097 = vadd.f32 0.0, %v2096
  %v2098 = vpop.f32.mrb[0].mxu0
  %2099 = vmatprep.mubr.f32.mxu0 0.0
  %2100 = vmatmul.mubr.f32.gmra.mrb[0].mxu0 %v1950
  %v2101 = vpop.f32.mrb[0].mxu0
  %v2102 = vadd.f32 0.0, %v2101
  %v2103 = vpop.f32.mrb[0].mxu0
  %2104 = vmatprep.mubr.f32.mxu0 0.0
  %2105 = vmatmul.mubr.f32.gmra.mrb[0].mxu0 %v1953
  %v2106 = vpop.f32.mrb[0].mxu0
  %v2107 = vadd.f32 0.0, %v2106
  %v2108 = vpop.f32.mrb[0].mxu0
  %2109 = vdwg.mxu0
  %v2110 = vld [vmem:[%s4] sm:$0xff]
  %v2111 = vld [vmem:[%s4 + $0x8] sm:$0xff]
  %v2112 = vld [vmem:[%s4 + $0x10] sm:$0xff]
  %v2113 = vld [vmem:[%s4 + $0x18] sm:$0xff]
  %v2114 = vld [vmem:[%s4 + $0x20] sm:$0xff]
  %v2115 = vld [vmem:[%s4 + $0x28] sm:$0xff]
  %v2116 = vld [vmem:[%s4 + $0x30] sm:$0xff]
  %v2117 = vld [vmem:[%s4 + $0x38] sm:$0xff]
  %v2118 = vld [vmem:[%s4 + $0x40] sm:$0xff]
  %v2119 = vld [vmem:[%s4 + $0x48] sm:$0xff]
  %v2120 = vld [vmem:[%s4 + $0x50] sm:$0xff]
  %v2121 = vld [vmem:[%s4 + $0x58] sm:$0xff]
  %v2122 = vld [vmem:[%s4 + $0x60] sm:$0xff]
  %v2123 = vld [vmem:[%s4 + $0x68] sm:$0xff]
  %v2124 = vld [vmem:[%s4 + $0x70] sm:$0xff]
  %v2125 = vld [vmem:[%s4 + $0x78] sm:$0xff]
  %v2126 = vld [vmem:[%s4 + $0x80] sm:$0xff]
  %v2127 = vld [vmem:[%s4 + $0x88] sm:$0xff]
  %vm2128 = vcmask 130048
  %v2130 = vsel %vm2128, %v2111, 0
  %v2133 = vsel %vm2128, %v2113, 0
  %v2136 = vsel %vm2128, %v2115, 0
  %v2139 = vsel %vm2128, %v2117, 0
  %v2142 = vsel %vm2128, %v2119, 0
  %v2145 = vsel %vm2128, %v2121, 0
  %v2148 = vsel %vm2128, %v2123, 0
  %v2151 = vsel %vm2128, %v2125, 0
  %v2154 = vsel %vm2128, %v2127, 0
  %2156 = vmatprep.subr.mxu0 0.0
  %2157 = vmatpush1.msra.mxu0 %v2022
  %2158 = vmatprep.subr.mxu0 0.0
  %2159 = vmatpush1.msra.mxu0 %v2027
  %2160 = vmatprep.subr.mxu0 0.0
  %2161 = vmatpush1.msra.mxu0 %v2032
  %2162 = vmatprep.subr.mxu0 0.0
  %2163 = vmatpush1.msra.mxu0 %v2037
  %2164 = vmatprep.subr.mxu0 0.0
  %2165 = vmatpush1.msra.mxu0 %v2042
  %2166 = vmatprep.subr.mxu0 0.0
  %2167 = vmatpush1.msra.mxu0 %v2047
  %2168 = vmatprep.subr.mxu0 0.0
  %2169 = vmatpush1.msra.mxu0 %v2052
  %2170 = vmatprep.subr.mxu0 0.0
  %2171 = vmatpush1.msra.mxu0 %v2057
  %2172 = vmatprep.subr.mxu0 0.0
  %2173 = vmatpush1.msra.mxu0 %v2062
  %2174 = vmatprep.subr.mxu0 0.0
  %2175 = vmatpush1.msra.mxu0 %v2067
  %2176 = vmatprep.subr.mxu0 0.0
  %2177 = vmatpush1.msra.mxu0 %v2072
  %2178 = vmatprep.subr.mxu0 0.0
  %2179 = vmatpush1.msra.mxu0 %v2077
  %2180 = vmatprep.subr.mxu0 0.0
  %2181 = vmatpush1.msra.mxu0 %v2082
  %2182 = vmatprep.subr.mxu0 0.0
  %2183 = vmatpush1.msra.mxu0 %v2087
  %2184 = vmatprep.subr.mxu0 0.0
  %2185 = vmatpush1.msra.mxu0 %v2092
  %2186 = vmatprep.subr.mxu0 0.0
  %2187 = vmatpush1.msra.mxu0 %v2097
  %2188 = vmatprep.subr.mxu0 0.0
  %2189 = vmatpush1.msra.mxu0 %v2102
  %2190 = vmatprep.subr.mxu0 0.0
  %2191 = vmatpush1.msra.mxu0 %v2107
  %2192 = vmatprep.subr.mxu0 0.0
  %2193 = vmatpush1.msra.mxu0 0.0
  %2194 = vmatprep.subr.mxu0 0.0
  %2195 = vmatpush1.msra.mxu0 0.0
  %2196 = vmatprep.subr.mxu0 0.0
  %2197 = vmatpush1.msra.mxu0 0.0
  %2198 = vmatprep.subr.mxu0 0.0
  %2199 = vmatpush1.msra.mxu0 0.0
  %2200 = vmatprep.subr.mxu0 0.0
  %2201 = vmatpush1.msra.mxu0 0.0
  %2202 = vmatprep.subr.mxu0 0.0
  %2203 = vmatpush1.msra.mxu0 0.0
  %2204 = vmatprep.subr.mxu0 0.0
  %2205 = vmatpush1.msra.mxu0 0.0
  %2206 = vmatprep.subr.mxu0 0.0
  %2207 = vmatpush1.msra.mxu0 0.0
  %2208 = vmatprep.subr.mxu0 0.0
  %2209 = vmatpush1.msra.mxu0 0.0
  %2210 = vmatprep.subr.mxu0 0.0
  %2211 = vmatpush1.msra.mxu0 0.0
  %2212 = vmatprep.subr.mxu0 0.0
  %2213 = vmatpush1.msra.mxu0 0.0
  %2214 = vmatprep.subr.mxu0 0.0
  %2215 = vmatpush1.msra.mxu0 0.0
  %2216 = vmatprep.subr.mxu0 0.0
  %2217 = vmatpush1.msra.mxu0 0.0
  %2218 = vmatprep.subr.mxu0 0.0
  %2219 = vmatpush1.msra.mxu0 0.0
  %2220 = vmatprep.mubr.f32.mxu0 %v2130
  %2221 = vmatmul.mubr.f32.gmra.mrb[0].mxu0 %v2110
  %v2222 = vpop.f32.mrb[0].mxu0
  %v2223 = vadd.f32 0.0, %v2222
  %v2224 = vpop.f32.mrb[0].mxu0
  %2225 = vmatprep.mubr.f32.mxu0 %v2133
  %2226 = vmatmul.mubr.f32.gmra.mrb[0].mxu0 %v2112
  %v2227 = vpop.f32.mrb[0].mxu0
  %v2228 = vadd.f32 0.0, %v2227
  %v2229 = vpop.f32.mrb[0].mxu0
  %2230 = vmatprep.mubr.f32.mxu0 %v2136
  %2231 = vmatmul.mubr.f32.gmra.mrb[0].mxu0 %v2114
  %v2232 = vpop.f32.mrb[0].mxu0
  %v2233 = vadd.f32 0.0, %v2232
  %v2234 = vpop.f32.mrb[0].mxu0
  %2235 = vmatprep.mubr.f32.mxu0 %v2139
  %2236 = vmatmul.mubr.f32.gmra.mrb[0].mxu0 %v2116
  %v2237 = vpop.f32.mrb[0].mxu0
  %v2238 = vadd.f32 0.0, %v2237
  %v2239 = vpop.f32.mrb[0].mxu0
  %2240 = vmatprep.mubr.f32.mxu0 %v2142
  %2241 = vmatmul.mubr.f32.gmra.mrb[0].mxu0 %v2118
  %v2242 = vpop.f32.mrb[0].mxu0
  %v2243 = vadd.f32 0.0, %v2242
  %v2244 = vpop.f32.mrb[0].mxu0
  %2245 = vmatprep.mubr.f32.mxu0 %v2145
  %2246 = vmatmul.mubr.f32.gmra.mrb[0].mxu0 %v2120
  %v2247 = vpop.f32.mrb[0].mxu0
  %v2248 = vadd.f32 0.0, %v2247
  %v2249 = vpop.f32.mrb[0].mxu0
  %2250 = vmatprep.mubr.f32.mxu0 %v2148
  %2251 = vmatmul.mubr.f32.gmra.mrb[0].mxu0 %v2122
  %v2252 = vpop.f32.mrb[0].mxu0
  %v2253 = vadd.f32 0.0, %v2252
  %v2254 = vpop.f32.mrb[0].mxu0
  %2255 = vmatprep.mubr.f32.mxu0 %v2151
  %2256 = vmatmul.mubr.f32.gmra.mrb[0].mxu0 %v2124
  %v2257 = vpop.f32.mrb[0].mxu0
  %v2258 = vadd.f32 0.0, %v2257
  %v2259 = vpop.f32.mrb[0].mxu0
  %2260 = vmatprep.mubr.f32.mxu0 %v2154
  %2261 = vmatmul.mubr.f32.gmra.mrb[0].mxu0 %v2126
  %v2262 = vpop.f32.mrb[0].mxu0
  %v2263 = vadd.f32 0.0, %v2262
  %v2264 = vpop.f32.mrb[0].mxu0
  %2265 = vdwg.mxu0
  %s2266 = scalar_lea.vmem %s4, 144
  %v2267 = vld [vmem:[%s2266] sm:$0xff]
  %v2268 = vld [vmem:[%s2266 + $0x8] sm:$0xff]
  %v2269 = vld [vmem:[%s2266 + $0x10] sm:$0xff]
  %v2270 = vld [vmem:[%s2266 + $0x18] sm:$0xff]
  %v2271 = vld [vmem:[%s2266 + $0x20] sm:$0xff]
  %v2272 = vld [vmem:[%s2266 + $0x28] sm:$0xff]
  %v2273 = vld [vmem:[%s2266 + $0x30] sm:$0xff]
  %v2274 = vld [vmem:[%s2266 + $0x38] sm:$0xff]
  %v2275 = vld [vmem:[%s2266 + $0x40] sm:$0xff]
  %v2276 = vld [vmem:[%s2266 + $0x48] sm:$0xff]
  %v2277 = vld [vmem:[%s2266 + $0x50] sm:$0xff]
  %v2278 = vld [vmem:[%s2266 + $0x58] sm:$0xff]
  %v2279 = vld [vmem:[%s2266 + $0x60] sm:$0xff]
  %v2280 = vld [vmem:[%s2266 + $0x68] sm:$0xff]
  %v2281 = vld [vmem:[%s2266 + $0x70] sm:$0xff]
  %v2282 = vld [vmem:[%s2266 + $0x78] sm:$0xff]
  %v2283 = vld [vmem:[%s2266 + $0x80] sm:$0xff]
  %v2284 = vld [vmem:[%s2266 + $0x88] sm:$0xff]
  %v2286 = vsel %vm2128, %v2268, 0
  %v2289 = vsel %vm2128, %v2270, 0
  %v2292 = vsel %vm2128, %v2272, 0
  %v2295 = vsel %vm2128, %v2274, 0
  %v2298 = vsel %vm2128, %v2276, 0
  %v2301 = vsel %vm2128, %v2278, 0
  %v2304 = vsel %vm2128, %v2280, 0
  %v2307 = vsel %vm2128, %v2282, 0
  %v2310 = vsel %vm2128, %v2284, 0
  %2312 = vmatprep.subr.mxu0 0.0
  %2313 = vmatpush1.msra.mxu0 %v2022
  %2314 = vmatprep.subr.mxu0 0.0
  %2315 = vmatpush1.msra.mxu0 %v2027
  %2316 = vmatprep.subr.mxu0 0.0
  %2317 = vmatpush1.msra.mxu0 %v2032
  %2318 = vmatprep.subr.mxu0 0.0
  %2319 = vmatpush1.msra.mxu0 %v2037
  %2320 = vmatprep.subr.mxu0 0.0
  %2321 = vmatpush1.msra.mxu0 %v2042
  %2322 = vmatprep.subr.mxu0 0.0
  %2323 = vmatpush1.msra.mxu0 %v2047
  %2324 = vmatprep.subr.mxu0 0.0
  %2325 = vmatpush1.msra.mxu0 %v2052
  %2326 = vmatprep.subr.mxu0 0.0
  %2327 = vmatpush1.msra.mxu0 %v2057
  %2328 = vmatprep.subr.mxu0 0.0
  %2329 = vmatpush1.msra.mxu0 %v2062
  %2330 = vmatprep.subr.mxu0 0.0
  %2331 = vmatpush1.msra.mxu0 %v2067
  %2332 = vmatprep.subr.mxu0 0.0
  %2333 = vmatpush1.msra.mxu0 %v2072
  %2334 = vmatprep.subr.mxu0 0.0
  %2335 = vmatpush1.msra.mxu0 %v2077
  %2336 = vmatprep.subr.mxu0 0.0
  %2337 = vmatpush1.msra.mxu0 %v2082
  %2338 = vmatprep.subr.mxu0 0.0
  %2339 = vmatpush1.msra.mxu0 %v2087
  %2340 = vmatprep.subr.mxu0 0.0
  %2341 = vmatpush1.msra.mxu0 %v2092
  %2342 = vmatprep.subr.mxu0 0.0
  %2343 = vmatpush1.msra.mxu0 %v2097
  %2344 = vmatprep.subr.mxu0 0.0
  %2345 = vmatpush1.msra.mxu0 %v2102
  %2346 = vmatprep.subr.mxu0 0.0
  %2347 = vmatpush1.msra.mxu0 %v2107
  %2348 = vmatprep.subr.mxu0 0.0
  %2349 = vmatpush1.msra.mxu0 0.0
  %2350 = vmatprep.subr.mxu0 0.0
  %2351 = vmatpush1.msra.mxu0 0.0
  %2352 = vmatprep.subr.mxu0 0.0
  %2353 = vmatpush1.msra.mxu0 0.0
  %2354 = vmatprep.subr.mxu0 0.0
  %2355 = vmatpush1.msra.mxu0 0.0
  %2356 = vmatprep.subr.mxu0 0.0
  %2357 = vmatpush1.msra.mxu0 0.0
  %2358 = vmatprep.subr.mxu0 0.0
  %2359 = vmatpush1.msra.mxu0 0.0
  %2360 = vmatprep.subr.mxu0 0.0
  %2361 = vmatpush1.msra.mxu0 0.0
  %2362 = vmatprep.subr.mxu0 0.0
  %2363 = vmatpush1.msra.mxu0 0.0
  %2364 = vmatprep.subr.mxu0 0.0
  %2365 = vmatpush1.msra.mxu0 0.0
  %2366 = vmatprep.subr.mxu0 0.0
  %2367 = vmatpush1.msra.mxu0 0.0
  %2368 = vmatprep.subr.mxu0 0.0
  %2369 = vmatpush1.msra.mxu0 0.0
  %2370 = vmatprep.subr.mxu0 0.0
  %2371 = vmatpush1.msra.mxu0 0.0
  %2372 = vmatprep.subr.mxu0 0.0
  %2373 = vmatpush1.msra.mxu0 0.0
  %2374 = vmatprep.subr.mxu0 0.0
  %2375 = vmatpush1.msra.mxu0 0.0
  %2376 = vmatprep.mubr.f32.mxu0 %v2286
  %2377 = vmatmul.mubr.f32.gmra.mrb[0].mxu0 %v2267
  %v2378 = vpop.f32.mrb[0].mxu0
  %v2379 = vadd.f32 0.0, %v2378
  %v2380 = vpop.f32.mrb[0].mxu0
  %2381 = vmatprep.mubr.f32.mxu0 %v2289
  %2382 = vmatmul.mubr.f32.gmra.mrb[0].mxu0 %v2269
  %v2383 = vpop.f32.mrb[0].mxu0
  %v2384 = vadd.f32 0.0, %v2383
  %v2385 = vpop.f32.mrb[0].mxu0
  %2386 = vmatprep.mubr.f32.mxu0 %v2292
  %2387 = vmatmul.mubr.f32.gmra.mrb[0].mxu0 %v2271
  %v2388 = vpop.f32.mrb[0].mxu0
  %v2389 = vadd.f32 0.0, %v2388
  %v2390 = vpop.f32.mrb[0].mxu0
  %2391 = vmatprep.mubr.f32.mxu0 %v2295
  %2392 = vmatmul.mubr.f32.gmra.mrb[0].mxu0 %v2273
  %v2393 = vpop.f32.mrb[0].mxu0
  %v2394 = vadd.f32 0.0, %v2393
  %v2395 = vpop.f32.mrb[0].mxu0
  %2396 = vmatprep.mubr.f32.mxu0 %v2298
  %2397 = vmatmul.mubr.f32.gmra.mrb[0].mxu0 %v2275
  %v2398 = vpop.f32.mrb[0].mxu0
  %v2399 = vadd.f32 0.0, %v2398
  %v2400 = vpop.f32.mrb[0].mxu0
  %2401 = vmatprep.mubr.f32.mxu0 %v2301
  %2402 = vmatmul.mubr.f32.gmra.mrb[0].mxu0 %v2277
  %v2403 = vpop.f32.mrb[0].mxu0
  %v2404 = vadd.f32 0.0, %v2403
  %v2405 = vpop.f32.mrb[0].mxu0
  %2406 = vmatprep.mubr.f32.mxu0 %v2304
  %2407 = vmatmul.mubr.f32.gmra.mrb[0].mxu0 %v2279
  %v2408 = vpop.f32.mrb[0].mxu0
  %v2409 = vadd.f32 0.0, %v2408
  %v2410 = vpop.f32.mrb[0].mxu0
  %2411 = vmatprep.mubr.f32.mxu0 %v2307
  %2412 = vmatmul.mubr.f32.gmra.mrb[0].mxu0 %v2281
  %v2413 = vpop.f32.mrb[0].mxu0
  %v2414 = vadd.f32 0.0, %v2413
  %v2415 = vpop.f32.mrb[0].mxu0
  %2416 = vmatprep.mubr.f32.mxu0 %v2310
  %2417 = vmatmul.mubr.f32.gmra.mrb[0].mxu0 %v2283
  %v2418 = vpop.f32.mrb[0].mxu0
  %v2419 = vadd.f32 0.0, %v2418
  %v2420 = vpop.f32.mrb[0].mxu0
  %2421 = vdwg.mxu0
  %v2422 = vmax.f32 %v2223, %v2379
  %v2423 = vmax.f32 %v2228, %v2384
  %v2424 = vmax.f32 %v2233, %v2389
  %v2425 = vmax.f32 %v2238, %v2394
  %v2426 = vmax.f32 %v2243, %v2399
  %v2427 = vmax.f32 %v2248, %v2404
  %v2428 = vmax.f32 %v2253, %v2409
  %v2429 = vmax.f32 %v2258, %v2414
  %v2430 = vmax.f32 %v2263, %v2419
  %s2431 = scalar_lea.vmem %s5, 48
  %v2432 = vld [vmem:[%s2431] sm:$0xff]
  %v2433 = vld [vmem:[%s2431 + $0x8] sm:$0xff]
  %v2434 = vld [vmem:[%s2431 + $0x10] sm:$0xff]
  %v2435 = vld [vmem:[%s2431 + $0x18] sm:$0xff]
  %v2436 = vld [vmem:[%s2431 + $0x20] sm:$0xff]
  %v2437 = vld [vmem:[%s2431 + $0x28] sm:$0xff]
  %2438 = vmatprep.subr.mxu0 0.0
  %2439 = vmatpush1.msra.mxu0 %v2432
  %2440 = vmatprep.subr.mxu0 0.0
  %2441 = vmatpush1.msra.mxu0 %v2433
  %2442 = vmatprep.subr.mxu0 0.0
  %2443 = vmatpush1.msra.mxu0 %v2434
  %2444 = vmatprep.subr.mxu0 0.0
  %2445 = vmatpush1.msra.mxu0 %v2435
  %2446 = vmatprep.subr.mxu0 0.0
  %2447 = vmatpush1.msra.mxu0 %v2436
  %2448 = vmatprep.subr.mxu0 0.0
  %2449 = vmatpush1.msra.mxu0 %v2437
  %2450 = vmatprep.subr.mxu0 0.0
  %2451 = vmatpush1.msra.mxu0 0.0
  %2452 = vmatprep.subr.mxu0 0.0
  %2453 = vmatpush1.msra.mxu0 0.0
  %2454 = vmatprep.subr.mxu0 0.0
  %2455 = vmatpush1.msra.mxu0 0.0
  %2456 = vmatprep.subr.mxu0 0.0
  %2457 = vmatpush1.msra.mxu0 0.0
  %2458 = vmatprep.subr.mxu0 0.0
  %2459 = vmatpush1.msra.mxu0 0.0
  %2460 = vmatprep.subr.mxu0 0.0
  %2461 = vmatpush1.msra.mxu0 0.0
  %2462 = vmatprep.subr.mxu0 0.0
  %2463 = vmatpush1.msra.mxu0 0.0
  %2464 = vmatprep.subr.mxu0 0.0
  %2465 = vmatpush1.msra.mxu0 0.0
  %2466 = vmatprep.subr.mxu0 0.0
  %2467 = vmatpush1.msra.mxu0 0.0
  %2468 = vmatprep.subr.mxu0 0.0
  %2469 = vmatpush1.msra.mxu0 0.0
  %2470 = vmatprep.subr.mxu0 0.0
  %2471 = vmatpush1.msra.mxu0 0.0
  %2472 = vmatprep.subr.mxu0 0.0
  %2473 = vmatpush1.msra.mxu0 0.0
  %2474 = vmatprep.subr.mxu0 0.0
  %2475 = vmatpush1.msra.mxu0 0.0
  %2476 = vmatprep.subr.mxu0 0.0
  %2477 = vmatpush1.msra.mxu0 0.0
  %2478 = vmatprep.subr.mxu0 0.0
  %2479 = vmatpush1.msra.mxu0 0.0
  %2480 = vmatprep.subr.mxu0 0.0
  %2481 = vmatpush1.msra.mxu0 0.0
  %2482 = vmatprep.subr.mxu0 0.0
  %2483 = vmatpush1.msra.mxu0 0.0
  %2484 = vmatprep.subr.mxu0 0.0
  %2485 = vmatpush1.msra.mxu0 0.0
  %2486 = vmatprep.subr.mxu0 0.0
  %2487 = vmatpush1.msra.mxu0 0.0
  %2488 = vmatprep.subr.mxu0 0.0
  %2489 = vmatpush1.msra.mxu0 0.0
  %2490 = vmatprep.subr.mxu0 0.0
  %2491 = vmatpush1.msra.mxu0 0.0
  %2492 = vmatprep.subr.mxu0 0.0
  %2493 = vmatpush1.msra.mxu0 0.0
  %2494 = vmatprep.subr.mxu0 0.0
  %2495 = vmatpush1.msra.mxu0 0.0
  %2496 = vmatprep.subr.mxu0 0.0
  %2497 = vmatpush1.msra.mxu0 0.0
  %2498 = vmatprep.subr.mxu0 0.0
  %2499 = vmatpush1.msra.mxu0 0.0
  %2500 = vmatprep.subr.mxu0 0.0
  %2501 = vmatpush1.msra.mxu0 0.0
  %2502 = vmatprep.mubr.f32.mxu0 0.0
  %2503 = vmatmul.mubr.f32.gmra.mrb[0].mxu0 %v1902
  %v2504 = vpop.f32.mrb[0].mxu0
  %v2505 = vadd.f32 0.0, %v2504
  %v2506 = vpop.f32.mrb[0].mxu0
  %2507 = vmatprep.mubr.f32.mxu0 0.0
  %2508 = vmatmul.mubr.f32.gmra.mrb[0].mxu0 %v1905
  %v2509 = vpop.f32.mrb[0].mxu0
  %v2510 = vadd.f32 0.0, %v2509
  %v2511 = vpop.f32.mrb[0].mxu0
  %2512 = vmatprep.mubr.f32.mxu0 0.0
  %2513 = vmatmul.mubr.f32.gmra.mrb[0].mxu0 %v1908
  %v2514 = vpop.f32.mrb[0].mxu0
  %v2515 = vadd.f32 0.0, %v2514
  %v2516 = vpop.f32.mrb[0].mxu0
  %2517 = vmatprep.mubr.f32.mxu0 0.0
  %2518 = vmatmul.mubr.f32.gmra.mrb[0].mxu0 %v1911
  %v2519 = vpop.f32.mrb[0].mxu0
  %v2520 = vadd.f32 0.0, %v2519
  %v2521 = vpop.f32.mrb[0].mxu0
  %2522 = vmatprep.mubr.f32.mxu0 0.0
  %2523 = vmatmul.mubr.f32.gmra.mrb[0].mxu0 %v1914
  %v2524 = vpop.f32.mrb[0].mxu0
  %v2525 = vadd.f32 0.0, %v2524
  %v2526 = vpop.f32.mrb[0].mxu0
  %2527 = vmatprep.mubr.f32.mxu0 0.0
  %2528 = vmatmul.mubr.f32.gmra.mrb[0].mxu0 %v1917
  %v2529 = vpop.f32.mrb[0].mxu0
  %v2530 = vadd.f32 0.0, %v2529
  %v2531 = vpop.f32.mrb[0].mxu0
  %2532 = vmatprep.mubr.f32.mxu0 0.0
  %2533 = vmatmul.mubr.f32.gmra.mrb[0].mxu0 %v1920
  %v2534 = vpop.f32.mrb[0].mxu0
  %v2535 = vadd.f32 0.0, %v2534
  %v2536 = vpop.f32.mrb[0].mxu0
  %2537 = vmatprep.mubr.f32.mxu0 0.0
  %2538 = vmatmul.mubr.f32.gmra.mrb[0].mxu0 %v1923
  %v2539 = vpop.f32.mrb[0].mxu0
  %v2540 = vadd.f32 0.0, %v2539
  %v2541 = vpop.f32.mrb[0].mxu0
  %2542 = vmatprep.mubr.f32.mxu0 0.0
  %2543 = vmatmul.mubr.f32.gmra.mrb[0].mxu0 %v1926
  %v2544 = vpop.f32.mrb[0].mxu0
  %v2545 = vadd.f32 0.0, %v2544
  %v2546 = vpop.f32.mrb[0].mxu0
  %2547 = vmatprep.mubr.f32.mxu0 0.0
  %2548 = vmatmul.mubr.f32.gmra.mrb[0].mxu0 %v1929
  %v2549 = vpop.f32.mrb[0].mxu0
  %v2550 = vadd.f32 0.0, %v2549
  %v2551 = vpop.f32.mrb[0].mxu0
  %2552 = vmatprep.mubr.f32.mxu0 0.0
  %2553 = vmatmul.mubr.f32.gmra.mrb[0].mxu0 %v1932
  %v2554 = vpop.f32.mrb[0].mxu0
  %v2555 = vadd.f32 0.0, %v2554
  %v2556 = vpop.f32.mrb[0].mxu0
  %2557 = vmatprep.mubr.f32.mxu0 0.0
  %2558 = vmatmul.mubr.f32.gmra.mrb[0].mxu0 %v1935
  %v2559 = vpop.f32.mrb[0].mxu0
  %v2560 = vadd.f32 0.0, %v2559
  %v2561 = vpop.f32.mrb[0].mxu0
  %2562 = vmatprep.mubr.f32.mxu0 0.0
  %2563 = vmatmul.mubr.f32.gmra.mrb[0].mxu0 %v1938
  %v2564 = vpop.f32.mrb[0].mxu0
  %v2565 = vadd.f32 0.0, %v2564
  %v2566 = vpop.f32.mrb[0].mxu0
  %2567 = vmatprep.mubr.f32.mxu0 0.0
  %2568 = vmatmul.mubr.f32.gmra.mrb[0].mxu0 %v1941
  %v2569 = vpop.f32.mrb[0].mxu0
  %v2570 = vadd.f32 0.0, %v2569
  %v2571 = vpop.f32.mrb[0].mxu0
  %2572 = vmatprep.mubr.f32.mxu0 0.0
  %2573 = vmatmul.mubr.f32.gmra.mrb[0].mxu0 %v1944
  %v2574 = vpop.f32.mrb[0].mxu0
  %v2575 = vadd.f32 0.0, %v2574
  %v2576 = vpop.f32.mrb[0].mxu0
  %2577 = vmatprep.mubr.f32.mxu0 0.0
  %2578 = vmatmul.mubr.f32.gmra.mrb[0].mxu0 %v1947
  %v2579 = vpop.f32.mrb[0].mxu0
  %v2580 = vadd.f32 0.0, %v2579
  %v2581 = vpop.f32.mrb[0].mxu0
  %2582 = vmatprep.mubr.f32.mxu0 0.0
  %2583 = vmatmul.mubr.f32.gmra.mrb[0].mxu0 %v1950
  %v2584 = vpop.f32.mrb[0].mxu0
  %v2585 = vadd.f32 0.0, %v2584
  %v2586 = vpop.f32.mrb[0].mxu0
  %2587 = vmatprep.mubr.f32.mxu0 0.0
  %2588 = vmatmul.mubr.f32.gmra.mrb[0].mxu0 %v1953
  %v2589 = vpop.f32.mrb[0].mxu0
  %v2590 = vadd.f32 0.0, %v2589
  %v2591 = vpop.f32.mrb[0].mxu0
  %2592 = vdwg.mxu0
  %2593 = vmatprep.subr.mxu0 0.0
  %2594 = vmatpush1.msra.mxu0 %v2505
  %2595 = vmatprep.subr.mxu0 0.0
  %2596 = vmatpush1.msra.mxu0 %v2510
  %2597 = vmatprep.subr.mxu0 0.0
  %2598 = vmatpush1.msra.mxu0 %v2515
  %2599 = vmatprep.subr.mxu0 0.0
  %2600 = vmatpush1.msra.mxu0 %v2520
  %2601 = vmatprep.subr.mxu0 0.0
  %2602 = vmatpush1.msra.mxu0 %v2525
  %2603 = vmatprep.subr.mxu0 0.0
  %2604 = vmatpush1.msra.mxu0 %v2530
  %2605 = vmatprep.subr.mxu0 0.0
  %2606 = vmatpush1.msra.mxu0 %v2535
  %2607 = vmatprep.subr.mxu0 0.0
  %2608 = vmatpush1.msra.mxu0 %v2540
  %2609 = vmatprep.subr.mxu0 0.0
  %2610 = vmatpush1.msra.mxu0 %v2545
  %2611 = vmatprep.subr.mxu0 0.0
  %2612 = vmatpush1.msra.mxu0 %v2550
  %2613 = vmatprep.subr.mxu0 0.0
  %2614 = vmatpush1.msra.mxu0 %v2555
  %2615 = vmatprep.subr.mxu0 0.0
  %2616 = vmatpush1.msra.mxu0 %v2560
  %2617 = vmatprep.subr.mxu0 0.0
  %2618 = vmatpush1.msra.mxu0 %v2565
  %2619 = vmatprep.subr.mxu0 0.0
  %2620 = vmatpush1.msra.mxu0 %v2570
  %2621 = vmatprep.subr.mxu0 0.0
  %2622 = vmatpush1.msra.mxu0 %v2575
  %2623 = vmatprep.subr.mxu0 0.0
  %2624 = vmatpush1.msra.mxu0 %v2580
  %2625 = vmatprep.subr.mxu0 0.0
  %2626 = vmatpush1.msra.mxu0 %v2585
  %2627 = vmatprep.subr.mxu0 0.0
  %2628 = vmatpush1.msra.mxu0 %v2590
  %2629 = vmatprep.subr.mxu0 0.0
  %2630 = vmatpush1.msra.mxu0 0.0
  %2631 = vmatprep.subr.mxu0 0.0
  %2632 = vmatpush1.msra.mxu0 0.0
  %2633 = vmatprep.subr.mxu0 0.0
  %2634 = vmatpush1.msra.mxu0 0.0
  %2635 = vmatprep.subr.mxu0 0.0
  %2636 = vmatpush1.msra.mxu0 0.0
  %2637 = vmatprep.subr.mxu0 0.0
  %2638 = vmatpush1.msra.mxu0 0.0
  %2639 = vmatprep.subr.mxu0 0.0
  %2640 = vmatpush1.msra.mxu0 0.0
  %2641 = vmatprep.subr.mxu0 0.0
  %2642 = vmatpush1.msra.mxu0 0.0
  %2643 = vmatprep.subr.mxu0 0.0
  %2644 = vmatpush1.msra.mxu0 0.0
  %2645 = vmatprep.subr.mxu0 0.0
  %2646 = vmatpush1.msra.mxu0 0.0
  %2647 = vmatprep.subr.mxu0 0.0
  %2648 = vmatpush1.msra.mxu0 0.0
  %2649 = vmatprep.subr.mxu0 0.0
  %2650 = vmatpush1.msra.mxu0 0.0
  %2651 = vmatprep.subr.mxu0 0.0
  %2652 = vmatpush1.msra.mxu0 0.0
  %2653 = vmatprep.subr.mxu0 0.0
  %2654 = vmatpush1.msra.mxu0 0.0
  %2655 = vmatprep.subr.mxu0 0.0
  %2656 = vmatpush1.msra.mxu0 0.0
  %2657 = vmatprep.mubr.f32.mxu0 %v2130
  %2658 = vmatmul.mubr.f32.gmra.mrb[0].mxu0 %v2110
  %v2659 = vpop.f32.mrb[0].mxu0
  %v2660 = vadd.f32 0.0, %v2659
  %v2661 = vpop.f32.mrb[0].mxu0
  %2662 = vmatprep.mubr.f32.mxu0 %v2133
  %2663 = vmatmul.mubr.f32.gmra.mrb[0].mxu0 %v2112
  %v2664 = vpop.f32.mrb[0].mxu0
  %v2665 = vadd.f32 0.0, %v2664
  %v2666 = vpop.f32.mrb[0].mxu0
  %2667 = vmatprep.mubr.f32.mxu0 %v2136
  %2668 = vmatmul.mubr.f32.gmra.mrb[0].mxu0 %v2114
  %v2669 = vpop.f32.mrb[0].mxu0
  %v2670 = vadd.f32 0.0, %v2669
  %v2671 = vpop.f32.mrb[0].mxu0
  %2672 = vmatprep.mubr.f32.mxu0 %v2139
  %2673 = vmatmul.mubr.f32.gmra.mrb[0].mxu0 %v2116
  %v2674 = vpop.f32.mrb[0].mxu0
  %v2675 = vadd.f32 0.0, %v2674
  %v2676 = vpop.f32.mrb[0].mxu0
  %2677 = vmatprep.mubr.f32.mxu0 %v2142
  %2678 = vmatmul.mubr.f32.gmra.mrb[0].mxu0 %v2118
  %v2679 = vpop.f32.mrb[0].mxu0
  %v2680 = vadd.f32 0.0, %v2679
  %v2681 = vpop.f32.mrb[0].mxu0
  %2682 = vmatprep.mubr.f32.mxu0 %v2145
  %2683 = vmatmul.mubr.f32.gmra.mrb[0].mxu0 %v2120
  %v2684 = vpop.f32.mrb[0].mxu0
  %v2685 = vadd.f32 0.0, %v2684
  %v2686 = vpop.f32.mrb[0].mxu0
  %2687 = vmatprep.mubr.f32.mxu0 %v2148
  %2688 = vmatmul.mubr.f32.gmra.mrb[0].mxu0 %v2122
  %v2689 = vpop.f32.mrb[0].mxu0
  %v2690 = vadd.f32 0.0, %v2689
  %v2691 = vpop.f32.mrb[0].mxu0
  %2692 = vmatprep.mubr.f32.mxu0 %v2151
  %2693 = vmatmul.mubr.f32.gmra.mrb[0].mxu0 %v2124
  %v2694 = vpop.f32.mrb[0].mxu0
  %v2695 = vadd.f32 0.0, %v2694
  %v2696 = vpop.f32.mrb[0].mxu0
  %2697 = vmatprep.mubr.f32.mxu0 %v2154
  %2698 = vmatmul.mubr.f32.gmra.mrb[0].mxu0 %v2126
  %v2699 = vpop.f32.mrb[0].mxu0
  %v2700 = vadd.f32 0.0, %v2699
  %v2701 = vpop.f32.mrb[0].mxu0
  %2702 = vdwg.mxu0
  %v2703 = vmax.f32 %v2422, %v2660
  %v2704 = vmax.f32 %v2423, %v2665
  %v2705 = vmax.f32 %v2424, %v2670
  %v2706 = vmax.f32 %v2425, %v2675
  %v2707 = vmax.f32 %v2426, %v2680
  %v2708 = vmax.f32 %v2427, %v2685
  %v2709 = vmax.f32 %v2428, %v2690
  %v2710 = vmax.f32 %v2429, %v2695
  %v2711 = vmax.f32 %v2430, %v2700
  %2712 = vmatprep.subr.mxu0 0.0
  %2713 = vmatpush1.msra.mxu0 %v2505
  %2714 = vmatprep.subr.mxu0 0.0
  %2715 = vmatpush1.msra.mxu0 %v2510
  %2716 = vmatprep.subr.mxu0 0.0
  %2717 = vmatpush1.msra.mxu0 %v2515
  %2718 = vmatprep.subr.mxu0 0.0
  %2719 = vmatpush1.msra.mxu0 %v2520
  %2720 = vmatprep.subr.mxu0 0.0
  %2721 = vmatpush1.msra.mxu0 %v2525
  %2722 = vmatprep.subr.mxu0 0.0
  %2723 = vmatpush1.msra.mxu0 %v2530
  %2724 = vmatprep.subr.mxu0 0.0
  %2725 = vmatpush1.msra.mxu0 %v2535
  %2726 = vmatprep.subr.mxu0 0.0
  %2727 = vmatpush1.msra.mxu0 %v2540
  %2728 = vmatprep.subr.mxu0 0.0
  %2729 = vmatpush1.msra.mxu0 %v2545
  %2730 = vmatprep.subr.mxu0 0.0
  %2731 = vmatpush1.msra.mxu0 %v2550
  %2732 = vmatprep.subr.mxu0 0.0
  %2733 = vmatpush1.msra.mxu0 %v2555
  %2734 = vmatprep.subr.mxu0 0.0
  %2735 = vmatpush1.msra.mxu0 %v2560
  %2736 = vmatprep.subr.mxu0 0.0
  %2737 = vmatpush1.msra.mxu0 %v2565
  %2738 = vmatprep.subr.mxu0 0.0
  %2739 = vmatpush1.msra.mxu0 %v2570
  %2740 = vmatprep.subr.mxu0 0.0
  %2741 = vmatpush1.msra.mxu0 %v2575
  %2742 = vmatprep.subr.mxu0 0.0
  %2743 = vmatpush1.msra.mxu0 %v2580
  %2744 = vmatprep.subr.mxu0 0.0
  %2745 = vmatpush1.msra.mxu0 %v2585
  %2746 = vmatprep.subr.mxu0 0.0
  %2747 = vmatpush1.msra.mxu0 %v2590
  %2748 = vmatprep.subr.mxu0 0.0
  %2749 = vmatpush1.msra.mxu0 0.0
  %2750 = vmatprep.subr.mxu0 0.0
  %2751 = vmatpush1.msra.mxu0 0.0
  %2752 = vmatprep.subr.mxu0 0.0
  %2753 = vmatpush1.msra.mxu0 0.0
  %2754 = vmatprep.subr.mxu0 0.0
  %2755 = vmatpush1.msra.mxu0 0.0
  %2756 = vmatprep.subr.mxu0 0.0
  %2757 = vmatpush1.msra.mxu0 0.0
  %2758 = vmatprep.subr.mxu0 0.0
  %2759 = vmatpush1.msra.mxu0 0.0
  %2760 = vmatprep.subr.mxu0 0.0
  %2761 = vmatpush1.msra.mxu0 0.0
  %2762 = vmatprep.subr.mxu0 0.0
  %2763 = vmatpush1.msra.mxu0 0.0
  %2764 = vmatprep.subr.mxu0 0.0
  %2765 = vmatpush1.msra.mxu0 0.0
  %2766 = vmatprep.subr.mxu0 0.0
  %2767 = vmatpush1.msra.mxu0 0.0
  %2768 = vmatprep.subr.mxu0 0.0
  %2769 = vmatpush1.msra.mxu0 0.0
  %2770 = vmatprep.subr.mxu0 0.0
  %2771 = vmatpush1.msra.mxu0 0.0
  %2772 = vmatprep.subr.mxu0 0.0
  %2773 = vmatpush1.msra.mxu0 0.0
  %2774 = vmatprep.subr.mxu0 0.0
  %2775 = vmatpush1.msra.mxu0 0.0
  %2776 = vmatprep.mubr.f32.mxu0 %v2286
  %2777 = vmatmul.mubr.f32.gmra.mrb[0].mxu0 %v2267
  %v2778 = vpop.f32.mrb[0].mxu0
  %v2779 = vadd.f32 0.0, %v2778
  %v2780 = vpop.f32.mrb[0].mxu0
  %2781 = vmatprep.mubr.f32.mxu0 %v2289
  %2782 = vmatmul.mubr.f32.gmra.mrb[0].mxu0 %v2269
  %v2783 = vpop.f32.mrb[0].mxu0
  %v2784 = vadd.f32 0.0, %v2783
  %v2785 = vpop.f32.mrb[0].mxu0
  %2786 = vmatprep.mubr.f32.mxu0 %v2292
  %2787 = vmatmul.mubr.f32.gmra.mrb[0].mxu0 %v2271
  %v2788 = vpop.f32.mrb[0].mxu0
  %v2789 = vadd.f32 0.0, %v2788
  %v2790 = vpop.f32.mrb[0].mxu0
  %2791 = vmatprep.mubr.f32.mxu0 %v2295
  %2792 = vmatmul.mubr.f32.gmra.mrb[0].mxu0 %v2273
  %v2793 = vpop.f32.mrb[0].mxu0
  %v2794 = vadd.f32 0.0, %v2793
  %v2795 = vpop.f32.mrb[0].mxu0
  %2796 = vmatprep.mubr.f32.mxu0 %v2298
  %2797 = vmatmul.mubr.f32.gmra.mrb[0].mxu0 %v2275
  %v2798 = vpop.f32.mrb[0].mxu0
  %v2799 = vadd.f32 0.0, %v2798
  %v2800 = vpop.f32.mrb[0].mxu0
  %2801 = vmatprep.mubr.f32.mxu0 %v2301
  %2802 = vmatmul.mubr.f32.gmra.mrb[0].mxu0 %v2277
  %v2803 = vpop.f32.mrb[0].mxu0
  %v2804 = vadd.f32 0.0, %v2803
  %v2805 = vpop.f32.mrb[0].mxu0
  %2806 = vmatprep.mubr.f32.mxu0 %v2304
  %2807 = vmatmul.mubr.f32.gmra.mrb[0].mxu0 %v2279
  %v2808 = vpop.f32.mrb[0].mxu0
  %v2809 = vadd.f32 0.0, %v2808
  %v2810 = vpop.f32.mrb[0].mxu0
  %2811 = vmatprep.mubr.f32.mxu0 %v2307
  %2812 = vmatmul.mubr.f32.gmra.mrb[0].mxu0 %v2281
  %v2813 = vpop.f32.mrb[0].mxu0
  %v2814 = vadd.f32 0.0, %v2813
  %v2815 = vpop.f32.mrb[0].mxu0
  %2816 = vmatprep.mubr.f32.mxu0 %v2310
  %2817 = vmatmul.mubr.f32.gmra.mrb[0].mxu0 %v2283
  %v2818 = vpop.f32.mrb[0].mxu0
  %v2819 = vadd.f32 0.0, %v2818
  %v2820 = vpop.f32.mrb[0].mxu0
  %2821 = vdwg.mxu0
  %v2822 = vmax.f32 %v2703, %v2779
  %v2823 = vmax.f32 %v2704, %v2784
  %v2824 = vmax.f32 %v2705, %v2789
  %v2825 = vmax.f32 %v2706, %v2794
  %v2826 = vmax.f32 %v2707, %v2799
  %v2827 = vmax.f32 %v2708, %v2804
  %v2828 = vmax.f32 %v2709, %v2809
  %v2829 = vmax.f32 %v2710, %v2814
  %v2830 = vmax.f32 %v2711, %v2819
  %v2831 = vld [vmem:[%s7] sm:$0xff]
  %v2832 = vld [vmem:[%s7 + $0x8] sm:$0xff]
  %v2833 = vld [vmem:[%s7 + $0x10] sm:$0xff]
  %v2834 = vld [vmem:[%s7 + $0x18] sm:$0xff]
  %v2835 = vld [vmem:[%s7 + $0x20] sm:$0xff]
  %v2836 = vld [vmem:[%s7 + $0x28] sm:$0xff]
  %v2837 = vld [vmem:[%s7 + $0x30] sm:$0xff]
  %v2838 = vld [vmem:[%s7 + $0x38] sm:$0xff]
  %v2839 = vld [vmem:[%s7 + $0x40] sm:$0xff]
  %v2840 = vld [vmem:[%s7 + $0x48] sm:$0xff]
  %v2841 = vld [vmem:[%s7 + $0x50] sm:$0xff]
  %v2842 = vld [vmem:[%s7 + $0x58] sm:$0xff]
  %v2843 = vld [vmem:[%s7 + $0x60] sm:$0xff]
  %v2844 = vld [vmem:[%s7 + $0x68] sm:$0xff]
  %v2845 = vld [vmem:[%s7 + $0x70] sm:$0xff]
  %v2846 = vld [vmem:[%s7 + $0x78] sm:$0xff]
  %v2847 = vld [vmem:[%s6] sm:$0xff]
  %v2848 = vld [vmem:[%s6 + $0x8] sm:$0xff]
  %v2849 = vld [vmem:[%s6 + $0x10] sm:$0xff]
  %v2850 = vld [vmem:[%s6 + $0x18] sm:$0xff]
  %v2851 = vld [vmem:[%s6 + $0x20] sm:$0xff]
  %v2852 = vld [vmem:[%s6 + $0x28] sm:$0xff]
  %v2853 = vld [vmem:[%s6 + $0x30] sm:$0xff]
  %v2854 = vld [vmem:[%s6 + $0x38] sm:$0xff]
  %v2855 = vld [vmem:[%s6 + $0x40] sm:$0xff]
  %v2856 = vld [vmem:[%s6 + $0x48] sm:$0xff]
  %v2857 = vld [vmem:[%s6 + $0x50] sm:$0xff]
  %v2858 = vld [vmem:[%s6 + $0x58] sm:$0xff]
  %v2859 = vld [vmem:[%s6 + $0x60] sm:$0xff]
  %v2860 = vld [vmem:[%s6 + $0x68] sm:$0xff]
  %v2861 = vld [vmem:[%s6 + $0x70] sm:$0xff]
  %v2862 = vld [vmem:[%s6 + $0x78] sm:$0xff]
  %v2863 = vld [vmem:[%s8] sm:$0xff]
  %v2864 = vld [vmem:[%s8 + $0x8] sm:$0xff]
  %v2865 = vld [vmem:[%s8 + $0x10] sm:$0xff]
  %vm2866 = vcmask 195584
  %v2868 = vsel %vm2866, %v2822, 0
  %v2871 = vsel %vm2866, %v2823, 0
  %v2874 = vsel %vm2866, %v2824, 0
  %v2877 = vsel %vm2866, %v2825, 0
  %v2880 = vsel %vm2866, %v2826, 0
  %v2883 = vsel %vm2866, %v2827, 0
  %v2886 = vsel %vm2866, %v2828, 0
  %v2889 = vsel %vm2866, %v2829, 0
  %v2892 = vsel %vm2866, %v2830, 0
  %2894 = vmatprep.subr.mxu0 0.0
  %2895 = vmatpush1.msra.mxu0 %v2863
  %2896 = vmatprep.subr.mxu0 0.0
  %2897 = vmatpush1.msra.mxu0 %v2864
  %2898 = vmatprep.subr.mxu0 0.0
  %2899 = vmatpush1.msra.mxu0 %v2865
  %2900 = vmatprep.subr.mxu0 0.0
  %2901 = vmatpush1.msra.mxu0 0.0
  %2902 = vmatprep.subr.mxu0 0.0
  %2903 = vmatpush1.msra.mxu0 0.0
  %2904 = vmatprep.subr.mxu0 0.0
  %2905 = vmatpush1.msra.mxu0 0.0
  %2906 = vmatprep.subr.mxu0 0.0
  %2907 = vmatpush1.msra.mxu0 0.0
  %2908 = vmatprep.subr.mxu0 0.0
  %2909 = vmatpush1.msra.mxu0 0.0
  %2910 = vmatprep.subr.mxu0 0.0
  %2911 = vmatpush1.msra.mxu0 0.0
  %2912 = vmatprep.subr.mxu0 0.0
  %2913 = vmatpush1.msra.mxu0 0.0
  %2914 = vmatprep.subr.mxu0 0.0
  %2915 = vmatpush1.msra.mxu0 0.0
  %2916 = vmatprep.subr.mxu0 0.0
  %2917 = vmatpush1.msra.mxu0 0.0
  %2918 = vmatprep.subr.mxu0 0.0
  %2919 = vmatpush1.msra.mxu0 0.0
  %2920 = vmatprep.subr.mxu0 0.0
  %2921 = vmatpush1.msra.mxu0 0.0
  %2922 = vmatprep.subr.mxu0 0.0
  %2923 = vmatpush1.msra.mxu0 0.0
  %2924 = vmatprep.subr.mxu0 0.0
  %2925 = vmatpush1.msra.mxu0 0.0
  %2926 = vmatprep.subr.mxu0 0.0
  %2927 = vmatpush1.msra.mxu0 0.0
  %2928 = vmatprep.subr.mxu0 0.0
  %2929 = vmatpush1.msra.mxu0 0.0
  %2930 = vmatprep.subr.mxu0 0.0
  %2931 = vmatpush1.msra.mxu0 0.0
  %2932 = vmatprep.subr.mxu0 0.0
  %2933 = vmatpush1.msra.mxu0 0.0
  %2934 = vmatprep.subr.mxu0 0.0
  %2935 = vmatpush1.msra.mxu0 0.0
  %2936 = vmatprep.subr.mxu0 0.0
  %2937 = vmatpush1.msra.mxu0 0.0
  %2938 = vmatprep.subr.mxu0 0.0
  %2939 = vmatpush1.msra.mxu0 0.0
  %2940 = vmatprep.subr.mxu0 0.0
  %2941 = vmatpush1.msra.mxu0 0.0
  %2942 = vmatprep.subr.mxu0 0.0
  %2943 = vmatpush1.msra.mxu0 0.0
  %2944 = vmatprep.subr.mxu0 0.0
  %2945 = vmatpush1.msra.mxu0 0.0
  %2946 = vmatprep.subr.mxu0 0.0
  %2947 = vmatpush1.msra.mxu0 0.0
  %2948 = vmatprep.subr.mxu0 0.0
  %2949 = vmatpush1.msra.mxu0 0.0
  %2950 = vmatprep.subr.mxu0 0.0
  %2951 = vmatpush1.msra.mxu0 0.0
  %2952 = vmatprep.subr.mxu0 0.0
  %2953 = vmatpush1.msra.mxu0 0.0
  %2954 = vmatprep.subr.mxu0 0.0
  %2955 = vmatpush1.msra.mxu0 0.0
  %2956 = vmatprep.subr.mxu0 0.0
  %2957 = vmatpush1.msra.mxu0 0.0
  %2958 = vmatprep.mubr.f32.mxu0 0.0
  %2959 = vmatmul.mubr.f32.gmra.mrb[0].mxu0 %v2868
  %v2960 = vpop.f32.mrb[0].mxu0
  %v2961 = vadd.f32 0.0, %v2960
  %v2962 = vpop.f32.mrb[0].mxu0
  %2963 = vmatprep.mubr.f32.mxu0 0.0
  %2964 = vmatmul.mubr.f32.gmra.mrb[0].mxu0 %v2871
  %v2965 = vpop.f32.mrb[0].mxu0
  %v2966 = vadd.f32 0.0, %v2965
  %v2967 = vpop.f32.mrb[0].mxu0
  %2968 = vmatprep.mubr.f32.mxu0 0.0
  %2969 = vmatmul.mubr.f32.gmra.mrb[0].mxu0 %v2874
  %v2970 = vpop.f32.mrb[0].mxu0
  %v2971 = vadd.f32 0.0, %v2970
  %v2972 = vpop.f32.mrb[0].mxu0
  %2973 = vmatprep.mubr.f32.mxu0 0.0
  %2974 = vmatmul.mubr.f32.gmra.mrb[0].mxu0 %v2877
  %v2975 = vpop.f32.mrb[0].mxu0
  %v2976 = vadd.f32 0.0, %v2975
  %v2977 = vpop.f32.mrb[0].mxu0
  %2978 = vmatprep.mubr.f32.mxu0 0.0
  %2979 = vmatmul.mubr.f32.gmra.mrb[0].mxu0 %v2880
  %v2980 = vpop.f32.mrb[0].mxu0
  %v2981 = vadd.f32 0.0, %v2980
  %v2982 = vpop.f32.mrb[0].mxu0
  %2983 = vmatprep.mubr.f32.mxu0 0.0
  %2984 = vmatmul.mubr.f32.gmra.mrb[0].mxu0 %v2883
  %v2985 = vpop.f32.mrb[0].mxu0
  %v2986 = vadd.f32 0.0, %v2985
  %v2987 = vpop.f32.mrb[0].mxu0
  %2988 = vmatprep.mubr.f32.mxu0 0.0
  %2989 = vmatmul.mubr.f32.gmra.mrb[0].mxu0 %v2886
  %v2990 = vpop.f32.mrb[0].mxu0
  %v2991 = vadd.f32 0.0, %v2990
  %v2992 = vpop.f32.mrb[0].mxu0
  %2993 = vmatprep.mubr.f32.mxu0 0.0
  %2994 = vmatmul.mubr.f32.gmra.mrb[0].mxu0 %v2889
  %v2995 = vpop.f32.mrb[0].mxu0
  %v2996 = vadd.f32 0.0, %v2995
  %v2997 = vpop.f32.mrb[0].mxu0
  %2998 = vmatprep.mubr.f32.mxu0 0.0
  %2999 = vmatmul.mubr.f32.gmra.mrb[0].mxu0 %v2892
  %v3000 = vpop.f32.mrb[0].mxu0
  %v3001 = vadd.f32 0.0, %v3000
  %v3002 = vpop.f32.mrb[0].mxu0
  %3003 = vdwg.mxu0
  %s3004 = scalar_lea.vmem %s6, 128
  %v3005 = vld [vmem:[%s3004] sm:$0xff]
  %v3006 = vld [vmem:[%s3004 + $0x8] sm:$0xff]
  %v3007 = vld [vmem:[%s3004 + $0x10] sm:$0xff]
  %v3008 = vld [vmem:[%s3004 + $0x18] sm:$0xff]
  %v3009 = vld [vmem:[%s3004 + $0x20] sm:$0xff]
  %v3010 = vld [vmem:[%s3004 + $0x28] sm:$0xff]
  %v3011 = vld [vmem:[%s3004 + $0x30] sm:$0xff]
  %v3012 = vld [vmem:[%s3004 + $0x38] sm:$0xff]
  %v3013 = vld [vmem:[%s3004 + $0x40] sm:$0xff]
  %v3014 = vld [vmem:[%s3004 + $0x48] sm:$0xff]
  %v3015 = vld [vmem:[%s3004 + $0x50] sm:$0xff]
  %v3016 = vld [vmem:[%s3004 + $0x58] sm:$0xff]
  %v3017 = vld [vmem:[%s3004 + $0x60] sm:$0xff]
  %v3018 = vld [vmem:[%s3004 + $0x68] sm:$0xff]
  %v3019 = vld [vmem:[%s3004 + $0x70] sm:$0xff]
  %v3020 = vld [vmem:[%s3004 + $0x78] sm:$0xff]
  %s3021 = scalar_lea.vmem %s8, 24
  %v3022 = vld [vmem:[%s3021] sm:$0xff]
  %v3023 = vld [vmem:[%s3021 + $0x8] sm:$0xff]
  %v3024 = vld [vmem:[%s3021 + $0x10] sm:$0xff]
  %3025 = vmatprep.subr.mxu0 0.0
  %3026 = vmatpush1.msra.mxu0 %v3022
  %3027 = vmatprep.subr.mxu0 0.0
  %3028 = vmatpush1.msra.mxu0 %v3023
  %3029 = vmatprep.subr.mxu0 0.0
  %3030 = vmatpush1.msra.mxu0 %v3024
  %3031 = vmatprep.subr.mxu0 0.0
  %3032 = vmatpush1.msra.mxu0 0.0
  %3033 = vmatprep.subr.mxu0 0.0
  %3034 = vmatpush1.msra.mxu0 0.0
  %3035 = vmatprep.subr.mxu0 0.0
  %3036 = vmatpush1.msra.mxu0 0.0
  %3037 = vmatprep.subr.mxu0 0.0
  %3038 = vmatpush1.msra.mxu0 0.0
  %3039 = vmatprep.subr.mxu0 0.0
  %3040 = vmatpush1.msra.mxu0 0.0
  %3041 = vmatprep.subr.mxu0 0.0
  %3042 = vmatpush1.msra.mxu0 0.0
  %3043 = vmatprep.subr.mxu0 0.0
  %3044 = vmatpush1.msra.mxu0 0.0
  %3045 = vmatprep.subr.mxu0 0.0
  %3046 = vmatpush1.msra.mxu0 0.0
  %3047 = vmatprep.subr.mxu0 0.0
  %3048 = vmatpush1.msra.mxu0 0.0
  %3049 = vmatprep.subr.mxu0 0.0
  %3050 = vmatpush1.msra.mxu0 0.0
  %3051 = vmatprep.subr.mxu0 0.0
  %3052 = vmatpush1.msra.mxu0 0.0
  %3053 = vmatprep.subr.mxu0 0.0
  %3054 = vmatpush1.msra.mxu0 0.0
  %3055 = vmatprep.subr.mxu0 0.0
  %3056 = vmatpush1.msra.mxu0 0.0
  %3057 = vmatprep.subr.mxu0 0.0
  %3058 = vmatpush1.msra.mxu0 0.0
  %3059 = vmatprep.subr.mxu0 0.0
  %3060 = vmatpush1.msra.mxu0 0.0
  %3061 = vmatprep.subr.mxu0 0.0
  %3062 = vmatpush1.msra.mxu0 0.0
  %3063 = vmatprep.subr.mxu0 0.0
  %3064 = vmatpush1.msra.mxu0 0.0
  %3065 = vmatprep.subr.mxu0 0.0
  %3066 = vmatpush1.msra.mxu0 0.0
  %3067 = vmatprep.subr.mxu0 0.0
  %3068 = vmatpush1.msra.mxu0 0.0
  %3069 = vmatprep.subr.mxu0 0.0
  %3070 = vmatpush1.msra.mxu0 0.0
  %3071 = vmatprep.subr.mxu0 0.0
  %3072 = vmatpush1.msra.mxu0 0.0
  %3073 = vmatprep.subr.mxu0 0.0
  %3074 = vmatpush1.msra.mxu0 0.0
  %3075 = vmatprep.subr.mxu0 0.0
  %3076 = vmatpush1.msra.mxu0 0.0
  %3077 = vmatprep.subr.mxu0 0.0
  %3078 = vmatpush1.msra.mxu0 0.0
  %3079 = vmatprep.subr.mxu0 0.0
  %3080 = vmatpush1.msra.mxu0 0.0
  %3081 = vmatprep.subr.mxu0 0.0
  %3082 = vmatpush1.msra.mxu0 0.0
  %3083 = vmatprep.subr.mxu0 0.0
  %3084 = vmatpush1.msra.mxu0 0.0
  %3085 = vmatprep.subr.mxu0 0.0
  %3086 = vmatpush1.msra.mxu0 0.0
  %3087 = vmatprep.subr.mxu0 0.0
  %3088 = vmatpush1.msra.mxu0 0.0
  %3089 = vmatprep.mubr.f32.mxu0 0.0
  %3090 = vmatmul.mubr.f32.gmra.mrb[0].mxu0 %v2868
  %v3091 = vpop.f32.mrb[0].mxu0
  %v3092 = vadd.f32 0.0, %v3091
  %v3093 = vpop.f32.mrb[0].mxu0
  %3094 = vmatprep.mubr.f32.mxu0 0.0
  %3095 = vmatmul.mubr.f32.gmra.mrb[0].mxu0 %v2871
  %v3096 = vpop.f32.mrb[0].mxu0
  %v3097 = vadd.f32 0.0, %v3096
  %v3098 = vpop.f32.mrb[0].mxu0
  %3099 = vmatprep.mubr.f32.mxu0 0.0
  %3100 = vmatmul.mubr.f32.gmra.mrb[0].mxu0 %v2874
  %v3101 = vpop.f32.mrb[0].mxu0
  %v3102 = vadd.f32 0.0, %v3101
  %v3103 = vpop.f32.mrb[0].mxu0
  %3104 = vmatprep.mubr.f32.mxu0 0.0
  %3105 = vmatmul.mubr.f32.gmra.mrb[0].mxu0 %v2877
  %v3106 = vpop.f32.mrb[0].mxu0
  %v3107 = vadd.f32 0.0, %v3106
  %v3108 = vpop.f32.mrb[0].mxu0
  %3109 = vmatprep.mubr.f32.mxu0 0.0
  %3110 = vmatmul.mubr.f32.gmra.mrb[0].mxu0 %v2880
  %v3111 = vpop.f32.mrb[0].mxu0
  %v3112 = vadd.f32 0.0, %v3111
  %v3113 = vpop.f32.mrb[0].mxu0
  %3114 = vmatprep.mubr.f32.mxu0 0.0
  %3115 = vmatmul.mubr.f32.gmra.mrb[0].mxu0 %v2883
  %v3116 = vpop.f32.mrb[0].mxu0
  %v3117 = vadd.f32 0.0, %v3116
  %v3118 = vpop.f32.mrb[0].mxu0
  %3119 = vmatprep.mubr.f32.mxu0 0.0
  %3120 = vmatmul.mubr.f32.gmra.mrb[0].mxu0 %v2886
  %v3121 = vpop.f32.mrb[0].mxu0
  %v3122 = vadd.f32 0.0, %v3121
  %v3123 = vpop.f32.mrb[0].mxu0
  %3124 = vmatprep.mubr.f32.mxu0 0.0
  %3125 = vmatmul.mubr.f32.gmra.mrb[0].mxu0 %v2889
  %v3126 = vpop.f32.mrb[0].mxu0
  %v3127 = vadd.f32 0.0, %v3126
  %v3128 = vpop.f32.mrb[0].mxu0
  %3129 = vmatprep.mubr.f32.mxu0 0.0
  %3130 = vmatmul.mubr.f32.gmra.mrb[0].mxu0 %v2892
  %v3131 = vpop.f32.mrb[0].mxu0
  %v3132 = vadd.f32 0.0, %v3131
  %v3133 = vpop.f32.mrb[0].mxu0
  %3134 = vdwg.mxu0
  %vm3135 = vcmask 588800
  %v3137 = vsel %vm3135, %v3005, 0
  %v3140 = vsel %vm3135, %v3006, 0
  %v3143 = vsel %vm3135, %v3007, 0
  %v3146 = vsel %vm3135, %v3008, 0
  %v3149 = vsel %vm3135, %v3009, 0
  %v3152 = vsel %vm3135, %v3010, 0
  %v3155 = vsel %vm3135, %v3011, 0
  %v3158 = vsel %vm3135, %v3012, 0
  %v3161 = vsel %vm3135, %v3013, 0
  %v3164 = vsel %vm3135, %v3014, 0
  %v3167 = vsel %vm3135, %v3015, 0
  %v3170 = vsel %vm3135, %v3016, 0
  %v3173 = vsel %vm3135, %v3017, 0
  %v3176 = vsel %vm3135, %v3018, 0
  %v3179 = vsel %vm3135, %v3019, 0
  %v3182 = vsel %vm3135, %v3020, 0
  %3184 = vmatprep.subr.mxu0 0.0
  %3185 = vmatpush1.msra.mxu0 %v3092
  %3186 = vmatprep.subr.mxu0 0.0
  %3187 = vmatpush1.msra.mxu0 %v3097
  %3188 = vmatprep.subr.mxu0 0.0
  %3189 = vmatpush1.msra.mxu0 %v3102
  %3190 = vmatprep.subr.mxu0 0.0
  %3191 = vmatpush1.msra.mxu0 %v3107
  %3192 = vmatprep.subr.mxu0 0.0
  %3193 = vmatpush1.msra.mxu0 %v3112
  %3194 = vmatprep.subr.mxu0 0.0
  %3195 = vmatpush1.msra.mxu0 %v3117
  %3196 = vmatprep.subr.mxu0 0.0
  %3197 = vmatpush1.msra.mxu0 %v3122
  %3198 = vmatprep.subr.mxu0 0.0
  %3199 = vmatpush1.msra.mxu0 %v3127
  %3200 = vmatprep.subr.mxu0 0.0
  %3201 = vmatpush1.msra.mxu0 %v3132
  %3202 = vmatprep.subr.mxu0 0.0
  %3203 = vmatpush1.msra.mxu0 0.0
  %3204 = vmatprep.subr.mxu0 0.0
  %3205 = vmatpush1.msra.mxu0 0.0
  %3206 = vmatprep.subr.mxu0 0.0
  %3207 = vmatpush1.msra.mxu0 0.0
  %3208 = vmatprep.subr.mxu0 0.0
  %3209 = vmatpush1.msra.mxu0 0.0
  %3210 = vmatprep.subr.mxu0 0.0
  %3211 = vmatpush1.msra.mxu0 0.0
  %3212 = vmatprep.subr.mxu0 0.0
  %3213 = vmatpush1.msra.mxu0 0.0
  %3214 = vmatprep.subr.mxu0 0.0
  %3215 = vmatpush1.msra.mxu0 0.0
  %3216 = vmatprep.subr.mxu0 0.0
  %3217 = vmatpush1.msra.mxu0 0.0
  %3218 = vmatprep.subr.mxu0 0.0
  %3219 = vmatpush1.msra.mxu0 0.0
  %3220 = vmatprep.subr.mxu0 0.0
  %3221 = vmatpush1.msra.mxu0 0.0
  %3222 = vmatprep.subr.mxu0 0.0
  %3223 = vmatpush1.msra.mxu0 0.0
  %3224 = vmatprep.subr.mxu0 0.0
  %3225 = vmatpush1.msra.mxu0 0.0
  %3226 = vmatprep.subr.mxu0 0.0
  %3227 = vmatpush1.msra.mxu0 0.0
  %3228 = vmatprep.subr.mxu0 0.0
  %3229 = vmatpush1.msra.mxu0 0.0
  %3230 = vmatprep.subr.mxu0 0.0
  %3231 = vmatpush1.msra.mxu0 0.0
  %3232 = vmatprep.subr.mxu0 0.0
  %3233 = vmatpush1.msra.mxu0 0.0
  %3234 = vmatprep.subr.mxu0 0.0
  %3235 = vmatpush1.msra.mxu0 0.0
  %3236 = vmatprep.subr.mxu0 0.0
  %3237 = vmatpush1.msra.mxu0 0.0
  %3238 = vmatprep.subr.mxu0 0.0
  %3239 = vmatpush1.msra.mxu0 0.0
  %3240 = vmatprep.subr.mxu0 0.0
  %3241 = vmatpush1.msra.mxu0 0.0
  %3242 = vmatprep.subr.mxu0 0.0
  %3243 = vmatpush1.msra.mxu0 0.0
  %3244 = vmatprep.subr.mxu0 0.0
  %3245 = vmatpush1.msra.mxu0 0.0
  %3246 = vmatprep.subr.mxu0 0.0
  %3247 = vmatpush1.msra.mxu0 0.0
  %3248 = vmatprep.mubr.f32.mxu0 0.0
  %3249 = vmatmul.mubr.f32.gmra.mrb[0].mxu0 %v3137
  %v3250 = vpop.f32.mrb[0].mxu0
  %v3251 = vadd.f32 0.0, %v3250
  %v3252 = vpop.f32.mrb[0].mxu0
  %3253 = vmatprep.mubr.f32.mxu0 0.0
  %3254 = vmatmul.mubr.f32.gmra.mrb[0].mxu0 %v3140
  %v3255 = vpop.f32.mrb[0].mxu0
  %v3256 = vadd.f32 0.0, %v3255
  %v3257 = vpop.f32.mrb[0].mxu0
  %3258 = vmatprep.mubr.f32.mxu0 0.0
  %3259 = vmatmul.mubr.f32.gmra.mrb[0].mxu0 %v3143
  %v3260 = vpop.f32.mrb[0].mxu0
  %v3261 = vadd.f32 0.0, %v3260
  %v3262 = vpop.f32.mrb[0].mxu0
  %3263 = vmatprep.mubr.f32.mxu0 0.0
  %3264 = vmatmul.mubr.f32.gmra.mrb[0].mxu0 %v3146
  %v3265 = vpop.f32.mrb[0].mxu0
  %v3266 = vadd.f32 0.0, %v3265
  %v3267 = vpop.f32.mrb[0].mxu0
  %3268 = vmatprep.mubr.f32.mxu0 0.0
  %3269 = vmatmul.mubr.f32.gmra.mrb[0].mxu0 %v3149
  %v3270 = vpop.f32.mrb[0].mxu0
  %v3271 = vadd.f32 0.0, %v3270
  %v3272 = vpop.f32.mrb[0].mxu0
  %3273 = vmatprep.mubr.f32.mxu0 0.0
  %3274 = vmatmul.mubr.f32.gmra.mrb[0].mxu0 %v3152
  %v3275 = vpop.f32.mrb[0].mxu0
  %v3276 = vadd.f32 0.0, %v3275
  %v3277 = vpop.f32.mrb[0].mxu0
  %3278 = vmatprep.mubr.f32.mxu0 0.0
  %3279 = vmatmul.mubr.f32.gmra.mrb[0].mxu0 %v3155
  %v3280 = vpop.f32.mrb[0].mxu0
  %v3281 = vadd.f32 0.0, %v3280
  %v3282 = vpop.f32.mrb[0].mxu0
  %3283 = vmatprep.mubr.f32.mxu0 0.0
  %3284 = vmatmul.mubr.f32.gmra.mrb[0].mxu0 %v3158
  %v3285 = vpop.f32.mrb[0].mxu0
  %v3286 = vadd.f32 0.0, %v3285
  %v3287 = vpop.f32.mrb[0].mxu0
  %3288 = vmatprep.mubr.f32.mxu0 0.0
  %3289 = vmatmul.mubr.f32.gmra.mrb[0].mxu0 %v3161
  %v3290 = vpop.f32.mrb[0].mxu0
  %v3291 = vadd.f32 0.0, %v3290
  %v3292 = vpop.f32.mrb[0].mxu0
  %3293 = vmatprep.mubr.f32.mxu0 0.0
  %3294 = vmatmul.mubr.f32.gmra.mrb[0].mxu0 %v3164
  %v3295 = vpop.f32.mrb[0].mxu0
  %v3296 = vadd.f32 0.0, %v3295
  %v3297 = vpop.f32.mrb[0].mxu0
  %3298 = vmatprep.mubr.f32.mxu0 0.0
  %3299 = vmatmul.mubr.f32.gmra.mrb[0].mxu0 %v3167
  %v3300 = vpop.f32.mrb[0].mxu0
  %v3301 = vadd.f32 0.0, %v3300
  %v3302 = vpop.f32.mrb[0].mxu0
  %3303 = vmatprep.mubr.f32.mxu0 0.0
  %3304 = vmatmul.mubr.f32.gmra.mrb[0].mxu0 %v3170
  %v3305 = vpop.f32.mrb[0].mxu0
  %v3306 = vadd.f32 0.0, %v3305
  %v3307 = vpop.f32.mrb[0].mxu0
  %3308 = vmatprep.mubr.f32.mxu0 0.0
  %3309 = vmatmul.mubr.f32.gmra.mrb[0].mxu0 %v3173
  %v3310 = vpop.f32.mrb[0].mxu0
  %v3311 = vadd.f32 0.0, %v3310
  %v3312 = vpop.f32.mrb[0].mxu0
  %3313 = vmatprep.mubr.f32.mxu0 0.0
  %3314 = vmatmul.mubr.f32.gmra.mrb[0].mxu0 %v3176
  %v3315 = vpop.f32.mrb[0].mxu0
  %v3316 = vadd.f32 0.0, %v3315
  %v3317 = vpop.f32.mrb[0].mxu0
  %3318 = vmatprep.mubr.f32.mxu0 0.0
  %3319 = vmatmul.mubr.f32.gmra.mrb[0].mxu0 %v3179
  %v3320 = vpop.f32.mrb[0].mxu0
  %v3321 = vadd.f32 0.0, %v3320
  %v3322 = vpop.f32.mrb[0].mxu0
  %3323 = vmatprep.mubr.f32.mxu0 0.0
  %3324 = vmatmul.mubr.f32.gmra.mrb[0].mxu0 %v3182
  %v3325 = vpop.f32.mrb[0].mxu0
  %v3326 = vadd.f32 0.0, %v3325
  %v3327 = vpop.f32.mrb[0].mxu0
  %3328 = vdwg.mxu0
  %v3330 = vsel %vm3135, %v2847, 0
  %v3333 = vsel %vm3135, %v2848, 0
  %v3336 = vsel %vm3135, %v2849, 0
  %v3339 = vsel %vm3135, %v2850, 0
  %v3342 = vsel %vm3135, %v2851, 0
  %v3345 = vsel %vm3135, %v2852, 0
  %v3348 = vsel %vm3135, %v2853, 0
  %v3351 = vsel %vm3135, %v2854, 0
  %v3354 = vsel %vm3135, %v2855, 0
  %v3357 = vsel %vm3135, %v2856, 0
  %v3360 = vsel %vm3135, %v2857, 0
  %v3363 = vsel %vm3135, %v2858, 0
  %v3366 = vsel %vm3135, %v2859, 0
  %v3369 = vsel %vm3135, %v2860, 0
  %v3372 = vsel %vm3135, %v2861, 0
  %v3375 = vsel %vm3135, %v2862, 0
  %3377 = vmatprep.subr.mxu0 0.0
  %3378 = vmatpush1.msra.mxu0 %v2961
  %3379 = vmatprep.subr.mxu0 0.0
  %3380 = vmatpush1.msra.mxu0 %v2966
  %3381 = vmatprep.subr.mxu0 0.0
  %3382 = vmatpush1.msra.mxu0 %v2971
  %3383 = vmatprep.subr.mxu0 0.0
  %3384 = vmatpush1.msra.mxu0 %v2976
  %3385 = vmatprep.subr.mxu0 0.0
  %3386 = vmatpush1.msra.mxu0 %v2981
  %3387 = vmatprep.subr.mxu0 0.0
  %3388 = vmatpush1.msra.mxu0 %v2986
  %3389 = vmatprep.subr.mxu0 0.0
  %3390 = vmatpush1.msra.mxu0 %v2991
  %3391 = vmatprep.subr.mxu0 0.0
  %3392 = vmatpush1.msra.mxu0 %v2996
  %3393 = vmatprep.subr.mxu0 0.0
  %3394 = vmatpush1.msra.mxu0 %v3001
  %3395 = vmatprep.subr.mxu0 0.0
  %3396 = vmatpush1.msra.mxu0 0.0
  %3397 = vmatprep.subr.mxu0 0.0
  %3398 = vmatpush1.msra.mxu0 0.0
  %3399 = vmatprep.subr.mxu0 0.0
  %3400 = vmatpush1.msra.mxu0 0.0
  %3401 = vmatprep.subr.mxu0 0.0
  %3402 = vmatpush1.msra.mxu0 0.0
  %3403 = vmatprep.subr.mxu0 0.0
  %3404 = vmatpush1.msra.mxu0 0.0
  %3405 = vmatprep.subr.mxu0 0.0
  %3406 = vmatpush1.msra.mxu0 0.0
  %3407 = vmatprep.subr.mxu0 0.0
  %3408 = vmatpush1.msra.mxu0 0.0
  %3409 = vmatprep.subr.mxu0 0.0
  %3410 = vmatpush1.msra.mxu0 0.0
  %3411 = vmatprep.subr.mxu0 0.0
  %3412 = vmatpush1.msra.mxu0 0.0
  %3413 = vmatprep.subr.mxu0 0.0
  %3414 = vmatpush1.msra.mxu0 0.0
  %3415 = vmatprep.subr.mxu0 0.0
  %3416 = vmatpush1.msra.mxu0 0.0
  %3417 = vmatprep.subr.mxu0 0.0
  %3418 = vmatpush1.msra.mxu0 0.0
  %3419 = vmatprep.subr.mxu0 0.0
  %3420 = vmatpush1.msra.mxu0 0.0
  %3421 = vmatprep.subr.mxu0 0.0
  %3422 = vmatpush1.msra.mxu0 0.0
  %3423 = vmatprep.subr.mxu0 0.0
  %3424 = vmatpush1.msra.mxu0 0.0
  %3425 = vmatprep.subr.mxu0 0.0
  %3426 = vmatpush1.msra.mxu0 0.0
  %3427 = vmatprep.subr.mxu0 0.0
  %3428 = vmatpush1.msra.mxu0 0.0
  %3429 = vmatprep.subr.mxu0 0.0
  %3430 = vmatpush1.msra.mxu0 0.0
  %3431 = vmatprep.subr.mxu0 0.0
  %3432 = vmatpush1.msra.mxu0 0.0
  %3433 = vmatprep.subr.mxu0 0.0
  %3434 = vmatpush1.msra.mxu0 0.0
  %3435 = vmatprep.subr.mxu0 0.0
  %3436 = vmatpush1.msra.mxu0 0.0
  %3437 = vmatprep.subr.mxu0 0.0
  %3438 = vmatpush1.msra.mxu0 0.0
  %3439 = vmatprep.subr.mxu0 0.0
  %3440 = vmatpush1.msra.mxu0 0.0
  %3441 = vmatprep.mubr.f32.mxu0 0.0
  %3442 = vmatmul.mubr.f32.gmra.mrb[0].mxu0 %v3330
  %v3443 = vpop.f32.mrb[0].mxu0
  %v3444 = vadd.f32 %v3251, %v3443
  %v3445 = vpop.f32.mrb[0].mxu0
  %3446 = vmatprep.mubr.f32.mxu0 0.0
  %3447 = vmatmul.mubr.f32.gmra.mrb[0].mxu0 %v3333
  %v3448 = vpop.f32.mrb[0].mxu0
  %v3449 = vadd.f32 %v3256, %v3448
  %v3450 = vpop.f32.mrb[0].mxu0
  %3451 = vmatprep.mubr.f32.mxu0 0.0
  %3452 = vmatmul.mubr.f32.gmra.mrb[0].mxu0 %v3336
  %v3453 = vpop.f32.mrb[0].mxu0
  %v3454 = vadd.f32 %v3261, %v3453
  %v3455 = vpop.f32.mrb[0].mxu0
  %3456 = vmatprep.mubr.f32.mxu0 0.0
  %3457 = vmatmul.mubr.f32.gmra.mrb[0].mxu0 %v3339
  %v3458 = vpop.f32.mrb[0].mxu0
  %v3459 = vadd.f32 %v3266, %v3458
  %v3460 = vpop.f32.mrb[0].mxu0
  %3461 = vmatprep.mubr.f32.mxu0 0.0
  %3462 = vmatmul.mubr.f32.gmra.mrb[0].mxu0 %v3342
  %v3463 = vpop.f32.mrb[0].mxu0
  %v3464 = vadd.f32 %v3271, %v3463
  %v3465 = vpop.f32.mrb[0].mxu0
  %3466 = vmatprep.mubr.f32.mxu0 0.0
  %3467 = vmatmul.mubr.f32.gmra.mrb[0].mxu0 %v3345
  %v3468 = vpop.f32.mrb[0].mxu0
  %v3469 = vadd.f32 %v3276, %v3468
  %v3470 = vpop.f32.mrb[0].mxu0
  %3471 = vmatprep.mubr.f32.mxu0 0.0
  %3472 = vmatmul.mubr.f32.gmra.mrb[0].mxu0 %v3348
  %v3473 = vpop.f32.mrb[0].mxu0
  %v3474 = vadd.f32 %v3281, %v3473
  %v3475 = vpop.f32.mrb[0].mxu0
  %3476 = vmatprep.mubr.f32.mxu0 0.0
  %3477 = vmatmul.mubr.f32.gmra.mrb[0].mxu0 %v3351
  %v3478 = vpop.f32.mrb[0].mxu0
  %v3479 = vadd.f32 %v3286, %v3478
  %v3480 = vpop.f32.mrb[0].mxu0
  %3481 = vmatprep.mubr.f32.mxu0 0.0
  %3482 = vmatmul.mubr.f32.gmra.mrb[0].mxu0 %v3354
  %v3483 = vpop.f32.mrb[0].mxu0
  %v3484 = vadd.f32 %v3291, %v3483
  %v3485 = vpop.f32.mrb[0].mxu0
  %3486 = vmatprep.mubr.f32.mxu0 0.0
  %3487 = vmatmul.mubr.f32.gmra.mrb[0].mxu0 %v3357
  %v3488 = vpop.f32.mrb[0].mxu0
  %v3489 = vadd.f32 %v3296, %v3488
  %v3490 = vpop.f32.mrb[0].mxu0
  %3491 = vmatprep.mubr.f32.mxu0 0.0
  %3492 = vmatmul.mubr.f32.gmra.mrb[0].mxu0 %v3360
  %v3493 = vpop.f32.mrb[0].mxu0
  %v3494 = vadd.f32 %v3301, %v3493
  %v3495 = vpop.f32.mrb[0].mxu0
  %3496 = vmatprep.mubr.f32.mxu0 0.0
  %3497 = vmatmul.mubr.f32.gmra.mrb[0].mxu0 %v3363
  %v3498 = vpop.f32.mrb[0].mxu0
  %v3499 = vadd.f32 %v3306, %v3498
  %v3500 = vpop.f32.mrb[0].mxu0
  %3501 = vmatprep.mubr.f32.mxu0 0.0
  %3502 = vmatmul.mubr.f32.gmra.mrb[0].mxu0 %v3366
  %v3503 = vpop.f32.mrb[0].mxu0
  %v3504 = vadd.f32 %v3311, %v3503
  %v3505 = vpop.f32.mrb[0].mxu0
  %3506 = vmatprep.mubr.f32.mxu0 0.0
  %3507 = vmatmul.mubr.f32.gmra.mrb[0].mxu0 %v3369
  %v3508 = vpop.f32.mrb[0].mxu0
  %v3509 = vadd.f32 %v3316, %v3508
  %v3510 = vpop.f32.mrb[0].mxu0
  %3511 = vmatprep.mubr.f32.mxu0 0.0
  %3512 = vmatmul.mubr.f32.gmra.mrb[0].mxu0 %v3372
  %v3513 = vpop.f32.mrb[0].mxu0
  %v3514 = vadd.f32 %v3321, %v3513
  %v3515 = vpop.f32.mrb[0].mxu0
  %3516 = vmatprep.mubr.f32.mxu0 0.0
  %3517 = vmatmul.mubr.f32.gmra.mrb[0].mxu0 %v3375
  %v3518 = vpop.f32.mrb[0].mxu0
  %v3519 = vadd.f32 %v3326, %v3518
  %v3520 = vpop.f32.mrb[0].mxu0
  %3521 = vdwg.mxu0
  %s3522 = scalar_lea.vmem %s6, 256
  %v3523 = vld [vmem:[%s3522] sm:$0xff]
  %v3524 = vld [vmem:[%s3522 + $0x8] sm:$0xff]
  %v3525 = vld [vmem:[%s3522 + $0x10] sm:$0xff]
  %v3526 = vld [vmem:[%s3522 + $0x18] sm:$0xff]
  %v3527 = vld [vmem:[%s3522 + $0x20] sm:$0xff]
  %v3528 = vld [vmem:[%s3522 + $0x28] sm:$0xff]
  %v3529 = vld [vmem:[%s3522 + $0x30] sm:$0xff]
  %v3530 = vld [vmem:[%s3522 + $0x38] sm:$0xff]
  %v3531 = vld [vmem:[%s3522 + $0x40] sm:$0xff]
  %v3532 = vld [vmem:[%s3522 + $0x48] sm:$0xff]
  %v3533 = vld [vmem:[%s3522 + $0x50] sm:$0xff]
  %v3534 = vld [vmem:[%s3522 + $0x58] sm:$0xff]
  %v3535 = vld [vmem:[%s3522 + $0x60] sm:$0xff]
  %v3536 = vld [vmem:[%s3522 + $0x68] sm:$0xff]
  %v3537 = vld [vmem:[%s3522 + $0x70] sm:$0xff]
  %v3538 = vld [vmem:[%s3522 + $0x78] sm:$0xff]
  %s3539 = scalar_lea.vmem %s8, 48
  %v3540 = vld [vmem:[%s3539] sm:$0xff]
  %v3541 = vld [vmem:[%s3539 + $0x8] sm:$0xff]
  %v3542 = vld [vmem:[%s3539 + $0x10] sm:$0xff]
  %3543 = vmatprep.subr.mxu0 0.0
  %3544 = vmatpush1.msra.mxu0 %v3540
  %3545 = vmatprep.subr.mxu0 0.0
  %3546 = vmatpush1.msra.mxu0 %v3541
  %3547 = vmatprep.subr.mxu0 0.0
  %3548 = vmatpush1.msra.mxu0 %v3542
  %3549 = vmatprep.subr.mxu0 0.0
  %3550 = vmatpush1.msra.mxu0 0.0
  %3551 = vmatprep.subr.mxu0 0.0
  %3552 = vmatpush1.msra.mxu0 0.0
  %3553 = vmatprep.subr.mxu0 0.0
  %3554 = vmatpush1.msra.mxu0 0.0
  %3555 = vmatprep.subr.mxu0 0.0
  %3556 = vmatpush1.msra.mxu0 0.0
  %3557 = vmatprep.subr.mxu0 0.0
  %3558 = vmatpush1.msra.mxu0 0.0
  %3559 = vmatprep.subr.mxu0 0.0
  %3560 = vmatpush1.msra.mxu0 0.0
  %3561 = vmatprep.subr.mxu0 0.0
  %3562 = vmatpush1.msra.mxu0 0.0
  %3563 = vmatprep.subr.mxu0 0.0
  %3564 = vmatpush1.msra.mxu0 0.0
  %3565 = vmatprep.subr.mxu0 0.0
  %3566 = vmatpush1.msra.mxu0 0.0
  %3567 = vmatprep.subr.mxu0 0.0
  %3568 = vmatpush1.msra.mxu0 0.0
  %3569 = vmatprep.subr.mxu0 0.0
  %3570 = vmatpush1.msra.mxu0 0.0
  %3571 = vmatprep.subr.mxu0 0.0
  %3572 = vmatpush1.msra.mxu0 0.0
  %3573 = vmatprep.subr.mxu0 0.0
  %3574 = vmatpush1.msra.mxu0 0.0
  %3575 = vmatprep.subr.mxu0 0.0
  %3576 = vmatpush1.msra.mxu0 0.0
  %3577 = vmatprep.subr.mxu0 0.0
  %3578 = vmatpush1.msra.mxu0 0.0
  %3579 = vmatprep.subr.mxu0 0.0
  %3580 = vmatpush1.msra.mxu0 0.0
  %3581 = vmatprep.subr.mxu0 0.0
  %3582 = vmatpush1.msra.mxu0 0.0
  %3583 = vmatprep.subr.mxu0 0.0
  %3584 = vmatpush1.msra.mxu0 0.0
  %3585 = vmatprep.subr.mxu0 0.0
  %3586 = vmatpush1.msra.mxu0 0.0
  %3587 = vmatprep.subr.mxu0 0.0
  %3588 = vmatpush1.msra.mxu0 0.0
  %3589 = vmatprep.subr.mxu0 0.0
  %3590 = vmatpush1.msra.mxu0 0.0
  %3591 = vmatprep.subr.mxu0 0.0
  %3592 = vmatpush1.msra.mxu0 0.0
  %3593 = vmatprep.subr.mxu0 0.0
  %3594 = vmatpush1.msra.mxu0 0.0
  %3595 = vmatprep.subr.mxu0 0.0
  %3596 = vmatpush1.msra.mxu0 0.0
  %3597 = vmatprep.subr.mxu0 0.0
  %3598 = vmatpush1.msra.mxu0 0.0
  %3599 = vmatprep.subr.mxu0 0.0
  %3600 = vmatpush1.msra.mxu0 0.0
  %3601 = vmatprep.subr.mxu0 0.0
  %3602 = vmatpush1.msra.mxu0 0.0
  %3603 = vmatprep.subr.mxu0 0.0
  %3604 = vmatpush1.msra.mxu0 0.0
  %3605 = vmatprep.subr.mxu0 0.0
  %3606 = vmatpush1.msra.mxu0 0.0
  %3607 = vmatprep.mubr.f32.mxu0 0.0
  %3608 = vmatmul.mubr.f32.gmra.mrb[0].mxu0 %v2868
  %v3609 = vpop.f32.mrb[0].mxu0
  %v3610 = vadd.f32 0.0, %v3609
  %v3611 = vpop.f32.mrb[0].mxu0
  %3612 = vmatprep.mubr.f32.mxu0 0.0
  %3613 = vmatmul.mubr.f32.gmra.mrb[0].mxu0 %v2871
  %v3614 = vpop.f32.mrb[0].mxu0
  %v3615 = vadd.f32 0.0, %v3614
  %v3616 = vpop.f32.mrb[0].mxu0
  %3617 = vmatprep.mubr.f32.mxu0 0.0
  %3618 = vmatmul.mubr.f32.gmra.mrb[0].mxu0 %v2874
  %v3619 = vpop.f32.mrb[0].mxu0
  %v3620 = vadd.f32 0.0, %v3619
  %v3621 = vpop.f32.mrb[0].mxu0
  %3622 = vmatprep.mubr.f32.mxu0 0.0
  %3623 = vmatmul.mubr.f32.gmra.mrb[0].mxu0 %v2877
  %v3624 = vpop.f32.mrb[0].mxu0
  %v3625 = vadd.f32 0.0, %v3624
  %v3626 = vpop.f32.mrb[0].mxu0
  %3627 = vmatprep.mubr.f32.mxu0 0.0
  %3628 = vmatmul.mubr.f32.gmra.mrb[0].mxu0 %v2880
  %v3629 = vpop.f32.mrb[0].mxu0
  %v3630 = vadd.f32 0.0, %v3629
  %v3631 = vpop.f32.mrb[0].mxu0
  %3632 = vmatprep.mubr.f32.mxu0 0.0
  %3633 = vmatmul.mubr.f32.gmra.mrb[0].mxu0 %v2883
  %v3634 = vpop.f32.mrb[0].mxu0
  %v3635 = vadd.f32 0.0, %v3634
  %v3636 = vpop.f32.mrb[0].mxu0
  %3637 = vmatprep.mubr.f32.mxu0 0.0
  %3638 = vmatmul.mubr.f32.gmra.mrb[0].mxu0 %v2886
  %v3639 = vpop.f32.mrb[0].mxu0
  %v3640 = vadd.f32 0.0, %v3639
  %v3641 = vpop.f32.mrb[0].mxu0
  %3642 = vmatprep.mubr.f32.mxu0 0.0
  %3643 = vmatmul.mubr.f32.gmra.mrb[0].mxu0 %v2889
  %v3644 = vpop.f32.mrb[0].mxu0
  %v3645 = vadd.f32 0.0, %v3644
  %v3646 = vpop.f32.mrb[0].mxu0
  %3647 = vmatprep.mubr.f32.mxu0 0.0
  %3648 = vmatmul.mubr.f32.gmra.mrb[0].mxu0 %v2892
  %v3649 = vpop.f32.mrb[0].mxu0
  %v3650 = vadd.f32 0.0, %v3649
  %v3651 = vpop.f32.mrb[0].mxu0
  %3652 = vdwg.mxu0
  %v3654 = vsel %vm3135, %v3523, 0
  %v3657 = vsel %vm3135, %v3524, 0
  %v3660 = vsel %vm3135, %v3525, 0
  %v3663 = vsel %vm3135, %v3526, 0
  %v3666 = vsel %vm3135, %v3527, 0
  %v3669 = vsel %vm3135, %v3528, 0
  %v3672 = vsel %vm3135, %v3529, 0
  %v3675 = vsel %vm3135, %v3530, 0
  %v3678 = vsel %vm3135, %v3531, 0
  %v3681 = vsel %vm3135, %v3532, 0
  %v3684 = vsel %vm3135, %v3533, 0
  %v3687 = vsel %vm3135, %v3534, 0
  %v3690 = vsel %vm3135, %v3535, 0
  %v3693 = vsel %vm3135, %v3536, 0
  %v3696 = vsel %vm3135, %v3537, 0
  %v3699 = vsel %vm3135, %v3538, 0
  %3701 = vmatprep.subr.mxu0 0.0
  %3702 = vmatpush1.msra.mxu0 %v3610
  %3703 = vmatprep.subr.mxu0 0.0
  %3704 = vmatpush1.msra.mxu0 %v3615
  %3705 = vmatprep.subr.mxu0 0.0
  %3706 = vmatpush1.msra.mxu0 %v3620
  %3707 = vmatprep.subr.mxu0 0.0
  %3708 = vmatpush1.msra.mxu0 %v3625
  %3709 = vmatprep.subr.mxu0 0.0
  %3710 = vmatpush1.msra.mxu0 %v3630
  %3711 = vmatprep.subr.mxu0 0.0
  %3712 = vmatpush1.msra.mxu0 %v3635
  %3713 = vmatprep.subr.mxu0 0.0
  %3714 = vmatpush1.msra.mxu0 %v3640
  %3715 = vmatprep.subr.mxu0 0.0
  %3716 = vmatpush1.msra.mxu0 %v3645
  %3717 = vmatprep.subr.mxu0 0.0
  %3718 = vmatpush1.msra.mxu0 %v3650
  %3719 = vmatprep.subr.mxu0 0.0
  %3720 = vmatpush1.msra.mxu0 0.0
  %3721 = vmatprep.subr.mxu0 0.0
  %3722 = vmatpush1.msra.mxu0 0.0
  %3723 = vmatprep.subr.mxu0 0.0
  %3724 = vmatpush1.msra.mxu0 0.0
  %3725 = vmatprep.subr.mxu0 0.0
  %3726 = vmatpush1.msra.mxu0 0.0
  %3727 = vmatprep.subr.mxu0 0.0
  %3728 = vmatpush1.msra.mxu0 0.0
  %3729 = vmatprep.subr.mxu0 0.0
  %3730 = vmatpush1.msra.mxu0 0.0
  %3731 = vmatprep.subr.mxu0 0.0
  %3732 = vmatpush1.msra.mxu0 0.0
  %3733 = vmatprep.subr.mxu0 0.0
  %3734 = vmatpush1.msra.mxu0 0.0
  %3735 = vmatprep.subr.mxu0 0.0
  %3736 = vmatpush1.msra.mxu0 0.0
  %3737 = vmatprep.subr.mxu0 0.0
  %3738 = vmatpush1.msra.mxu0 0.0
  %3739 = vmatprep.subr.mxu0 0.0
  %3740 = vmatpush1.msra.mxu0 0.0
  %3741 = vmatprep.subr.mxu0 0.0
  %3742 = vmatpush1.msra.mxu0 0.0
  %3743 = vmatprep.subr.mxu0 0.0
  %3744 = vmatpush1.msra.mxu0 0.0
  %3745 = vmatprep.subr.mxu0 0.0
  %3746 = vmatpush1.msra.mxu0 0.0
  %3747 = vmatprep.subr.mxu0 0.0
  %3748 = vmatpush1.msra.mxu0 0.0
  %3749 = vmatprep.subr.mxu0 0.0
  %3750 = vmatpush1.msra.mxu0 0.0
  %3751 = vmatprep.subr.mxu0 0.0
  %3752 = vmatpush1.msra.mxu0 0.0
  %3753 = vmatprep.subr.mxu0 0.0
  %3754 = vmatpush1.msra.mxu0 0.0
  %3755 = vmatprep.subr.mxu0 0.0
  %3756 = vmatpush1.msra.mxu0 0.0
  %3757 = vmatprep.subr.mxu0 0.0
  %3758 = vmatpush1.msra.mxu0 0.0
  %3759 = vmatprep.subr.mxu0 0.0
  %3760 = vmatpush1.msra.mxu0 0.0
  %3761 = vmatprep.subr.mxu0 0.0
  %3762 = vmatpush1.msra.mxu0 0.0
  %3763 = vmatprep.subr.mxu0 0.0
  %3764 = vmatpush1.msra.mxu0 0.0
  %3765 = vmatprep.mubr.f32.mxu0 0.0
  %3766 = vmatmul.mubr.f32.gmra.mrb[0].mxu0 %v3654
  %v3767 = vpop.f32.mrb[0].mxu0
  %v3768 = vadd.f32 0.0, %v3767
  %v3769 = vpop.f32.mrb[0].mxu0
  %3770 = vmatprep.mubr.f32.mxu0 0.0
  %3771 = vmatmul.mubr.f32.gmra.mrb[0].mxu0 %v3657
  %v3772 = vpop.f32.mrb[0].mxu0
  %v3773 = vadd.f32 0.0, %v3772
  %v3774 = vpop.f32.mrb[0].mxu0
  %3775 = vmatprep.mubr.f32.mxu0 0.0
  %3776 = vmatmul.mubr.f32.gmra.mrb[0].mxu0 %v3660
  %v3777 = vpop.f32.mrb[0].mxu0
  %v3778 = vadd.f32 0.0, %v3777
  %v3779 = vpop.f32.mrb[0].mxu0
  %3780 = vmatprep.mubr.f32.mxu0 0.0
  %3781 = vmatmul.mubr.f32.gmra.mrb[0].mxu0 %v3663
  %v3782 = vpop.f32.mrb[0].mxu0
  %v3783 = vadd.f32 0.0, %v3782
  %v3784 = vpop.f32.mrb[0].mxu0
  %3785 = vmatprep.mubr.f32.mxu0 0.0
  %3786 = vmatmul.mubr.f32.gmra.mrb[0].mxu0 %v3666
  %v3787 = vpop.f32.mrb[0].mxu0
  %v3788 = vadd.f32 0.0, %v3787
  %v3789 = vpop.f32.mrb[0].mxu0
  %3790 = vmatprep.mubr.f32.mxu0 0.0
  %3791 = vmatmul.mubr.f32.gmra.mrb[0].mxu0 %v3669
  %v3792 = vpop.f32.mrb[0].mxu0
  %v3793 = vadd.f32 0.0, %v3792
  %v3794 = vpop.f32.mrb[0].mxu0
  %3795 = vmatprep.mubr.f32.mxu0 0.0
  %3796 = vmatmul.mubr.f32.gmra.mrb[0].mxu0 %v3672
  %v3797 = vpop.f32.mrb[0].mxu0
  %v3798 = vadd.f32 0.0, %v3797
  %v3799 = vpop.f32.mrb[0].mxu0
  %3800 = vmatprep.mubr.f32.mxu0 0.0
  %3801 = vmatmul.mubr.f32.gmra.mrb[0].mxu0 %v3675
  %v3802 = vpop.f32.mrb[0].mxu0
  %v3803 = vadd.f32 0.0, %v3802
  %v3804 = vpop.f32.mrb[0].mxu0
  %3805 = vmatprep.mubr.f32.mxu0 0.0
  %3806 = vmatmul.mubr.f32.gmra.mrb[0].mxu0 %v3678
  %v3807 = vpop.f32.mrb[0].mxu0
  %v3808 = vadd.f32 0.0, %v3807
  %v3809 = vpop.f32.mrb[0].mxu0
  %3810 = vmatprep.mubr.f32.mxu0 0.0
  %3811 = vmatmul.mubr.f32.gmra.mrb[0].mxu0 %v3681
  %v3812 = vpop.f32.mrb[0].mxu0
  %v3813 = vadd.f32 0.0, %v3812
  %v3814 = vpop.f32.mrb[0].mxu0
  %3815 = vmatprep.mubr.f32.mxu0 0.0
  %3816 = vmatmul.mubr.f32.gmra.mrb[0].mxu0 %v3684
  %v3817 = vpop.f32.mrb[0].mxu0
  %v3818 = vadd.f32 0.0, %v3817
  %v3819 = vpop.f32.mrb[0].mxu0
  %3820 = vmatprep.mubr.f32.mxu0 0.0
  %3821 = vmatmul.mubr.f32.gmra.mrb[0].mxu0 %v3687
  %v3822 = vpop.f32.mrb[0].mxu0
  %v3823 = vadd.f32 0.0, %v3822
  %v3824 = vpop.f32.mrb[0].mxu0
  %3825 = vmatprep.mubr.f32.mxu0 0.0
  %3826 = vmatmul.mubr.f32.gmra.mrb[0].mxu0 %v3690
  %v3827 = vpop.f32.mrb[0].mxu0
  %v3828 = vadd.f32 0.0, %v3827
  %v3829 = vpop.f32.mrb[0].mxu0
  %3830 = vmatprep.mubr.f32.mxu0 0.0
  %3831 = vmatmul.mubr.f32.gmra.mrb[0].mxu0 %v3693
  %v3832 = vpop.f32.mrb[0].mxu0
  %v3833 = vadd.f32 0.0, %v3832
  %v3834 = vpop.f32.mrb[0].mxu0
  %3835 = vmatprep.mubr.f32.mxu0 0.0
  %3836 = vmatmul.mubr.f32.gmra.mrb[0].mxu0 %v3696
  %v3837 = vpop.f32.mrb[0].mxu0
  %v3838 = vadd.f32 0.0, %v3837
  %v3839 = vpop.f32.mrb[0].mxu0
  %3840 = vmatprep.mubr.f32.mxu0 0.0
  %3841 = vmatmul.mubr.f32.gmra.mrb[0].mxu0 %v3699
  %v3842 = vpop.f32.mrb[0].mxu0
  %v3843 = vadd.f32 0.0, %v3842
  %v3844 = vpop.f32.mrb[0].mxu0
  %3845 = vdwg.mxu0
  %v3846 = vadd.f32 %v3444, %v3768
  %v3847 = vadd.f32 %v3449, %v3773
  %v3848 = vadd.f32 %v3454, %v3778
  %v3849 = vadd.f32 %v3459, %v3783
  %v3850 = vadd.f32 %v3464, %v3788
  %v3851 = vadd.f32 %v3469, %v3793
  %v3852 = vadd.f32 %v3474, %v3798
  %v3853 = vadd.f32 %v3479, %v3803
  %v3854 = vadd.f32 %v3484, %v3808
  %v3855 = vadd.f32 %v3489, %v3813
  %v3856 = vadd.f32 %v3494, %v3818
  %v3857 = vadd.f32 %v3499, %v3823
  %v3858 = vadd.f32 %v3504, %v3828
  %v3859 = vadd.f32 %v3509, %v3833
  %v3860 = vadd.f32 %v3514, %v3838
  %v3861 = vadd.f32 %v3519, %v3843
  %s3862 = scalar_lea.vmem %s6, 384
  %v3863 = vld [vmem:[%s3862] sm:$0xff]
  %v3864 = vld [vmem:[%s3862 + $0x8] sm:$0xff]
  %v3865 = vld [vmem:[%s3862 + $0x10] sm:$0xff]
  %v3866 = vld [vmem:[%s3862 + $0x18] sm:$0xff]
  %v3867 = vld [vmem:[%s3862 + $0x20] sm:$0xff]
  %v3868 = vld [vmem:[%s3862 + $0x28] sm:$0xff]
  %v3869 = vld [vmem:[%s3862 + $0x30] sm:$0xff]
  %v3870 = vld [vmem:[%s3862 + $0x38] sm:$0xff]
  %v3871 = vld [vmem:[%s3862 + $0x40] sm:$0xff]
  %v3872 = vld [vmem:[%s3862 + $0x48] sm:$0xff]
  %v3873 = vld [vmem:[%s3862 + $0x50] sm:$0xff]
  %v3874 = vld [vmem:[%s3862 + $0x58] sm:$0xff]
  %v3875 = vld [vmem:[%s3862 + $0x60] sm:$0xff]
  %v3876 = vld [vmem:[%s3862 + $0x68] sm:$0xff]
  %v3877 = vld [vmem:[%s3862 + $0x70] sm:$0xff]
  %v3878 = vld [vmem:[%s3862 + $0x78] sm:$0xff]
  %s3879 = scalar_lea.vmem %s8, 72
  %v3880 = vld [vmem:[%s3879] sm:$0xff]
  %v3881 = vld [vmem:[%s3879 + $0x8] sm:$0xff]
  %v3882 = vld [vmem:[%s3879 + $0x10] sm:$0xff]
  %3883 = vmatprep.subr.mxu0 0.0
  %3884 = vmatpush1.msra.mxu0 %v3880
  %3885 = vmatprep.subr.mxu0 0.0
  %3886 = vmatpush1.msra.mxu0 %v3881
  %3887 = vmatprep.subr.mxu0 0.0
  %3888 = vmatpush1.msra.mxu0 %v3882
  %3889 = vmatprep.subr.mxu0 0.0
  %3890 = vmatpush1.msra.mxu0 0.0
  %3891 = vmatprep.subr.mxu0 0.0
  %3892 = vmatpush1.msra.mxu0 0.0
  %3893 = vmatprep.subr.mxu0 0.0
  %3894 = vmatpush1.msra.mxu0 0.0
  %3895 = vmatprep.subr.mxu0 0.0
  %3896 = vmatpush1.msra.mxu0 0.0
  %3897 = vmatprep.subr.mxu0 0.0
  %3898 = vmatpush1.msra.mxu0 0.0
  %3899 = vmatprep.subr.mxu0 0.0
  %3900 = vmatpush1.msra.mxu0 0.0
  %3901 = vmatprep.subr.mxu0 0.0
  %3902 = vmatpush1.msra.mxu0 0.0
  %3903 = vmatprep.subr.mxu0 0.0
  %3904 = vmatpush1.msra.mxu0 0.0
  %3905 = vmatprep.subr.mxu0 0.0
  %3906 = vmatpush1.msra.mxu0 0.0
  %3907 = vmatprep.subr.mxu0 0.0
  %3908 = vmatpush1.msra.mxu0 0.0
  %3909 = vmatprep.subr.mxu0 0.0
  %3910 = vmatpush1.msra.mxu0 0.0
  %3911 = vmatprep.subr.mxu0 0.0
  %3912 = vmatpush1.msra.mxu0 0.0
  %3913 = vmatprep.subr.mxu0 0.0
  %3914 = vmatpush1.msra.mxu0 0.0
  %3915 = vmatprep.subr.mxu0 0.0
  %3916 = vmatpush1.msra.mxu0 0.0
  %3917 = vmatprep.subr.mxu0 0.0
  %3918 = vmatpush1.msra.mxu0 0.0
  %3919 = vmatprep.subr.mxu0 0.0
  %3920 = vmatpush1.msra.mxu0 0.0
  %3921 = vmatprep.subr.mxu0 0.0
  %3922 = vmatpush1.msra.mxu0 0.0
  %3923 = vmatprep.subr.mxu0 0.0
  %3924 = vmatpush1.msra.mxu0 0.0
  %3925 = vmatprep.subr.mxu0 0.0
  %3926 = vmatpush1.msra.mxu0 0.0
  %3927 = vmatprep.subr.mxu0 0.0
  %3928 = vmatpush1.msra.mxu0 0.0
  %3929 = vmatprep.subr.mxu0 0.0
  %3930 = vmatpush1.msra.mxu0 0.0
  %3931 = vmatprep.subr.mxu0 0.0
  %3932 = vmatpush1.msra.mxu0 0.0
  %3933 = vmatprep.subr.mxu0 0.0
  %3934 = vmatpush1.msra.mxu0 0.0
  %3935 = vmatprep.subr.mxu0 0.0
  %3936 = vmatpush1.msra.mxu0 0.0
  %3937 = vmatprep.subr.mxu0 0.0
  %3938 = vmatpush1.msra.mxu0 0.0
  %3939 = vmatprep.subr.mxu0 0.0
  %3940 = vmatpush1.msra.mxu0 0.0
  %3941 = vmatprep.subr.mxu0 0.0
  %3942 = vmatpush1.msra.mxu0 0.0
  %3943 = vmatprep.subr.mxu0 0.0
  %3944 = vmatpush1.msra.mxu0 0.0
  %3945 = vmatprep.subr.mxu0 0.0
  %3946 = vmatpush1.msra.mxu0 0.0
  %3947 = vmatprep.mubr.f32.mxu0 0.0
  %3948 = vmatmul.mubr.f32.gmra.mrb[0].mxu0 %v2868
  %v3949 = vpop.f32.mrb[0].mxu0
  %v3950 = vadd.f32 0.0, %v3949
  %v3951 = vpop.f32.mrb[0].mxu0
  %3952 = vmatprep.mubr.f32.mxu0 0.0
  %3953 = vmatmul.mubr.f32.gmra.mrb[0].mxu0 %v2871
  %v3954 = vpop.f32.mrb[0].mxu0
  %v3955 = vadd.f32 0.0, %v3954
  %v3956 = vpop.f32.mrb[0].mxu0
  %3957 = vmatprep.mubr.f32.mxu0 0.0
  %3958 = vmatmul.mubr.f32.gmra.mrb[0].mxu0 %v2874
  %v3959 = vpop.f32.mrb[0].mxu0
  %v3960 = vadd.f32 0.0, %v3959
  %v3961 = vpop.f32.mrb[0].mxu0
  %3962 = vmatprep.mubr.f32.mxu0 0.0
  %3963 = vmatmul.mubr.f32.gmra.mrb[0].mxu0 %v2877
  %v3964 = vpop.f32.mrb[0].mxu0
  %v3965 = vadd.f32 0.0, %v3964
  %v3966 = vpop.f32.mrb[0].mxu0
  %3967 = vmatprep.mubr.f32.mxu0 0.0
  %3968 = vmatmul.mubr.f32.gmra.mrb[0].mxu0 %v2880
  %v3969 = vpop.f32.mrb[0].mxu0
  %v3970 = vadd.f32 0.0, %v3969
  %v3971 = vpop.f32.mrb[0].mxu0
  %3972 = vmatprep.mubr.f32.mxu0 0.0
  %3973 = vmatmul.mubr.f32.gmra.mrb[0].mxu0 %v2883
  %v3974 = vpop.f32.mrb[0].mxu0
  %v3975 = vadd.f32 0.0, %v3974
  %v3976 = vpop.f32.mrb[0].mxu0
  %3977 = vmatprep.mubr.f32.mxu0 0.0
  %3978 = vmatmul.mubr.f32.gmra.mrb[0].mxu0 %v2886
  %v3979 = vpop.f32.mrb[0].mxu0
  %v3980 = vadd.f32 0.0, %v3979
  %v3981 = vpop.f32.mrb[0].mxu0
  %3982 = vmatprep.mubr.f32.mxu0 0.0
  %3983 = vmatmul.mubr.f32.gmra.mrb[0].mxu0 %v2889
  %v3984 = vpop.f32.mrb[0].mxu0
  %v3985 = vadd.f32 0.0, %v3984
  %v3986 = vpop.f32.mrb[0].mxu0
  %3987 = vmatprep.mubr.f32.mxu0 0.0
  %3988 = vmatmul.mubr.f32.gmra.mrb[0].mxu0 %v2892
  %v3989 = vpop.f32.mrb[0].mxu0
  %v3990 = vadd.f32 0.0, %v3989
  %v3991 = vpop.f32.mrb[0].mxu0
  %3992 = vdwg.mxu0
  %v3994 = vsel %vm3135, %v3863, 0
  %v3997 = vsel %vm3135, %v3864, 0
  %v4000 = vsel %vm3135, %v3865, 0
  %v4003 = vsel %vm3135, %v3866, 0
  %v4006 = vsel %vm3135, %v3867, 0
  %v4009 = vsel %vm3135, %v3868, 0
  %v4012 = vsel %vm3135, %v3869, 0
  %v4015 = vsel %vm3135, %v3870, 0
  %v4018 = vsel %vm3135, %v3871, 0
  %v4021 = vsel %vm3135, %v3872, 0
  %v4024 = vsel %vm3135, %v3873, 0
  %v4027 = vsel %vm3135, %v3874, 0
  %v4030 = vsel %vm3135, %v3875, 0
  %v4033 = vsel %vm3135, %v3876, 0
  %v4036 = vsel %vm3135, %v3877, 0
  %v4039 = vsel %vm3135, %v3878, 0
  %4041 = vmatprep.subr.mxu0 0.0
  %4042 = vmatpush1.msra.mxu0 %v3950
  %4043 = vmatprep.subr.mxu0 0.0
  %4044 = vmatpush1.msra.mxu0 %v3955
  %4045 = vmatprep.subr.mxu0 0.0
  %4046 = vmatpush1.msra.mxu0 %v3960
  %4047 = vmatprep.subr.mxu0 0.0
  %4048 = vmatpush1.msra.mxu0 %v3965
  %4049 = vmatprep.subr.mxu0 0.0
  %4050 = vmatpush1.msra.mxu0 %v3970
  %4051 = vmatprep.subr.mxu0 0.0
  %4052 = vmatpush1.msra.mxu0 %v3975
  %4053 = vmatprep.subr.mxu0 0.0
  %4054 = vmatpush1.msra.mxu0 %v3980
  %4055 = vmatprep.subr.mxu0 0.0
  %4056 = vmatpush1.msra.mxu0 %v3985
  %4057 = vmatprep.subr.mxu0 0.0
  %4058 = vmatpush1.msra.mxu0 %v3990
  %4059 = vmatprep.subr.mxu0 0.0
  %4060 = vmatpush1.msra.mxu0 0.0
  %4061 = vmatprep.subr.mxu0 0.0
  %4062 = vmatpush1.msra.mxu0 0.0
  %4063 = vmatprep.subr.mxu0 0.0
  %4064 = vmatpush1.msra.mxu0 0.0
  %4065 = vmatprep.subr.mxu0 0.0
  %4066 = vmatpush1.msra.mxu0 0.0
  %4067 = vmatprep.subr.mxu0 0.0
  %4068 = vmatpush1.msra.mxu0 0.0
  %4069 = vmatprep.subr.mxu0 0.0
  %4070 = vmatpush1.msra.mxu0 0.0
  %4071 = vmatprep.subr.mxu0 0.0
  %4072 = vmatpush1.msra.mxu0 0.0
  %4073 = vmatprep.subr.mxu0 0.0
  %4074 = vmatpush1.msra.mxu0 0.0
  %4075 = vmatprep.subr.mxu0 0.0
  %4076 = vmatpush1.msra.mxu0 0.0
  %4077 = vmatprep.subr.mxu0 0.0
  %4078 = vmatpush1.msra.mxu0 0.0
  %4079 = vmatprep.subr.mxu0 0.0
  %4080 = vmatpush1.msra.mxu0 0.0
  %4081 = vmatprep.subr.mxu0 0.0
  %4082 = vmatpush1.msra.mxu0 0.0
  %4083 = vmatprep.subr.mxu0 0.0
  %4084 = vmatpush1.msra.mxu0 0.0
  %4085 = vmatprep.subr.mxu0 0.0
  %4086 = vmatpush1.msra.mxu0 0.0
  %4087 = vmatprep.subr.mxu0 0.0
  %4088 = vmatpush1.msra.mxu0 0.0
  %4089 = vmatprep.subr.mxu0 0.0
  %4090 = vmatpush1.msra.mxu0 0.0
  %4091 = vmatprep.subr.mxu0 0.0
  %4092 = vmatpush1.msra.mxu0 0.0
  %4093 = vmatprep.subr.mxu0 0.0
  %4094 = vmatpush1.msra.mxu0 0.0
  %4095 = vmatprep.subr.mxu0 0.0
  %4096 = vmatpush1.msra.mxu0 0.0
  %4097 = vmatprep.subr.mxu0 0.0
  %4098 = vmatpush1.msra.mxu0 0.0
  %4099 = vmatprep.subr.mxu0 0.0
  %4100 = vmatpush1.msra.mxu0 0.0
  %4101 = vmatprep.subr.mxu0 0.0
  %4102 = vmatpush1.msra.mxu0 0.0
  %4103 = vmatprep.subr.mxu0 0.0
  %4104 = vmatpush1.msra.mxu0 0.0
  %4105 = vmatprep.mubr.f32.mxu0 0.0
  %4106 = vmatmul.mubr.f32.gmra.mrb[0].mxu0 %v3994
  %v4107 = vpop.f32.mrb[0].mxu0
  %v4108 = vadd.f32 0.0, %v4107
  %v4109 = vpop.f32.mrb[0].mxu0
  %4110 = vmatprep.mubr.f32.mxu0 0.0
  %4111 = vmatmul.mubr.f32.gmra.mrb[0].mxu0 %v3997
  %v4112 = vpop.f32.mrb[0].mxu0
  %v4113 = vadd.f32 0.0, %v4112
  %v4114 = vpop.f32.mrb[0].mxu0
  %4115 = vmatprep.mubr.f32.mxu0 0.0
  %4116 = vmatmul.mubr.f32.gmra.mrb[0].mxu0 %v4000
  %v4117 = vpop.f32.mrb[0].mxu0
  %v4118 = vadd.f32 0.0, %v4117
  %v4119 = vpop.f32.mrb[0].mxu0
  %4120 = vmatprep.mubr.f32.mxu0 0.0
  %4121 = vmatmul.mubr.f32.gmra.mrb[0].mxu0 %v4003
  %v4122 = vpop.f32.mrb[0].mxu0
  %v4123 = vadd.f32 0.0, %v4122
  %v4124 = vpop.f32.mrb[0].mxu0
  %4125 = vmatprep.mubr.f32.mxu0 0.0
  %4126 = vmatmul.mubr.f32.gmra.mrb[0].mxu0 %v4006
  %v4127 = vpop.f32.mrb[0].mxu0
  %v4128 = vadd.f32 0.0, %v4127
  %v4129 = vpop.f32.mrb[0].mxu0
  %4130 = vmatprep.mubr.f32.mxu0 0.0
  %4131 = vmatmul.mubr.f32.gmra.mrb[0].mxu0 %v4009
  %v4132 = vpop.f32.mrb[0].mxu0
  %v4133 = vadd.f32 0.0, %v4132
  %v4134 = vpop.f32.mrb[0].mxu0
  %4135 = vmatprep.mubr.f32.mxu0 0.0
  %4136 = vmatmul.mubr.f32.gmra.mrb[0].mxu0 %v4012
  %v4137 = vpop.f32.mrb[0].mxu0
  %v4138 = vadd.f32 0.0, %v4137
  %v4139 = vpop.f32.mrb[0].mxu0
  %4140 = vmatprep.mubr.f32.mxu0 0.0
  %4141 = vmatmul.mubr.f32.gmra.mrb[0].mxu0 %v4015
  %v4142 = vpop.f32.mrb[0].mxu0
  %v4143 = vadd.f32 0.0, %v4142
  %v4144 = vpop.f32.mrb[0].mxu0
  %4145 = vmatprep.mubr.f32.mxu0 0.0
  %4146 = vmatmul.mubr.f32.gmra.mrb[0].mxu0 %v4018
  %v4147 = vpop.f32.mrb[0].mxu0
  %v4148 = vadd.f32 0.0, %v4147
  %v4149 = vpop.f32.mrb[0].mxu0
  %4150 = vmatprep.mubr.f32.mxu0 0.0
  %4151 = vmatmul.mubr.f32.gmra.mrb[0].mxu0 %v4021
  %v4152 = vpop.f32.mrb[0].mxu0
  %v4153 = vadd.f32 0.0, %v4152
  %v4154 = vpop.f32.mrb[0].mxu0
  %4155 = vmatprep.mubr.f32.mxu0 0.0
  %4156 = vmatmul.mubr.f32.gmra.mrb[0].mxu0 %v4024
  %v4157 = vpop.f32.mrb[0].mxu0
  %v4158 = vadd.f32 0.0, %v4157
  %v4159 = vpop.f32.mrb[0].mxu0
  %4160 = vmatprep.mubr.f32.mxu0 0.0
  %4161 = vmatmul.mubr.f32.gmra.mrb[0].mxu0 %v4027
  %v4162 = vpop.f32.mrb[0].mxu0
  %v4163 = vadd.f32 0.0, %v4162
  %v4164 = vpop.f32.mrb[0].mxu0
  %4165 = vmatprep.mubr.f32.mxu0 0.0
  %4166 = vmatmul.mubr.f32.gmra.mrb[0].mxu0 %v4030
  %v4167 = vpop.f32.mrb[0].mxu0
  %v4168 = vadd.f32 0.0, %v4167
  %v4169 = vpop.f32.mrb[0].mxu0
  %4170 = vmatprep.mubr.f32.mxu0 0.0
  %4171 = vmatmul.mubr.f32.gmra.mrb[0].mxu0 %v4033
  %v4172 = vpop.f32.mrb[0].mxu0
  %v4173 = vadd.f32 0.0, %v4172
  %v4174 = vpop.f32.mrb[0].mxu0
  %4175 = vmatprep.mubr.f32.mxu0 0.0
  %4176 = vmatmul.mubr.f32.gmra.mrb[0].mxu0 %v4036
  %v4177 = vpop.f32.mrb[0].mxu0
  %v4178 = vadd.f32 0.0, %v4177
  %v4179 = vpop.f32.mrb[0].mxu0
  %4180 = vmatprep.mubr.f32.mxu0 0.0
  %4181 = vmatmul.mubr.f32.gmra.mrb[0].mxu0 %v4039
  %v4182 = vpop.f32.mrb[0].mxu0
  %v4183 = vadd.f32 0.0, %v4182
  %v4184 = vpop.f32.mrb[0].mxu0
  %4185 = vdwg.mxu0
  %v4186 = vadd.f32 %v3846, %v4108
  %v4187 = vadd.f32 %v3847, %v4113
  %v4188 = vadd.f32 %v3848, %v4118
  %v4189 = vadd.f32 %v3849, %v4123
  %v4190 = vadd.f32 %v3850, %v4128
  %v4191 = vadd.f32 %v3851, %v4133
  %v4192 = vadd.f32 %v3852, %v4138
  %v4193 = vadd.f32 %v3853, %v4143
  %v4194 = vadd.f32 %v3854, %v4148
  %v4195 = vadd.f32 %v3855, %v4153
  %v4196 = vadd.f32 %v3856, %v4158
  %v4197 = vadd.f32 %v3857, %v4163
  %v4198 = vadd.f32 %v3858, %v4168
  %v4199 = vadd.f32 %v3859, %v4173
  %v4200 = vadd.f32 %v3860, %v4178
  %v4201 = vadd.f32 %v3861, %v4183
  %s4202 = scalar_lea.vmem %s6, 512
  %v4203 = vld [vmem:[%s4202] sm:$0xff]
  %v4204 = vld [vmem:[%s4202 + $0x8] sm:$0xff]
  %v4205 = vld [vmem:[%s4202 + $0x10] sm:$0xff]
  %v4206 = vld [vmem:[%s4202 + $0x18] sm:$0xff]
  %v4207 = vld [vmem:[%s4202 + $0x20] sm:$0xff]
  %v4208 = vld [vmem:[%s4202 + $0x28] sm:$0xff]
  %v4209 = vld [vmem:[%s4202 + $0x30] sm:$0xff]
  %v4210 = vld [vmem:[%s4202 + $0x38] sm:$0xff]
  %v4211 = vld [vmem:[%s4202 + $0x40] sm:$0xff]
  %v4212 = vld [vmem:[%s4202 + $0x48] sm:$0xff]
  %v4213 = vld [vmem:[%s4202 + $0x50] sm:$0xff]
  %v4214 = vld [vmem:[%s4202 + $0x58] sm:$0xff]
  %v4215 = vld [vmem:[%s4202 + $0x60] sm:$0xff]
  %v4216 = vld [vmem:[%s4202 + $0x68] sm:$0xff]
  %v4217 = vld [vmem:[%s4202 + $0x70] sm:$0xff]
  %v4218 = vld [vmem:[%s4202 + $0x78] sm:$0xff]
  %s4219 = scalar_lea.vmem %s8, 96
  %v4220 = vld [vmem:[%s4219] sm:$0xff]
  %v4221 = vld [vmem:[%s4219 + $0x8] sm:$0xff]
  %v4222 = vld [vmem:[%s4219 + $0x10] sm:$0xff]
  %4223 = vmatprep.subr.mxu0 0.0
  %4224 = vmatpush1.msra.mxu0 %v4220
  %4225 = vmatprep.subr.mxu0 0.0
  %4226 = vmatpush1.msra.mxu0 %v4221
  %4227 = vmatprep.subr.mxu0 0.0
  %4228 = vmatpush1.msra.mxu0 %v4222
  %4229 = vmatprep.subr.mxu0 0.0
  %4230 = vmatpush1.msra.mxu0 0.0
  %4231 = vmatprep.subr.mxu0 0.0
  %4232 = vmatpush1.msra.mxu0 0.0
  %4233 = vmatprep.subr.mxu0 0.0
  %4234 = vmatpush1.msra.mxu0 0.0
  %4235 = vmatprep.subr.mxu0 0.0
  %4236 = vmatpush1.msra.mxu0 0.0
  %4237 = vmatprep.subr.mxu0 0.0
  %4238 = vmatpush1.msra.mxu0 0.0
  %4239 = vmatprep.subr.mxu0 0.0
  %4240 = vmatpush1.msra.mxu0 0.0
  %4241 = vmatprep.subr.mxu0 0.0
  %4242 = vmatpush1.msra.mxu0 0.0
  %4243 = vmatprep.subr.mxu0 0.0
  %4244 = vmatpush1.msra.mxu0 0.0
  %4245 = vmatprep.subr.mxu0 0.0
  %4246 = vmatpush1.msra.mxu0 0.0
  %4247 = vmatprep.subr.mxu0 0.0
  %4248 = vmatpush1.msra.mxu0 0.0
  %4249 = vmatprep.subr.mxu0 0.0
  %4250 = vmatpush1.msra.mxu0 0.0
  %4251 = vmatprep.subr.mxu0 0.0
  %4252 = vmatpush1.msra.mxu0 0.0
  %4253 = vmatprep.subr.mxu0 0.0
  %4254 = vmatpush1.msra.mxu0 0.0
  %4255 = vmatprep.subr.mxu0 0.0
  %4256 = vmatpush1.msra.mxu0 0.0
  %4257 = vmatprep.subr.mxu0 0.0
  %4258 = vmatpush1.msra.mxu0 0.0
  %4259 = vmatprep.subr.mxu0 0.0
  %4260 = vmatpush1.msra.mxu0 0.0
  %4261 = vmatprep.subr.mxu0 0.0
  %4262 = vmatpush1.msra.mxu0 0.0
  %4263 = vmatprep.subr.mxu0 0.0
  %4264 = vmatpush1.msra.mxu0 0.0
  %4265 = vmatprep.subr.mxu0 0.0
  %4266 = vmatpush1.msra.mxu0 0.0
  %4267 = vmatprep.subr.mxu0 0.0
  %4268 = vmatpush1.msra.mxu0 0.0
  %4269 = vmatprep.subr.mxu0 0.0
  %4270 = vmatpush1.msra.mxu0 0.0
  %4271 = vmatprep.subr.mxu0 0.0
  %4272 = vmatpush1.msra.mxu0 0.0
  %4273 = vmatprep.subr.mxu0 0.0
  %4274 = vmatpush1.msra.mxu0 0.0
  %4275 = vmatprep.subr.mxu0 0.0
  %4276 = vmatpush1.msra.mxu0 0.0
  %4277 = vmatprep.subr.mxu0 0.0
  %4278 = vmatpush1.msra.mxu0 0.0
  %4279 = vmatprep.subr.mxu0 0.0
  %4280 = vmatpush1.msra.mxu0 0.0
  %4281 = vmatprep.subr.mxu0 0.0
  %4282 = vmatpush1.msra.mxu0 0.0
  %4283 = vmatprep.subr.mxu0 0.0
  %4284 = vmatpush1.msra.mxu0 0.0
  %4285 = vmatprep.subr.mxu0 0.0
  %4286 = vmatpush1.msra.mxu0 0.0
  %4287 = vmatprep.mubr.f32.mxu0 0.0
  %4288 = vmatmul.mubr.f32.gmra.mrb[0].mxu0 %v2868
  %v4289 = vpop.f32.mrb[0].mxu0
  %v4290 = vadd.f32 0.0, %v4289
  %v4291 = vpop.f32.mrb[0].mxu0
  %4292 = vmatprep.mubr.f32.mxu0 0.0
  %4293 = vmatmul.mubr.f32.gmra.mrb[0].mxu0 %v2871
  %v4294 = vpop.f32.mrb[0].mxu0
  %v4295 = vadd.f32 0.0, %v4294
  %v4296 = vpop.f32.mrb[0].mxu0
  %4297 = vmatprep.mubr.f32.mxu0 0.0
  %4298 = vmatmul.mubr.f32.gmra.mrb[0].mxu0 %v2874
  %v4299 = vpop.f32.mrb[0].mxu0
  %v4300 = vadd.f32 0.0, %v4299
  %v4301 = vpop.f32.mrb[0].mxu0
  %4302 = vmatprep.mubr.f32.mxu0 0.0
  %4303 = vmatmul.mubr.f32.gmra.mrb[0].mxu0 %v2877
  %v4304 = vpop.f32.mrb[0].mxu0
  %v4305 = vadd.f32 0.0, %v4304
  %v4306 = vpop.f32.mrb[0].mxu0
  %4307 = vmatprep.mubr.f32.mxu0 0.0
  %4308 = vmatmul.mubr.f32.gmra.mrb[0].mxu0 %v2880
  %v4309 = vpop.f32.mrb[0].mxu0
  %v4310 = vadd.f32 0.0, %v4309
  %v4311 = vpop.f32.mrb[0].mxu0
  %4312 = vmatprep.mubr.f32.mxu0 0.0
  %4313 = vmatmul.mubr.f32.gmra.mrb[0].mxu0 %v2883
  %v4314 = vpop.f32.mrb[0].mxu0
  %v4315 = vadd.f32 0.0, %v4314
  %v4316 = vpop.f32.mrb[0].mxu0
  %4317 = vmatprep.mubr.f32.mxu0 0.0
  %4318 = vmatmul.mubr.f32.gmra.mrb[0].mxu0 %v2886
  %v4319 = vpop.f32.mrb[0].mxu0
  %v4320 = vadd.f32 0.0, %v4319
  %v4321 = vpop.f32.mrb[0].mxu0
  %4322 = vmatprep.mubr.f32.mxu0 0.0
  %4323 = vmatmul.mubr.f32.gmra.mrb[0].mxu0 %v2889
  %v4324 = vpop.f32.mrb[0].mxu0
  %v4325 = vadd.f32 0.0, %v4324
  %v4326 = vpop.f32.mrb[0].mxu0
  %4327 = vmatprep.mubr.f32.mxu0 0.0
  %4328 = vmatmul.mubr.f32.gmra.mrb[0].mxu0 %v2892
  %v4329 = vpop.f32.mrb[0].mxu0
  %v4330 = vadd.f32 0.0, %v4329
  %v4331 = vpop.f32.mrb[0].mxu0
  %4332 = vdwg.mxu0
  %v4334 = vsel %vm3135, %v4203, 0
  %v4337 = vsel %vm3135, %v4204, 0
  %v4340 = vsel %vm3135, %v4205, 0
  %v4343 = vsel %vm3135, %v4206, 0
  %v4346 = vsel %vm3135, %v4207, 0
  %v4349 = vsel %vm3135, %v4208, 0
  %v4352 = vsel %vm3135, %v4209, 0
  %v4355 = vsel %vm3135, %v4210, 0
  %v4358 = vsel %vm3135, %v4211, 0
  %v4361 = vsel %vm3135, %v4212, 0
  %v4364 = vsel %vm3135, %v4213, 0
  %v4367 = vsel %vm3135, %v4214, 0
  %v4370 = vsel %vm3135, %v4215, 0
  %v4373 = vsel %vm3135, %v4216, 0
  %v4376 = vsel %vm3135, %v4217, 0
  %v4379 = vsel %vm3135, %v4218, 0
  %4381 = vmatprep.subr.mxu0 0.0
  %4382 = vmatpush1.msra.mxu0 %v4290
  %4383 = vmatprep.subr.mxu0 0.0
  %4384 = vmatpush1.msra.mxu0 %v4295
  %4385 = vmatprep.subr.mxu0 0.0
  %4386 = vmatpush1.msra.mxu0 %v4300
  %4387 = vmatprep.subr.mxu0 0.0
  %4388 = vmatpush1.msra.mxu0 %v4305
  %4389 = vmatprep.subr.mxu0 0.0
  %4390 = vmatpush1.msra.mxu0 %v4310
  %4391 = vmatprep.subr.mxu0 0.0
  %4392 = vmatpush1.msra.mxu0 %v4315
  %4393 = vmatprep.subr.mxu0 0.0
  %4394 = vmatpush1.msra.mxu0 %v4320
  %4395 = vmatprep.subr.mxu0 0.0
  %4396 = vmatpush1.msra.mxu0 %v4325
  %4397 = vmatprep.subr.mxu0 0.0
  %4398 = vmatpush1.msra.mxu0 %v4330
  %4399 = vmatprep.subr.mxu0 0.0
  %4400 = vmatpush1.msra.mxu0 0.0
  %4401 = vmatprep.subr.mxu0 0.0
  %4402 = vmatpush1.msra.mxu0 0.0
  %4403 = vmatprep.subr.mxu0 0.0
  %4404 = vmatpush1.msra.mxu0 0.0
  %4405 = vmatprep.subr.mxu0 0.0
  %4406 = vmatpush1.msra.mxu0 0.0
  %4407 = vmatprep.subr.mxu0 0.0
  %4408 = vmatpush1.msra.mxu0 0.0
  %4409 = vmatprep.subr.mxu0 0.0
  %4410 = vmatpush1.msra.mxu0 0.0
  %4411 = vmatprep.subr.mxu0 0.0
  %4412 = vmatpush1.msra.mxu0 0.0
  %4413 = vmatprep.subr.mxu0 0.0
  %4414 = vmatpush1.msra.mxu0 0.0
  %4415 = vmatprep.subr.mxu0 0.0
  %4416 = vmatpush1.msra.mxu0 0.0
  %4417 = vmatprep.subr.mxu0 0.0
  %4418 = vmatpush1.msra.mxu0 0.0
  %4419 = vmatprep.subr.mxu0 0.0
  %4420 = vmatpush1.msra.mxu0 0.0
  %4421 = vmatprep.subr.mxu0 0.0
  %4422 = vmatpush1.msra.mxu0 0.0
  %4423 = vmatprep.subr.mxu0 0.0
  %4424 = vmatpush1.msra.mxu0 0.0
  %4425 = vmatprep.subr.mxu0 0.0
  %4426 = vmatpush1.msra.mxu0 0.0
  %4427 = vmatprep.subr.mxu0 0.0
  %4428 = vmatpush1.msra.mxu0 0.0
  %4429 = vmatprep.subr.mxu0 0.0
  %4430 = vmatpush1.msra.mxu0 0.0
  %4431 = vmatprep.subr.mxu0 0.0
  %4432 = vmatpush1.msra.mxu0 0.0
  %4433 = vmatprep.subr.mxu0 0.0
  %4434 = vmatpush1.msra.mxu0 0.0
  %4435 = vmatprep.subr.mxu0 0.0
  %4436 = vmatpush1.msra.mxu0 0.0
  %4437 = vmatprep.subr.mxu0 0.0
  %4438 = vmatpush1.msra.mxu0 0.0
  %4439 = vmatprep.subr.mxu0 0.0
  %4440 = vmatpush1.msra.mxu0 0.0
  %4441 = vmatprep.subr.mxu0 0.0
  %4442 = vmatpush1.msra.mxu0 0.0
  %4443 = vmatprep.subr.mxu0 0.0
  %4444 = vmatpush1.msra.mxu0 0.0
  %4445 = vmatprep.mubr.f32.mxu0 0.0
  %4446 = vmatmul.mubr.f32.gmra.mrb[0].mxu0 %v4334
  %v4447 = vpop.f32.mrb[0].mxu0
  %v4448 = vadd.f32 0.0, %v4447
  %v4449 = vpop.f32.mrb[0].mxu0
  %4450 = vmatprep.mubr.f32.mxu0 0.0
  %4451 = vmatmul.mubr.f32.gmra.mrb[0].mxu0 %v4337
  %v4452 = vpop.f32.mrb[0].mxu0
  %v4453 = vadd.f32 0.0, %v4452
  %v4454 = vpop.f32.mrb[0].mxu0
  %4455 = vmatprep.mubr.f32.mxu0 0.0
  %4456 = vmatmul.mubr.f32.gmra.mrb[0].mxu0 %v4340
  %v4457 = vpop.f32.mrb[0].mxu0
  %v4458 = vadd.f32 0.0, %v4457
  %v4459 = vpop.f32.mrb[0].mxu0
  %4460 = vmatprep.mubr.f32.mxu0 0.0
  %4461 = vmatmul.mubr.f32.gmra.mrb[0].mxu0 %v4343
  %v4462 = vpop.f32.mrb[0].mxu0
  %v4463 = vadd.f32 0.0, %v4462
  %v4464 = vpop.f32.mrb[0].mxu0
  %4465 = vmatprep.mubr.f32.mxu0 0.0
  %4466 = vmatmul.mubr.f32.gmra.mrb[0].mxu0 %v4346
  %v4467 = vpop.f32.mrb[0].mxu0
  %v4468 = vadd.f32 0.0, %v4467
  %v4469 = vpop.f32.mrb[0].mxu0
  %4470 = vmatprep.mubr.f32.mxu0 0.0
  %4471 = vmatmul.mubr.f32.gmra.mrb[0].mxu0 %v4349
  %v4472 = vpop.f32.mrb[0].mxu0
  %v4473 = vadd.f32 0.0, %v4472
  %v4474 = vpop.f32.mrb[0].mxu0
  %4475 = vmatprep.mubr.f32.mxu0 0.0
  %4476 = vmatmul.mubr.f32.gmra.mrb[0].mxu0 %v4352
  %v4477 = vpop.f32.mrb[0].mxu0
  %v4478 = vadd.f32 0.0, %v4477
  %v4479 = vpop.f32.mrb[0].mxu0
  %4480 = vmatprep.mubr.f32.mxu0 0.0
  %4481 = vmatmul.mubr.f32.gmra.mrb[0].mxu0 %v4355
  %v4482 = vpop.f32.mrb[0].mxu0
  %v4483 = vadd.f32 0.0, %v4482
  %v4484 = vpop.f32.mrb[0].mxu0
  %4485 = vmatprep.mubr.f32.mxu0 0.0
  %4486 = vmatmul.mubr.f32.gmra.mrb[0].mxu0 %v4358
  %v4487 = vpop.f32.mrb[0].mxu0
  %v4488 = vadd.f32 0.0, %v4487
  %v4489 = vpop.f32.mrb[0].mxu0
  %4490 = vmatprep.mubr.f32.mxu0 0.0
  %4491 = vmatmul.mubr.f32.gmra.mrb[0].mxu0 %v4361
  %v4492 = vpop.f32.mrb[0].mxu0
  %v4493 = vadd.f32 0.0, %v4492
  %v4494 = vpop.f32.mrb[0].mxu0
  %4495 = vmatprep.mubr.f32.mxu0 0.0
  %4496 = vmatmul.mubr.f32.gmra.mrb[0].mxu0 %v4364
  %v4497 = vpop.f32.mrb[0].mxu0
  %v4498 = vadd.f32 0.0, %v4497
  %v4499 = vpop.f32.mrb[0].mxu0
  %4500 = vmatprep.mubr.f32.mxu0 0.0
  %4501 = vmatmul.mubr.f32.gmra.mrb[0].mxu0 %v4367
  %v4502 = vpop.f32.mrb[0].mxu0
  %v4503 = vadd.f32 0.0, %v4502
  %v4504 = vpop.f32.mrb[0].mxu0
  %4505 = vmatprep.mubr.f32.mxu0 0.0
  %4506 = vmatmul.mubr.f32.gmra.mrb[0].mxu0 %v4370
  %v4507 = vpop.f32.mrb[0].mxu0
  %v4508 = vadd.f32 0.0, %v4507
  %v4509 = vpop.f32.mrb[0].mxu0
  %4510 = vmatprep.mubr.f32.mxu0 0.0
  %4511 = vmatmul.mubr.f32.gmra.mrb[0].mxu0 %v4373
  %v4512 = vpop.f32.mrb[0].mxu0
  %v4513 = vadd.f32 0.0, %v4512
  %v4514 = vpop.f32.mrb[0].mxu0
  %4515 = vmatprep.mubr.f32.mxu0 0.0
  %4516 = vmatmul.mubr.f32.gmra.mrb[0].mxu0 %v4376
  %v4517 = vpop.f32.mrb[0].mxu0
  %v4518 = vadd.f32 0.0, %v4517
  %v4519 = vpop.f32.mrb[0].mxu0
  %4520 = vmatprep.mubr.f32.mxu0 0.0
  %4521 = vmatmul.mubr.f32.gmra.mrb[0].mxu0 %v4379
  %v4522 = vpop.f32.mrb[0].mxu0
  %v4523 = vadd.f32 0.0, %v4522
  %v4524 = vpop.f32.mrb[0].mxu0
  %4525 = vdwg.mxu0
  %v4526 = vadd.f32 %v4186, %v4448
  %v4527 = vadd.f32 %v4187, %v4453
  %v4528 = vadd.f32 %v4188, %v4458
  %v4529 = vadd.f32 %v4189, %v4463
  %v4530 = vadd.f32 %v4190, %v4468
  %v4531 = vadd.f32 %v4191, %v4473
  %v4532 = vadd.f32 %v4192, %v4478
  %v4533 = vadd.f32 %v4193, %v4483
  %v4534 = vadd.f32 %v4194, %v4488
  %v4535 = vadd.f32 %v4195, %v4493
  %v4536 = vadd.f32 %v4196, %v4498
  %v4537 = vadd.f32 %v4197, %v4503
  %v4538 = vadd.f32 %v4198, %v4508
  %v4539 = vadd.f32 %v4199, %v4513
  %v4540 = vadd.f32 %v4200, %v4518
  %v4541 = vadd.f32 %v4201, %v4523
  %4543 = vset.pattern.permute.xlu0 0
  %4544 = vperm.xlu0 %4543, %v2831
  %v4545 = vpop.permute.xlu0 %4544
  %4548 = vset.pattern.permute.xlu0 0
  %4549 = vperm.xlu0 %4548, %v2832
  %v4550 = vpop.permute.xlu0 %4549
  %4553 = vset.pattern.permute.xlu0 0
  %4554 = vperm.xlu0 %4553, %v2833
  %v4555 = vpop.permute.xlu0 %4554
  %4558 = vset.pattern.permute.xlu0 0
  %4559 = vperm.xlu0 %4558, %v2834
  %v4560 = vpop.permute.xlu0 %4559
  %4563 = vset.pattern.permute.xlu0 0
  %4564 = vperm.xlu0 %4563, %v2835
  %v4565 = vpop.permute.xlu0 %4564
  %4568 = vset.pattern.permute.xlu0 0
  %4569 = vperm.xlu0 %4568, %v2836
  %v4570 = vpop.permute.xlu0 %4569
  %4573 = vset.pattern.permute.xlu0 0
  %4574 = vperm.xlu0 %4573, %v2837
  %v4575 = vpop.permute.xlu0 %4574
  %4578 = vset.pattern.permute.xlu0 0
  %4579 = vperm.xlu0 %4578, %v2838
  %v4580 = vpop.permute.xlu0 %4579
  %4583 = vset.pattern.permute.xlu0 0
  %4584 = vperm.xlu0 %4583, %v2839
  %v4585 = vpop.permute.xlu0 %4584
  %4588 = vset.pattern.permute.xlu0 0
  %4589 = vperm.xlu0 %4588, %v2840
  %v4590 = vpop.permute.xlu0 %4589
  %4593 = vset.pattern.permute.xlu0 0
  %4594 = vperm.xlu0 %4593, %v2841
  %v4595 = vpop.permute.xlu0 %4594
  %4598 = vset.pattern.permute.xlu0 0
  %4599 = vperm.xlu0 %4598, %v2842
  %v4600 = vpop.permute.xlu0 %4599
  %4603 = vset.pattern.permute.xlu0 0
  %4604 = vperm.xlu0 %4603, %v2843
  %v4605 = vpop.permute.xlu0 %4604
  %4608 = vset.pattern.permute.xlu0 0
  %4609 = vperm.xlu0 %4608, %v2844
  %v4610 = vpop.permute.xlu0 %4609
  %4613 = vset.pattern.permute.xlu0 0
  %4614 = vperm.xlu0 %4613, %v2845
  %v4615 = vpop.permute.xlu0 %4614
  %4618 = vset.pattern.permute.xlu0 0
  %4619 = vperm.xlu0 %4618, %v2846
  %v4620 = vpop.permute.xlu0 %4619
  %v4622 = vadd.f32 %v4526, %v4545
  %v4623 = vadd.f32 %v4527, %v4550
  %v4624 = vadd.f32 %v4528, %v4555
  %v4625 = vadd.f32 %v4529, %v4560
  %v4626 = vadd.f32 %v4530, %v4565
  %v4627 = vadd.f32 %v4531, %v4570
  %v4628 = vadd.f32 %v4532, %v4575
  %v4629 = vadd.f32 %v4533, %v4580
  %v4630 = vadd.f32 %v4534, %v4585
  %v4631 = vadd.f32 %v4535, %v4590
  %v4632 = vadd.f32 %v4536, %v4595
  %v4633 = vadd.f32 %v4537, %v4600
  %v4634 = vadd.f32 %v4538, %v4605
  %v4635 = vadd.f32 %v4539, %v4610
  %v4636 = vadd.f32 %v4540, %v4615
  %v4637 = vadd.f32 %v4541, %v4620
  %v4638 = vmax.f32 %v4622, 0.0
  %v4639 = vmax.f32 %v4623, 0.0
  %v4640 = vmax.f32 %v4624, 0.0
  %v4641 = vmax.f32 %v4625, 0.0
  %v4642 = vmax.f32 %v4626, 0.0
  %v4643 = vmax.f32 %v4627, 0.0
  %v4644 = vmax.f32 %v4628, 0.0
  %v4645 = vmax.f32 %v4629, 0.0
  %v4646 = vmax.f32 %v4630, 0.0
  %v4647 = vmax.f32 %v4631, 0.0
  %v4648 = vmax.f32 %v4632, 0.0
  %v4649 = vmax.f32 %v4633, 0.0
  %v4650 = vmax.f32 %v4634, 0.0
  %v4651 = vmax.f32 %v4635, 0.0
  %v4652 = vmax.f32 %v4636, 0.0
  %v4653 = vmax.f32 %v4637, 0.0
  %v4654 = vld [vmem:[%s10] sm:$0xff]
  %v4655 = vld [vmem:[%s10 + $0x8] sm:$0xff]
  %v4657 = vsel %vm2128, %v4638, 0
  %v4660 = vsel %vm2128, %v4639, 0
  %v4663 = vsel %vm2128, %v4640, 0
  %v4666 = vsel %vm2128, %v4641, 0
  %v4669 = vsel %vm2128, %v4642, 0
  %v4672 = vsel %vm2128, %v4643, 0
  %v4675 = vsel %vm2128, %v4644, 0
  %v4678 = vsel %vm2128, %v4645, 0
  %v4681 = vsel %vm2128, %v4646, 0
  %v4684 = vsel %vm2128, %v4647, 0
  %v4687 = vsel %vm2128, %v4648, 0
  %v4690 = vsel %vm2128, %v4649, 0
  %v4693 = vsel %vm2128, %v4650, 0
  %v4696 = vsel %vm2128, %v4651, 0
  %v4699 = vsel %vm2128, %v4652, 0
  %v4702 = vsel %vm2128, %v4653, 0
  %4704 = vmatprep.subr.mxu0 0.0
  %4705 = vmatpush1.msra.mxu0 %v4654
  %4706 = vmatprep.subr.mxu0 0.0
  %4707 = vmatpush1.msra.mxu0 %v4655
  %4708 = vmatprep.subr.mxu0 0.0
  %4709 = vmatpush1.msra.mxu0 0.0
  %4710 = vmatprep.subr.mxu0 0.0
  %4711 = vmatpush1.msra.mxu0 0.0
  %4712 = vmatprep.subr.mxu0 0.0
  %4713 = vmatpush1.msra.mxu0 0.0
  %4714 = vmatprep.subr.mxu0 0.0
  %4715 = vmatpush1.msra.mxu0 0.0
  %4716 = vmatprep.subr.mxu0 0.0
  %4717 = vmatpush1.msra.mxu0 0.0
  %4718 = vmatprep.subr.mxu0 0.0
  %4719 = vmatpush1.msra.mxu0 0.0
  %4720 = vmatprep.subr.mxu0 0.0
  %4721 = vmatpush1.msra.mxu0 0.0
  %4722 = vmatprep.subr.mxu0 0.0
  %4723 = vmatpush1.msra.mxu0 0.0
  %4724 = vmatprep.subr.mxu0 0.0
  %4725 = vmatpush1.msra.mxu0 0.0
  %4726 = vmatprep.subr.mxu0 0.0
  %4727 = vmatpush1.msra.mxu0 0.0
  %4728 = vmatprep.subr.mxu0 0.0
  %4729 = vmatpush1.msra.mxu0 0.0
  %4730 = vmatprep.subr.mxu0 0.0
  %4731 = vmatpush1.msra.mxu0 0.0
  %4732 = vmatprep.subr.mxu0 0.0
  %4733 = vmatpush1.msra.mxu0 0.0
  %4734 = vmatprep.subr.mxu0 0.0
  %4735 = vmatpush1.msra.mxu0 0.0
  %4736 = vmatprep.subr.mxu0 0.0
  %4737 = vmatpush1.msra.mxu0 0.0
  %4738 = vmatprep.subr.mxu0 0.0
  %4739 = vmatpush1.msra.mxu0 0.0
  %4740 = vmatprep.subr.mxu0 0.0
  %4741 = vmatpush1.msra.mxu0 0.0
  %4742 = vmatprep.subr.mxu0 0.0
  %4743 = vmatpush1.msra.mxu0 0.0
  %4744 = vmatprep.subr.mxu0 0.0
  %4745 = vmatpush1.msra.mxu0 0.0
  %4746 = vmatprep.subr.mxu0 0.0
  %4747 = vmatpush1.msra.mxu0 0.0
  %4748 = vmatprep.subr.mxu0 0.0
  %4749 = vmatpush1.msra.mxu0 0.0
  %4750 = vmatprep.subr.mxu0 0.0
  %4751 = vmatpush1.msra.mxu0 0.0
  %4752 = vmatprep.subr.mxu0 0.0
  %4753 = vmatpush1.msra.mxu0 0.0
  %4754 = vmatprep.subr.mxu0 0.0
  %4755 = vmatpush1.msra.mxu0 0.0
  %4756 = vmatprep.subr.mxu0 0.0
  %4757 = vmatpush1.msra.mxu0 0.0
  %4758 = vmatprep.subr.mxu0 0.0
  %4759 = vmatpush1.msra.mxu0 0.0
  %4760 = vmatprep.subr.mxu0 0.0
  %4761 = vmatpush1.msra.mxu0 0.0
  %4762 = vmatprep.subr.mxu0 0.0
  %4763 = vmatpush1.msra.mxu0 0.0
  %4764 = vmatprep.subr.mxu0 0.0
  %4765 = vmatpush1.msra.mxu0 0.0
  %4766 = vmatprep.subr.mxu0 0.0
  %4767 = vmatpush1.msra.mxu0 0.0
  %4768 = vmatprep.mubr.f32.mxu0 0.0
  %4769 = vmatmul.mubr.f32.gmra.mrb[0].mxu0 %v4657
  %v4770 = vpop.f32.mrb[0].mxu0
  %v4771 = vadd.f32 0.0, %v4770
  %v4772 = vpop.f32.mrb[0].mxu0
  %4773 = vmatprep.mubr.f32.mxu0 0.0
  %4774 = vmatmul.mubr.f32.gmra.mrb[0].mxu0 %v4660
  %v4775 = vpop.f32.mrb[0].mxu0
  %v4776 = vadd.f32 0.0, %v4775
  %v4777 = vpop.f32.mrb[0].mxu0
  %4778 = vmatprep.mubr.f32.mxu0 0.0
  %4779 = vmatmul.mubr.f32.gmra.mrb[0].mxu0 %v4663
  %v4780 = vpop.f32.mrb[0].mxu0
  %v4781 = vadd.f32 0.0, %v4780
  %v4782 = vpop.f32.mrb[0].mxu0
  %4783 = vmatprep.mubr.f32.mxu0 0.0
  %4784 = vmatmul.mubr.f32.gmra.mrb[0].mxu0 %v4666
  %v4785 = vpop.f32.mrb[0].mxu0
  %v4786 = vadd.f32 0.0, %v4785
  %v4787 = vpop.f32.mrb[0].mxu0
  %4788 = vmatprep.mubr.f32.mxu0 0.0
  %4789 = vmatmul.mubr.f32.gmra.mrb[0].mxu0 %v4669
  %v4790 = vpop.f32.mrb[0].mxu0
  %v4791 = vadd.f32 0.0, %v4790
  %v4792 = vpop.f32.mrb[0].mxu0
  %4793 = vmatprep.mubr.f32.mxu0 0.0
  %4794 = vmatmul.mubr.f32.gmra.mrb[0].mxu0 %v4672
  %v4795 = vpop.f32.mrb[0].mxu0
  %v4796 = vadd.f32 0.0, %v4795
  %v4797 = vpop.f32.mrb[0].mxu0
  %4798 = vmatprep.mubr.f32.mxu0 0.0
  %4799 = vmatmul.mubr.f32.gmra.mrb[0].mxu0 %v4675
  %v4800 = vpop.f32.mrb[0].mxu0
  %v4801 = vadd.f32 0.0, %v4800
  %v4802 = vpop.f32.mrb[0].mxu0
  %4803 = vmatprep.mubr.f32.mxu0 0.0
  %4804 = vmatmul.mubr.f32.gmra.mrb[0].mxu0 %v4678
  %v4805 = vpop.f32.mrb[0].mxu0
  %v4806 = vadd.f32 0.0, %v4805
  %v4807 = vpop.f32.mrb[0].mxu0
  %4808 = vmatprep.mubr.f32.mxu0 0.0
  %4809 = vmatmul.mubr.f32.gmra.mrb[0].mxu0 %v4681
  %v4810 = vpop.f32.mrb[0].mxu0
  %v4811 = vadd.f32 0.0, %v4810
  %v4812 = vpop.f32.mrb[0].mxu0
  %4813 = vmatprep.mubr.f32.mxu0 0.0
  %4814 = vmatmul.mubr.f32.gmra.mrb[0].mxu0 %v4684
  %v4815 = vpop.f32.mrb[0].mxu0
  %v4816 = vadd.f32 0.0, %v4815
  %v4817 = vpop.f32.mrb[0].mxu0
  %4818 = vmatprep.mubr.f32.mxu0 0.0
  %4819 = vmatmul.mubr.f32.gmra.mrb[0].mxu0 %v4687
  %v4820 = vpop.f32.mrb[0].mxu0
  %v4821 = vadd.f32 0.0, %v4820
  %v4822 = vpop.f32.mrb[0].mxu0
  %4823 = vmatprep.mubr.f32.mxu0 0.0
  %4824 = vmatmul.mubr.f32.gmra.mrb[0].mxu0 %v4690
  %v4825 = vpop.f32.mrb[0].mxu0
  %v4826 = vadd.f32 0.0, %v4825
  %v4827 = vpop.f32.mrb[0].mxu0
  %4828 = vmatprep.mubr.f32.mxu0 0.0
  %4829 = vmatmul.mubr.f32.gmra.mrb[0].mxu0 %v4693
  %v4830 = vpop.f32.mrb[0].mxu0
  %v4831 = vadd.f32 0.0, %v4830
  %v4832 = vpop.f32.mrb[0].mxu0
  %4833 = vmatprep.mubr.f32.mxu0 0.0
  %4834 = vmatmul.mubr.f32.gmra.mrb[0].mxu0 %v4696
  %v4835 = vpop.f32.mrb[0].mxu0
  %v4836 = vadd.f32 0.0, %v4835
  %v4837 = vpop.f32.mrb[0].mxu0
  %4838 = vmatprep.mubr.f32.mxu0 0.0
  %4839 = vmatmul.mubr.f32.gmra.mrb[0].mxu0 %v4699
  %v4840 = vpop.f32.mrb[0].mxu0
  %v4841 = vadd.f32 0.0, %v4840
  %v4842 = vpop.f32.mrb[0].mxu0
  %4843 = vmatprep.mubr.f32.mxu0 0.0
  %4844 = vmatmul.mubr.f32.gmra.mrb[0].mxu0 %v4702
  %v4845 = vpop.f32.mrb[0].mxu0
  %v4846 = vadd.f32 0.0, %v4845
  %v4847 = vpop.f32.mrb[0].mxu0
  %4848 = vdwg.mxu0
  %v4849 = vld [vmem:[%s9] sm:$0xff]
  %v4850 = vld [vmem:[%s9 + $0x8] sm:$0xff]
  %v4851 = vld [vmem:[%s9 + $0x10] sm:$0xff]
  %v4852 = vld [vmem:[%s9 + $0x18] sm:$0xff]
  %v4853 = vld [vmem:[%s9 + $0x20] sm:$0xff]
  %v4854 = vld [vmem:[%s9 + $0x28] sm:$0xff]
  %v4855 = vld [vmem:[%s9 + $0x30] sm:$0xff]
  %v4856 = vld [vmem:[%s9 + $0x38] sm:$0xff]
  %4857 = vmatprep.subr.mxu0 0.0
  %4858 = vmatpush1.msra.mxu0 %v4771
  %4859 = vmatprep.subr.mxu0 0.0
  %4860 = vmatpush1.msra.mxu0 %v4776
  %4861 = vmatprep.subr.mxu0 0.0
  %4862 = vmatpush1.msra.mxu0 %v4781
  %4863 = vmatprep.subr.mxu0 0.0
  %4864 = vmatpush1.msra.mxu0 %v4786
  %4865 = vmatprep.subr.mxu0 0.0
  %4866 = vmatpush1.msra.mxu0 %v4791
  %4867 = vmatprep.subr.mxu0 0.0
  %4868 = vmatpush1.msra.mxu0 %v4796
  %4869 = vmatprep.subr.mxu0 0.0
  %4870 = vmatpush1.msra.mxu0 %v4801
  %4871 = vmatprep.subr.mxu0 0.0
  %4872 = vmatpush1.msra.mxu0 %v4806
  %4873 = vmatprep.subr.mxu0 0.0
  %4874 = vmatpush1.msra.mxu0 %v4811
  %4875 = vmatprep.subr.mxu0 0.0
  %4876 = vmatpush1.msra.mxu0 %v4816
  %4877 = vmatprep.subr.mxu0 0.0
  %4878 = vmatpush1.msra.mxu0 %v4821
  %4879 = vmatprep.subr.mxu0 0.0
  %4880 = vmatpush1.msra.mxu0 %v4826
  %4881 = vmatprep.subr.mxu0 0.0
  %4882 = vmatpush1.msra.mxu0 %v4831
  %4883 = vmatprep.subr.mxu0 0.0
  %4884 = vmatpush1.msra.mxu0 %v4836
  %4885 = vmatprep.subr.mxu0 0.0
  %4886 = vmatpush1.msra.mxu0 %v4841
  %4887 = vmatprep.subr.mxu0 0.0
  %4888 = vmatpush1.msra.mxu0 %v4846
  %4889 = vmatprep.subr.mxu0 0.0
  %4890 = vmatpush1.msra.mxu0 0.0
  %4891 = vmatprep.subr.mxu0 0.0
  %4892 = vmatpush1.msra.mxu0 0.0
  %4893 = vmatprep.subr.mxu0 0.0
  %4894 = vmatpush1.msra.mxu0 0.0
  %4895 = vmatprep.subr.mxu0 0.0
  %4896 = vmatpush1.msra.mxu0 0.0
  %4897 = vmatprep.subr.mxu0 0.0
  %4898 = vmatpush1.msra.mxu0 0.0
  %4899 = vmatprep.subr.mxu0 0.0
  %4900 = vmatpush1.msra.mxu0 0.0
  %4901 = vmatprep.subr.mxu0 0.0
  %4902 = vmatpush1.msra.mxu0 0.0
  %4903 = vmatprep.subr.mxu0 0.0
  %4904 = vmatpush1.msra.mxu0 0.0
  %4905 = vmatprep.subr.mxu0 0.0
  %4906 = vmatpush1.msra.mxu0 0.0
  %4907 = vmatprep.subr.mxu0 0.0
  %4908 = vmatpush1.msra.mxu0 0.0
  %4909 = vmatprep.subr.mxu0 0.0
  %4910 = vmatpush1.msra.mxu0 0.0
  %4911 = vmatprep.subr.mxu0 0.0
  %4912 = vmatpush1.msra.mxu0 0.0
  %4913 = vmatprep.subr.mxu0 0.0
  %4914 = vmatpush1.msra.mxu0 0.0
  %4915 = vmatprep.subr.mxu0 0.0
  %4916 = vmatpush1.msra.mxu0 0.0
  %4917 = vmatprep.subr.mxu0 0.0
  %4918 = vmatpush1.msra.mxu0 0.0
  %4919 = vmatprep.subr.mxu0 0.0
  %4920 = vmatpush1.msra.mxu0 0.0
  %4921 = vmatprep.mubr.f32.mxu0 0.0
  %4922 = vmatmul.mubr.f32.gmra.mrb[0].mxu0 %v4849
  %v4923 = vpop.f32.mrb[0].mxu0
  %v4924 = vadd.f32 0.0, %v4923
  %v4925 = vpop.f32.mrb[0].mxu0
  %4926 = vmatprep.mubr.f32.mxu0 0.0
  %4927 = vmatmul.mubr.f32.gmra.mrb[0].mxu0 %v4850
  %v4928 = vpop.f32.mrb[0].mxu0
  %v4929 = vadd.f32 0.0, %v4928
  %v4930 = vpop.f32.mrb[0].mxu0
  %4931 = vmatprep.mubr.f32.mxu0 0.0
  %4932 = vmatmul.mubr.f32.gmra.mrb[0].mxu0 %v4851
  %v4933 = vpop.f32.mrb[0].mxu0
  %v4934 = vadd.f32 0.0, %v4933
  %v4935 = vpop.f32.mrb[0].mxu0
  %4936 = vmatprep.mubr.f32.mxu0 0.0
  %4937 = vmatmul.mubr.f32.gmra.mrb[0].mxu0 %v4852
  %v4938 = vpop.f32.mrb[0].mxu0
  %v4939 = vadd.f32 0.0, %v4938
  %v4940 = vpop.f32.mrb[0].mxu0
  %4941 = vmatprep.mubr.f32.mxu0 0.0
  %4942 = vmatmul.mubr.f32.gmra.mrb[0].mxu0 %v4853
  %v4943 = vpop.f32.mrb[0].mxu0
  %v4944 = vadd.f32 0.0, %v4943
  %v4945 = vpop.f32.mrb[0].mxu0
  %4946 = vmatprep.mubr.f32.mxu0 0.0
  %4947 = vmatmul.mubr.f32.gmra.mrb[0].mxu0 %v4854
  %v4948 = vpop.f32.mrb[0].mxu0
  %v4949 = vadd.f32 0.0, %v4948
  %v4950 = vpop.f32.mrb[0].mxu0
  %4951 = vmatprep.mubr.f32.mxu0 0.0
  %4952 = vmatmul.mubr.f32.gmra.mrb[0].mxu0 %v4855
  %v4953 = vpop.f32.mrb[0].mxu0
  %v4954 = vadd.f32 0.0, %v4953
  %v4955 = vpop.f32.mrb[0].mxu0
  %4956 = vmatprep.mubr.f32.mxu0 0.0
  %4957 = vmatmul.mubr.f32.gmra.mrb[0].mxu0 %v4856
  %v4958 = vpop.f32.mrb[0].mxu0
  %v4959 = vadd.f32 0.0, %v4958
  %v4960 = vpop.f32.mrb[0].mxu0
  %4961 = vdwg.mxu0
  %s4962 = scalar_lea.vmem %s9, 64
  %v4963 = vld [vmem:[%s4962] sm:$0xff]
  %v4964 = vld [vmem:[%s4962 + $0x8] sm:$0xff]
  %v4965 = vld [vmem:[%s4962 + $0x10] sm:$0xff]
  %v4966 = vld [vmem:[%s4962 + $0x18] sm:$0xff]
  %v4967 = vld [vmem:[%s4962 + $0x20] sm:$0xff]
  %v4968 = vld [vmem:[%s4962 + $0x28] sm:$0xff]
  %v4969 = vld [vmem:[%s4962 + $0x30] sm:$0xff]
  %v4970 = vld [vmem:[%s4962 + $0x38] sm:$0xff]
  %4971 = vmatprep.subr.mxu0 0.0
  %4972 = vmatpush1.msra.mxu0 %v4771
  %4973 = vmatprep.subr.mxu0 0.0
  %4974 = vmatpush1.msra.mxu0 %v4776
  %4975 = vmatprep.subr.mxu0 0.0
  %4976 = vmatpush1.msra.mxu0 %v4781
  %4977 = vmatprep.subr.mxu0 0.0
  %4978 = vmatpush1.msra.mxu0 %v4786
  %4979 = vmatprep.subr.mxu0 0.0
  %4980 = vmatpush1.msra.mxu0 %v4791
  %4981 = vmatprep.subr.mxu0 0.0
  %4982 = vmatpush1.msra.mxu0 %v4796
  %4983 = vmatprep.subr.mxu0 0.0
  %4984 = vmatpush1.msra.mxu0 %v4801
  %4985 = vmatprep.subr.mxu0 0.0
  %4986 = vmatpush1.msra.mxu0 %v4806
  %4987 = vmatprep.subr.mxu0 0.0
  %4988 = vmatpush1.msra.mxu0 %v4811
  %4989 = vmatprep.subr.mxu0 0.0
  %4990 = vmatpush1.msra.mxu0 %v4816
  %4991 = vmatprep.subr.mxu0 0.0
  %4992 = vmatpush1.msra.mxu0 %v4821
  %4993 = vmatprep.subr.mxu0 0.0
  %4994 = vmatpush1.msra.mxu0 %v4826
  %4995 = vmatprep.subr.mxu0 0.0
  %4996 = vmatpush1.msra.mxu0 %v4831
  %4997 = vmatprep.subr.mxu0 0.0
  %4998 = vmatpush1.msra.mxu0 %v4836
  %4999 = vmatprep.subr.mxu0 0.0
  %5000 = vmatpush1.msra.mxu0 %v4841
  %5001 = vmatprep.subr.mxu0 0.0
  %5002 = vmatpush1.msra.mxu0 %v4846
  %5003 = vmatprep.subr.mxu0 0.0
  %5004 = vmatpush1.msra.mxu0 0.0
  %5005 = vmatprep.subr.mxu0 0.0
  %5006 = vmatpush1.msra.mxu0 0.0
  %5007 = vmatprep.subr.mxu0 0.0
  %5008 = vmatpush1.msra.mxu0 0.0
  %5009 = vmatprep.subr.mxu0 0.0
  %5010 = vmatpush1.msra.mxu0 0.0
  %5011 = vmatprep.subr.mxu0 0.0
  %5012 = vmatpush1.msra.mxu0 0.0
  %5013 = vmatprep.subr.mxu0 0.0
  %5014 = vmatpush1.msra.mxu0 0.0
  %5015 = vmatprep.subr.mxu0 0.0
  %5016 = vmatpush1.msra.mxu0 0.0
  %5017 = vmatprep.subr.mxu0 0.0
  %5018 = vmatpush1.msra.mxu0 0.0
  %5019 = vmatprep.subr.mxu0 0.0
  %5020 = vmatpush1.msra.mxu0 0.0
  %5021 = vmatprep.subr.mxu0 0.0
  %5022 = vmatpush1.msra.mxu0 0.0
  %5023 = vmatprep.subr.mxu0 0.0
  %5024 = vmatpush1.msra.mxu0 0.0
  %5025 = vmatprep.subr.mxu0 0.0
  %5026 = vmatpush1.msra.mxu0 0.0
  %5027 = vmatprep.subr.mxu0 0.0
  %5028 = vmatpush1.msra.mxu0 0.0
  %5029 = vmatprep.subr.mxu0 0.0
  %5030 = vmatpush1.msra.mxu0 0.0
  %5031 = vmatprep.subr.mxu0 0.0
  %5032 = vmatpush1.msra.mxu0 0.0
  %5033 = vmatprep.subr.mxu0 0.0
  %5034 = vmatpush1.msra.mxu0 0.0
  %5035 = vmatprep.mubr.f32.mxu0 0.0
  %5036 = vmatmul.mubr.f32.gmra.mrb[0].mxu0 %v4963
  %v5037 = vpop.f32.mrb[0].mxu0
  %v5038 = vadd.f32 0.0, %v5037
  %v5039 = vpop.f32.mrb[0].mxu0
  %5040 = vmatprep.mubr.f32.mxu0 0.0
  %5041 = vmatmul.mubr.f32.gmra.mrb[0].mxu0 %v4964
  %v5042 = vpop.f32.mrb[0].mxu0
  %v5043 = vadd.f32 0.0, %v5042
  %v5044 = vpop.f32.mrb[0].mxu0
  %5045 = vmatprep.mubr.f32.mxu0 0.0
  %5046 = vmatmul.mubr.f32.gmra.mrb[0].mxu0 %v4965
  %v5047 = vpop.f32.mrb[0].mxu0
  %v5048 = vadd.f32 0.0, %v5047
  %v5049 = vpop.f32.mrb[0].mxu0
  %5050 = vmatprep.mubr.f32.mxu0 0.0
  %5051 = vmatmul.mubr.f32.gmra.mrb[0].mxu0 %v4966
  %v5052 = vpop.f32.mrb[0].mxu0
  %v5053 = vadd.f32 0.0, %v5052
  %v5054 = vpop.f32.mrb[0].mxu0
  %5055 = vmatprep.mubr.f32.mxu0 0.0
  %5056 = vmatmul.mubr.f32.gmra.mrb[0].mxu0 %v4967
  %v5057 = vpop.f32.mrb[0].mxu0
  %v5058 = vadd.f32 0.0, %v5057
  %v5059 = vpop.f32.mrb[0].mxu0
  %5060 = vmatprep.mubr.f32.mxu0 0.0
  %5061 = vmatmul.mubr.f32.gmra.mrb[0].mxu0 %v4968
  %v5062 = vpop.f32.mrb[0].mxu0
  %v5063 = vadd.f32 0.0, %v5062
  %v5064 = vpop.f32.mrb[0].mxu0
  %5065 = vmatprep.mubr.f32.mxu0 0.0
  %5066 = vmatmul.mubr.f32.gmra.mrb[0].mxu0 %v4969
  %v5067 = vpop.f32.mrb[0].mxu0
  %v5068 = vadd.f32 0.0, %v5067
  %v5069 = vpop.f32.mrb[0].mxu0
  %5070 = vmatprep.mubr.f32.mxu0 0.0
  %5071 = vmatmul.mubr.f32.gmra.mrb[0].mxu0 %v4970
  %v5072 = vpop.f32.mrb[0].mxu0
  %v5073 = vadd.f32 0.0, %v5072
  %v5074 = vpop.f32.mrb[0].mxu0
  %5075 = vdwg.mxu0
  %v5076 = vmax.f32 %v4924, %v5038
  %v5077 = vmax.f32 %v4929, %v5043
  %v5078 = vmax.f32 %v4934, %v5048
  %v5079 = vmax.f32 %v4939, %v5053
  %v5080 = vmax.f32 %v4944, %v5058
  %v5081 = vmax.f32 %v4949, %v5063
  %v5082 = vmax.f32 %v4954, %v5068
  %v5083 = vmax.f32 %v4959, %v5073
  %s5084 = scalar_lea.vmem %s10, 16
  %v5085 = vld [vmem:[%s5084] sm:$0xff]
  %v5086 = vld [vmem:[%s5084 + $0x8] sm:$0xff]
  %5087 = vmatprep.subr.mxu0 0.0
  %5088 = vmatpush1.msra.mxu0 %v5085
  %5089 = vmatprep.subr.mxu0 0.0
  %5090 = vmatpush1.msra.mxu0 %v5086
  %5091 = vmatprep.subr.mxu0 0.0
  %5092 = vmatpush1.msra.mxu0 0.0
  %5093 = vmatprep.subr.mxu0 0.0
  %5094 = vmatpush1.msra.mxu0 0.0
  %5095 = vmatprep.subr.mxu0 0.0
  %5096 = vmatpush1.msra.mxu0 0.0
  %5097 = vmatprep.subr.mxu0 0.0
  %5098 = vmatpush1.msra.mxu0 0.0
  %5099 = vmatprep.subr.mxu0 0.0
  %5100 = vmatpush1.msra.mxu0 0.0
  %5101 = vmatprep.subr.mxu0 0.0
  %5102 = vmatpush1.msra.mxu0 0.0
  %5103 = vmatprep.subr.mxu0 0.0
  %5104 = vmatpush1.msra.mxu0 0.0
  %5105 = vmatprep.subr.mxu0 0.0
  %5106 = vmatpush1.msra.mxu0 0.0
  %5107 = vmatprep.subr.mxu0 0.0
  %5108 = vmatpush1.msra.mxu0 0.0
  %5109 = vmatprep.subr.mxu0 0.0
  %5110 = vmatpush1.msra.mxu0 0.0
  %5111 = vmatprep.subr.mxu0 0.0
  %5112 = vmatpush1.msra.mxu0 0.0
  %5113 = vmatprep.subr.mxu0 0.0
  %5114 = vmatpush1.msra.mxu0 0.0
  %5115 = vmatprep.subr.mxu0 0.0
  %5116 = vmatpush1.msra.mxu0 0.0
  %5117 = vmatprep.subr.mxu0 0.0
  %5118 = vmatpush1.msra.mxu0 0.0
  %5119 = vmatprep.subr.mxu0 0.0
  %5120 = vmatpush1.msra.mxu0 0.0
  %5121 = vmatprep.subr.mxu0 0.0
  %5122 = vmatpush1.msra.mxu0 0.0
  %5123 = vmatprep.subr.mxu0 0.0
  %5124 = vmatpush1.msra.mxu0 0.0
  %5125 = vmatprep.subr.mxu0 0.0
  %5126 = vmatpush1.msra.mxu0 0.0
  %5127 = vmatprep.subr.mxu0 0.0
  %5128 = vmatpush1.msra.mxu0 0.0
  %5129 = vmatprep.subr.mxu0 0.0
  %5130 = vmatpush1.msra.mxu0 0.0
  %5131 = vmatprep.subr.mxu0 0.0
  %5132 = vmatpush1.msra.mxu0 0.0
  %5133 = vmatprep.subr.mxu0 0.0
  %5134 = vmatpush1.msra.mxu0 0.0
  %5135 = vmatprep.subr.mxu0 0.0
  %5136 = vmatpush1.msra.mxu0 0.0
  %5137 = vmatprep.subr.mxu0 0.0
  %5138 = vmatpush1.msra.mxu0 0.0
  %5139 = vmatprep.subr.mxu0 0.0
  %5140 = vmatpush1.msra.mxu0 0.0
  %5141 = vmatprep.subr.mxu0 0.0
  %5142 = vmatpush1.msra.mxu0 0.0
  %5143 = vmatprep.subr.mxu0 0.0
  %5144 = vmatpush1.msra.mxu0 0.0
  %5145 = vmatprep.subr.mxu0 0.0
  %5146 = vmatpush1.msra.mxu0 0.0
  %5147 = vmatprep.subr.mxu0 0.0
  %5148 = vmatpush1.msra.mxu0 0.0
  %5149 = vmatprep.subr.mxu0 0.0
  %5150 = vmatpush1.msra.mxu0 0.0
  %5151 = vmatprep.mubr.f32.mxu0 0.0
  %5152 = vmatmul.mubr.f32.gmra.mrb[0].mxu0 %v4657
  %v5153 = vpop.f32.mrb[0].mxu0
  %v5154 = vadd.f32 0.0, %v5153
  %v5155 = vpop.f32.mrb[0].mxu0
  %5156 = vmatprep.mubr.f32.mxu0 0.0
  %5157 = vmatmul.mubr.f32.gmra.mrb[0].mxu0 %v4660
  %v5158 = vpop.f32.mrb[0].mxu0
  %v5159 = vadd.f32 0.0, %v5158
  %v5160 = vpop.f32.mrb[0].mxu0
  %5161 = vmatprep.mubr.f32.mxu0 0.0
  %5162 = vmatmul.mubr.f32.gmra.mrb[0].mxu0 %v4663
  %v5163 = vpop.f32.mrb[0].mxu0
  %v5164 = vadd.f32 0.0, %v5163
  %v5165 = vpop.f32.mrb[0].mxu0
  %5166 = vmatprep.mubr.f32.mxu0 0.0
  %5167 = vmatmul.mubr.f32.gmra.mrb[0].mxu0 %v4666
  %v5168 = vpop.f32.mrb[0].mxu0
  %v5169 = vadd.f32 0.0, %v5168
  %v5170 = vpop.f32.mrb[0].mxu0
  %5171 = vmatprep.mubr.f32.mxu0 0.0
  %5172 = vmatmul.mubr.f32.gmra.mrb[0].mxu0 %v4669
  %v5173 = vpop.f32.mrb[0].mxu0
  %v5174 = vadd.f32 0.0, %v5173
  %v5175 = vpop.f32.mrb[0].mxu0
  %5176 = vmatprep.mubr.f32.mxu0 0.0
  %5177 = vmatmul.mubr.f32.gmra.mrb[0].mxu0 %v4672
  %v5178 = vpop.f32.mrb[0].mxu0
  %v5179 = vadd.f32 0.0, %v5178
  %v5180 = vpop.f32.mrb[0].mxu0
  %5181 = vmatprep.mubr.f32.mxu0 0.0
  %5182 = vmatmul.mubr.f32.gmra.mrb[0].mxu0 %v4675
  %v5183 = vpop.f32.mrb[0].mxu0
  %v5184 = vadd.f32 0.0, %v5183
  %v5185 = vpop.f32.mrb[0].mxu0
  %5186 = vmatprep.mubr.f32.mxu0 0.0
  %5187 = vmatmul.mubr.f32.gmra.mrb[0].mxu0 %v4678
  %v5188 = vpop.f32.mrb[0].mxu0
  %v5189 = vadd.f32 0.0, %v5188
  %v5190 = vpop.f32.mrb[0].mxu0
  %5191 = vmatprep.mubr.f32.mxu0 0.0
  %5192 = vmatmul.mubr.f32.gmra.mrb[0].mxu0 %v4681
  %v5193 = vpop.f32.mrb[0].mxu0
  %v5194 = vadd.f32 0.0, %v5193
  %v5195 = vpop.f32.mrb[0].mxu0
  %5196 = vmatprep.mubr.f32.mxu0 0.0
  %5197 = vmatmul.mubr.f32.gmra.mrb[0].mxu0 %v4684
  %v5198 = vpop.f32.mrb[0].mxu0
  %v5199 = vadd.f32 0.0, %v5198
  %v5200 = vpop.f32.mrb[0].mxu0
  %5201 = vmatprep.mubr.f32.mxu0 0.0
  %5202 = vmatmul.mubr.f32.gmra.mrb[0].mxu0 %v4687
  %v5203 = vpop.f32.mrb[0].mxu0
  %v5204 = vadd.f32 0.0, %v5203
  %v5205 = vpop.f32.mrb[0].mxu0
  %5206 = vmatprep.mubr.f32.mxu0 0.0
  %5207 = vmatmul.mubr.f32.gmra.mrb[0].mxu0 %v4690
  %v5208 = vpop.f32.mrb[0].mxu0
  %v5209 = vadd.f32 0.0, %v5208
  %v5210 = vpop.f32.mrb[0].mxu0
  %5211 = vmatprep.mubr.f32.mxu0 0.0
  %5212 = vmatmul.mubr.f32.gmra.mrb[0].mxu0 %v4693
  %v5213 = vpop.f32.mrb[0].mxu0
  %v5214 = vadd.f32 0.0, %v5213
  %v5215 = vpop.f32.mrb[0].mxu0
  %5216 = vmatprep.mubr.f32.mxu0 0.0
  %5217 = vmatmul.mubr.f32.gmra.mrb[0].mxu0 %v4696
  %v5218 = vpop.f32.mrb[0].mxu0
  %v5219 = vadd.f32 0.0, %v5218
  %v5220 = vpop.f32.mrb[0].mxu0
  %5221 = vmatprep.mubr.f32.mxu0 0.0
  %5222 = vmatmul.mubr.f32.gmra.mrb[0].mxu0 %v4699
  %v5223 = vpop.f32.mrb[0].mxu0
  %v5224 = vadd.f32 0.0, %v5223
  %v5225 = vpop.f32.mrb[0].mxu0
  %5226 = vmatprep.mubr.f32.mxu0 0.0
  %5227 = vmatmul.mubr.f32.gmra.mrb[0].mxu0 %v4702
  %v5228 = vpop.f32.mrb[0].mxu0
  %v5229 = vadd.f32 0.0, %v5228
  %v5230 = vpop.f32.mrb[0].mxu0
  %5231 = vdwg.mxu0
  %5232 = vmatprep.subr.mxu0 0.0
  %5233 = vmatpush1.msra.mxu0 %v5154
  %5234 = vmatprep.subr.mxu0 0.0
  %5235 = vmatpush1.msra.mxu0 %v5159
  %5236 = vmatprep.subr.mxu0 0.0
  %5237 = vmatpush1.msra.mxu0 %v5164
  %5238 = vmatprep.subr.mxu0 0.0
  %5239 = vmatpush1.msra.mxu0 %v5169
  %5240 = vmatprep.subr.mxu0 0.0
  %5241 = vmatpush1.msra.mxu0 %v5174
  %5242 = vmatprep.subr.mxu0 0.0
  %5243 = vmatpush1.msra.mxu0 %v5179
  %5244 = vmatprep.subr.mxu0 0.0
  %5245 = vmatpush1.msra.mxu0 %v5184
  %5246 = vmatprep.subr.mxu0 0.0
  %5247 = vmatpush1.msra.mxu0 %v5189
  %5248 = vmatprep.subr.mxu0 0.0
  %5249 = vmatpush1.msra.mxu0 %v5194
  %5250 = vmatprep.subr.mxu0 0.0
  %5251 = vmatpush1.msra.mxu0 %v5199
  %5252 = vmatprep.subr.mxu0 0.0
  %5253 = vmatpush1.msra.mxu0 %v5204
  %5254 = vmatprep.subr.mxu0 0.0
  %5255 = vmatpush1.msra.mxu0 %v5209
  %5256 = vmatprep.subr.mxu0 0.0
  %5257 = vmatpush1.msra.mxu0 %v5214
  %5258 = vmatprep.subr.mxu0 0.0
  %5259 = vmatpush1.msra.mxu0 %v5219
  %5260 = vmatprep.subr.mxu0 0.0
  %5261 = vmatpush1.msra.mxu0 %v5224
  %5262 = vmatprep.subr.mxu0 0.0
  %5263 = vmatpush1.msra.mxu0 %v5229
  %5264 = vmatprep.subr.mxu0 0.0
  %5265 = vmatpush1.msra.mxu0 0.0
  %5266 = vmatprep.subr.mxu0 0.0
  %5267 = vmatpush1.msra.mxu0 0.0
  %5268 = vmatprep.subr.mxu0 0.0
  %5269 = vmatpush1.msra.mxu0 0.0
  %5270 = vmatprep.subr.mxu0 0.0
  %5271 = vmatpush1.msra.mxu0 0.0
  %5272 = vmatprep.subr.mxu0 0.0
  %5273 = vmatpush1.msra.mxu0 0.0
  %5274 = vmatprep.subr.mxu0 0.0
  %5275 = vmatpush1.msra.mxu0 0.0
  %5276 = vmatprep.subr.mxu0 0.0
  %5277 = vmatpush1.msra.mxu0 0.0
  %5278 = vmatprep.subr.mxu0 0.0
  %5279 = vmatpush1.msra.mxu0 0.0
  %5280 = vmatprep.subr.mxu0 0.0
  %5281 = vmatpush1.msra.mxu0 0.0
  %5282 = vmatprep.subr.mxu0 0.0
  %5283 = vmatpush1.msra.mxu0 0.0
  %5284 = vmatprep.subr.mxu0 0.0
  %5285 = vmatpush1.msra.mxu0 0.0
  %5286 = vmatprep.subr.mxu0 0.0
  %5287 = vmatpush1.msra.mxu0 0.0
  %5288 = vmatprep.subr.mxu0 0.0
  %5289 = vmatpush1.msra.mxu0 0.0
  %5290 = vmatprep.subr.mxu0 0.0
  %5291 = vmatpush1.msra.mxu0 0.0
  %5292 = vmatprep.subr.mxu0 0.0
  %5293 = vmatpush1.msra.mxu0 0.0
  %5294 = vmatprep.subr.mxu0 0.0
  %5295 = vmatpush1.msra.mxu0 0.0
  %5296 = vmatprep.mubr.f32.mxu0 0.0
  %5297 = vmatmul.mubr.f32.gmra.mrb[0].mxu0 %v4849
  %v5298 = vpop.f32.mrb[0].mxu0
  %v5299 = vadd.f32 0.0, %v5298
  %v5300 = vpop.f32.mrb[0].mxu0
  %5301 = vmatprep.mubr.f32.mxu0 0.0
  %5302 = vmatmul.mubr.f32.gmra.mrb[0].mxu0 %v4850
  %v5303 = vpop.f32.mrb[0].mxu0
  %v5304 = vadd.f32 0.0, %v5303
  %v5305 = vpop.f32.mrb[0].mxu0
  %5306 = vmatprep.mubr.f32.mxu0 0.0
  %5307 = vmatmul.mubr.f32.gmra.mrb[0].mxu0 %v4851
  %v5308 = vpop.f32.mrb[0].mxu0
  %v5309 = vadd.f32 0.0, %v5308
  %v5310 = vpop.f32.mrb[0].mxu0
  %5311 = vmatprep.mubr.f32.mxu0 0.0
  %5312 = vmatmul.mubr.f32.gmra.mrb[0].mxu0 %v4852
  %v5313 = vpop.f32.mrb[0].mxu0
  %v5314 = vadd.f32 0.0, %v5313
  %v5315 = vpop.f32.mrb[0].mxu0
  %5316 = vmatprep.mubr.f32.mxu0 0.0
  %5317 = vmatmul.mubr.f32.gmra.mrb[0].mxu0 %v4853
  %v5318 = vpop.f32.mrb[0].mxu0
  %v5319 = vadd.f32 0.0, %v5318
  %v5320 = vpop.f32.mrb[0].mxu0
  %5321 = vmatprep.mubr.f32.mxu0 0.0
  %5322 = vmatmul.mubr.f32.gmra.mrb[0].mxu0 %v4854
  %v5323 = vpop.f32.mrb[0].mxu0
  %v5324 = vadd.f32 0.0, %v5323
  %v5325 = vpop.f32.mrb[0].mxu0
  %5326 = vmatprep.mubr.f32.mxu0 0.0
  %5327 = vmatmul.mubr.f32.gmra.mrb[0].mxu0 %v4855
  %v5328 = vpop.f32.mrb[0].mxu0
  %v5329 = vadd.f32 0.0, %v5328
  %v5330 = vpop.f32.mrb[0].mxu0
  %5331 = vmatprep.mubr.f32.mxu0 0.0
  %5332 = vmatmul.mubr.f32.gmra.mrb[0].mxu0 %v4856
  %v5333 = vpop.f32.mrb[0].mxu0
  %v5334 = vadd.f32 0.0, %v5333
  %v5335 = vpop.f32.mrb[0].mxu0
  %5336 = vdwg.mxu0
  %v5337 = vmax.f32 %v5076, %v5299
  %v5338 = vmax.f32 %v5077, %v5304
  %v5339 = vmax.f32 %v5078, %v5309
  %v5340 = vmax.f32 %v5079, %v5314
  %v5341 = vmax.f32 %v5080, %v5319
  %v5342 = vmax.f32 %v5081, %v5324
  %v5343 = vmax.f32 %v5082, %v5329
  %v5344 = vmax.f32 %v5083, %v5334
  %5345 = vmatprep.subr.mxu0 0.0
  %5346 = vmatpush1.msra.mxu0 %v5154
  %5347 = vmatprep.subr.mxu0 0.0
  %5348 = vmatpush1.msra.mxu0 %v5159
  %5349 = vmatprep.subr.mxu0 0.0
  %5350 = vmatpush1.msra.mxu0 %v5164
  %5351 = vmatprep.subr.mxu0 0.0
  %5352 = vmatpush1.msra.mxu0 %v5169
  %5353 = vmatprep.subr.mxu0 0.0
  %5354 = vmatpush1.msra.mxu0 %v5174
  %5355 = vmatprep.subr.mxu0 0.0
  %5356 = vmatpush1.msra.mxu0 %v5179
  %5357 = vmatprep.subr.mxu0 0.0
  %5358 = vmatpush1.msra.mxu0 %v5184
  %5359 = vmatprep.subr.mxu0 0.0
  %5360 = vmatpush1.msra.mxu0 %v5189
  %5361 = vmatprep.subr.mxu0 0.0
  %5362 = vmatpush1.msra.mxu0 %v5194
  %5363 = vmatprep.subr.mxu0 0.0
  %5364 = vmatpush1.msra.mxu0 %v5199
  %5365 = vmatprep.subr.mxu0 0.0
  %5366 = vmatpush1.msra.mxu0 %v5204
  %5367 = vmatprep.subr.mxu0 0.0
  %5368 = vmatpush1.msra.mxu0 %v5209
  %5369 = vmatprep.subr.mxu0 0.0
  %5370 = vmatpush1.msra.mxu0 %v5214
  %5371 = vmatprep.subr.mxu0 0.0
  %5372 = vmatpush1.msra.mxu0 %v5219
  %5373 = vmatprep.subr.mxu0 0.0
  %5374 = vmatpush1.msra.mxu0 %v5224
  %5375 = vmatprep.subr.mxu0 0.0
  %5376 = vmatpush1.msra.mxu0 %v5229
  %5377 = vmatprep.subr.mxu0 0.0
  %5378 = vmatpush1.msra.mxu0 0.0
  %5379 = vmatprep.subr.mxu0 0.0
  %5380 = vmatpush1.msra.mxu0 0.0
  %5381 = vmatprep.subr.mxu0 0.0
  %5382 = vmatpush1.msra.mxu0 0.0
  %5383 = vmatprep.subr.mxu0 0.0
  %5384 = vmatpush1.msra.mxu0 0.0
  %5385 = vmatprep.subr.mxu0 0.0
  %5386 = vmatpush1.msra.mxu0 0.0
  %5387 = vmatprep.subr.mxu0 0.0
  %5388 = vmatpush1.msra.mxu0 0.0
  %5389 = vmatprep.subr.mxu0 0.0
  %5390 = vmatpush1.msra.mxu0 0.0
  %5391 = vmatprep.subr.mxu0 0.0
  %5392 = vmatpush1.msra.mxu0 0.0
  %5393 = vmatprep.subr.mxu0 0.0
  %5394 = vmatpush1.msra.mxu0 0.0
  %5395 = vmatprep.subr.mxu0 0.0
  %5396 = vmatpush1.msra.mxu0 0.0
  %5397 = vmatprep.subr.mxu0 0.0
  %5398 = vmatpush1.msra.mxu0 0.0
  %5399 = vmatprep.subr.mxu0 0.0
  %5400 = vmatpush1.msra.mxu0 0.0
  %5401 = vmatprep.subr.mxu0 0.0
  %5402 = vmatpush1.msra.mxu0 0.0
  %5403 = vmatprep.subr.mxu0 0.0
  %5404 = vmatpush1.msra.mxu0 0.0
  %5405 = vmatprep.subr.mxu0 0.0
  %5406 = vmatpush1.msra.mxu0 0.0
  %5407 = vmatprep.subr.mxu0 0.0
  %5408 = vmatpush1.msra.mxu0 0.0
  %5409 = vmatprep.mubr.f32.mxu0 0.0
  %5410 = vmatmul.mubr.f32.gmra.mrb[0].mxu0 %v4963
  %v5411 = vpop.f32.mrb[0].mxu0
  %v5412 = vadd.f32 0.0, %v5411
  %v5413 = vpop.f32.mrb[0].mxu0
  %5414 = vmatprep.mubr.f32.mxu0 0.0
  %5415 = vmatmul.mubr.f32.gmra.mrb[0].mxu0 %v4964
  %v5416 = vpop.f32.mrb[0].mxu0
  %v5417 = vadd.f32 0.0, %v5416
  %v5418 = vpop.f32.mrb[0].mxu0
  %5419 = vmatprep.mubr.f32.mxu0 0.0
  %5420 = vmatmul.mubr.f32.gmra.mrb[0].mxu0 %v4965
  %v5421 = vpop.f32.mrb[0].mxu0
  %v5422 = vadd.f32 0.0, %v5421
  %v5423 = vpop.f32.mrb[0].mxu0
  %5424 = vmatprep.mubr.f32.mxu0 0.0
  %5425 = vmatmul.mubr.f32.gmra.mrb[0].mxu0 %v4966
  %v5426 = vpop.f32.mrb[0].mxu0
  %v5427 = vadd.f32 0.0, %v5426
  %v5428 = vpop.f32.mrb[0].mxu0
  %5429 = vmatprep.mubr.f32.mxu0 0.0
  %5430 = vmatmul.mubr.f32.gmra.mrb[0].mxu0 %v4967
  %v5431 = vpop.f32.mrb[0].mxu0
  %v5432 = vadd.f32 0.0, %v5431
  %v5433 = vpop.f32.mrb[0].mxu0
  %5434 = vmatprep.mubr.f32.mxu0 0.0
  %5435 = vmatmul.mubr.f32.gmra.mrb[0].mxu0 %v4968
  %v5436 = vpop.f32.mrb[0].mxu0
  %v5437 = vadd.f32 0.0, %v5436
  %v5438 = vpop.f32.mrb[0].mxu0
  %5439 = vmatprep.mubr.f32.mxu0 0.0
  %5440 = vmatmul.mubr.f32.gmra.mrb[0].mxu0 %v4969
  %v5441 = vpop.f32.mrb[0].mxu0
  %v5442 = vadd.f32 0.0, %v5441
  %v5443 = vpop.f32.mrb[0].mxu0
  %5444 = vmatprep.mubr.f32.mxu0 0.0
  %5445 = vmatmul.mubr.f32.gmra.mrb[0].mxu0 %v4970
  %v5446 = vpop.f32.mrb[0].mxu0
  %v5447 = vadd.f32 0.0, %v5446
  %v5448 = vpop.f32.mrb[0].mxu0
  %5449 = vdwg.mxu0
  %v5450 = vmax.f32 %v5337, %v5412
  %v5451 = vmax.f32 %v5338, %v5417
  %v5452 = vmax.f32 %v5339, %v5422
  %v5453 = vmax.f32 %v5340, %v5427
  %v5454 = vmax.f32 %v5341, %v5432
  %v5455 = vmax.f32 %v5342, %v5437
  %v5456 = vmax.f32 %v5343, %v5442
  %v5457 = vmax.f32 %v5344, %v5447
  %v5458 = vld [vmem:[%s11] sm:$0xff]
  %vm5459 = vcmask 64512
  %v5461 = vsel %vm5459, %v5450, 0
  %v5464 = vsel %vm5459, %v5451, 0
  %v5467 = vsel %vm5459, %v5452, 0
  %v5470 = vsel %vm5459, %v5453, 0
  %v5473 = vsel %vm5459, %v5454, 0
  %v5476 = vsel %vm5459, %v5455, 0
  %v5479 = vsel %vm5459, %v5456, 0
  %v5482 = vsel %vm5459, %v5457, 0
  %5484 = vmatprep.subr.mxu0 0.0
  %5485 = vmatpush1.msra.mxu0 %v5458
  %5486 = vmatprep.subr.mxu0 0.0
  %5487 = vmatpush1.msra.mxu0 0.0
  %5488 = vmatprep.subr.mxu0 0.0
  %5489 = vmatpush1.msra.mxu0 0.0
  %5490 = vmatprep.subr.mxu0 0.0
  %5491 = vmatpush1.msra.mxu0 0.0
  %5492 = vmatprep.subr.mxu0 0.0
  %5493 = vmatpush1.msra.mxu0 0.0
  %5494 = vmatprep.subr.mxu0 0.0
  %5495 = vmatpush1.msra.mxu0 0.0
  %5496 = vmatprep.subr.mxu0 0.0
  %5497 = vmatpush1.msra.mxu0 0.0
  %5498 = vmatprep.subr.mxu0 0.0
  %5499 = vmatpush1.msra.mxu0 0.0
  %5500 = vmatprep.subr.mxu0 0.0
  %5501 = vmatpush1.msra.mxu0 0.0
  %5502 = vmatprep.subr.mxu0 0.0
  %5503 = vmatpush1.msra.mxu0 0.0
  %5504 = vmatprep.subr.mxu0 0.0
  %5505 = vmatpush1.msra.mxu0 0.0
  %5506 = vmatprep.subr.mxu0 0.0
  %5507 = vmatpush1.msra.mxu0 0.0
  %5508 = vmatprep.subr.mxu0 0.0
  %5509 = vmatpush1.msra.mxu0 0.0
  %5510 = vmatprep.subr.mxu0 0.0
  %5511 = vmatpush1.msra.mxu0 0.0
  %5512 = vmatprep.subr.mxu0 0.0
  %5513 = vmatpush1.msra.mxu0 0.0
  %5514 = vmatprep.subr.mxu0 0.0
  %5515 = vmatpush1.msra.mxu0 0.0
  %5516 = vmatprep.subr.mxu0 0.0
  %5517 = vmatpush1.msra.mxu0 0.0
  %5518 = vmatprep.subr.mxu0 0.0
  %5519 = vmatpush1.msra.mxu0 0.0
  %5520 = vmatprep.subr.mxu0 0.0
  %5521 = vmatpush1.msra.mxu0 0.0
  %5522 = vmatprep.subr.mxu0 0.0
  %5523 = vmatpush1.msra.mxu0 0.0
  %5524 = vmatprep.subr.mxu0 0.0
  %5525 = vmatpush1.msra.mxu0 0.0
  %5526 = vmatprep.subr.mxu0 0.0
  %5527 = vmatpush1.msra.mxu0 0.0
  %5528 = vmatprep.subr.mxu0 0.0
  %5529 = vmatpush1.msra.mxu0 0.0
  %5530 = vmatprep.subr.mxu0 0.0
  %5531 = vmatpush1.msra.mxu0 0.0
  %5532 = vmatprep.subr.mxu0 0.0
  %5533 = vmatpush1.msra.mxu0 0.0
  %5534 = vmatprep.subr.mxu0 0.0
  %5535 = vmatpush1.msra.mxu0 0.0
  %5536 = vmatprep.subr.mxu0 0.0
  %5537 = vmatpush1.msra.mxu0 0.0
  %5538 = vmatprep.subr.mxu0 0.0
  %5539 = vmatpush1.msra.mxu0 0.0
  %5540 = vmatprep.subr.mxu0 0.0
  %5541 = vmatpush1.msra.mxu0 0.0
  %5542 = vmatprep.subr.mxu0 0.0
  %5543 = vmatpush1.msra.mxu0 0.0
  %5544 = vmatprep.subr.mxu0 0.0
  %5545 = vmatpush1.msra.mxu0 0.0
  %5546 = vmatprep.subr.mxu0 0.0
  %5547 = vmatpush1.msra.mxu0 0.0
  %5548 = vmatprep.mubr.f32.mxu0 0.0
  %5549 = vmatmul.mubr.f32.gmra.mrb[0].mxu0 %v5461
  %v5550 = vpop.f32.mrb[0].mxu0
  %v5551 = vadd.f32 0.0, %v5550
  %v5552 = vpop.f32.mrb[0].mxu0
  %5553 = vmatprep.mubr.f32.mxu0 0.0
  %5554 = vmatmul.mubr.f32.gmra.mrb[0].mxu0 %v5464
  %v5555 = vpop.f32.mrb[0].mxu0
  %v5556 = vadd.f32 0.0, %v5555
  %v5557 = vpop.f32.mrb[0].mxu0
  %5558 = vmatprep.mubr.f32.mxu0 0.0
  %5559 = vmatmul.mubr.f32.gmra.mrb[0].mxu0 %v5467
  %v5560 = vpop.f32.mrb[0].mxu0
  %v5561 = vadd.f32 0.0, %v5560
  %v5562 = vpop.f32.mrb[0].mxu0
  %5563 = vmatprep.mubr.f32.mxu0 0.0
  %5564 = vmatmul.mubr.f32.gmra.mrb[0].mxu0 %v5470
  %v5565 = vpop.f32.mrb[0].mxu0
  %v5566 = vadd.f32 0.0, %v5565
  %v5567 = vpop.f32.mrb[0].mxu0
  %5568 = vmatprep.mubr.f32.mxu0 0.0
  %5569 = vmatmul.mubr.f32.gmra.mrb[0].mxu0 %v5473
  %v5570 = vpop.f32.mrb[0].mxu0
  %v5571 = vadd.f32 0.0, %v5570
  %v5572 = vpop.f32.mrb[0].mxu0
  %5573 = vmatprep.mubr.f32.mxu0 0.0
  %5574 = vmatmul.mubr.f32.gmra.mrb[0].mxu0 %v5476
  %v5575 = vpop.f32.mrb[0].mxu0
  %v5576 = vadd.f32 0.0, %v5575
  %v5577 = vpop.f32.mrb[0].mxu0
  %5578 = vmatprep.mubr.f32.mxu0 0.0
  %5579 = vmatmul.mubr.f32.gmra.mrb[0].mxu0 %v5479
  %v5580 = vpop.f32.mrb[0].mxu0
  %v5581 = vadd.f32 0.0, %v5580
  %v5582 = vpop.f32.mrb[0].mxu0
  %5583 = vmatprep.mubr.f32.mxu0 0.0
  %5584 = vmatmul.mubr.f32.gmra.mrb[0].mxu0 %v5482
  %v5585 = vpop.f32.mrb[0].mxu0
  %v5586 = vadd.f32 0.0, %v5585
  %v5587 = vpop.f32.mrb[0].mxu0
  %5588 = vdwg.mxu0
  %v5589 = vld [vmem:[%s12] sm:$0xff]
  %v5590 = vld [vmem:[%s12 + $0x8] sm:$0xff]
  %v5591 = vld [vmem:[%s12 + $0x10] sm:$0xff]
  %v5592 = vld [vmem:[%s12 + $0x18] sm:$0xff]
  %v5593 = vld [vmem:[%s12 + $0x20] sm:$0xff]
  %v5594 = vld [vmem:[%s12 + $0x28] sm:$0xff]
  %v5595 = vld [vmem:[%s12 + $0x30] sm:$0xff]
  %v5596 = vld [vmem:[%s12 + $0x38] sm:$0xff]
  %v5597 = vld [vmem:[%s12 + $0x40] sm:$0xff]
  %v5598 = vld [vmem:[%s12 + $0x48] sm:$0xff]
  %v5599 = vld [vmem:[%s12 + $0x50] sm:$0xff]
  %v5600 = vld [vmem:[%s12 + $0x58] sm:$0xff]
  %v5601 = vld [vmem:[%s12 + $0x60] sm:$0xff]
  %v5602 = vld [vmem:[%s12 + $0x68] sm:$0xff]
  %v5603 = vld [vmem:[%s12 + $0x70] sm:$0xff]
  %s5604 = scalar_lea.vmem %s11, 8
  %v5605 = vld [vmem:[%s5604] sm:$0xff]
  %5606 = vmatprep.subr.mxu0 0.0
  %5607 = vmatpush1.msra.mxu0 %v5605
  %5608 = vmatprep.subr.mxu0 0.0
  %5609 = vmatpush1.msra.mxu0 0.0
  %5610 = vmatprep.subr.mxu0 0.0
  %5611 = vmatpush1.msra.mxu0 0.0
  %5612 = vmatprep.subr.mxu0 0.0
  %5613 = vmatpush1.msra.mxu0 0.0
  %5614 = vmatprep.subr.mxu0 0.0
  %5615 = vmatpush1.msra.mxu0 0.0
  %5616 = vmatprep.subr.mxu0 0.0
  %5617 = vmatpush1.msra.mxu0 0.0
  %5618 = vmatprep.subr.mxu0 0.0
  %5619 = vmatpush1.msra.mxu0 0.0
  %5620 = vmatprep.subr.mxu0 0.0
  %5621 = vmatpush1.msra.mxu0 0.0
  %5622 = vmatprep.subr.mxu0 0.0
  %5623 = vmatpush1.msra.mxu0 0.0
  %5624 = vmatprep.subr.mxu0 0.0
  %5625 = vmatpush1.msra.mxu0 0.0
  %5626 = vmatprep.subr.mxu0 0.0
  %5627 = vmatpush1.msra.mxu0 0.0
  %5628 = vmatprep.subr.mxu0 0.0
  %5629 = vmatpush1.msra.mxu0 0.0
  %5630 = vmatprep.subr.mxu0 0.0
  %5631 = vmatpush1.msra.mxu0 0.0
  %5632 = vmatprep.subr.mxu0 0.0
  %5633 = vmatpush1.msra.mxu0 0.0
  %5634 = vmatprep.subr.mxu0 0.0
  %5635 = vmatpush1.msra.mxu0 0.0
  %5636 = vmatprep.subr.mxu0 0.0
  %5637 = vmatpush1.msra.mxu0 0.0
  %5638 = vmatprep.subr.mxu0 0.0
  %5639 = vmatpush1.msra.mxu0 0.0
  %5640 = vmatprep.subr.mxu0 0.0
  %5641 = vmatpush1.msra.mxu0 0.0
  %5642 = vmatprep.subr.mxu0 0.0
  %5643 = vmatpush1.msra.mxu0 0.0
  %5644 = vmatprep.subr.mxu0 0.0
  %5645 = vmatpush1.msra.mxu0 0.0
  %5646 = vmatprep.subr.mxu0 0.0
  %5647 = vmatpush1.msra.mxu0 0.0
  %5648 = vmatprep.subr.mxu0 0.0
  %5649 = vmatpush1.msra.mxu0 0.0
  %5650 = vmatprep.subr.mxu0 0.0
  %5651 = vmatpush1.msra.mxu0 0.0
  %5652 = vmatprep.subr.mxu0 0.0
  %5653 = vmatpush1.msra.mxu0 0.0
  %5654 = vmatprep.subr.mxu0 0.0
  %5655 = vmatpush1.msra.mxu0 0.0
  %5656 = vmatprep.subr.mxu0 0.0
  %5657 = vmatpush1.msra.mxu0 0.0
  %5658 = vmatprep.subr.mxu0 0.0
  %5659 = vmatpush1.msra.mxu0 0.0
  %5660 = vmatprep.subr.mxu0 0.0
  %5661 = vmatpush1.msra.mxu0 0.0
  %5662 = vmatprep.subr.mxu0 0.0
  %5663 = vmatpush1.msra.mxu0 0.0
  %5664 = vmatprep.subr.mxu0 0.0
  %5665 = vmatpush1.msra.mxu0 0.0
  %5666 = vmatprep.subr.mxu0 0.0
  %5667 = vmatpush1.msra.mxu0 0.0
  %5668 = vmatprep.subr.mxu0 0.0
  %5669 = vmatpush1.msra.mxu0 0.0
  %5670 = vmatprep.mubr.f32.mxu0 0.0
  %5671 = vmatmul.mubr.f32.gmra.mrb[0].mxu0 %v5461
  %v5672 = vpop.f32.mrb[0].mxu0
  %v5673 = vadd.f32 0.0, %v5672
  %v5674 = vpop.f32.mrb[0].mxu0
  %5675 = vmatprep.mubr.f32.mxu0 0.0
  %5676 = vmatmul.mubr.f32.gmra.mrb[0].mxu0 %v5464
  %v5677 = vpop.f32.mrb[0].mxu0
  %v5678 = vadd.f32 0.0, %v5677
  %v5679 = vpop.f32.mrb[0].mxu0
  %5680 = vmatprep.mubr.f32.mxu0 0.0
  %5681 = vmatmul.mubr.f32.gmra.mrb[0].mxu0 %v5467
  %v5682 = vpop.f32.mrb[0].mxu0
  %v5683 = vadd.f32 0.0, %v5682
  %v5684 = vpop.f32.mrb[0].mxu0
  %5685 = vmatprep.mubr.f32.mxu0 0.0
  %5686 = vmatmul.mubr.f32.gmra.mrb[0].mxu0 %v5470
  %v5687 = vpop.f32.mrb[0].mxu0
  %v5688 = vadd.f32 0.0, %v5687
  %v5689 = vpop.f32.mrb[0].mxu0
  %5690 = vmatprep.mubr.f32.mxu0 0.0
  %5691 = vmatmul.mubr.f32.gmra.mrb[0].mxu0 %v5473
  %v5692 = vpop.f32.mrb[0].mxu0
  %v5693 = vadd.f32 0.0, %v5692
  %v5694 = vpop.f32.mrb[0].mxu0
  %5695 = vmatprep.mubr.f32.mxu0 0.0
  %5696 = vmatmul.mubr.f32.gmra.mrb[0].mxu0 %v5476
  %v5697 = vpop.f32.mrb[0].mxu0
  %v5698 = vadd.f32 0.0, %v5697
  %v5699 = vpop.f32.mrb[0].mxu0
  %5700 = vmatprep.mubr.f32.mxu0 0.0
  %5701 = vmatmul.mubr.f32.gmra.mrb[0].mxu0 %v5479
  %v5702 = vpop.f32.mrb[0].mxu0
  %v5703 = vadd.f32 0.0, %v5702
  %v5704 = vpop.f32.mrb[0].mxu0
  %5705 = vmatprep.mubr.f32.mxu0 0.0
  %5706 = vmatmul.mubr.f32.gmra.mrb[0].mxu0 %v5482
  %v5707 = vpop.f32.mrb[0].mxu0
  %v5708 = vadd.f32 0.0, %v5707
  %v5709 = vpop.f32.mrb[0].mxu0
  %5710 = vdwg.mxu0
  %s5711 = scalar_lea.vmem %s12, 120
  %v5712 = vld [vmem:[%s5711] sm:$0xff]
  %v5713 = vld [vmem:[%s5711 + $0x8] sm:$0xff]
  %v5714 = vld [vmem:[%s5711 + $0x10] sm:$0xff]
  %v5715 = vld [vmem:[%s5711 + $0x18] sm:$0xff]
  %v5716 = vld [vmem:[%s5711 + $0x20] sm:$0xff]
  %v5717 = vld [vmem:[%s5711 + $0x28] sm:$0xff]
  %v5718 = vld [vmem:[%s5711 + $0x30] sm:$0xff]
  %v5719 = vld [vmem:[%s5711 + $0x38] sm:$0xff]
  %v5720 = vld [vmem:[%s5711 + $0x40] sm:$0xff]
  %v5721 = vld [vmem:[%s5711 + $0x48] sm:$0xff]
  %v5722 = vld [vmem:[%s5711 + $0x50] sm:$0xff]
  %v5723 = vld [vmem:[%s5711 + $0x58] sm:$0xff]
  %v5724 = vld [vmem:[%s5711 + $0x60] sm:$0xff]
  %v5725 = vld [vmem:[%s5711 + $0x68] sm:$0xff]
  %v5726 = vld [vmem:[%s5711 + $0x70] sm:$0xff]
  %vm5727 = vcmask 523264
  %v5729 = vsel %vm5727, %v5712, 0
  %v5732 = vsel %vm5727, %v5713, 0
  %v5735 = vsel %vm5727, %v5714, 0
  %v5738 = vsel %vm5727, %v5715, 0
  %v5741 = vsel %vm5727, %v5716, 0
  %v5744 = vsel %vm5727, %v5717, 0
  %v5747 = vsel %vm5727, %v5718, 0
  %v5750 = vsel %vm5727, %v5719, 0
  %v5753 = vsel %vm5727, %v5720, 0
  %v5756 = vsel %vm5727, %v5721, 0
  %v5759 = vsel %vm5727, %v5722, 0
  %v5762 = vsel %vm5727, %v5723, 0
  %v5765 = vsel %vm5727, %v5724, 0
  %v5768 = vsel %vm5727, %v5725, 0
  %v5771 = vsel %vm5727, %v5726, 0
  %5773 = vmatprep.subr.mxu0 0.0
  %5774 = vmatpush1.msra.mxu0 %v5673
  %5775 = vmatprep.subr.mxu0 0.0
  %5776 = vmatpush1.msra.mxu0 %v5678
  %5777 = vmatprep.subr.mxu0 0.0
  %5778 = vmatpush1.msra.mxu0 %v5683
  %5779 = vmatprep.subr.mxu0 0.0
  %5780 = vmatpush1.msra.mxu0 %v5688
  %5781 = vmatprep.subr.mxu0 0.0
  %5782 = vmatpush1.msra.mxu0 %v5693
  %5783 = vmatprep.subr.mxu0 0.0
  %5784 = vmatpush1.msra.mxu0 %v5698
  %5785 = vmatprep.subr.mxu0 0.0
  %5786 = vmatpush1.msra.mxu0 %v5703
  %5787 = vmatprep.subr.mxu0 0.0
  %5788 = vmatpush1.msra.mxu0 %v5708
  %5789 = vmatprep.subr.mxu0 0.0
  %5790 = vmatpush1.msra.mxu0 0.0
  %5791 = vmatprep.subr.mxu0 0.0
  %5792 = vmatpush1.msra.mxu0 0.0
  %5793 = vmatprep.subr.mxu0 0.0
  %5794 = vmatpush1.msra.mxu0 0.0
  %5795 = vmatprep.subr.mxu0 0.0
  %5796 = vmatpush1.msra.mxu0 0.0
  %5797 = vmatprep.subr.mxu0 0.0
  %5798 = vmatpush1.msra.mxu0 0.0
  %5799 = vmatprep.subr.mxu0 0.0
  %5800 = vmatpush1.msra.mxu0 0.0
  %5801 = vmatprep.subr.mxu0 0.0
  %5802 = vmatpush1.msra.mxu0 0.0
  %5803 = vmatprep.subr.mxu0 0.0
  %5804 = vmatpush1.msra.mxu0 0.0
  %5805 = vmatprep.subr.mxu0 0.0
  %5806 = vmatpush1.msra.mxu0 0.0
  %5807 = vmatprep.subr.mxu0 0.0
  %5808 = vmatpush1.msra.mxu0 0.0
  %5809 = vmatprep.subr.mxu0 0.0
  %5810 = vmatpush1.msra.mxu0 0.0
  %5811 = vmatprep.subr.mxu0 0.0
  %5812 = vmatpush1.msra.mxu0 0.0
  %5813 = vmatprep.subr.mxu0 0.0
  %5814 = vmatpush1.msra.mxu0 0.0
  %5815 = vmatprep.subr.mxu0 0.0
  %5816 = vmatpush1.msra.mxu0 0.0
  %5817 = vmatprep.subr.mxu0 0.0
  %5818 = vmatpush1.msra.mxu0 0.0
  %5819 = vmatprep.subr.mxu0 0.0
  %5820 = vmatpush1.msra.mxu0 0.0
  %5821 = vmatprep.subr.mxu0 0.0
  %5822 = vmatpush1.msra.mxu0 0.0
  %5823 = vmatprep.subr.mxu0 0.0
  %5824 = vmatpush1.msra.mxu0 0.0
  %5825 = vmatprep.subr.mxu0 0.0
  %5826 = vmatpush1.msra.mxu0 0.0
  %5827 = vmatprep.subr.mxu0 0.0
  %5828 = vmatpush1.msra.mxu0 0.0
  %5829 = vmatprep.subr.mxu0 0.0
  %5830 = vmatpush1.msra.mxu0 0.0
  %5831 = vmatprep.subr.mxu0 0.0
  %5832 = vmatpush1.msra.mxu0 0.0
  %5833 = vmatprep.subr.mxu0 0.0
  %5834 = vmatpush1.msra.mxu0 0.0
  %5835 = vmatprep.subr.mxu0 0.0
  %5836 = vmatpush1.msra.mxu0 0.0
  %5837 = vmatprep.mubr.f32.mxu0 0.0
  %5838 = vmatmul.mubr.f32.gmra.mrb[0].mxu0 %v5729
  %v5839 = vpop.f32.mrb[0].mxu0
  %v5840 = vadd.f32 0.0, %v5839
  %v5841 = vpop.f32.mrb[0].mxu0
  %5842 = vmatprep.mubr.f32.mxu0 0.0
  %5843 = vmatmul.mubr.f32.gmra.mrb[0].mxu0 %v5732
  %v5844 = vpop.f32.mrb[0].mxu0
  %v5845 = vadd.f32 0.0, %v5844
  %v5846 = vpop.f32.mrb[0].mxu0
  %5847 = vmatprep.mubr.f32.mxu0 0.0
  %5848 = vmatmul.mubr.f32.gmra.mrb[0].mxu0 %v5735
  %v5849 = vpop.f32.mrb[0].mxu0
  %v5850 = vadd.f32 0.0, %v5849
  %v5851 = vpop.f32.mrb[0].mxu0
  %5852 = vmatprep.mubr.f32.mxu0 0.0
  %5853 = vmatmul.mubr.f32.gmra.mrb[0].mxu0 %v5738
  %v5854 = vpop.f32.mrb[0].mxu0
  %v5855 = vadd.f32 0.0, %v5854
  %v5856 = vpop.f32.mrb[0].mxu0
  %5857 = vmatprep.mubr.f32.mxu0 0.0
  %5858 = vmatmul.mubr.f32.gmra.mrb[0].mxu0 %v5741
  %v5859 = vpop.f32.mrb[0].mxu0
  %v5860 = vadd.f32 0.0, %v5859
  %v5861 = vpop.f32.mrb[0].mxu0
  %5862 = vmatprep.mubr.f32.mxu0 0.0
  %5863 = vmatmul.mubr.f32.gmra.mrb[0].mxu0 %v5744
  %v5864 = vpop.f32.mrb[0].mxu0
  %v5865 = vadd.f32 0.0, %v5864
  %v5866 = vpop.f32.mrb[0].mxu0
  %5867 = vmatprep.mubr.f32.mxu0 0.0
  %5868 = vmatmul.mubr.f32.gmra.mrb[0].mxu0 %v5747
  %v5869 = vpop.f32.mrb[0].mxu0
  %v5870 = vadd.f32 0.0, %v5869
  %v5871 = vpop.f32.mrb[0].mxu0
  %5872 = vmatprep.mubr.f32.mxu0 0.0
  %5873 = vmatmul.mubr.f32.gmra.mrb[0].mxu0 %v5750
  %v5874 = vpop.f32.mrb[0].mxu0
  %v5875 = vadd.f32 0.0, %v5874
  %v5876 = vpop.f32.mrb[0].mxu0
  %5877 = vmatprep.mubr.f32.mxu0 0.0
  %5878 = vmatmul.mubr.f32.gmra.mrb[0].mxu0 %v5753
  %v5879 = vpop.f32.mrb[0].mxu0
  %v5880 = vadd.f32 0.0, %v5879
  %v5881 = vpop.f32.mrb[0].mxu0
  %5882 = vmatprep.mubr.f32.mxu0 0.0
  %5883 = vmatmul.mubr.f32.gmra.mrb[0].mxu0 %v5756
  %v5884 = vpop.f32.mrb[0].mxu0
  %v5885 = vadd.f32 0.0, %v5884
  %v5886 = vpop.f32.mrb[0].mxu0
  %5887 = vmatprep.mubr.f32.mxu0 0.0
  %5888 = vmatmul.mubr.f32.gmra.mrb[0].mxu0 %v5759
  %v5889 = vpop.f32.mrb[0].mxu0
  %v5890 = vadd.f32 0.0, %v5889
  %v5891 = vpop.f32.mrb[0].mxu0
  %5892 = vmatprep.mubr.f32.mxu0 0.0
  %5893 = vmatmul.mubr.f32.gmra.mrb[0].mxu0 %v5762
  %v5894 = vpop.f32.mrb[0].mxu0
  %v5895 = vadd.f32 0.0, %v5894
  %v5896 = vpop.f32.mrb[0].mxu0
  %5897 = vmatprep.mubr.f32.mxu0 0.0
  %5898 = vmatmul.mubr.f32.gmra.mrb[0].mxu0 %v5765
  %v5899 = vpop.f32.mrb[0].mxu0
  %v5900 = vadd.f32 0.0, %v5899
  %v5901 = vpop.f32.mrb[0].mxu0
  %5902 = vmatprep.mubr.f32.mxu0 0.0
  %5903 = vmatmul.mubr.f32.gmra.mrb[0].mxu0 %v5768
  %v5904 = vpop.f32.mrb[0].mxu0
  %v5905 = vadd.f32 0.0, %v5904
  %v5906 = vpop.f32.mrb[0].mxu0
  %5907 = vmatprep.mubr.f32.mxu0 0.0
  %5908 = vmatmul.mubr.f32.gmra.mrb[0].mxu0 %v5771
  %v5909 = vpop.f32.mrb[0].mxu0
  %v5910 = vadd.f32 0.0, %v5909
  %v5911 = vpop.f32.mrb[0].mxu0
  %5912 = vdwg.mxu0
  %v5914 = vsel %vm5727, %v5589, 0
  %v5917 = vsel %vm5727, %v5590, 0
  %v5920 = vsel %vm5727, %v5591, 0
  %v5923 = vsel %vm5727, %v5592, 0
  %v5926 = vsel %vm5727, %v5593, 0
  %v5929 = vsel %vm5727, %v5594, 0
  %v5932 = vsel %vm5727, %v5595, 0
  %v5935 = vsel %vm5727, %v5596, 0
  %v5938 = vsel %vm5727, %v5597, 0
  %v5941 = vsel %vm5727, %v5598, 0
  %v5944 = vsel %vm5727, %v5599, 0
  %v5947 = vsel %vm5727, %v5600, 0
  %v5950 = vsel %vm5727, %v5601, 0
  %v5953 = vsel %vm5727, %v5602, 0
  %v5956 = vsel %vm5727, %v5603, 0
  %5958 = vmatprep.subr.mxu0 0.0
  %5959 = vmatpush1.msra.mxu0 %v5551
  %5960 = vmatprep.subr.mxu0 0.0
  %5961 = vmatpush1.msra.mxu0 %v5556
  %5962 = vmatprep.subr.mxu0 0.0
  %5963 = vmatpush1.msra.mxu0 %v5561
  %5964 = vmatprep.subr.mxu0 0.0
  %5965 = vmatpush1.msra.mxu0 %v5566
  %5966 = vmatprep.subr.mxu0 0.0
  %5967 = vmatpush1.msra.mxu0 %v5571
  %5968 = vmatprep.subr.mxu0 0.0
  %5969 = vmatpush1.msra.mxu0 %v5576
  %5970 = vmatprep.subr.mxu0 0.0
  %5971 = vmatpush1.msra.mxu0 %v5581
  %5972 = vmatprep.subr.mxu0 0.0
  %5973 = vmatpush1.msra.mxu0 %v5586
  %5974 = vmatprep.subr.mxu0 0.0
  %5975 = vmatpush1.msra.mxu0 0.0
  %5976 = vmatprep.subr.mxu0 0.0
  %5977 = vmatpush1.msra.mxu0 0.0
  %5978 = vmatprep.subr.mxu0 0.0
  %5979 = vmatpush1.msra.mxu0 0.0
  %5980 = vmatprep.subr.mxu0 0.0
  %5981 = vmatpush1.msra.mxu0 0.0
  %5982 = vmatprep.subr.mxu0 0.0
  %5983 = vmatpush1.msra.mxu0 0.0
  %5984 = vmatprep.subr.mxu0 0.0
  %5985 = vmatpush1.msra.mxu0 0.0
  %5986 = vmatprep.subr.mxu0 0.0
  %5987 = vmatpush1.msra.mxu0 0.0
  %5988 = vmatprep.subr.mxu0 0.0
  %5989 = vmatpush1.msra.mxu0 0.0
  %5990 = vmatprep.subr.mxu0 0.0
  %5991 = vmatpush1.msra.mxu0 0.0
  %5992 = vmatprep.subr.mxu0 0.0
  %5993 = vmatpush1.msra.mxu0 0.0
  %5994 = vmatprep.subr.mxu0 0.0
  %5995 = vmatpush1.msra.mxu0 0.0
  %5996 = vmatprep.subr.mxu0 0.0
  %5997 = vmatpush1.msra.mxu0 0.0
  %5998 = vmatprep.subr.mxu0 0.0
  %5999 = vmatpush1.msra.mxu0 0.0
  %6000 = vmatprep.subr.mxu0 0.0
  %6001 = vmatpush1.msra.mxu0 0.0
  %6002 = vmatprep.subr.mxu0 0.0
  %6003 = vmatpush1.msra.mxu0 0.0
  %6004 = vmatprep.subr.mxu0 0.0
  %6005 = vmatpush1.msra.mxu0 0.0
  %6006 = vmatprep.subr.mxu0 0.0
  %6007 = vmatpush1.msra.mxu0 0.0
  %6008 = vmatprep.subr.mxu0 0.0
  %6009 = vmatpush1.msra.mxu0 0.0
  %6010 = vmatprep.subr.mxu0 0.0
  %6011 = vmatpush1.msra.mxu0 0.0
  %6012 = vmatprep.subr.mxu0 0.0
  %6013 = vmatpush1.msra.mxu0 0.0
  %6014 = vmatprep.subr.mxu0 0.0
  %6015 = vmatpush1.msra.mxu0 0.0
  %6016 = vmatprep.subr.mxu0 0.0
  %6017 = vmatpush1.msra.mxu0 0.0
  %6018 = vmatprep.subr.mxu0 0.0
  %6019 = vmatpush1.msra.mxu0 0.0
  %6020 = vmatprep.subr.mxu0 0.0
  %6021 = vmatpush1.msra.mxu0 0.0
  %6022 = vmatprep.mubr.f32.mxu0 0.0
  %6023 = vmatmul.mubr.f32.gmra.mrb[0].mxu0 %v5914
  %v6024 = vpop.f32.mrb[0].mxu0
  %v6025 = vadd.f32 %v5840, %v6024
  %v6026 = vpop.f32.mrb[0].mxu0
  %6027 = vmatprep.mubr.f32.mxu0 0.0
  %6028 = vmatmul.mubr.f32.gmra.mrb[0].mxu0 %v5917
  %v6029 = vpop.f32.mrb[0].mxu0
  %v6030 = vadd.f32 %v5845, %v6029
  %v6031 = vpop.f32.mrb[0].mxu0
  %6032 = vmatprep.mubr.f32.mxu0 0.0
  %6033 = vmatmul.mubr.f32.gmra.mrb[0].mxu0 %v5920
  %v6034 = vpop.f32.mrb[0].mxu0
  %v6035 = vadd.f32 %v5850, %v6034
  %v6036 = vpop.f32.mrb[0].mxu0
  %6037 = vmatprep.mubr.f32.mxu0 0.0
  %6038 = vmatmul.mubr.f32.gmra.mrb[0].mxu0 %v5923
  %v6039 = vpop.f32.mrb[0].mxu0
  %v6040 = vadd.f32 %v5855, %v6039
  %v6041 = vpop.f32.mrb[0].mxu0
  %6042 = vmatprep.mubr.f32.mxu0 0.0
  %6043 = vmatmul.mubr.f32.gmra.mrb[0].mxu0 %v5926
  %v6044 = vpop.f32.mrb[0].mxu0
  %v6045 = vadd.f32 %v5860, %v6044
  %v6046 = vpop.f32.mrb[0].mxu0
  %6047 = vmatprep.mubr.f32.mxu0 0.0
  %6048 = vmatmul.mubr.f32.gmra.mrb[0].mxu0 %v5929
  %v6049 = vpop.f32.mrb[0].mxu0
  %v6050 = vadd.f32 %v5865, %v6049
  %v6051 = vpop.f32.mrb[0].mxu0
  %6052 = vmatprep.mubr.f32.mxu0 0.0
  %6053 = vmatmul.mubr.f32.gmra.mrb[0].mxu0 %v5932
  %v6054 = vpop.f32.mrb[0].mxu0
  %v6055 = vadd.f32 %v5870, %v6054
  %v6056 = vpop.f32.mrb[0].mxu0
  %6057 = vmatprep.mubr.f32.mxu0 0.0
  %6058 = vmatmul.mubr.f32.gmra.mrb[0].mxu0 %v5935
  %v6059 = vpop.f32.mrb[0].mxu0
  %v6060 = vadd.f32 %v5875, %v6059
  %v6061 = vpop.f32.mrb[0].mxu0
  %6062 = vmatprep.mubr.f32.mxu0 0.0
  %6063 = vmatmul.mubr.f32.gmra.mrb[0].mxu0 %v5938
  %v6064 = vpop.f32.mrb[0].mxu0
  %v6065 = vadd.f32 %v5880, %v6064
  %v6066 = vpop.f32.mrb[0].mxu0
  %6067 = vmatprep.mubr.f32.mxu0 0.0
  %6068 = vmatmul.mubr.f32.gmra.mrb[0].mxu0 %v5941
  %v6069 = vpop.f32.mrb[0].mxu0
  %v6070 = vadd.f32 %v5885, %v6069
  %v6071 = vpop.f32.mrb[0].mxu0
  %6072 = vmatprep.mubr.f32.mxu0 0.0
  %6073 = vmatmul.mubr.f32.gmra.mrb[0].mxu0 %v5944
  %v6074 = vpop.f32.mrb[0].mxu0
  %v6075 = vadd.f32 %v5890, %v6074
  %v6076 = vpop.f32.mrb[0].mxu0
  %6077 = vmatprep.mubr.f32.mxu0 0.0
  %6078 = vmatmul.mubr.f32.gmra.mrb[0].mxu0 %v5947
  %v6079 = vpop.f32.mrb[0].mxu0
  %v6080 = vadd.f32 %v5895, %v6079
  %v6081 = vpop.f32.mrb[0].mxu0
  %6082 = vmatprep.mubr.f32.mxu0 0.0
  %6083 = vmatmul.mubr.f32.gmra.mrb[0].mxu0 %v5950
  %v6084 = vpop.f32.mrb[0].mxu0
  %v6085 = vadd.f32 %v5900, %v6084
  %v6086 = vpop.f32.mrb[0].mxu0
  %6087 = vmatprep.mubr.f32.mxu0 0.0
  %6088 = vmatmul.mubr.f32.gmra.mrb[0].mxu0 %v5953
  %v6089 = vpop.f32.mrb[0].mxu0
  %v6090 = vadd.f32 %v5905, %v6089
  %v6091 = vpop.f32.mrb[0].mxu0
  %6092 = vmatprep.mubr.f32.mxu0 0.0
  %6093 = vmatmul.mubr.f32.gmra.mrb[0].mxu0 %v5956
  %v6094 = vpop.f32.mrb[0].mxu0
  %v6095 = vadd.f32 %v5910, %v6094
  %v6096 = vpop.f32.mrb[0].mxu0
  %6097 = vdwg.mxu0
  %s6098 = scalar_lea.vmem %s11, 16
  %v6099 = vld [vmem:[%s6098] sm:$0xff]
  %6100 = vmatprep.subr.mxu0 0.0
  %6101 = vmatpush1.msra.mxu0 %v6099
  %6102 = vmatprep.subr.mxu0 0.0
  %6103 = vmatpush1.msra.mxu0 0.0
  %6104 = vmatprep.subr.mxu0 0.0
  %6105 = vmatpush1.msra.mxu0 0.0
  %6106 = vmatprep.subr.mxu0 0.0
  %6107 = vmatpush1.msra.mxu0 0.0
  %6108 = vmatprep.subr.mxu0 0.0
  %6109 = vmatpush1.msra.mxu0 0.0
  %6110 = vmatprep.subr.mxu0 0.0
  %6111 = vmatpush1.msra.mxu0 0.0
  %6112 = vmatprep.subr.mxu0 0.0
  %6113 = vmatpush1.msra.mxu0 0.0
  %6114 = vmatprep.subr.mxu0 0.0
  %6115 = vmatpush1.msra.mxu0 0.0
  %6116 = vmatprep.subr.mxu0 0.0
  %6117 = vmatpush1.msra.mxu0 0.0
  %6118 = vmatprep.subr.mxu0 0.0
  %6119 = vmatpush1.msra.mxu0 0.0
  %6120 = vmatprep.subr.mxu0 0.0
  %6121 = vmatpush1.msra.mxu0 0.0
  %6122 = vmatprep.subr.mxu0 0.0
  %6123 = vmatpush1.msra.mxu0 0.0
  %6124 = vmatprep.subr.mxu0 0.0
  %6125 = vmatpush1.msra.mxu0 0.0
  %6126 = vmatprep.subr.mxu0 0.0
  %6127 = vmatpush1.msra.mxu0 0.0
  %6128 = vmatprep.subr.mxu0 0.0
  %6129 = vmatpush1.msra.mxu0 0.0
  %6130 = vmatprep.subr.mxu0 0.0
  %6131 = vmatpush1.msra.mxu0 0.0
  %6132 = vmatprep.subr.mxu0 0.0
  %6133 = vmatpush1.msra.mxu0 0.0
  %6134 = vmatprep.subr.mxu0 0.0
  %6135 = vmatpush1.msra.mxu0 0.0
  %6136 = vmatprep.subr.mxu0 0.0
  %6137 = vmatpush1.msra.mxu0 0.0
  %6138 = vmatprep.subr.mxu0 0.0
  %6139 = vmatpush1.msra.mxu0 0.0
  %6140 = vmatprep.subr.mxu0 0.0
  %6141 = vmatpush1.msra.mxu0 0.0
  %6142 = vmatprep.subr.mxu0 0.0
  %6143 = vmatpush1.msra.mxu0 0.0
  %6144 = vmatprep.subr.mxu0 0.0
  %6145 = vmatpush1.msra.mxu0 0.0
  %6146 = vmatprep.subr.mxu0 0.0
  %6147 = vmatpush1.msra.mxu0 0.0
  %6148 = vmatprep.subr.mxu0 0.0
  %6149 = vmatpush1.msra.mxu0 0.0
  %6150 = vmatprep.subr.mxu0 0.0
  %6151 = vmatpush1.msra.mxu0 0.0
  %6152 = vmatprep.subr.mxu0 0.0
  %6153 = vmatpush1.msra.mxu0 0.0
  %6154 = vmatprep.subr.mxu0 0.0
  %6155 = vmatpush1.msra.mxu0 0.0
  %6156 = vmatprep.subr.mxu0 0.0
  %6157 = vmatpush1.msra.mxu0 0.0
  %6158 = vmatprep.subr.mxu0 0.0
  %6159 = vmatpush1.msra.mxu0 0.0
  %6160 = vmatprep.subr.mxu0 0.0
  %6161 = vmatpush1.msra.mxu0 0.0
  %6162 = vmatprep.subr.mxu0 0.0
  %6163 = vmatpush1.msra.mxu0 0.0
  %6164 = vmatprep.mubr.f32.mxu0 0.0
  %6165 = vmatmul.mubr.f32.gmra.mrb[0].mxu0 %v5461
  %v6166 = vpop.f32.mrb[0].mxu0
  %v6167 = vadd.f32 0.0, %v6166
  %v6168 = vpop.f32.mrb[0].mxu0
  %6169 = vmatprep.mubr.f32.mxu0 0.0
  %6170 = vmatmul.mubr.f32.gmra.mrb[0].mxu0 %v5464
  %v6171 = vpop.f32.mrb[0].mxu0
  %v6172 = vadd.f32 0.0, %v6171
  %v6173 = vpop.f32.mrb[0].mxu0
  %6174 = vmatprep.mubr.f32.mxu0 0.0
  %6175 = vmatmul.mubr.f32.gmra.mrb[0].mxu0 %v5467
  %v6176 = vpop.f32.mrb[0].mxu0
  %v6177 = vadd.f32 0.0, %v6176
  %v6178 = vpop.f32.mrb[0].mxu0
  %6179 = vmatprep.mubr.f32.mxu0 0.0
  %6180 = vmatmul.mubr.f32.gmra.mrb[0].mxu0 %v5470
  %v6181 = vpop.f32.mrb[0].mxu0
  %v6182 = vadd.f32 0.0, %v6181
  %v6183 = vpop.f32.mrb[0].mxu0
  %6184 = vmatprep.mubr.f32.mxu0 0.0
  %6185 = vmatmul.mubr.f32.gmra.mrb[0].mxu0 %v5473
  %v6186 = vpop.f32.mrb[0].mxu0
  %v6187 = vadd.f32 0.0, %v6186
  %v6188 = vpop.f32.mrb[0].mxu0
  %6189 = vmatprep.mubr.f32.mxu0 0.0
  %6190 = vmatmul.mubr.f32.gmra.mrb[0].mxu0 %v5476
  %v6191 = vpop.f32.mrb[0].mxu0
  %v6192 = vadd.f32 0.0, %v6191
  %v6193 = vpop.f32.mrb[0].mxu0
  %6194 = vmatprep.mubr.f32.mxu0 0.0
  %6195 = vmatmul.mubr.f32.gmra.mrb[0].mxu0 %v5479
  %v6196 = vpop.f32.mrb[0].mxu0
  %v6197 = vadd.f32 0.0, %v6196
  %v6198 = vpop.f32.mrb[0].mxu0
  %6199 = vmatprep.mubr.f32.mxu0 0.0
  %6200 = vmatmul.mubr.f32.gmra.mrb[0].mxu0 %v5482
  %v6201 = vpop.f32.mrb[0].mxu0
  %v6202 = vadd.f32 0.0, %v6201
  %v6203 = vpop.f32.mrb[0].mxu0
  %6204 = vdwg.mxu0
  %s6205 = scalar_lea.vmem %s12, 240
  %v6206 = vld [vmem:[%s6205] sm:$0xff]
  %v6207 = vld [vmem:[%s6205 + $0x8] sm:$0xff]
  %v6208 = vld [vmem:[%s6205 + $0x10] sm:$0xff]
  %v6209 = vld [vmem:[%s6205 + $0x18] sm:$0xff]
  %v6210 = vld [vmem:[%s6205 + $0x20] sm:$0xff]
  %v6211 = vld [vmem:[%s6205 + $0x28] sm:$0xff]
  %v6212 = vld [vmem:[%s6205 + $0x30] sm:$0xff]
  %v6213 = vld [vmem:[%s6205 + $0x38] sm:$0xff]
  %v6214 = vld [vmem:[%s6205 + $0x40] sm:$0xff]
  %v6215 = vld [vmem:[%s6205 + $0x48] sm:$0xff]
  %v6216 = vld [vmem:[%s6205 + $0x50] sm:$0xff]
  %v6217 = vld [vmem:[%s6205 + $0x58] sm:$0xff]
  %v6218 = vld [vmem:[%s6205 + $0x60] sm:$0xff]
  %v6219 = vld [vmem:[%s6205 + $0x68] sm:$0xff]
  %v6220 = vld [vmem:[%s6205 + $0x70] sm:$0xff]
  %v6222 = vsel %vm5727, %v6206, 0
  %v6225 = vsel %vm5727, %v6207, 0
  %v6228 = vsel %vm5727, %v6208, 0
  %v6231 = vsel %vm5727, %v6209, 0
  %v6234 = vsel %vm5727, %v6210, 0
  %v6237 = vsel %vm5727, %v6211, 0
  %v6240 = vsel %vm5727, %v6212, 0
  %v6243 = vsel %vm5727, %v6213, 0
  %v6246 = vsel %vm5727, %v6214, 0
  %v6249 = vsel %vm5727, %v6215, 0
  %v6252 = vsel %vm5727, %v6216, 0
  %v6255 = vsel %vm5727, %v6217, 0
  %v6258 = vsel %vm5727, %v6218, 0
  %v6261 = vsel %vm5727, %v6219, 0
  %v6264 = vsel %vm5727, %v6220, 0
  %6266 = vmatprep.subr.mxu0 0.0
  %6267 = vmatpush1.msra.mxu0 %v6167
  %6268 = vmatprep.subr.mxu0 0.0
  %6269 = vmatpush1.msra.mxu0 %v6172
  %6270 = vmatprep.subr.mxu0 0.0
  %6271 = vmatpush1.msra.mxu0 %v6177
  %6272 = vmatprep.subr.mxu0 0.0
  %6273 = vmatpush1.msra.mxu0 %v6182
  %6274 = vmatprep.subr.mxu0 0.0
  %6275 = vmatpush1.msra.mxu0 %v6187
  %6276 = vmatprep.subr.mxu0 0.0
  %6277 = vmatpush1.msra.mxu0 %v6192
  %6278 = vmatprep.subr.mxu0 0.0
  %6279 = vmatpush1.msra.mxu0 %v6197
  %6280 = vmatprep.subr.mxu0 0.0
  %6281 = vmatpush1.msra.mxu0 %v6202
  %6282 = vmatprep.subr.mxu0 0.0
  %6283 = vmatpush1.msra.mxu0 0.0
  %6284 = vmatprep.subr.mxu0 0.0
  %6285 = vmatpush1.msra.mxu0 0.0
  %6286 = vmatprep.subr.mxu0 0.0
  %6287 = vmatpush1.msra.mxu0 0.0
  %6288 = vmatprep.subr.mxu0 0.0
  %6289 = vmatpush1.msra.mxu0 0.0
  %6290 = vmatprep.subr.mxu0 0.0
  %6291 = vmatpush1.msra.mxu0 0.0
  %6292 = vmatprep.subr.mxu0 0.0
  %6293 = vmatpush1.msra.mxu0 0.0
  %6294 = vmatprep.subr.mxu0 0.0
  %6295 = vmatpush1.msra.mxu0 0.0
  %6296 = vmatprep.subr.mxu0 0.0
  %6297 = vmatpush1.msra.mxu0 0.0
  %6298 = vmatprep.subr.mxu0 0.0
  %6299 = vmatpush1.msra.mxu0 0.0
  %6300 = vmatprep.subr.mxu0 0.0
  %6301 = vmatpush1.msra.mxu0 0.0
  %6302 = vmatprep.subr.mxu0 0.0
  %6303 = vmatpush1.msra.mxu0 0.0
  %6304 = vmatprep.subr.mxu0 0.0
  %6305 = vmatpush1.msra.mxu0 0.0
  %6306 = vmatprep.subr.mxu0 0.0
  %6307 = vmatpush1.msra.mxu0 0.0
  %6308 = vmatprep.subr.mxu0 0.0
  %6309 = vmatpush1.msra.mxu0 0.0
  %6310 = vmatprep.subr.mxu0 0.0
  %6311 = vmatpush1.msra.mxu0 0.0
  %6312 = vmatprep.subr.mxu0 0.0
  %6313 = vmatpush1.msra.mxu0 0.0
  %6314 = vmatprep.subr.mxu0 0.0
  %6315 = vmatpush1.msra.mxu0 0.0
  %6316 = vmatprep.subr.mxu0 0.0
  %6317 = vmatpush1.msra.mxu0 0.0
  %6318 = vmatprep.subr.mxu0 0.0
  %6319 = vmatpush1.msra.mxu0 0.0
  %6320 = vmatprep.subr.mxu0 0.0
  %6321 = vmatpush1.msra.mxu0 0.0
  %6322 = vmatprep.subr.mxu0 0.0
  %6323 = vmatpush1.msra.mxu0 0.0
  %6324 = vmatprep.subr.mxu0 0.0
  %6325 = vmatpush1.msra.mxu0 0.0
  %6326 = vmatprep.subr.mxu0 0.0
  %6327 = vmatpush1.msra.mxu0 0.0
  %6328 = vmatprep.subr.mxu0 0.0
  %6329 = vmatpush1.msra.mxu0 0.0
  %6330 = vmatprep.mubr.f32.mxu0 0.0
  %6331 = vmatmul.mubr.f32.gmra.mrb[0].mxu0 %v6222
  %v6332 = vpop.f32.mrb[0].mxu0
  %v6333 = vadd.f32 0.0, %v6332
  %v6334 = vpop.f32.mrb[0].mxu0
  %6335 = vmatprep.mubr.f32.mxu0 0.0
  %6336 = vmatmul.mubr.f32.gmra.mrb[0].mxu0 %v6225
  %v6337 = vpop.f32.mrb[0].mxu0
  %v6338 = vadd.f32 0.0, %v6337
  %v6339 = vpop.f32.mrb[0].mxu0
  %6340 = vmatprep.mubr.f32.mxu0 0.0
  %6341 = vmatmul.mubr.f32.gmra.mrb[0].mxu0 %v6228
  %v6342 = vpop.f32.mrb[0].mxu0
  %v6343 = vadd.f32 0.0, %v6342
  %v6344 = vpop.f32.mrb[0].mxu0
  %6345 = vmatprep.mubr.f32.mxu0 0.0
  %6346 = vmatmul.mubr.f32.gmra.mrb[0].mxu0 %v6231
  %v6347 = vpop.f32.mrb[0].mxu0
  %v6348 = vadd.f32 0.0, %v6347
  %v6349 = vpop.f32.mrb[0].mxu0
  %6350 = vmatprep.mubr.f32.mxu0 0.0
  %6351 = vmatmul.mubr.f32.gmra.mrb[0].mxu0 %v6234
  %v6352 = vpop.f32.mrb[0].mxu0
  %v6353 = vadd.f32 0.0, %v6352
  %v6354 = vpop.f32.mrb[0].mxu0
  %6355 = vmatprep.mubr.f32.mxu0 0.0
  %6356 = vmatmul.mubr.f32.gmra.mrb[0].mxu0 %v6237
  %v6357 = vpop.f32.mrb[0].mxu0
  %v6358 = vadd.f32 0.0, %v6357
  %v6359 = vpop.f32.mrb[0].mxu0
  %6360 = vmatprep.mubr.f32.mxu0 0.0
  %6361 = vmatmul.mubr.f32.gmra.mrb[0].mxu0 %v6240
  %v6362 = vpop.f32.mrb[0].mxu0
  %v6363 = vadd.f32 0.0, %v6362
  %v6364 = vpop.f32.mrb[0].mxu0
  %6365 = vmatprep.mubr.f32.mxu0 0.0
  %6366 = vmatmul.mubr.f32.gmra.mrb[0].mxu0 %v6243
  %v6367 = vpop.f32.mrb[0].mxu0
  %v6368 = vadd.f32 0.0, %v6367
  %v6369 = vpop.f32.mrb[0].mxu0
  %6370 = vmatprep.mubr.f32.mxu0 0.0
  %6371 = vmatmul.mubr.f32.gmra.mrb[0].mxu0 %v6246
  %v6372 = vpop.f32.mrb[0].mxu0
  %v6373 = vadd.f32 0.0, %v6372
  %v6374 = vpop.f32.mrb[0].mxu0
  %6375 = vmatprep.mubr.f32.mxu0 0.0
  %6376 = vmatmul.mubr.f32.gmra.mrb[0].mxu0 %v6249
  %v6377 = vpop.f32.mrb[0].mxu0
  %v6378 = vadd.f32 0.0, %v6377
  %v6379 = vpop.f32.mrb[0].mxu0
  %6380 = vmatprep.mubr.f32.mxu0 0.0
  %6381 = vmatmul.mubr.f32.gmra.mrb[0].mxu0 %v6252
  %v6382 = vpop.f32.mrb[0].mxu0
  %v6383 = vadd.f32 0.0, %v6382
  %v6384 = vpop.f32.mrb[0].mxu0
  %6385 = vmatprep.mubr.f32.mxu0 0.0
  %6386 = vmatmul.mubr.f32.gmra.mrb[0].mxu0 %v6255
  %v6387 = vpop.f32.mrb[0].mxu0
  %v6388 = vadd.f32 0.0, %v6387
  %v6389 = vpop.f32.mrb[0].mxu0
  %6390 = vmatprep.mubr.f32.mxu0 0.0
  %6391 = vmatmul.mubr.f32.gmra.mrb[0].mxu0 %v6258
  %v6392 = vpop.f32.mrb[0].mxu0
  %v6393 = vadd.f32 0.0, %v6392
  %v6394 = vpop.f32.mrb[0].mxu0
  %6395 = vmatprep.mubr.f32.mxu0 0.0
  %6396 = vmatmul.mubr.f32.gmra.mrb[0].mxu0 %v6261
  %v6397 = vpop.f32.mrb[0].mxu0
  %v6398 = vadd.f32 0.0, %v6397
  %v6399 = vpop.f32.mrb[0].mxu0
  %6400 = vmatprep.mubr.f32.mxu0 0.0
  %6401 = vmatmul.mubr.f32.gmra.mrb[0].mxu0 %v6264
  %v6402 = vpop.f32.mrb[0].mxu0
  %v6403 = vadd.f32 0.0, %v6402
  %v6404 = vpop.f32.mrb[0].mxu0
  %6405 = vdwg.mxu0
  %v6406 = vadd.f32 %v6025, %v6333
  %v6407 = vadd.f32 %v6030, %v6338
  %v6408 = vadd.f32 %v6035, %v6343
  %v6409 = vadd.f32 %v6040, %v6348
  %v6410 = vadd.f32 %v6045, %v6353
  %v6411 = vadd.f32 %v6050, %v6358
  %v6412 = vadd.f32 %v6055, %v6363
  %v6413 = vadd.f32 %v6060, %v6368
  %v6414 = vadd.f32 %v6065, %v6373
  %v6415 = vadd.f32 %v6070, %v6378
  %v6416 = vadd.f32 %v6075, %v6383
  %v6417 = vadd.f32 %v6080, %v6388
  %v6418 = vadd.f32 %v6085, %v6393
  %v6419 = vadd.f32 %v6090, %v6398
  %v6420 = vadd.f32 %v6095, %v6403
  %s6421 = scalar_lea.vmem %s11, 24
  %v6422 = vld [vmem:[%s6421] sm:$0xff]
  %6423 = vmatprep.subr.mxu0 0.0
  %6424 = vmatpush1.msra.mxu0 %v6422
  %6425 = vmatprep.subr.mxu0 0.0
  %6426 = vmatpush1.msra.mxu0 0.0
  %6427 = vmatprep.subr.mxu0 0.0
  %6428 = vmatpush1.msra.mxu0 0.0
  %6429 = vmatprep.subr.mxu0 0.0
  %6430 = vmatpush1.msra.mxu0 0.0
  %6431 = vmatprep.subr.mxu0 0.0
  %6432 = vmatpush1.msra.mxu0 0.0
  %6433 = vmatprep.subr.mxu0 0.0
  %6434 = vmatpush1.msra.mxu0 0.0
  %6435 = vmatprep.subr.mxu0 0.0
  %6436 = vmatpush1.msra.mxu0 0.0
  %6437 = vmatprep.subr.mxu0 0.0
  %6438 = vmatpush1.msra.mxu0 0.0
  %6439 = vmatprep.subr.mxu0 0.0
  %6440 = vmatpush1.msra.mxu0 0.0
  %6441 = vmatprep.subr.mxu0 0.0
  %6442 = vmatpush1.msra.mxu0 0.0
  %6443 = vmatprep.subr.mxu0 0.0
  %6444 = vmatpush1.msra.mxu0 0.0
  %6445 = vmatprep.subr.mxu0 0.0
  %6446 = vmatpush1.msra.mxu0 0.0
  %6447 = vmatprep.subr.mxu0 0.0
  %6448 = vmatpush1.msra.mxu0 0.0
  %6449 = vmatprep.subr.mxu0 0.0
  %6450 = vmatpush1.msra.mxu0 0.0
  %6451 = vmatprep.subr.mxu0 0.0
  %6452 = vmatpush1.msra.mxu0 0.0
  %6453 = vmatprep.subr.mxu0 0.0
  %6454 = vmatpush1.msra.mxu0 0.0
  %6455 = vmatprep.subr.mxu0 0.0
  %6456 = vmatpush1.msra.mxu0 0.0
  %6457 = vmatprep.subr.mxu0 0.0
  %6458 = vmatpush1.msra.mxu0 0.0
  %6459 = vmatprep.subr.mxu0 0.0
  %6460 = vmatpush1.msra.mxu0 0.0
  %6461 = vmatprep.subr.mxu0 0.0
  %6462 = vmatpush1.msra.mxu0 0.0
  %6463 = vmatprep.subr.mxu0 0.0
  %6464 = vmatpush1.msra.mxu0 0.0
  %6465 = vmatprep.subr.mxu0 0.0
  %6466 = vmatpush1.msra.mxu0 0.0
  %6467 = vmatprep.subr.mxu0 0.0
  %6468 = vmatpush1.msra.mxu0 0.0
  %6469 = vmatprep.subr.mxu0 0.0
  %6470 = vmatpush1.msra.mxu0 0.0
  %6471 = vmatprep.subr.mxu0 0.0
  %6472 = vmatpush1.msra.mxu0 0.0
  %6473 = vmatprep.subr.mxu0 0.0
  %6474 = vmatpush1.msra.mxu0 0.0
  %6475 = vmatprep.subr.mxu0 0.0
  %6476 = vmatpush1.msra.mxu0 0.0
  %6477 = vmatprep.subr.mxu0 0.0
  %6478 = vmatpush1.msra.mxu0 0.0
  %6479 = vmatprep.subr.mxu0 0.0
  %6480 = vmatpush1.msra.mxu0 0.0
  %6481 = vmatprep.subr.mxu0 0.0
  %6482 = vmatpush1.msra.mxu0 0.0
  %6483 = vmatprep.subr.mxu0 0.0
  %6484 = vmatpush1.msra.mxu0 0.0
  %6485 = vmatprep.subr.mxu0 0.0
  %6486 = vmatpush1.msra.mxu0 0.0
  %6487 = vmatprep.mubr.f32.mxu0 0.0
  %6488 = vmatmul.mubr.f32.gmra.mrb[0].mxu0 %v5461
  %v6489 = vpop.f32.mrb[0].mxu0
  %v6490 = vadd.f32 0.0, %v6489
  %v6491 = vpop.f32.mrb[0].mxu0
  %6492 = vmatprep.mubr.f32.mxu0 0.0
  %6493 = vmatmul.mubr.f32.gmra.mrb[0].mxu0 %v5464
  %v6494 = vpop.f32.mrb[0].mxu0
  %v6495 = vadd.f32 0.0, %v6494
  %v6496 = vpop.f32.mrb[0].mxu0
  %6497 = vmatprep.mubr.f32.mxu0 0.0
  %6498 = vmatmul.mubr.f32.gmra.mrb[0].mxu0 %v5467
  %v6499 = vpop.f32.mrb[0].mxu0
  %v6500 = vadd.f32 0.0, %v6499
  %v6501 = vpop.f32.mrb[0].mxu0
  %6502 = vmatprep.mubr.f32.mxu0 0.0
  %6503 = vmatmul.mubr.f32.gmra.mrb[0].mxu0 %v5470
  %v6504 = vpop.f32.mrb[0].mxu0
  %v6505 = vadd.f32 0.0, %v6504
  %v6506 = vpop.f32.mrb[0].mxu0
  %6507 = vmatprep.mubr.f32.mxu0 0.0
  %6508 = vmatmul.mubr.f32.gmra.mrb[0].mxu0 %v5473
  %v6509 = vpop.f32.mrb[0].mxu0
  %v6510 = vadd.f32 0.0, %v6509
  %v6511 = vpop.f32.mrb[0].mxu0
  %6512 = vmatprep.mubr.f32.mxu0 0.0
  %6513 = vmatmul.mubr.f32.gmra.mrb[0].mxu0 %v5476
  %v6514 = vpop.f32.mrb[0].mxu0
  %v6515 = vadd.f32 0.0, %v6514
  %v6516 = vpop.f32.mrb[0].mxu0
  %6517 = vmatprep.mubr.f32.mxu0 0.0
  %6518 = vmatmul.mubr.f32.gmra.mrb[0].mxu0 %v5479
  %v6519 = vpop.f32.mrb[0].mxu0
  %v6520 = vadd.f32 0.0, %v6519
  %v6521 = vpop.f32.mrb[0].mxu0
  %6522 = vmatprep.mubr.f32.mxu0 0.0
  %6523 = vmatmul.mubr.f32.gmra.mrb[0].mxu0 %v5482
  %v6524 = vpop.f32.mrb[0].mxu0
  %v6525 = vadd.f32 0.0, %v6524
  %v6526 = vpop.f32.mrb[0].mxu0
  %6527 = vdwg.mxu0
  %s6528 = scalar_lea.vmem %s12, 360
  %v6529 = vld [vmem:[%s6528] sm:$0xff]
  %v6530 = vld [vmem:[%s6528 + $0x8] sm:$0xff]
  %v6531 = vld [vmem:[%s6528 + $0x10] sm:$0xff]
  %v6532 = vld [vmem:[%s6528 + $0x18] sm:$0xff]
  %v6533 = vld [vmem:[%s6528 + $0x20] sm:$0xff]
  %v6534 = vld [vmem:[%s6528 + $0x28] sm:$0xff]
  %v6535 = vld [vmem:[%s6528 + $0x30] sm:$0xff]
  %v6536 = vld [vmem:[%s6528 + $0x38] sm:$0xff]
  %v6537 = vld [vmem:[%s6528 + $0x40] sm:$0xff]
  %v6538 = vld [vmem:[%s6528 + $0x48] sm:$0xff]
  %v6539 = vld [vmem:[%s6528 + $0x50] sm:$0xff]
  %v6540 = vld [vmem:[%s6528 + $0x58] sm:$0xff]
  %v6541 = vld [vmem:[%s6528 + $0x60] sm:$0xff]
  %v6542 = vld [vmem:[%s6528 + $0x68] sm:$0xff]
  %v6543 = vld [vmem:[%s6528 + $0x70] sm:$0xff]
  %v6545 = vsel %vm5727, %v6529, 0
  %v6548 = vsel %vm5727, %v6530, 0
  %v6551 = vsel %vm5727, %v6531, 0
  %v6554 = vsel %vm5727, %v6532, 0
  %v6557 = vsel %vm5727, %v6533, 0
  %v6560 = vsel %vm5727, %v6534, 0
  %v6563 = vsel %vm5727, %v6535, 0
  %v6566 = vsel %vm5727, %v6536, 0
  %v6569 = vsel %vm5727, %v6537, 0
  %v6572 = vsel %vm5727, %v6538, 0
  %v6575 = vsel %vm5727, %v6539, 0
  %v6578 = vsel %vm5727, %v6540, 0
  %v6581 = vsel %vm5727, %v6541, 0
  %v6584 = vsel %vm5727, %v6542, 0
  %v6587 = vsel %vm5727, %v6543, 0
  %6589 = vmatprep.subr.mxu0 0.0
  %6590 = vmatpush1.msra.mxu0 %v6490
  %6591 = vmatprep.subr.mxu0 0.0
  %6592 = vmatpush1.msra.mxu0 %v6495
  %6593 = vmatprep.subr.mxu0 0.0
  %6594 = vmatpush1.msra.mxu0 %v6500
  %6595 = vmatprep.subr.mxu0 0.0
  %6596 = vmatpush1.msra.mxu0 %v6505
  %6597 = vmatprep.subr.mxu0 0.0
  %6598 = vmatpush1.msra.mxu0 %v6510
  %6599 = vmatprep.subr.mxu0 0.0
  %6600 = vmatpush1.msra.mxu0 %v6515
  %6601 = vmatprep.subr.mxu0 0.0
  %6602 = vmatpush1.msra.mxu0 %v6520
  %6603 = vmatprep.subr.mxu0 0.0
  %6604 = vmatpush1.msra.mxu0 %v6525
  %6605 = vmatprep.subr.mxu0 0.0
  %6606 = vmatpush1.msra.mxu0 0.0
  %6607 = vmatprep.subr.mxu0 0.0
  %6608 = vmatpush1.msra.mxu0 0.0
  %6609 = vmatprep.subr.mxu0 0.0
  %6610 = vmatpush1.msra.mxu0 0.0
  %6611 = vmatprep.subr.mxu0 0.0
  %6612 = vmatpush1.msra.mxu0 0.0
  %6613 = vmatprep.subr.mxu0 0.0
  %6614 = vmatpush1.msra.mxu0 0.0
  %6615 = vmatprep.subr.mxu0 0.0
  %6616 = vmatpush1.msra.mxu0 0.0
  %6617 = vmatprep.subr.mxu0 0.0
  %6618 = vmatpush1.msra.mxu0 0.0
  %6619 = vmatprep.subr.mxu0 0.0
  %6620 = vmatpush1.msra.mxu0 0.0
  %6621 = vmatprep.subr.mxu0 0.0
  %6622 = vmatpush1.msra.mxu0 0.0
  %6623 = vmatprep.subr.mxu0 0.0
  %6624 = vmatpush1.msra.mxu0 0.0
  %6625 = vmatprep.subr.mxu0 0.0
  %6626 = vmatpush1.msra.mxu0 0.0
  %6627 = vmatprep.subr.mxu0 0.0
  %6628 = vmatpush1.msra.mxu0 0.0
  %6629 = vmatprep.subr.mxu0 0.0
  %6630 = vmatpush1.msra.mxu0 0.0
  %6631 = vmatprep.subr.mxu0 0.0
  %6632 = vmatpush1.msra.mxu0 0.0
  %6633 = vmatprep.subr.mxu0 0.0
  %6634 = vmatpush1.msra.mxu0 0.0
  %6635 = vmatprep.subr.mxu0 0.0
  %6636 = vmatpush1.msra.mxu0 0.0
  %6637 = vmatprep.subr.mxu0 0.0
  %6638 = vmatpush1.msra.mxu0 0.0
  %6639 = vmatprep.subr.mxu0 0.0
  %6640 = vmatpush1.msra.mxu0 0.0
  %6641 = vmatprep.subr.mxu0 0.0
  %6642 = vmatpush1.msra.mxu0 0.0
  %6643 = vmatprep.subr.mxu0 0.0
  %6644 = vmatpush1.msra.mxu0 0.0
  %6645 = vmatprep.subr.mxu0 0.0
  %6646 = vmatpush1.msra.mxu0 0.0
  %6647 = vmatprep.subr.mxu0 0.0
  %6648 = vmatpush1.msra.mxu0 0.0
  %6649 = vmatprep.subr.mxu0 0.0
  %6650 = vmatpush1.msra.mxu0 0.0
  %6651 = vmatprep.subr.mxu0 0.0
  %6652 = vmatpush1.msra.mxu0 0.0
  %6653 = vmatprep.mubr.f32.mxu0 0.0
  %6654 = vmatmul.mubr.f32.gmra.mrb[0].mxu0 %v6545
  %v6655 = vpop.f32.mrb[0].mxu0
  %v6656 = vadd.f32 0.0, %v6655
  %v6657 = vpop.f32.mrb[0].mxu0
  %6658 = vmatprep.mubr.f32.mxu0 0.0
  %6659 = vmatmul.mubr.f32.gmra.mrb[0].mxu0 %v6548
  %v6660 = vpop.f32.mrb[0].mxu0
  %v6661 = vadd.f32 0.0, %v6660
  %v6662 = vpop.f32.mrb[0].mxu0
  %6663 = vmatprep.mubr.f32.mxu0 0.0
  %6664 = vmatmul.mubr.f32.gmra.mrb[0].mxu0 %v6551
  %v6665 = vpop.f32.mrb[0].mxu0
  %v6666 = vadd.f32 0.0, %v6665
  %v6667 = vpop.f32.mrb[0].mxu0
  %6668 = vmatprep.mubr.f32.mxu0 0.0
  %6669 = vmatmul.mubr.f32.gmra.mrb[0].mxu0 %v6554
  %v6670 = vpop.f32.mrb[0].mxu0
  %v6671 = vadd.f32 0.0, %v6670
  %v6672 = vpop.f32.mrb[0].mxu0
  %6673 = vmatprep.mubr.f32.mxu0 0.0
  %6674 = vmatmul.mubr.f32.gmra.mrb[0].mxu0 %v6557
  %v6675 = vpop.f32.mrb[0].mxu0
  %v6676 = vadd.f32 0.0, %v6675
  %v6677 = vpop.f32.mrb[0].mxu0
  %6678 = vmatprep.mubr.f32.mxu0 0.0
  %6679 = vmatmul.mubr.f32.gmra.mrb[0].mxu0 %v6560
  %v6680 = vpop.f32.mrb[0].mxu0
  %v6681 = vadd.f32 0.0, %v6680
  %v6682 = vpop.f32.mrb[0].mxu0
  %6683 = vmatprep.mubr.f32.mxu0 0.0
  %6684 = vmatmul.mubr.f32.gmra.mrb[0].mxu0 %v6563
  %v6685 = vpop.f32.mrb[0].mxu0
  %v6686 = vadd.f32 0.0, %v6685
  %v6687 = vpop.f32.mrb[0].mxu0
  %6688 = vmatprep.mubr.f32.mxu0 0.0
  %6689 = vmatmul.mubr.f32.gmra.mrb[0].mxu0 %v6566
  %v6690 = vpop.f32.mrb[0].mxu0
  %v6691 = vadd.f32 0.0, %v6690
  %v6692 = vpop.f32.mrb[0].mxu0
  %6693 = vmatprep.mubr.f32.mxu0 0.0
  %6694 = vmatmul.mubr.f32.gmra.mrb[0].mxu0 %v6569
  %v6695 = vpop.f32.mrb[0].mxu0
  %v6696 = vadd.f32 0.0, %v6695
  %v6697 = vpop.f32.mrb[0].mxu0
  %6698 = vmatprep.mubr.f32.mxu0 0.0
  %6699 = vmatmul.mubr.f32.gmra.mrb[0].mxu0 %v6572
  %v6700 = vpop.f32.mrb[0].mxu0
  %v6701 = vadd.f32 0.0, %v6700
  %v6702 = vpop.f32.mrb[0].mxu0
  %6703 = vmatprep.mubr.f32.mxu0 0.0
  %6704 = vmatmul.mubr.f32.gmra.mrb[0].mxu0 %v6575
  %v6705 = vpop.f32.mrb[0].mxu0
  %v6706 = vadd.f32 0.0, %v6705
  %v6707 = vpop.f32.mrb[0].mxu0
  %6708 = vmatprep.mubr.f32.mxu0 0.0
  %6709 = vmatmul.mubr.f32.gmra.mrb[0].mxu0 %v6578
  %v6710 = vpop.f32.mrb[0].mxu0
  %v6711 = vadd.f32 0.0, %v6710
  %v6712 = vpop.f32.mrb[0].mxu0
  %6713 = vmatprep.mubr.f32.mxu0 0.0
  %6714 = vmatmul.mubr.f32.gmra.mrb[0].mxu0 %v6581
  %v6715 = vpop.f32.mrb[0].mxu0
  %v6716 = vadd.f32 0.0, %v6715
  %v6717 = vpop.f32.mrb[0].mxu0
  %6718 = vmatprep.mubr.f32.mxu0 0.0
  %6719 = vmatmul.mubr.f32.gmra.mrb[0].mxu0 %v6584
  %v6720 = vpop.f32.mrb[0].mxu0
  %v6721 = vadd.f32 0.0, %v6720
  %v6722 = vpop.f32.mrb[0].mxu0
  %6723 = vmatprep.mubr.f32.mxu0 0.0
  %6724 = vmatmul.mubr.f32.gmra.mrb[0].mxu0 %v6587
  %v6725 = vpop.f32.mrb[0].mxu0
  %v6726 = vadd.f32 0.0, %v6725
  %v6727 = vpop.f32.mrb[0].mxu0
  %6728 = vdwg.mxu0
  %v6729 = vadd.f32 %v6406, %v6656
  %v6730 = vadd.f32 %v6407, %v6661
  %v6731 = vadd.f32 %v6408, %v6666
  %v6732 = vadd.f32 %v6409, %v6671
  %v6733 = vadd.f32 %v6410, %v6676
  %v6734 = vadd.f32 %v6411, %v6681
  %v6735 = vadd.f32 %v6412, %v6686
  %v6736 = vadd.f32 %v6413, %v6691
  %v6737 = vadd.f32 %v6414, %v6696
  %v6738 = vadd.f32 %v6415, %v6701
  %v6739 = vadd.f32 %v6416, %v6706
  %v6740 = vadd.f32 %v6417, %v6711
  %v6741 = vadd.f32 %v6418, %v6716
  %v6742 = vadd.f32 %v6419, %v6721
  %v6743 = vadd.f32 %v6420, %v6726
  %v6744 = vld [vmem:[%s13] sm:$0xff]
  %v6745 = vld [vmem:[%s13 + $0x8] sm:$0xff]
  %v6746 = vld [vmem:[%s13 + $0x10] sm:$0xff]
  %v6747 = vld [vmem:[%s13 + $0x18] sm:$0xff]
  %v6748 = vld [vmem:[%s13 + $0x20] sm:$0xff]
  %v6749 = vld [vmem:[%s13 + $0x28] sm:$0xff]
  %v6750 = vld [vmem:[%s13 + $0x30] sm:$0xff]
  %v6751 = vld [vmem:[%s13 + $0x38] sm:$0xff]
  %v6752 = vld [vmem:[%s13 + $0x40] sm:$0xff]
  %v6753 = vld [vmem:[%s13 + $0x48] sm:$0xff]
  %v6754 = vld [vmem:[%s13 + $0x50] sm:$0xff]
  %v6755 = vld [vmem:[%s13 + $0x58] sm:$0xff]
  %v6756 = vld [vmem:[%s13 + $0x60] sm:$0xff]
  %v6757 = vld [vmem:[%s13 + $0x68] sm:$0xff]
  %v6758 = vld [vmem:[%s13 + $0x70] sm:$0xff]
  %6760 = vset.pattern.permute.xlu0 0
  %6761 = vperm.xlu0 %6760, %v6744
  %v6762 = vpop.permute.xlu0 %6761
  %6765 = vset.pattern.permute.xlu0 0
  %6766 = vperm.xlu0 %6765, %v6745
  %v6767 = vpop.permute.xlu0 %6766
  %6770 = vset.pattern.permute.xlu0 0
  %6771 = vperm.xlu0 %6770, %v6746
  %v6772 = vpop.permute.xlu0 %6771
  %6775 = vset.pattern.permute.xlu0 0
  %6776 = vperm.xlu0 %6775, %v6747
  %v6777 = vpop.permute.xlu0 %6776
  %6780 = vset.pattern.permute.xlu0 0
  %6781 = vperm.xlu0 %6780, %v6748
  %v6782 = vpop.permute.xlu0 %6781
  %6785 = vset.pattern.permute.xlu0 0
  %6786 = vperm.xlu0 %6785, %v6749
  %v6787 = vpop.permute.xlu0 %6786
  %6790 = vset.pattern.permute.xlu0 0
  %6791 = vperm.xlu0 %6790, %v6750
  %v6792 = vpop.permute.xlu0 %6791
  %6795 = vset.pattern.permute.xlu0 0
  %6796 = vperm.xlu0 %6795, %v6751
  %v6797 = vpop.permute.xlu0 %6796
  %6800 = vset.pattern.permute.xlu0 0
  %6801 = vperm.xlu0 %6800, %v6752
  %v6802 = vpop.permute.xlu0 %6801
  %6805 = vset.pattern.permute.xlu0 0
  %6806 = vperm.xlu0 %6805, %v6753
  %v6807 = vpop.permute.xlu0 %6806
  %6810 = vset.pattern.permute.xlu0 0
  %6811 = vperm.xlu0 %6810, %v6754
  %v6812 = vpop.permute.xlu0 %6811
  %6815 = vset.pattern.permute.xlu0 0
  %6816 = vperm.xlu0 %6815, %v6755
  %v6817 = vpop.permute.xlu0 %6816
  %6820 = vset.pattern.permute.xlu0 0
  %6821 = vperm.xlu0 %6820, %v6756
  %v6822 = vpop.permute.xlu0 %6821
  %6825 = vset.pattern.permute.xlu0 0
  %6826 = vperm.xlu0 %6825, %v6757
  %v6827 = vpop.permute.xlu0 %6826
  %6830 = vset.pattern.permute.xlu0 0
  %6831 = vperm.xlu0 %6830, %v6758
  %v6832 = vpop.permute.xlu0 %6831
  %v6834 = vadd.f32 %v6729, %v6762
  %v6835 = vadd.f32 %v6730, %v6767
  %v6836 = vadd.f32 %v6731, %v6772
  %v6837 = vadd.f32 %v6732, %v6777
  %v6838 = vadd.f32 %v6733, %v6782
  %v6839 = vadd.f32 %v6734, %v6787
  %v6840 = vadd.f32 %v6735, %v6792
  %v6841 = vadd.f32 %v6736, %v6797
  %v6842 = vadd.f32 %v6737, %v6802
  %v6843 = vadd.f32 %v6738, %v6807
  %v6844 = vadd.f32 %v6739, %v6812
  %v6845 = vadd.f32 %v6740, %v6817
  %v6846 = vadd.f32 %v6741, %v6822
  %v6847 = vadd.f32 %v6742, %v6827
  %v6848 = vadd.f32 %v6743, %v6832
  %v6849 = vmax.f32 %v6834, 0.0
  %v6850 = vmax.f32 %v6835, 0.0
  %v6851 = vmax.f32 %v6836, 0.0
  %v6852 = vmax.f32 %v6837, 0.0
  %v6853 = vmax.f32 %v6838, 0.0
  %v6854 = vmax.f32 %v6839, 0.0
  %v6855 = vmax.f32 %v6840, 0.0
  %v6856 = vmax.f32 %v6841, 0.0
  %v6857 = vmax.f32 %v6842, 0.0
  %v6858 = vmax.f32 %v6843, 0.0
  %v6859 = vmax.f32 %v6844, 0.0
  %v6860 = vmax.f32 %v6845, 0.0
  %v6861 = vmax.f32 %v6846, 0.0
  %v6862 = vmax.f32 %v6847, 0.0
  %v6863 = vmax.f32 %v6848, 0.0
  %v6864 = vld [vmem:[%s14] sm:$0xff]
  %v6865 = vld [vmem:[%s14 + $0x8] sm:$0xff]
  %v6866 = vld [vmem:[%s14 + $0x10] sm:$0xff]
  %v6867 = vld [vmem:[%s14 + $0x18] sm:$0xff]
  %v6868 = vld [vmem:[%s14 + $0x20] sm:$0xff]
  %v6869 = vld [vmem:[%s14 + $0x28] sm:$0xff]
  %v6870 = vld [vmem:[%s14 + $0x30] sm:$0xff]
  %v6871 = vld [vmem:[%s14 + $0x38] sm:$0xff]
  %v6872 = vld [vmem:[%s14 + $0x40] sm:$0xff]
  %v6873 = vld [vmem:[%s14 + $0x48] sm:$0xff]
  %v6874 = vld [vmem:[%s14 + $0x50] sm:$0xf]
  %v6875 = vld [vmem:[%s15] sm:$0xff]
  %v6876 = vld [vmem:[%s15 + $0x8] sm:$0xff]
  %v6877 = vld [vmem:[%s15 + $0x10] sm:$0xff]
  %v6878 = vld [vmem:[%s15 + $0x18] sm:$0xff]
  %v6879 = vld [vmem:[%s15 + $0x20] sm:$0xff]
  %v6880 = vld [vmem:[%s15 + $0x28] sm:$0xff]
  %v6881 = vld [vmem:[%s15 + $0x30] sm:$0xff]
  %v6882 = vld [vmem:[%s15 + $0x38] sm:$0xff]
  %v6883 = vld [vmem:[%s15 + $0x40] sm:$0xff]
  %v6884 = vld [vmem:[%s15 + $0x48] sm:$0xff]
  %v6885 = vld [vmem:[%s15 + $0x50] sm:$0xf]
  %6887 = vset.pattern.permute.xlu0 0
  %6888 = vperm.xlu0 %6887, %v6875
  %v6889 = vpop.permute.xlu0 %6888
  %6892 = vset.pattern.permute.xlu0 0
  %6893 = vperm.xlu0 %6892, %v6876
  %v6894 = vpop.permute.xlu0 %6893
  %6897 = vset.pattern.permute.xlu0 0
  %6898 = vperm.xlu0 %6897, %v6877
  %v6899 = vpop.permute.xlu0 %6898
  %6902 = vset.pattern.permute.xlu0 0
  %6903 = vperm.xlu0 %6902, %v6878
  %v6904 = vpop.permute.xlu0 %6903
  %6907 = vset.pattern.permute.xlu0 0
  %6908 = vperm.xlu0 %6907, %v6879
  %v6909 = vpop.permute.xlu0 %6908
  %6912 = vset.pattern.permute.xlu0 0
  %6913 = vperm.xlu0 %6912, %v6880
  %v6914 = vpop.permute.xlu0 %6913
  %6917 = vset.pattern.permute.xlu0 0
  %6918 = vperm.xlu0 %6917, %v6881
  %v6919 = vpop.permute.xlu0 %6918
  %6922 = vset.pattern.permute.xlu0 0
  %6923 = vperm.xlu0 %6922, %v6882
  %v6924 = vpop.permute.xlu0 %6923
  %6927 = vset.pattern.permute.xlu0 0
  %6928 = vperm.xlu0 %6927, %v6883
  %v6929 = vpop.permute.xlu0 %6928
  %6932 = vset.pattern.permute.xlu0 0
  %6933 = vperm.xlu0 %6932, %v6884
  %v6934 = vpop.permute.xlu0 %6933
  %6937 = vset.pattern.permute.xlu0 0
  %6938 = vperm.xlu0 %6937, %v6885
  %v6939 = vpop.permute.xlu0 %6938
  %vm6941 = vcmask 982016
  %v6943 = vsel %vm6941, %v6864, 0
  %v6946 = vsel %vm6941, %v6865, 0
  %v6949 = vsel %vm6941, %v6866, 0
  %v6952 = vsel %vm6941, %v6867, 0
  %v6955 = vsel %vm6941, %v6868, 0
  %v6958 = vsel %vm6941, %v6869, 0
  %v6961 = vsel %vm6941, %v6870, 0
  %v6964 = vsel %vm6941, %v6871, 0
  %v6967 = vsel %vm6941, %v6872, 0
  %v6970 = vsel %vm6941, %v6873, 0
  %v6973 = vsel %vm6941, %v6874, 0
  %6975 = vmatprep.subr.mxu0 0.0
  %6976 = vmatpush1.msra.mxu0 %v6849
  %6977 = vmatprep.subr.mxu0 0.0
  %6978 = vmatpush1.msra.mxu0 %v6850
  %6979 = vmatprep.subr.mxu0 0.0
  %6980 = vmatpush1.msra.mxu0 %v6851
  %6981 = vmatprep.subr.mxu0 0.0
  %6982 = vmatpush1.msra.mxu0 %v6852
  %6983 = vmatprep.subr.mxu0 0.0
  %6984 = vmatpush1.msra.mxu0 %v6853
  %6985 = vmatprep.subr.mxu0 0.0
  %6986 = vmatpush1.msra.mxu0 %v6854
  %6987 = vmatprep.subr.mxu0 0.0
  %6988 = vmatpush1.msra.mxu0 %v6855
  %6989 = vmatprep.subr.mxu0 0.0
  %6990 = vmatpush1.msra.mxu0 %v6856
  %6991 = vmatprep.subr.mxu0 0.0
  %6992 = vmatpush1.msra.mxu0 %v6857
  %6993 = vmatprep.subr.mxu0 0.0
  %6994 = vmatpush1.msra.mxu0 %v6858
  %6995 = vmatprep.subr.mxu0 0.0
  %6996 = vmatpush1.msra.mxu0 %v6859
  %6997 = vmatprep.subr.mxu0 0.0
  %6998 = vmatpush1.msra.mxu0 %v6860
  %6999 = vmatprep.subr.mxu0 0.0
  %7000 = vmatpush1.msra.mxu0 %v6861
  %7001 = vmatprep.subr.mxu0 0.0
  %7002 = vmatpush1.msra.mxu0 %v6862
  %7003 = vmatprep.subr.mxu0 0.0
  %7004 = vmatpush1.msra.mxu0 %v6863
  %7005 = vmatprep.subr.mxu0 0.0
  %7006 = vmatpush1.msra.mxu0 0.0
  %7007 = vmatprep.subr.mxu0 0.0
  %7008 = vmatpush1.msra.mxu0 0.0
  %7009 = vmatprep.subr.mxu0 0.0
  %7010 = vmatpush1.msra.mxu0 0.0
  %7011 = vmatprep.subr.mxu0 0.0
  %7012 = vmatpush1.msra.mxu0 0.0
  %7013 = vmatprep.subr.mxu0 0.0
  %7014 = vmatpush1.msra.mxu0 0.0
  %7015 = vmatprep.subr.mxu0 0.0
  %7016 = vmatpush1.msra.mxu0 0.0
  %7017 = vmatprep.subr.mxu0 0.0
  %7018 = vmatpush1.msra.mxu0 0.0
  %7019 = vmatprep.subr.mxu0 0.0
  %7020 = vmatpush1.msra.mxu0 0.0
  %7021 = vmatprep.subr.mxu0 0.0
  %7022 = vmatpush1.msra.mxu0 0.0
  %7023 = vmatprep.subr.mxu0 0.0
  %7024 = vmatpush1.msra.mxu0 0.0
  %7025 = vmatprep.subr.mxu0 0.0
  %7026 = vmatpush1.msra.mxu0 0.0
  %7027 = vmatprep.subr.mxu0 0.0
  %7028 = vmatpush1.msra.mxu0 0.0
  %7029 = vmatprep.subr.mxu0 0.0
  %7030 = vmatpush1.msra.mxu0 0.0
  %7031 = vmatprep.subr.mxu0 0.0
  %7032 = vmatpush1.msra.mxu0 0.0
  %7033 = vmatprep.subr.mxu0 0.0
  %7034 = vmatpush1.msra.mxu0 0.0
  %7035 = vmatprep.subr.mxu0 0.0
  %7036 = vmatpush1.msra.mxu0 0.0
  %7037 = vmatprep.subr.mxu0 0.0
  %7038 = vmatpush1.msra.mxu0 0.0
  %7039 = vmatprep.mubr.f32.mxu0 0.0
  %7040 = vmatmul.mubr.f32.gmra.mrb[0].mxu0 %v6943
  %v7041 = vpop.f32.mrb[0].mxu0
  %v7042 = vadd.f32 %v6889, %v7041
  %v7043 = vpop.f32.mrb[0].mxu0
  %7044 = vmatprep.mubr.f32.mxu0 0.0
  %7045 = vmatmul.mubr.f32.gmra.mrb[0].mxu0 %v6946
  %v7046 = vpop.f32.mrb[0].mxu0
  %v7047 = vadd.f32 %v6894, %v7046
  %v7048 = vpop.f32.mrb[0].mxu0
  %7049 = vmatprep.mubr.f32.mxu0 0.0
  %7050 = vmatmul.mubr.f32.gmra.mrb[0].mxu0 %v6949
  %v7051 = vpop.f32.mrb[0].mxu0
  %v7052 = vadd.f32 %v6899, %v7051
  %v7053 = vpop.f32.mrb[0].mxu0
  %7054 = vmatprep.mubr.f32.mxu0 0.0
  %7055 = vmatmul.mubr.f32.gmra.mrb[0].mxu0 %v6952
  %v7056 = vpop.f32.mrb[0].mxu0
  %v7057 = vadd.f32 %v6904, %v7056
  %v7058 = vpop.f32.mrb[0].mxu0
  %7059 = vmatprep.mubr.f32.mxu0 0.0
  %7060 = vmatmul.mubr.f32.gmra.mrb[0].mxu0 %v6955
  %v7061 = vpop.f32.mrb[0].mxu0
  %v7062 = vadd.f32 %v6909, %v7061
  %v7063 = vpop.f32.mrb[0].mxu0
  %7064 = vmatprep.mubr.f32.mxu0 0.0
  %7065 = vmatmul.mubr.f32.gmra.mrb[0].mxu0 %v6958
  %v7066 = vpop.f32.mrb[0].mxu0
  %v7067 = vadd.f32 %v6914, %v7066
  %v7068 = vpop.f32.mrb[0].mxu0
  %7069 = vmatprep.mubr.f32.mxu0 0.0
  %7070 = vmatmul.mubr.f32.gmra.mrb[0].mxu0 %v6961
  %v7071 = vpop.f32.mrb[0].mxu0
  %v7072 = vadd.f32 %v6919, %v7071
  %v7073 = vpop.f32.mrb[0].mxu0
  %7074 = vmatprep.mubr.f32.mxu0 0.0
  %7075 = vmatmul.mubr.f32.gmra.mrb[0].mxu0 %v6964
  %v7076 = vpop.f32.mrb[0].mxu0
  %v7077 = vadd.f32 %v6924, %v7076
  %v7078 = vpop.f32.mrb[0].mxu0
  %7079 = vmatprep.mubr.f32.mxu0 0.0
  %7080 = vmatmul.mubr.f32.gmra.mrb[0].mxu0 %v6967
  %v7081 = vpop.f32.mrb[0].mxu0
  %v7082 = vadd.f32 %v6929, %v7081
  %v7083 = vpop.f32.mrb[0].mxu0
  %7084 = vmatprep.mubr.f32.mxu0 0.0
  %7085 = vmatmul.mubr.f32.gmra.mrb[0].mxu0 %v6970
  %v7086 = vpop.f32.mrb[0].mxu0
  %v7087 = vadd.f32 %v6934, %v7086
  %v7088 = vpop.f32.mrb[0].mxu0
  %7089 = vmatprep.mubr.f32.mxu0 0.0
  %7090 = vmatmul.mubr.f32.gmra.mrb[0].mxu0 %v6973
  %v7091 = vpop.f32.mrb[0].mxu0
  %v7092 = vadd.f32 %v6939, %v7091
  %v7093 = vpop.f32.mrb[0].mxu0
  %7094 = vdwg.mxu0
  %v7095 = vmax.f32 %v7042, 0.0
  %v7096 = vmax.f32 %v7047, 0.0
  %v7097 = vmax.f32 %v7052, 0.0
  %v7098 = vmax.f32 %v7057, 0.0
  %v7099 = vmax.f32 %v7062, 0.0
  %v7100 = vmax.f32 %v7067, 0.0
  %v7101 = vmax.f32 %v7072, 0.0
  %v7102 = vmax.f32 %v7077, 0.0
  %v7103 = vmax.f32 %v7082, 0.0
  %v7104 = vmax.f32 %v7087, 0.0
  %v7105 = vmax.f32 %v7092, 0.0
  %v7106 = vld [vmem:[%s16] sm:$0xff]
  %v7107 = vld [vmem:[%s16 + $0x8] sm:$0x3]
  %v7108 = vld [vmem:[%s17] sm:$0xff]
  %v7109 = vld [vmem:[%s17 + $0x8] sm:$0x3]
  %7111 = vset.pattern.permute.xlu0 0
  %7112 = vperm.xlu0 %7111, %v7108
  %v7113 = vpop.permute.xlu0 %7112
  %7116 = vset.pattern.permute.xlu0 0
  %7117 = vperm.xlu0 %7116, %v7109
  %v7118 = vpop.permute.xlu0 %7117
  %vm7120 = vcmask 687104
  %v7122 = vsel %vm7120, %v7106, 0
  %v7125 = vsel %vm7120, %v7107, 0
  %v7128 = vsel %vm371, %v7105, 0
  %7130 = vmatprep.subr.mxu0 0.0
  %7131 = vmatpush1.msra.mxu0 %v7095
  %7132 = vmatprep.subr.mxu0 0.0
  %7133 = vmatpush1.msra.mxu0 %v7096
  %7134 = vmatprep.subr.mxu0 0.0
  %7135 = vmatpush1.msra.mxu0 %v7097
  %7136 = vmatprep.subr.mxu0 0.0
  %7137 = vmatpush1.msra.mxu0 %v7098
  %7138 = vmatprep.subr.mxu0 0.0
  %7139 = vmatpush1.msra.mxu0 %v7099
  %7140 = vmatprep.subr.mxu0 0.0
  %7141 = vmatpush1.msra.mxu0 %v7100
  %7142 = vmatprep.subr.mxu0 0.0
  %7143 = vmatpush1.msra.mxu0 %v7101
  %7144 = vmatprep.subr.mxu0 0.0
  %7145 = vmatpush1.msra.mxu0 %v7102
  %7146 = vmatprep.subr.mxu0 0.0
  %7147 = vmatpush1.msra.mxu0 %v7103
  %7148 = vmatprep.subr.mxu0 0.0
  %7149 = vmatpush1.msra.mxu0 %v7104
  %7150 = vmatprep.subr.mxu0 0.0
  %7151 = vmatpush1.msra.mxu0 %v7128
  %7152 = vmatprep.subr.mxu0 0.0
  %7153 = vmatpush1.msra.mxu0 0.0
  %7154 = vmatprep.subr.mxu0 0.0
  %7155 = vmatpush1.msra.mxu0 0.0
  %7156 = vmatprep.subr.mxu0 0.0
  %7157 = vmatpush1.msra.mxu0 0.0
  %7158 = vmatprep.subr.mxu0 0.0
  %7159 = vmatpush1.msra.mxu0 0.0
  %7160 = vmatprep.subr.mxu0 0.0
  %7161 = vmatpush1.msra.mxu0 0.0
  %7162 = vmatprep.subr.mxu0 0.0
  %7163 = vmatpush1.msra.mxu0 0.0
  %7164 = vmatprep.subr.mxu0 0.0
  %7165 = vmatpush1.msra.mxu0 0.0
  %7166 = vmatprep.subr.mxu0 0.0
  %7167 = vmatpush1.msra.mxu0 0.0
  %7168 = vmatprep.subr.mxu0 0.0
  %7169 = vmatpush1.msra.mxu0 0.0
  %7170 = vmatprep.subr.mxu0 0.0
  %7171 = vmatpush1.msra.mxu0 0.0
  %7172 = vmatprep.subr.mxu0 0.0
  %7173 = vmatpush1.msra.mxu0 0.0
  %7174 = vmatprep.subr.mxu0 0.0
  %7175 = vmatpush1.msra.mxu0 0.0
  %7176 = vmatprep.subr.mxu0 0.0
  %7177 = vmatpush1.msra.mxu0 0.0
  %7178 = vmatprep.subr.mxu0 0.0
  %7179 = vmatpush1.msra.mxu0 0.0
  %7180 = vmatprep.subr.mxu0 0.0
  %7181 = vmatpush1.msra.mxu0 0.0
  %7182 = vmatprep.subr.mxu0 0.0
  %7183 = vmatpush1.msra.mxu0 0.0
  %7184 = vmatprep.subr.mxu0 0.0
  %7185 = vmatpush1.msra.mxu0 0.0
  %7186 = vmatprep.subr.mxu0 0.0
  %7187 = vmatpush1.msra.mxu0 0.0
  %7188 = vmatprep.subr.mxu0 0.0
  %7189 = vmatpush1.msra.mxu0 0.0
  %7190 = vmatprep.subr.mxu0 0.0
  %7191 = vmatpush1.msra.mxu0 0.0
  %7192 = vmatprep.subr.mxu0 0.0
  %7193 = vmatpush1.msra.mxu0 0.0
  %7194 = vmatprep.mubr.f32.mxu0 0.0
  %7195 = vmatmul.mubr.f32.gmra.mrb[0].mxu0 %v7122
  %v7196 = vpop.f32.mrb[0].mxu0
  %v7197 = vadd.f32 %v7113, %v7196
  %v7198 = vpop.f32.mrb[0].mxu0
  %7199 = vmatprep.mubr.f32.mxu0 0.0
  %7200 = vmatmul.mubr.f32.gmra.mrb[0].mxu0 %v7125
  %v7201 = vpop.f32.mrb[0].mxu0
  %v7202 = vadd.f32 %v7118, %v7201
  %v7203 = vpop.f32.mrb[0].mxu0
  %7204 = vdwg.mxu0
  %vm7205 = vcmask 15360
  %7206 = vst.msk [vmem:[%s18] sm:$0xff] %vm7205, %v7197
  %vm7207 = vcmask 9216
  %7208 = vst.msk [vmem:[%s18 + $0x8] sm:$0x3] %vm7207, %v7202
  // Predicated region
  $region74: #{lenet_forward.1} parent=0 // pred_check
    _
  $region75: #{lenet_forward.1} parent=0 // pred_check_branch
    %7210 = sbr.rel (0) target = $region77
  $region76: #{lenet_forward.1} parent=0 // pred_region
    _
  $region77: #{lenet_forward.1} parent=0 // pred_fallthru
    _
  // Predicated region
  $region78: #{lenet_forward.1} parent=0 // pred_check
    _
  $region79: #{lenet_forward.1} parent=0 // pred_check_branch
    %7212 = sbr.rel (0) target = $region81
  $region80: #{lenet_forward.1} parent=0 // pred_region
    _
  $region81: #{lenet_forward.1} parent=0 // pred_fallthru
    _

</llo_original>
